<compile_context>
chip_gen: v6e
topology: v6e:2x2x1
jax: 0.10.0
libtpu: 0.0.40
codegen_flags: <defaults>
</compile_context>

<pallas_src>
import jax
import jax.numpy as jnp
from jax.experimental import pallas as pl
from jax.experimental.pallas import tpu as pltpu

EPS = 1e-5


def _vmem_limit_bytes():
    """~80% of physical per-core VMEM (fallback 64 MiB if the query fails)."""
    cap = 64 * 1024 * 1024
    try:
        cap = int(getattr(pltpu.get_tpu_info(), "vmem_capacity_bytes", cap))
    except Exception:
        pass
    return int(cap * 0.8)


def _make_dense_block_kernel(num_layers, growth_rate):
    L, G = num_layers, growth_rate

    def kernel(x_ref, *refs):
        o_ref, acc_ref = refs[-2], refs[-1]
        param_refs = refs[:-2]                       # 6 refs per layer
        N, H, W, _ = o_ref.shape
        Cin = x_ref.shape[-1]
        NHW = N * H * W
        inv_n = jnp.float32(1.0 / NHW)

        # Seed the in-place "concat" buffer: x occupies the trailing Cin lanes;
        # layer i's new features will land at lane offset (L-1-i)*G.
        o_ref[:, :, :, L * G:] = x_ref[...]

        # Hoisted once; reused by every MXU-based BN statistics reduction.
        ones_row = jnp.ones((1, NHW), jnp.float32)

        for i in range(L):
            g1, b1, w1, g2, b2, w2r = param_refs[6 * i:6 * (i + 1)]
            start = (L - i) * G                      # live suffix = layer input
            C = Cin + i * G
            Cmid = w1.shape[1]

            xf = o_ref[:, :, :, start:].reshape(NHW, C)

            # ---- BatchNorm2d #1: single-pass batch stats on the MXU ----
            s1 = jnp.dot(ones_row, xf, preferred_element_type=jnp.float32)
            q1 = jnp.dot(ones_row, xf * xf, preferred_element_type=jnp.float32)
            mu1 = s1 * inv_n
            var1 = jnp.maximum(q1 * inv_n - mu1 * mu1, 0.0)   # clamp cancellation
            sc1 = g1[...] * jax.lax.rsqrt(var1 + EPS)
            sh1 = b1[...] - mu1 * sc1
            # BN affine + ReLU + bf16 cast fused into the matmul operand.
            h = jnp.maximum(xf * sc1 + sh1, 0.0).astype(jnp.bfloat16)

            # ---- 1x1 conv (no bias): bf16 operands, f32 accumulation ----
            mid = jnp.dot(h, w1[...], preferred_element_type=jnp.float32)

            # ---- BatchNorm2d #2 + ReLU ----
            s2 = jnp.dot(ones_row, mid, preferred_element_type=jnp.float32)
            q2 = jnp.dot(ones_row, mid * mid, preferred_element_type=jnp.float32)
            mu2 = s2 * inv_n
            var2 = jnp.maximum(q2 * inv_n - mu2 * mu2, 0.0)
            sc2 = g2[...] * jax.lax.rsqrt(var2 + EPS)
            sh2 = b2[...] - mu2 * sc2
            midb = jnp.maximum(mid * sc2 + sh2, 0.0).astype(jnp.bfloat16)

            # ---- 3x3 conv, padding=1, no bias: kn2row ----
            # One lane-dense matmul over all 9 taps (output width 9*G) ...
            z = jnp.dot(midb, w2r[...], preferred_element_type=jnp.float32)
            z4 = z.reshape(N, H, W, 9 * G)
            # ... then shift-add the 9 tap planes into an f32 accumulator using
            # static shifted slices (no padded buffer, no im2col, no masks).
            acc_ref[...] = z4[:, :, :, 4 * G:5 * G]           # centre tap (1,1)
            for dy in range(3):
                for dx in range(3):
                    if dy == 1 and dx == 1:
                        continue
                    tap = dy * 3 + dx
                    oy, ox = dy - 1, dx - 1
                    ys_o = slice(max(0, -oy), H - max(0, oy))
                    xs_o = slice(max(0, -ox), W - max(0, ox))
                    ys_s = slice(max(0, oy), H - max(0, -oy))
                    xs_s = slice(max(0, ox), W - max(0, -ox))
                    acc_ref[:, ys_o, xs_o, :] += (
                        z4[:, ys_s, xs_s, tap * G:(tap + 1) * G])

            # torch.cat([out, x], dim=1): new features go just below the suffix.
            o_ref[:, :, :, start - G:start] = acc_ref[...]

    return kernel


def dense_block_nhwc(x, params_list):
    """Fused DenseBlock forward, NHWC in / NHWC out (no edge transposes)."""
    N, H, W, Cin = x.shape
    L = len(params_list)
    G = params_list[0][5].shape[3]

    flat_params = []
    for (g1, b1, w1, g2, b2, w2) in params_list:
        cmid = w1.shape[1]
        # (dy, dx, cin, g) -> (cin, dy, dx, g) -> (cin, 9*G): kn2row weight layout.
        w2r = jnp.transpose(w2, (2, 0, 1, 3)).reshape(cmid, 9 * G)
        flat_params += [g1, b1, w1.astype(jnp.bfloat16),
                        g2, b2, w2r.astype(jnp.bfloat16)]

    kernel = _make_dense_block_kernel(L, G)
    vspec = pl.BlockSpec(memory_space=pltpu.MemorySpace.VMEM)
    return pl.pallas_call(
        kernel,
        out_shape=jax.ShapeDtypeStruct((N, H, W, Cin + L * G), x.dtype),
        in_specs=[vspec] * (1 + 6 * L),
        out_specs=vspec,
        scratch_shapes=[pltpu.VMEM((N, H, W, G), jnp.float32)],
        compiler_params=pltpu.CompilerParams(
            vmem_limit_bytes=_vmem_limit_bytes()),
    )(x, *flat_params)


def dense_block(x_nchw, params_list):
    """NCHW wrapper matching the torch module layout.

    NOTE: the two edge transposes are full HBM read+writes done by XLA; in an
    NHWC pipeline call dense_block_nhwc directly and skip them.
    """
    x = jnp.transpose(x_nchw, (0, 2, 3, 1))           # NCHW -> NHWC
    out = dense_block_nhwc(x, params_list)
    return jnp.transpose(out, (0, 3, 1, 2))           # NHWC -> NCHW


# ---------------- parameter init (deterministic, synthetic) ----------------
def init_dense_block_params(key, c_in, num_layers, bn_size, growth_rate):
    params_list = []
    for i in range(num_layers):
        cin = c_in + i * growth_rate
        cmid = bn_size * growth_rate
        key, k1, k2 = jax.random.split(key, 3)
        g1 = jnp.ones((1, cin), jnp.float32)      # BN weight default init
        b1 = jnp.zeros((1, cin), jnp.float32)     # BN bias default init
        w1 = 0.1 * jax.random.normal(k1, (cin, cmid), jnp.float32)
        g2 = jnp.ones((1, cmid), jnp.float32)
        b2 = jnp.zeros((1, cmid), jnp.float32)
        w2 = 0.1 * jax.random.normal(k2, (3, 3, cmid, growth_rate), jnp.float32)
        params_list.append((g1, b1, w1, g2, b2, w2))
    return params_list


# -------- plain-JAX reference (independent formulation, same bf16 points) ---
def dense_layer_ref(x, params):
    g1, b1, w1, g2, b2, w2 = params
    N, H, W, C = x.shape
    Cmid = w1.shape[1]

    mu1 = jnp.mean(x, axis=(0, 1, 2))
    var1 = jnp.var(x, axis=(0, 1, 2))                  # biased, like torch BN (train)
    h = jnp.maximum((x - mu1) * jax.lax.rsqrt(var1 + EPS) * g1[0] + b1[0], 0.0)

    mid = jnp.dot(h.reshape(-1, C).astype(jnp.bfloat16), w1.astype(jnp.bfloat16),
                  preferred_element_type=jnp.float32).reshape(N, H, W, Cmid)

    mu2 = jnp.mean(mid, axis=(0, 1, 2))
    var2 = jnp.var(mid, axis=(0, 1, 2))
    m = jnp.maximum((mid - mu2) * jax.lax.rsqrt(var2 + EPS) * g2[0] + b2[0], 0.0)

    new = jax.lax.conv_general_dilated(
        m.astype(jnp.bfloat16), w2.astype(jnp.bfloat16),
        window_strides=(1, 1), padding=((1, 1), (1, 1)),
        dimension_numbers=("NHWC", "HWIO", "NHWC"),
        preferred_element_type=jnp.float32)
    return jnp.concatenate([new, x], axis=-1)


def dense_block_ref(x_nchw, params_list):
    x = jnp.transpose(x_nchw, (0, 2, 3, 1))
    for p in params_list:
        x = dense_layer_ref(x, p)
    return jnp.transpose(x, (0, 3, 1, 2))


if __name__ == "__main__":
    # Small config: c_in=4, num_layers=2, bn_size=2, growth_rate=4, act=ReLU
    N, C_IN, H, W = 2, 4, 16, 16
    NUM_LAYERS, BN_SIZE, GROWTH = 2, 2, 4

    key = jax.random.PRNGKey(0)
    kx, kp = jax.random.split(key)
    x = jax.random.normal(kx, (N, C_IN, H, W), jnp.float32)
    params_list = init_dense_block_params(kp, C_IN, NUM_LAYERS, BN_SIZE, GROWTH)

    out = jax.block_until_ready(dense_block(x, params_list))
    ref = jax.block_until_ready(dense_block_ref(x, params_list))

    assert out.shape == (N, C_IN + NUM_LAYERS * GROWTH, H, W), out.shape
    max_err = float(jnp.max(jnp.abs(out - ref)))
    # Tolerance covers bf16-operand rounding that may differ at rounding
    # boundaries between the fused kernel and the independent XLA reference;
    # structural bugs produce errors orders of magnitude larger.
    assert jnp.allclose(out, ref, atol=1e-2, rtol=1e-2), max_err
    print("KERNEL_OK")
</pallas_src>

<mosaic_0001>
module attributes {stable_mosaic.version = 11 : i64} {
  func.func @kernel(%arg0: memref<2x16x16x4xf32, #tpu.memory_space<vmem>>, %arg1: memref<1x4xf32, #tpu.memory_space<vmem>>, %arg2: memref<1x4xf32, #tpu.memory_space<vmem>>, %arg3: memref<4x8xbf16, #tpu.memory_space<vmem>>, %arg4: memref<1x8xf32, #tpu.memory_space<vmem>>, %arg5: memref<1x8xf32, #tpu.memory_space<vmem>>, %arg6: memref<8x36xbf16, #tpu.memory_space<vmem>>, %arg7: memref<1x8xf32, #tpu.memory_space<vmem>>, %arg8: memref<1x8xf32, #tpu.memory_space<vmem>>, %arg9: memref<8x8xbf16, #tpu.memory_space<vmem>>, %arg10: memref<1x8xf32, #tpu.memory_space<vmem>>, %arg11: memref<1x8xf32, #tpu.memory_space<vmem>>, %arg12: memref<8x36xbf16, #tpu.memory_space<vmem>>, %arg13: memref<2x16x16x12xf32, #tpu.memory_space<vmem>>, %arg14: memref<2x16x16x4xf32, #tpu.memory_space<vmem>>) attributes {dimension_semantics = [], scalar_prefetch = 0 : i64, scratch_operands = 1 : i64, tpu.core_type = #tpu.core_type<tc>} {
    %c0 = arith.constant 0 : index
    %c0_0 = arith.constant 0 : index
    %c0_1 = arith.constant 0 : index
    %c0_2 = arith.constant 0 : index
    %0 = vector.load %arg0[%c0, %c0_0, %c0_1, %c0_2] : memref<2x16x16x4xf32, #tpu.memory_space<vmem>>, vector<2x16x16x4xf32>
    %c0_3 = arith.constant 0 : index
    %c0_4 = arith.constant 0 : index
    %c0_5 = arith.constant 0 : index
    %c8 = arith.constant 8 : index
    %1 = vector.load %arg13[%c0_3, %c0_4, %c0_5, %c8] : memref<2x16x16x12xf32, #tpu.memory_space<vmem>>, vector<2x16x16x4xf32>
    tpu.vector_store %arg13[%c0_3, %c0_4, %c0_5, %c8], %0 {strides = array<i32>} : memref<2x16x16x12xf32, #tpu.memory_space<vmem>>, vector<2x16x16x4xf32>,
    %cst = arith.constant 1.000000e+00 : f32
    %2 = vector.broadcast %cst : f32 to vector<1x512xf32>
    %c0_6 = arith.constant 0 : index
    %c0_7 = arith.constant 0 : index
    %c0_8 = arith.constant 0 : index
    %c8_9 = arith.constant 8 : index
    %3 = vector.load %arg13[%c0_6, %c0_7, %c0_8, %c8_9] : memref<2x16x16x12xf32, #tpu.memory_space<vmem>>, vector<2x16x16x4xf32>
    %4 = vector.shape_cast %3 : vector<2x16x16x4xf32> to vector<512x4xf32>
    %cst_10 = arith.constant dense<0.000000e+00> : vector<1x4xf32>
    %5 = tpu.matmul %2, %4, %cst_10 {dimension_numbers = #tpu.dot_dimension_numbers<[1], [0], [0], [1], [0, 0, 1, 1], [], []>} : vector<1x512xf32>, vector<512x4xf32>, vector<1x4xf32> -> vector<1x4xf32>
    %6 = arith.mulf %4, %4 : vector<512x4xf32>
    %cst_11 = arith.constant dense<0.000000e+00> : vector<1x4xf32>
    %7 = tpu.matmul %2, %6, %cst_11 {dimension_numbers = #tpu.dot_dimension_numbers<[1], [0], [0], [1], [0, 0, 1, 1], [], []>} : vector<1x512xf32>, vector<512x4xf32>, vector<1x4xf32> -> vector<1x4xf32>
    %cst_12 = arith.constant 0.001953125 : f32
    %8 = vector.broadcast %cst_12 : f32 to vector<1x4xf32>
    %9 = arith.mulf %5, %8 : vector<1x4xf32>
    %cst_13 = arith.constant 0.001953125 : f32
    %10 = vector.broadcast %cst_13 : f32 to vector<1x4xf32>
    %11 = arith.mulf %7, %10 : vector<1x4xf32>
    %12 = arith.mulf %9, %9 : vector<1x4xf32>
    %13 = arith.subf %11, %12 : vector<1x4xf32>
    %cst_14 = arith.constant 0.000000e+00 : f32
    %14 = vector.broadcast %cst_14 : f32 to vector<1x4xf32>
    %15 = arith.maximumf %13, %14 : vector<1x4xf32>
    %c0_15 = arith.constant 0 : index
    %c0_16 = arith.constant 0 : index
    %16 = vector.load %arg1[%c0_15, %c0_16] : memref<1x4xf32, #tpu.memory_space<vmem>>, vector<1x4xf32>
    %cst_17 = arith.constant 9.99999974E-6 : f32
    %17 = vector.broadcast %cst_17 : f32 to vector<1x4xf32>
    %18 = arith.addf %15, %17 : vector<1x4xf32>
    %19 = math.rsqrt %18 : vector<1x4xf32>
    %20 = arith.mulf %16, %19 : vector<1x4xf32>
    %c0_18 = arith.constant 0 : index
    %c0_19 = arith.constant 0 : index
    %21 = vector.load %arg2[%c0_18, %c0_19] : memref<1x4xf32, #tpu.memory_space<vmem>>, vector<1x4xf32>
    %22 = arith.mulf %9, %20 : vector<1x4xf32>
    %23 = arith.subf %21, %22 : vector<1x4xf32>
    %24 = vector.broadcast %20 : vector<1x4xf32> to vector<512x4xf32>
    %25 = arith.mulf %4, %24 : vector<512x4xf32>
    %26 = vector.broadcast %23 : vector<1x4xf32> to vector<512x4xf32>
    %27 = arith.addf %25, %26 : vector<512x4xf32>
    %cst_20 = arith.constant 0.000000e+00 : f32
    %28 = vector.broadcast %cst_20 : f32 to vector<512x4xf32>
    %29 = arith.maximumf %27, %28 : vector<512x4xf32>
    %30 = arith.truncf %29 : vector<512x4xf32> to vector<512x4xbf16>
    %c0_21 = arith.constant 0 : index
    %c0_22 = arith.constant 0 : index
    %31 = vector.load %arg3[%c0_21, %c0_22] : memref<4x8xbf16, #tpu.memory_space<vmem>>, vector<4x8xbf16>
    %cst_23 = arith.constant dense<0.000000e+00> : vector<512x8xf32>
    %32 = tpu.matmul %30, %31, %cst_23 {dimension_numbers = #tpu.dot_dimension_numbers<[1], [0], [0], [1], [0, 0, 1, 1], [], []>} : vector<512x4xbf16>, vector<4x8xbf16>, vector<512x8xf32> -> vector<512x8xf32>
    %cst_24 = arith.constant dense<0.000000e+00> : vector<1x8xf32>
    %33 = tpu.matmul %2, %32, %cst_24 {dimension_numbers = #tpu.dot_dimension_numbers<[1], [0], [0], [1], [0, 0, 1, 1], [], []>} : vector<1x512xf32>, vector<512x8xf32>, vector<1x8xf32> -> vector<1x8xf32>
    %34 = arith.mulf %32, %32 : vector<512x8xf32>
    %cst_25 = arith.constant dense<0.000000e+00> : vector<1x8xf32>
    %35 = tpu.matmul %2, %34, %cst_25 {dimension_numbers = #tpu.dot_dimension_numbers<[1], [0], [0], [1], [0, 0, 1, 1], [], []>} : vector<1x512xf32>, vector<512x8xf32>, vector<1x8xf32> -> vector<1x8xf32>
    %cst_26 = arith.constant 0.001953125 : f32
    %36 = vector.broadcast %cst_26 : f32 to vector<1x8xf32>
    %37 = arith.mulf %33, %36 : vector<1x8xf32>
    %cst_27 = arith.constant 0.001953125 : f32
    %38 = vector.broadcast %cst_27 : f32 to vector<1x8xf32>
    %39 = arith.mulf %35, %38 : vector<1x8xf32>
    %40 = arith.mulf %37, %37 : vector<1x8xf32>
    %41 = arith.subf %39, %40 : vector<1x8xf32>
    %cst_28 = arith.constant 0.000000e+00 : f32
    %42 = vector.broadcast %cst_28 : f32 to vector<1x8xf32>
    %43 = arith.maximumf %41, %42 : vector<1x8xf32>
    %c0_29 = arith.constant 0 : index
    %c0_30 = arith.constant 0 : index
    %44 = vector.load %arg4[%c0_29, %c0_30] : memref<1x8xf32, #tpu.memory_space<vmem>>, vector<1x8xf32>
    %cst_31 = arith.constant 9.99999974E-6 : f32
    %45 = vector.broadcast %cst_31 : f32 to vector<1x8xf32>
    %46 = arith.addf %43, %45 : vector<1x8xf32>
    %47 = math.rsqrt %46 : vector<1x8xf32>
    %48 = arith.mulf %44, %47 : vector<1x8xf32>
    %c0_32 = arith.constant 0 : index
    %c0_33 = arith.constant 0 : index
    %49 = vector.load %arg5[%c0_32, %c0_33] : memref<1x8xf32, #tpu.memory_space<vmem>>, vector<1x8xf32>
    %50 = arith.mulf %37, %48 : vector<1x8xf32>
    %51 = arith.subf %49, %50 : vector<1x8xf32>
    %52 = vector.broadcast %48 : vector<1x8xf32> to vector<512x8xf32>
    %53 = arith.mulf %32, %52 : vector<512x8xf32>
    %54 = vector.broadcast %51 : vector<1x8xf32> to vector<512x8xf32>
    %55 = arith.addf %53, %54 : vector<512x8xf32>
    %cst_34 = arith.constant 0.000000e+00 : f32
    %56 = vector.broadcast %cst_34 : f32 to vector<512x8xf32>
    %57 = arith.maximumf %55, %56 : vector<512x8xf32>
    %58 = arith.truncf %57 : vector<512x8xf32> to vector<512x8xbf16>
    %c0_35 = arith.constant 0 : index
    %c0_36 = arith.constant 0 : index
    %59 = vector.load %arg6[%c0_35, %c0_36] : memref<8x36xbf16, #tpu.memory_space<vmem>>, vector<8x36xbf16>
    %cst_37 = arith.constant dense<0.000000e+00> : vector<512x36xf32>
    %60 = tpu.matmul %58, %59, %cst_37 {dimension_numbers = #tpu.dot_dimension_numbers<[1], [0], [0], [1], [0, 0, 1, 1], [], []>} : vector<512x8xbf16>, vector<8x36xbf16>, vector<512x36xf32> -> vector<512x36xf32>
    %61 = vector.shape_cast %60 : vector<512x36xf32> to vector<2x16x16x36xf32>
    %62 = vector.extract_strided_slice %61 {offsets = [0, 0, 0, 16], sizes = [2, 16, 16, 4], strides = [1, 1, 1, 1]} : vector<2x16x16x36xf32> to vector<2x16x16x4xf32>
    %c0_38 = arith.constant 0 : index
    %c0_39 = arith.constant 0 : index
    %c0_40 = arith.constant 0 : index
    %c0_41 = arith.constant 0 : index
    %63 = vector.load %arg14[%c0_38, %c0_39, %c0_40, %c0_41] : memref<2x16x16x4xf32, #tpu.memory_space<vmem>>, vector<2x16x16x4xf32>
    tpu.vector_store %arg14[%c0_38, %c0_39, %c0_40, %c0_41], %62 {strides = array<i32>} : memref<2x16x16x4xf32, #tpu.memory_space<vmem>>, vector<2x16x16x4xf32>,
    %c0_42 = arith.constant 0 : index
    %c1 = arith.constant 1 : index
    %c1_43 = arith.constant 1 : index
    %c0_44 = arith.constant 0 : index
    %64 = vector.load %arg14[%c0_42, %c1, %c1_43, %c0_44] : memref<2x16x16x4xf32, #tpu.memory_space<vmem>>, vector<2x15x15x4xf32>
    %65 = vector.extract_strided_slice %61 {offsets = [0, 0, 0, 0], sizes = [2, 15, 15, 4], strides = [1, 1, 1, 1]} : vector<2x16x16x36xf32> to vector<2x15x15x4xf32>
    %66 = arith.addf %64, %65 : vector<2x15x15x4xf32>
    %c0_45 = arith.constant 0 : index
    %c1_46 = arith.constant 1 : index
    %c1_47 = arith.constant 1 : index
    %c0_48 = arith.constant 0 : index
    %67 = vector.load %arg14[%c0_45, %c1_46, %c1_47, %c0_48] : memref<2x16x16x4xf32, #tpu.memory_space<vmem>>, vector<2x15x15x4xf32>
    tpu.vector_store %arg14[%c0_45, %c1_46, %c1_47, %c0_48], %66 {strides = array<i32>} : memref<2x16x16x4xf32, #tpu.memory_space<vmem>>, vector<2x15x15x4xf32>,
    %c0_49 = arith.constant 0 : index
    %c1_50 = arith.constant 1 : index
    %c0_51 = arith.constant 0 : index
    %c0_52 = arith.constant 0 : index
    %68 = vector.load %arg14[%c0_49, %c1_50, %c0_51, %c0_52] : memref<2x16x16x4xf32, #tpu.memory_space<vmem>>, vector<2x15x16x4xf32>
    %69 = vector.extract_strided_slice %61 {offsets = [0, 0, 0, 4], sizes = [2, 15, 16, 4], strides = [1, 1, 1, 1]} : vector<2x16x16x36xf32> to vector<2x15x16x4xf32>
    %70 = arith.addf %68, %69 : vector<2x15x16x4xf32>
    %c0_53 = arith.constant 0 : index
    %c1_54 = arith.constant 1 : index
    %c0_55 = arith.constant 0 : index
    %c0_56 = arith.constant 0 : index
    %71 = vector.load %arg14[%c0_53, %c1_54, %c0_55, %c0_56] : memref<2x16x16x4xf32, #tpu.memory_space<vmem>>, vector<2x15x16x4xf32>
    tpu.vector_store %arg14[%c0_53, %c1_54, %c0_55, %c0_56], %70 {strides = array<i32>} : memref<2x16x16x4xf32, #tpu.memory_space<vmem>>, vector<2x15x16x4xf32>,
    %c0_57 = arith.constant 0 : index
    %c1_58 = arith.constant 1 : index
    %c0_59 = arith.constant 0 : index
    %c0_60 = arith.constant 0 : index
    %72 = vector.load %arg14[%c0_57, %c1_58, %c0_59, %c0_60] : memref<2x16x16x4xf32, #tpu.memory_space<vmem>>, vector<2x15x15x4xf32>
    %73 = vector.extract_strided_slice %61 {offsets = [0, 0, 1, 8], sizes = [2, 15, 15, 4], strides = [1, 1, 1, 1]} : vector<2x16x16x36xf32> to vector<2x15x15x4xf32>
    %74 = arith.addf %72, %73 : vector<2x15x15x4xf32>
    %c0_61 = arith.constant 0 : index
    %c1_62 = arith.constant 1 : index
    %c0_63 = arith.constant 0 : index
    %c0_64 = arith.constant 0 : index
    %75 = vector.load %arg14[%c0_61, %c1_62, %c0_63, %c0_64] : memref<2x16x16x4xf32, #tpu.memory_space<vmem>>, vector<2x15x15x4xf32>
    tpu.vector_store %arg14[%c0_61, %c1_62, %c0_63, %c0_64], %74 {strides = array<i32>} : memref<2x16x16x4xf32, #tpu.memory_space<vmem>>, vector<2x15x15x4xf32>,
    %c0_65 = arith.constant 0 : index
    %c0_66 = arith.constant 0 : index
    %c1_67 = arith.constant 1 : index
    %c0_68 = arith.constant 0 : index
    %76 = vector.load %arg14[%c0_65, %c0_66, %c1_67, %c0_68] : memref<2x16x16x4xf32, #tpu.memory_space<vmem>>, vector<2x16x15x4xf32>
    %77 = vector.extract_strided_slice %61 {offsets = [0, 0, 0, 12], sizes = [2, 16, 15, 4], strides = [1, 1, 1, 1]} : vector<2x16x16x36xf32> to vector<2x16x15x4xf32>
    %78 = arith.addf %76, %77 : vector<2x16x15x4xf32>
    %c0_69 = arith.constant 0 : index
    %c0_70 = arith.constant 0 : index
    %c1_71 = arith.constant 1 : index
    %c0_72 = arith.constant 0 : index
    %79 = vector.load %arg14[%c0_69, %c0_70, %c1_71, %c0_72] : memref<2x16x16x4xf32, #tpu.memory_space<vmem>>, vector<2x16x15x4xf32>
    tpu.vector_store %arg14[%c0_69, %c0_70, %c1_71, %c0_72], %78 {strides = array<i32>} : memref<2x16x16x4xf32, #tpu.memory_space<vmem>>, vector<2x16x15x4xf32>,
    %c0_73 = arith.constant 0 : index
    %c0_74 = arith.constant 0 : index
    %c0_75 = arith.constant 0 : index
    %c0_76 = arith.constant 0 : index
    %80 = vector.load %arg14[%c0_73, %c0_74, %c0_75, %c0_76] : memref<2x16x16x4xf32, #tpu.memory_space<vmem>>, vector<2x16x15x4xf32>
    %81 = vector.extract_strided_slice %61 {offsets = [0, 0, 1, 20], sizes = [2, 16, 15, 4], strides = [1, 1, 1, 1]} : vector<2x16x16x36xf32> to vector<2x16x15x4xf32>
    %82 = arith.addf %80, %81 : vector<2x16x15x4xf32>
    %c0_77 = arith.constant 0 : index
    %c0_78 = arith.constant 0 : index
    %c0_79 = arith.constant 0 : index
    %c0_80 = arith.constant 0 : index
    %83 = vector.load %arg14[%c0_77, %c0_78, %c0_79, %c0_80] : memref<2x16x16x4xf32, #tpu.memory_space<vmem>>, vector<2x16x15x4xf32>
    tpu.vector_store %arg14[%c0_77, %c0_78, %c0_79, %c0_80], %82 {strides = array<i32>} : memref<2x16x16x4xf32, #tpu.memory_space<vmem>>, vector<2x16x15x4xf32>,
    %c0_81 = arith.constant 0 : index
    %c0_82 = arith.constant 0 : index
    %c1_83 = arith.constant 1 : index
    %c0_84 = arith.constant 0 : index
    %84 = vector.load %arg14[%c0_81, %c0_82, %c1_83, %c0_84] : memref<2x16x16x4xf32, #tpu.memory_space<vmem>>, vector<2x15x15x4xf32>
    %85 = vector.extract_strided_slice %61 {offsets = [0, 1, 0, 24], sizes = [2, 15, 15, 4], strides = [1, 1, 1, 1]} : vector<2x16x16x36xf32> to vector<2x15x15x4xf32>
    %86 = arith.addf %84, %85 : vector<2x15x15x4xf32>
    %c0_85 = arith.constant 0 : index
    %c0_86 = arith.constant 0 : index
    %c1_87 = arith.constant 1 : index
    %c0_88 = arith.constant 0 : index
    %87 = vector.load %arg14[%c0_85, %c0_86, %c1_87, %c0_88] : memref<2x16x16x4xf32, #tpu.memory_space<vmem>>, vector<2x15x15x4xf32>
    tpu.vector_store %arg14[%c0_85, %c0_86, %c1_87, %c0_88], %86 {strides = array<i32>} : memref<2x16x16x4xf32, #tpu.memory_space<vmem>>, vector<2x15x15x4xf32>,
    %c0_89 = arith.constant 0 : index
    %c0_90 = arith.constant 0 : index
    %c0_91 = arith.constant 0 : index
    %c0_92 = arith.constant 0 : index
    %88 = vector.load %arg14[%c0_89, %c0_90, %c0_91, %c0_92] : memref<2x16x16x4xf32, #tpu.memory_space<vmem>>, vector<2x15x16x4xf32>
    %89 = vector.extract_strided_slice %61 {offsets = [0, 1, 0, 28], sizes = [2, 15, 16, 4], strides = [1, 1, 1, 1]} : vector<2x16x16x36xf32> to vector<2x15x16x4xf32>
    %90 = arith.addf %88, %89 : vector<2x15x16x4xf32>
    %c0_93 = arith.constant 0 : index
    %c0_94 = arith.constant 0 : index
    %c0_95 = arith.constant 0 : index
    %c0_96 = arith.constant 0 : index
    %91 = vector.load %arg14[%c0_93, %c0_94, %c0_95, %c0_96] : memref<2x16x16x4xf32, #tpu.memory_space<vmem>>, vector<2x15x16x4xf32>
    tpu.vector_store %arg14[%c0_93, %c0_94, %c0_95, %c0_96], %90 {strides = array<i32>} : memref<2x16x16x4xf32, #tpu.memory_space<vmem>>, vector<2x15x16x4xf32>,
    %c0_97 = arith.constant 0 : index
    %c0_98 = arith.constant 0 : index
    %c0_99 = arith.constant 0 : index
    %c0_100 = arith.constant 0 : index
    %92 = vector.load %arg14[%c0_97, %c0_98, %c0_99, %c0_100] : memref<2x16x16x4xf32, #tpu.memory_space<vmem>>, vector<2x15x15x4xf32>
    %93 = vector.extract_strided_slice %61 {offsets = [0, 1, 1, 32], sizes = [2, 15, 15, 4], strides = [1, 1, 1, 1]} : vector<2x16x16x36xf32> to vector<2x15x15x4xf32>
    %94 = arith.addf %92, %93 : vector<2x15x15x4xf32>
    %c0_101 = arith.constant 0 : index
    %c0_102 = arith.constant 0 : index
    %c0_103 = arith.constant 0 : index
    %c0_104 = arith.constant 0 : index
    %95 = vector.load %arg14[%c0_101, %c0_102, %c0_103, %c0_104] : memref<2x16x16x4xf32, #tpu.memory_space<vmem>>, vector<2x15x15x4xf32>
    tpu.vector_store %arg14[%c0_101, %c0_102, %c0_103, %c0_104], %94 {strides = array<i32>} : memref<2x16x16x4xf32, #tpu.memory_space<vmem>>, vector<2x15x15x4xf32>,
    %c0_105 = arith.constant 0 : index
    %c0_106 = arith.constant 0 : index
    %c0_107 = arith.constant 0 : index
    %c0_108 = arith.constant 0 : index
    %96 = vector.load %arg14[%c0_105, %c0_106, %c0_107, %c0_108] : memref<2x16x16x4xf32, #tpu.memory_space<vmem>>, vector<2x16x16x4xf32>
    %c0_109 = arith.constant 0 : index
    %c0_110 = arith.constant 0 : index
    %c0_111 = arith.constant 0 : index
    %c4 = arith.constant 4 : index
    %97 = vector.load %arg13[%c0_109, %c0_110, %c0_111, %c4] : memref<2x16x16x12xf32, #tpu.memory_space<vmem>>, vector<2x16x16x4xf32>
    tpu.vector_store %arg13[%c0_109, %c0_110, %c0_111, %c4], %96 {strides = array<i32>} : memref<2x16x16x12xf32, #tpu.memory_space<vmem>>, vector<2x16x16x4xf32>,
    %c0_112 = arith.constant 0 : index
    %c0_113 = arith.constant 0 : index
    %c0_114 = arith.constant 0 : index
    %c4_115 = arith.constant 4 : index
    %98 = vector.load %arg13[%c0_112, %c0_113, %c0_114, %c4_115] : memref<2x16x16x12xf32, #tpu.memory_space<vmem>>, vector<2x16x16x8xf32>
    %99 = vector.shape_cast %98 : vector<2x16x16x8xf32> to vector<512x8xf32>
    %cst_116 = arith.constant dense<0.000000e+00> : vector<1x8xf32>
    %100 = tpu.matmul %2, %99, %cst_116 {dimension_numbers = #tpu.dot_dimension_numbers<[1], [0], [0], [1], [0, 0, 1, 1], [], []>} : vector<1x512xf32>, vector<512x8xf32>, vector<1x8xf32> -> vector<1x8xf32>
    %101 = arith.mulf %99, %99 : vector<512x8xf32>
    %cst_117 = arith.constant dense<0.000000e+00> : vector<1x8xf32>
    %102 = tpu.matmul %2, %101, %cst_117 {dimension_numbers = #tpu.dot_dimension_numbers<[1], [0], [0], [1], [0, 0, 1, 1], [], []>} : vector<1x512xf32>, vector<512x8xf32>, vector<1x8xf32> -> vector<1x8xf32>
    %cst_118 = arith.constant 0.001953125 : f32
    %103 = vector.broadcast %cst_118 : f32 to vector<1x8xf32>
    %104 = arith.mulf %100, %103 : vector<1x8xf32>
    %cst_119 = arith.constant 0.001953125 : f32
    %105 = vector.broadcast %cst_119 : f32 to vector<1x8xf32>
    %106 = arith.mulf %102, %105 : vector<1x8xf32>
    %107 = arith.mulf %104, %104 : vector<1x8xf32>
    %108 = arith.subf %106, %107 : vector<1x8xf32>
    %cst_120 = arith.constant 0.000000e+00 : f32
    %109 = vector.broadcast %cst_120 : f32 to vector<1x8xf32>
    %110 = arith.maximumf %108, %109 : vector<1x8xf32>
    %c0_121 = arith.constant 0 : index
    %c0_122 = arith.constant 0 : index
    %111 = vector.load %arg7[%c0_121, %c0_122] : memref<1x8xf32, #tpu.memory_space<vmem>>, vector<1x8xf32>
    %cst_123 = arith.constant 9.99999974E-6 : f32
    %112 = vector.broadcast %cst_123 : f32 to vector<1x8xf32>
    %113 = arith.addf %110, %112 : vector<1x8xf32>
    %114 = math.rsqrt %113 : vector<1x8xf32>
    %115 = arith.mulf %111, %114 : vector<1x8xf32>
    %c0_124 = arith.constant 0 : index
    %c0_125 = arith.constant 0 : index
    %116 = vector.load %arg8[%c0_124, %c0_125] : memref<1x8xf32, #tpu.memory_space<vmem>>, vector<1x8xf32>
    %117 = arith.mulf %104, %115 : vector<1x8xf32>
    %118 = arith.subf %116, %117 : vector<1x8xf32>
    %119 = vector.broadcast %115 : vector<1x8xf32> to vector<512x8xf32>
    %120 = arith.mulf %99, %119 : vector<512x8xf32>
    %121 = vector.broadcast %118 : vector<1x8xf32> to vector<512x8xf32>
    %122 = arith.addf %120, %121 : vector<512x8xf32>
    %cst_126 = arith.constant 0.000000e+00 : f32
    %123 = vector.broadcast %cst_126 : f32 to vector<512x8xf32>
    %124 = arith.maximumf %122, %123 : vector<512x8xf32>
    %125 = arith.truncf %124 : vector<512x8xf32> to vector<512x8xbf16>
    %c0_127 = arith.constant 0 : index
    %c0_128 = arith.constant 0 : index
    %126 = vector.load %arg9[%c0_127, %c0_128] : memref<8x8xbf16, #tpu.memory_space<vmem>>, vector<8x8xbf16>
    %cst_129 = arith.constant dense<0.000000e+00> : vector<512x8xf32>
    %127 = tpu.matmul %125, %126, %cst_129 {dimension_numbers = #tpu.dot_dimension_numbers<[1], [0], [0], [1], [0, 0, 1, 1], [], []>} : vector<512x8xbf16>, vector<8x8xbf16>, vector<512x8xf32> -> vector<512x8xf32>
    %cst_130 = arith.constant dense<0.000000e+00> : vector<1x8xf32>
    %128 = tpu.matmul %2, %127, %cst_130 {dimension_numbers = #tpu.dot_dimension_numbers<[1], [0], [0], [1], [0, 0, 1, 1], [], []>} : vector<1x512xf32>, vector<512x8xf32>, vector<1x8xf32> -> vector<1x8xf32>
    %129 = arith.mulf %127, %127 : vector<512x8xf32>
    %cst_131 = arith.constant dense<0.000000e+00> : vector<1x8xf32>
    %130 = tpu.matmul %2, %129, %cst_131 {dimension_numbers = #tpu.dot_dimension_numbers<[1], [0], [0], [1], [0, 0, 1, 1], [], []>} : vector<1x512xf32>, vector<512x8xf32>, vector<1x8xf32> -> vector<1x8xf32>
    %cst_132 = arith.constant 0.001953125 : f32
    %131 = vector.broadcast %cst_132 : f32 to vector<1x8xf32>
    %132 = arith.mulf %128, %131 : vector<1x8xf32>
    %cst_133 = arith.constant 0.001953125 : f32
    %133 = vector.broadcast %cst_133 : f32 to vector<1x8xf32>
    %134 = arith.mulf %130, %133 : vector<1x8xf32>
    %135 = arith.mulf %132, %132 : vector<1x8xf32>
    %136 = arith.subf %134, %135 : vector<1x8xf32>
    %cst_134 = arith.constant 0.000000e+00 : f32
    %137 = vector.broadcast %cst_134 : f32 to vector<1x8xf32>
    %138 = arith.maximumf %136, %137 : vector<1x8xf32>
    %c0_135 = arith.constant 0 : index
    %c0_136 = arith.constant 0 : index
    %139 = vector.load %arg10[%c0_135, %c0_136] : memref<1x8xf32, #tpu.memory_space<vmem>>, vector<1x8xf32>
    %cst_137 = arith.constant 9.99999974E-6 : f32
    %140 = vector.broadcast %cst_137 : f32 to vector<1x8xf32>
    %141 = arith.addf %138, %140 : vector<1x8xf32>
    %142 = math.rsqrt %141 : vector<1x8xf32>
    %143 = arith.mulf %139, %142 : vector<1x8xf32>
    %c0_138 = arith.constant 0 : index
    %c0_139 = arith.constant 0 : index
    %144 = vector.load %arg11[%c0_138, %c0_139] : memref<1x8xf32, #tpu.memory_space<vmem>>, vector<1x8xf32>
    %145 = arith.mulf %132, %143 : vector<1x8xf32>
    %146 = arith.subf %144, %145 : vector<1x8xf32>
    %147 = vector.broadcast %143 : vector<1x8xf32> to vector<512x8xf32>
    %148 = arith.mulf %127, %147 : vector<512x8xf32>
    %149 = vector.broadcast %146 : vector<1x8xf32> to vector<512x8xf32>
    %150 = arith.addf %148, %149 : vector<512x8xf32>
    %cst_140 = arith.constant 0.000000e+00 : f32
    %151 = vector.broadcast %cst_140 : f32 to vector<512x8xf32>
    %152 = arith.maximumf %150, %151 : vector<512x8xf32>
    %153 = arith.truncf %152 : vector<512x8xf32> to vector<512x8xbf16>
    %c0_141 = arith.constant 0 : index
    %c0_142 = arith.constant 0 : index
    %154 = vector.load %arg12[%c0_141, %c0_142] : memref<8x36xbf16, #tpu.memory_space<vmem>>, vector<8x36xbf16>
    %cst_143 = arith.constant dense<0.000000e+00> : vector<512x36xf32>
    %155 = tpu.matmul %153, %154, %cst_143 {dimension_numbers = #tpu.dot_dimension_numbers<[1], [0], [0], [1], [0, 0, 1, 1], [], []>} : vector<512x8xbf16>, vector<8x36xbf16>, vector<512x36xf32> -> vector<512x36xf32>
    %156 = vector.shape_cast %155 : vector<512x36xf32> to vector<2x16x16x36xf32>
    %157 = vector.extract_strided_slice %156 {offsets = [0, 0, 0, 16], sizes = [2, 16, 16, 4], strides = [1, 1, 1, 1]} : vector<2x16x16x36xf32> to vector<2x16x16x4xf32>
    %c0_144 = arith.constant 0 : index
    %c0_145 = arith.constant 0 : index
    %c0_146 = arith.constant 0 : index
    %c0_147 = arith.constant 0 : index
    %158 = vector.load %arg14[%c0_144, %c0_145, %c0_146, %c0_147] : memref<2x16x16x4xf32, #tpu.memory_space<vmem>>, vector<2x16x16x4xf32>
    tpu.vector_store %arg14[%c0_144, %c0_145, %c0_146, %c0_147], %157 {strides = array<i32>} : memref<2x16x16x4xf32, #tpu.memory_space<vmem>>, vector<2x16x16x4xf32>,
    %c0_148 = arith.constant 0 : index
    %c1_149 = arith.constant 1 : index
    %c1_150 = arith.constant 1 : index
    %c0_151 = arith.constant 0 : index
    %159 = vector.load %arg14[%c0_148, %c1_149, %c1_150, %c0_151] : memref<2x16x16x4xf32, #tpu.memory_space<vmem>>, vector<2x15x15x4xf32>
    %160 = vector.extract_strided_slice %156 {offsets = [0, 0, 0, 0], sizes = [2, 15, 15, 4], strides = [1, 1, 1, 1]} : vector<2x16x16x36xf32> to vector<2x15x15x4xf32>
    %161 = arith.addf %159, %160 : vector<2x15x15x4xf32>
    %c0_152 = arith.constant 0 : index
    %c1_153 = arith.constant 1 : index
    %c1_154 = arith.constant 1 : index
    %c0_155 = arith.constant 0 : index
    %162 = vector.load %arg14[%c0_152, %c1_153, %c1_154, %c0_155] : memref<2x16x16x4xf32, #tpu.memory_space<vmem>>, vector<2x15x15x4xf32>
    tpu.vector_store %arg14[%c0_152, %c1_153, %c1_154, %c0_155], %161 {strides = array<i32>} : memref<2x16x16x4xf32, #tpu.memory_space<vmem>>, vector<2x15x15x4xf32>,
    %c0_156 = arith.constant 0 : index
    %c1_157 = arith.constant 1 : index
    %c0_158 = arith.constant 0 : index
    %c0_159 = arith.constant 0 : index
    %163 = vector.load %arg14[%c0_156, %c1_157, %c0_158, %c0_159] : memref<2x16x16x4xf32, #tpu.memory_space<vmem>>, vector<2x15x16x4xf32>
    %164 = vector.extract_strided_slice %156 {offsets = [0, 0, 0, 4], sizes = [2, 15, 16, 4], strides = [1, 1, 1, 1]} : vector<2x16x16x36xf32> to vector<2x15x16x4xf32>
    %165 = arith.addf %163, %164 : vector<2x15x16x4xf32>
    %c0_160 = arith.constant 0 : index
    %c1_161 = arith.constant 1 : index
    %c0_162 = arith.constant 0 : index
    %c0_163 = arith.constant 0 : index
    %166 = vector.load %arg14[%c0_160, %c1_161, %c0_162, %c0_163] : memref<2x16x16x4xf32, #tpu.memory_space<vmem>>, vector<2x15x16x4xf32>
    tpu.vector_store %arg14[%c0_160, %c1_161, %c0_162, %c0_163], %165 {strides = array<i32>} : memref<2x16x16x4xf32, #tpu.memory_space<vmem>>, vector<2x15x16x4xf32>,
    %c0_164 = arith.constant 0 : index
    %c1_165 = arith.constant 1 : index
    %c0_166 = arith.constant 0 : index
    %c0_167 = arith.constant 0 : index
    %167 = vector.load %arg14[%c0_164, %c1_165, %c0_166, %c0_167] : memref<2x16x16x4xf32, #tpu.memory_space<vmem>>, vector<2x15x15x4xf32>
    %168 = vector.extract_strided_slice %156 {offsets = [0, 0, 1, 8], sizes = [2, 15, 15, 4], strides = [1, 1, 1, 1]} : vector<2x16x16x36xf32> to vector<2x15x15x4xf32>
    %169 = arith.addf %167, %168 : vector<2x15x15x4xf32>
    %c0_168 = arith.constant 0 : index
    %c1_169 = arith.constant 1 : index
    %c0_170 = arith.constant 0 : index
    %c0_171 = arith.constant 0 : index
    %170 = vector.load %arg14[%c0_168, %c1_169, %c0_170, %c0_171] : memref<2x16x16x4xf32, #tpu.memory_space<vmem>>, vector<2x15x15x4xf32>
    tpu.vector_store %arg14[%c0_168, %c1_169, %c0_170, %c0_171], %169 {strides = array<i32>} : memref<2x16x16x4xf32, #tpu.memory_space<vmem>>, vector<2x15x15x4xf32>,
    %c0_172 = arith.constant 0 : index
    %c0_173 = arith.constant 0 : index
    %c1_174 = arith.constant 1 : index
    %c0_175 = arith.constant 0 : index
    %171 = vector.load %arg14[%c0_172, %c0_173, %c1_174, %c0_175] : memref<2x16x16x4xf32, #tpu.memory_space<vmem>>, vector<2x16x15x4xf32>
    %172 = vector.extract_strided_slice %156 {offsets = [0, 0, 0, 12], sizes = [2, 16, 15, 4], strides = [1, 1, 1, 1]} : vector<2x16x16x36xf32> to vector<2x16x15x4xf32>
    %173 = arith.addf %171, %172 : vector<2x16x15x4xf32>
    %c0_176 = arith.constant 0 : index
    %c0_177 = arith.constant 0 : index
    %c1_178 = arith.constant 1 : index
    %c0_179 = arith.constant 0 : index
    %174 = vector.load %arg14[%c0_176, %c0_177, %c1_178, %c0_179] : memref<2x16x16x4xf32, #tpu.memory_space<vmem>>, vector<2x16x15x4xf32>
    tpu.vector_store %arg14[%c0_176, %c0_177, %c1_178, %c0_179], %173 {strides = array<i32>} : memref<2x16x16x4xf32, #tpu.memory_space<vmem>>, vector<2x16x15x4xf32>,
    %c0_180 = arith.constant 0 : index
    %c0_181 = arith.constant 0 : index
    %c0_182 = arith.constant 0 : index
    %c0_183 = arith.constant 0 : index
    %175 = vector.load %arg14[%c0_180, %c0_181, %c0_182, %c0_183] : memref<2x16x16x4xf32, #tpu.memory_space<vmem>>, vector<2x16x15x4xf32>
    %176 = vector.extract_strided_slice %156 {offsets = [0, 0, 1, 20], sizes = [2, 16, 15, 4], strides = [1, 1, 1, 1]} : vector<2x16x16x36xf32> to vector<2x16x15x4xf32>
    %177 = arith.addf %175, %176 : vector<2x16x15x4xf32>
    %c0_184 = arith.constant 0 : index
    %c0_185 = arith.constant 0 : index
    %c0_186 = arith.constant 0 : index
    %c0_187 = arith.constant 0 : index
    %178 = vector.load %arg14[%c0_184, %c0_185, %c0_186, %c0_187] : memref<2x16x16x4xf32, #tpu.memory_space<vmem>>, vector<2x16x15x4xf32>
    tpu.vector_store %arg14[%c0_184, %c0_185, %c0_186, %c0_187], %177 {strides = array<i32>} : memref<2x16x16x4xf32, #tpu.memory_space<vmem>>, vector<2x16x15x4xf32>,
    %c0_188 = arith.constant 0 : index
    %c0_189 = arith.constant 0 : index
    %c1_190 = arith.constant 1 : index
    %c0_191 = arith.constant 0 : index
    %179 = vector.load %arg14[%c0_188, %c0_189, %c1_190, %c0_191] : memref<2x16x16x4xf32, #tpu.memory_space<vmem>>, vector<2x15x15x4xf32>
    %180 = vector.extract_strided_slice %156 {offsets = [0, 1, 0, 24], sizes = [2, 15, 15, 4], strides = [1, 1, 1, 1]} : vector<2x16x16x36xf32> to vector<2x15x15x4xf32>
    %181 = arith.addf %179, %180 : vector<2x15x15x4xf32>
    %c0_192 = arith.constant 0 : index
    %c0_193 = arith.constant 0 : index
    %c1_194 = arith.constant 1 : index
    %c0_195 = arith.constant 0 : index
    %182 = vector.load %arg14[%c0_192, %c0_193, %c1_194, %c0_195] : memref<2x16x16x4xf32, #tpu.memory_space<vmem>>, vector<2x15x15x4xf32>
    tpu.vector_store %arg14[%c0_192, %c0_193, %c1_194, %c0_195], %181 {strides = array<i32>} : memref<2x16x16x4xf32, #tpu.memory_space<vmem>>, vector<2x15x15x4xf32>,
    %c0_196 = arith.constant 0 : index
    %c0_197 = arith.constant 0 : index
    %c0_198 = arith.constant 0 : index
    %c0_199 = arith.constant 0 : index
    %183 = vector.load %arg14[%c0_196, %c0_197, %c0_198, %c0_199] : memref<2x16x16x4xf32, #tpu.memory_space<vmem>>, vector<2x15x16x4xf32>
    %184 = vector.extract_strided_slice %156 {offsets = [0, 1, 0, 28], sizes = [2, 15, 16, 4], strides = [1, 1, 1, 1]} : vector<2x16x16x36xf32> to vector<2x15x16x4xf32>
    %185 = arith.addf %183, %184 : vector<2x15x16x4xf32>
    %c0_200 = arith.constant 0 : index
    %c0_201 = arith.constant 0 : index
    %c0_202 = arith.constant 0 : index
    %c0_203 = arith.constant 0 : index
    %186 = vector.load %arg14[%c0_200, %c0_201, %c0_202, %c0_203] : memref<2x16x16x4xf32, #tpu.memory_space<vmem>>, vector<2x15x16x4xf32>
    tpu.vector_store %arg14[%c0_200, %c0_201, %c0_202, %c0_203], %185 {strides = array<i32>} : memref<2x16x16x4xf32, #tpu.memory_space<vmem>>, vector<2x15x16x4xf32>,
    %c0_204 = arith.constant 0 : index
    %c0_205 = arith.constant 0 : index
    %c0_206 = arith.constant 0 : index
    %c0_207 = arith.constant 0 : index
    %187 = vector.load %arg14[%c0_204, %c0_205, %c0_206, %c0_207] : memref<2x16x16x4xf32, #tpu.memory_space<vmem>>, vector<2x15x15x4xf32>
    %188 = vector.extract_strided_slice %156 {offsets = [0, 1, 1, 32], sizes = [2, 15, 15, 4], strides = [1, 1, 1, 1]} : vector<2x16x16x36xf32> to vector<2x15x15x4xf32>
    %189 = arith.addf %187, %188 : vector<2x15x15x4xf32>
    %c0_208 = arith.constant 0 : index
    %c0_209 = arith.constant 0 : index
    %c0_210 = arith.constant 0 : index
    %c0_211 = arith.constant 0 : index
    %190 = vector.load %arg14[%c0_208, %c0_209, %c0_210, %c0_211] : memref<2x16x16x4xf32, #tpu.memory_space<vmem>>, vector<2x15x15x4xf32>
    tpu.vector_store %arg14[%c0_208, %c0_209, %c0_210, %c0_211], %189 {strides = array<i32>} : memref<2x16x16x4xf32, #tpu.memory_space<vmem>>, vector<2x15x15x4xf32>,
    %c0_212 = arith.constant 0 : index
    %c0_213 = arith.constant 0 : index
    %c0_214 = arith.constant 0 : index
    %c0_215 = arith.constant 0 : index
    %191 = vector.load %arg14[%c0_212, %c0_213, %c0_214, %c0_215] : memref<2x16x16x4xf32, #tpu.memory_space<vmem>>, vector<2x16x16x4xf32>
    %c0_216 = arith.constant 0 : index
    %c0_217 = arith.constant 0 : index
    %c0_218 = arith.constant 0 : index
    %c0_219 = arith.constant 0 : index
    %192 = vector.load %arg13[%c0_216, %c0_217, %c0_218, %c0_219] : memref<2x16x16x12xf32, #tpu.memory_space<vmem>>, vector<2x16x16x4xf32>
    tpu.vector_store %arg13[%c0_216, %c0_217, %c0_218, %c0_219], %191 {strides = array<i32>} : memref<2x16x16x12xf32, #tpu.memory_space<vmem>>, vector<2x16x16x4xf32>,
    return
  }
}

</mosaic_0001>

<llo_original>
// kernel: tpu_custom_call.1
$region0: #{tpu_custom_call.1}
  #allocation0 [shape = 'u32[]', space=smem, size = 0x4, offset = 0x4, fixed_abs, tag = 'smem constant byte address 0x4 - core index']
  #allocation1 [shape = 'u32[144,128]{1,0:T(1,128)}', space=vmem, size = 0x12000, scoped, tag = 'internal scratch']
  #allocation2 [shape = 'f32[2,16,16,4]{3,2,1,0:T(8,128)}', space=vmem, size = 0x40000, scoped, tag = 'scratch operand']
  %s0 = inlined_call_operand.vmem [shape: f32[2,16,16,4], index: 0, kind: input, shape index: {}]
  %s1 = inlined_call_operand.vmem [shape: f32[1,4], index: 1, kind: input, shape index: {}]
  %s2 = inlined_call_operand.vmem [shape: f32[1,4], index: 2, kind: input, shape index: {}]
  %s3 = inlined_call_operand.vmem [shape: bf16[4,8], index: 3, kind: input, shape index: {}]
  %s4 = inlined_call_operand.vmem [shape: f32[1,8], index: 4, kind: input, shape index: {}]
  %s5 = inlined_call_operand.vmem [shape: f32[1,8], index: 5, kind: input, shape index: {}]
  %s6 = inlined_call_operand.vmem [shape: bf16[8,36], index: 6, kind: input, shape index: {}]
  %s7 = inlined_call_operand.vmem [shape: f32[1,8], index: 7, kind: input, shape index: {}]
  %s8 = inlined_call_operand.vmem [shape: f32[1,8], index: 8, kind: input, shape index: {}]
  %s9 = inlined_call_operand.vmem [shape: bf16[8,8], index: 9, kind: input, shape index: {}]
  %s10 = inlined_call_operand.vmem [shape: f32[1,8], index: 10, kind: input, shape index: {}]
  %s11 = inlined_call_operand.vmem [shape: f32[1,8], index: 11, kind: input, shape index: {}]
  %s12 = inlined_call_operand.vmem [shape: bf16[8,36], index: 12, kind: input, shape index: {}]
  %s13 = inlined_call_operand.vmem [shape: f32[2,16,16,12], index: 13, kind: output, shape index: {}]
  %s14 = sld [smem:[#allocation0]]
  $region62: #{tpu_custom_call.1} parent=0
    _
  %s16 = ssub.s32 1, %s14
  %s17 = scalar_select 0, %s16, %s14
  // Predicated region
  $region2: #{tpu_custom_call.1} parent=0 // pred_check
    _
  $region3: #{tpu_custom_call.1} parent=0 // pred_check_branch
    %19 = sbr.rel (0) target = $region5
  $region4: #{tpu_custom_call.1} parent=0 // pred_region
    _
  $region5: #{tpu_custom_call.1} parent=0 // pred_fallthru
    _
  // Predicated region
  $region6: #{tpu_custom_call.1} parent=0 // pred_check
    _
  $region7: #{tpu_custom_call.1} parent=0 // pred_check_branch
    %21 = sbr.rel (0) target = $region9
  $region8: #{tpu_custom_call.1} parent=0 // pred_region
    _
  $region9: #{tpu_custom_call.1} parent=0 // pred_fallthru
    _
  // Predicated region
  $region10: #{tpu_custom_call.1} parent=0 // pred_check
    _
  $region11: #{tpu_custom_call.1} parent=0 // pred_check_branch
    %23 = sbr.rel (0) target = $region13
  $region12: #{tpu_custom_call.1} parent=0 // pred_region
    _
  $region13: #{tpu_custom_call.1} parent=0 // pred_fallthru
    _
  // Predicated region
  $region14: #{tpu_custom_call.1} parent=0 // pred_check
    _
  $region15: #{tpu_custom_call.1} parent=0 // pred_check_branch
    %25 = sbr.rel (0) target = $region17
  $region16: #{tpu_custom_call.1} parent=0 // pred_region
    _
  $region17: #{tpu_custom_call.1} parent=0 // pred_fallthru
    _
  // Predicated region
  $region18: #{tpu_custom_call.1} parent=0 // pred_check
    _
  $region19: #{tpu_custom_call.1} parent=0 // pred_check_branch
    %27 = sbr.rel (0) target = $region21
  $region20: #{tpu_custom_call.1} parent=0 // pred_region
    _
  $region21: #{tpu_custom_call.1} parent=0 // pred_fallthru
    _
  // Predicated region
  $region22: #{tpu_custom_call.1} parent=0 // pred_check
    _
  $region23: #{tpu_custom_call.1} parent=0 // pred_check_branch
    %29 = sbr.rel (0) target = $region25
  $region24: #{tpu_custom_call.1} parent=0 // pred_region
    _
  $region25: #{tpu_custom_call.1} parent=0 // pred_fallthru
    _
  // Predicated region
  $region26: #{tpu_custom_call.1} parent=0 // pred_check
    _
  $region27: #{tpu_custom_call.1} parent=0 // pred_check_branch
    %31 = sbr.rel (0) target = $region29
  $region28: #{tpu_custom_call.1} parent=0 // pred_region
    _
  $region29: #{tpu_custom_call.1} parent=0 // pred_fallthru
    _
  // Predicated region
  $region30: #{tpu_custom_call.1} parent=0 // pred_check
    _
  $region31: #{tpu_custom_call.1} parent=0 // pred_check_branch
    %33 = sbr.rel (0) target = $region33
  $region32: #{tpu_custom_call.1} parent=0 // pred_region
    _
  $region33: #{tpu_custom_call.1} parent=0 // pred_fallthru
    _
  // Predicated region
  $region34: #{tpu_custom_call.1} parent=0 // pred_check
    _
  $region35: #{tpu_custom_call.1} parent=0 // pred_check_branch
    %35 = sbr.rel (0) target = $region37
  $region36: #{tpu_custom_call.1} parent=0 // pred_region
    _
  $region37: #{tpu_custom_call.1} parent=0 // pred_fallthru
    _
  // Predicated region
  $region38: #{tpu_custom_call.1} parent=0 // pred_check
    _
  $region39: #{tpu_custom_call.1} parent=0 // pred_check_branch
    %37 = sbr.rel (0) target = $region41
  $region40: #{tpu_custom_call.1} parent=0 // pred_region
    _
  $region41: #{tpu_custom_call.1} parent=0 // pred_fallthru
    _
  // Predicated region
  $region42: #{tpu_custom_call.1} parent=0 // pred_check
    _
  $region43: #{tpu_custom_call.1} parent=0 // pred_check_branch
    %39 = sbr.rel (0) target = $region45
  $region44: #{tpu_custom_call.1} parent=0 // pred_region
    _
  $region45: #{tpu_custom_call.1} parent=0 // pred_fallthru
    _
  // Predicated region
  $region46: #{tpu_custom_call.1} parent=0 // pred_check
    _
  $region47: #{tpu_custom_call.1} parent=0 // pred_check_branch
    %41 = sbr.rel (0) target = $region49
  $region48: #{tpu_custom_call.1} parent=0 // pred_region
    _
  $region49: #{tpu_custom_call.1} parent=0 // pred_fallthru
    _
  // Predicated region
  $region50: #{tpu_custom_call.1} parent=0 // pred_check
    _
  $region51: #{tpu_custom_call.1} parent=0 // pred_check_branch
    %43 = sbr.rel (0) target = $region53
  $region52: #{tpu_custom_call.1} parent=0 // pred_region
    _
  $region53: #{tpu_custom_call.1} parent=0 // pred_fallthru
    _
  %v45 = vld [vmem:[%s0] sm:$0xff]
  %v46 = vld [vmem:[%s0 + $0x8] sm:$0xff]
  %v47 = vld [vmem:[%s0 + $0x10] sm:$0xff]
  %v48 = vld [vmem:[%s0 + $0x18] sm:$0xff]
  %v49 = vld [vmem:[%s0 + $0x20] sm:$0xff]
  %v50 = vld [vmem:[%s0 + $0x28] sm:$0xff]
  %v51 = vld [vmem:[%s0 + $0x30] sm:$0xff]
  %v52 = vld [vmem:[%s0 + $0x38] sm:$0xff]
  %v53 = vld [vmem:[%s0 + $0x40] sm:$0xff]
  %v54 = vld [vmem:[%s0 + $0x48] sm:$0xff]
  %v55 = vld [vmem:[%s0 + $0x50] sm:$0xff]
  %v56 = vld [vmem:[%s0 + $0x58] sm:$0xff]
  %v57 = vld [vmem:[%s0 + $0x60] sm:$0xff]
  %v58 = vld [vmem:[%s0 + $0x68] sm:$0xff]
  %v59 = vld [vmem:[%s0 + $0x70] sm:$0xff]
  %v60 = vld [vmem:[%s0 + $0x78] sm:$0xff]
  %v61 = vld [vmem:[%s0 + $0x80] sm:$0xff]
  %v62 = vld [vmem:[%s0 + $0x88] sm:$0xff]
  %v63 = vld [vmem:[%s0 + $0x90] sm:$0xff]
  %v64 = vld [vmem:[%s0 + $0x98] sm:$0xff]
  %v65 = vld [vmem:[%s0 + $0xa0] sm:$0xff]
  %v66 = vld [vmem:[%s0 + $0xa8] sm:$0xff]
  %v67 = vld [vmem:[%s0 + $0xb0] sm:$0xff]
  %v68 = vld [vmem:[%s0 + $0xb8] sm:$0xff]
  %v69 = vld [vmem:[%s0 + $0xc0] sm:$0xff]
  %v70 = vld [vmem:[%s0 + $0xc8] sm:$0xff]
  %v71 = vld [vmem:[%s0 + $0xd0] sm:$0xff]
  %v72 = vld [vmem:[%s0 + $0xd8] sm:$0xff]
  %v73 = vld [vmem:[%s0 + $0xe0] sm:$0xff]
  %v74 = vld [vmem:[%s0 + $0xe8] sm:$0xff]
  %v75 = vld [vmem:[%s0 + $0xf0] sm:$0xff]
  %v76 = vld [vmem:[%s0 + $0xf8] sm:$0xff]
  %v77 = vld [vmem:[%s0 + $0x100] sm:$0xff]
  %v78 = vld [vmem:[%s0 + $0x108] sm:$0xff]
  %v79 = vld [vmem:[%s0 + $0x110] sm:$0xff]
  %v80 = vld [vmem:[%s0 + $0x118] sm:$0xff]
  %v81 = vld [vmem:[%s0 + $0x120] sm:$0xff]
  %v82 = vld [vmem:[%s0 + $0x128] sm:$0xff]
  %v83 = vld [vmem:[%s0 + $0x130] sm:$0xff]
  %v84 = vld [vmem:[%s0 + $0x138] sm:$0xff]
  %v85 = vld [vmem:[%s0 + $0x140] sm:$0xff]
  %v86 = vld [vmem:[%s0 + $0x148] sm:$0xff]
  %v87 = vld [vmem:[%s0 + $0x150] sm:$0xff]
  %v88 = vld [vmem:[%s0 + $0x158] sm:$0xff]
  %v89 = vld [vmem:[%s0 + $0x160] sm:$0xff]
  %v90 = vld [vmem:[%s0 + $0x168] sm:$0xff]
  %v91 = vld [vmem:[%s0 + $0x170] sm:$0xff]
  %v92 = vld [vmem:[%s0 + $0x178] sm:$0xff]
  %v93 = vld [vmem:[%s0 + $0x180] sm:$0xff]
  %v94 = vld [vmem:[%s0 + $0x188] sm:$0xff]
  %v95 = vld [vmem:[%s0 + $0x190] sm:$0xff]
  %v96 = vld [vmem:[%s0 + $0x198] sm:$0xff]
  %v97 = vld [vmem:[%s0 + $0x1a0] sm:$0xff]
  %v98 = vld [vmem:[%s0 + $0x1a8] sm:$0xff]
  %v99 = vld [vmem:[%s0 + $0x1b0] sm:$0xff]
  %v100 = vld [vmem:[%s0 + $0x1b8] sm:$0xff]
  %v101 = vld [vmem:[%s0 + $0x1c0] sm:$0xff]
  %v102 = vld [vmem:[%s0 + $0x1c8] sm:$0xff]
  %v103 = vld [vmem:[%s0 + $0x1d0] sm:$0xff]
  %v104 = vld [vmem:[%s0 + $0x1d8] sm:$0xff]
  %v105 = vld [vmem:[%s0 + $0x1e0] sm:$0xff]
  %v106 = vld [vmem:[%s0 + $0x1e8] sm:$0xff]
  %v107 = vld [vmem:[%s0 + $0x1f0] sm:$0xff]
  %v108 = vld [vmem:[%s0 + $0x1f8] sm:$0xff]
  %173 = vrot.lane.b32.xlu0 %v45, 8
  %v174 = vpop.permute.xlu0 %173
  %175 = vrot.lane.b32.xlu0 %v46, 8
  %v176 = vpop.permute.xlu0 %175
  %177 = vrot.lane.b32.xlu0 %v47, 8
  %v178 = vpop.permute.xlu0 %177
  %179 = vrot.lane.b32.xlu0 %v48, 8
  %v180 = vpop.permute.xlu0 %179
  %181 = vrot.lane.b32.xlu0 %v49, 8
  %v182 = vpop.permute.xlu0 %181
  %183 = vrot.lane.b32.xlu0 %v50, 8
  %v184 = vpop.permute.xlu0 %183
  %185 = vrot.lane.b32.xlu0 %v51, 8
  %v186 = vpop.permute.xlu0 %185
  %187 = vrot.lane.b32.xlu0 %v52, 8
  %v188 = vpop.permute.xlu0 %187
  %189 = vrot.lane.b32.xlu0 %v53, 8
  %v190 = vpop.permute.xlu0 %189
  %191 = vrot.lane.b32.xlu0 %v54, 8
  %v192 = vpop.permute.xlu0 %191
  %193 = vrot.lane.b32.xlu0 %v55, 8
  %v194 = vpop.permute.xlu0 %193
  %195 = vrot.lane.b32.xlu0 %v56, 8
  %v196 = vpop.permute.xlu0 %195
  %197 = vrot.lane.b32.xlu0 %v57, 8
  %v198 = vpop.permute.xlu0 %197
  %199 = vrot.lane.b32.xlu0 %v58, 8
  %v200 = vpop.permute.xlu0 %199
  %201 = vrot.lane.b32.xlu0 %v59, 8
  %v202 = vpop.permute.xlu0 %201
  %203 = vrot.lane.b32.xlu0 %v60, 8
  %v204 = vpop.permute.xlu0 %203
  %205 = vrot.lane.b32.xlu0 %v61, 8
  %v206 = vpop.permute.xlu0 %205
  %207 = vrot.lane.b32.xlu0 %v62, 8
  %v208 = vpop.permute.xlu0 %207
  %209 = vrot.lane.b32.xlu0 %v63, 8
  %v210 = vpop.permute.xlu0 %209
  %211 = vrot.lane.b32.xlu0 %v64, 8
  %v212 = vpop.permute.xlu0 %211
  %213 = vrot.lane.b32.xlu0 %v65, 8
  %v214 = vpop.permute.xlu0 %213
  %215 = vrot.lane.b32.xlu0 %v66, 8
  %v216 = vpop.permute.xlu0 %215
  %217 = vrot.lane.b32.xlu0 %v67, 8
  %v218 = vpop.permute.xlu0 %217
  %219 = vrot.lane.b32.xlu0 %v68, 8
  %v220 = vpop.permute.xlu0 %219
  %221 = vrot.lane.b32.xlu0 %v69, 8
  %v222 = vpop.permute.xlu0 %221
  %223 = vrot.lane.b32.xlu0 %v70, 8
  %v224 = vpop.permute.xlu0 %223
  %225 = vrot.lane.b32.xlu0 %v71, 8
  %v226 = vpop.permute.xlu0 %225
  %227 = vrot.lane.b32.xlu0 %v72, 8
  %v228 = vpop.permute.xlu0 %227
  %229 = vrot.lane.b32.xlu0 %v73, 8
  %v230 = vpop.permute.xlu0 %229
  %231 = vrot.lane.b32.xlu0 %v74, 8
  %v232 = vpop.permute.xlu0 %231
  %233 = vrot.lane.b32.xlu0 %v75, 8
  %v234 = vpop.permute.xlu0 %233
  %235 = vrot.lane.b32.xlu0 %v76, 8
  %v236 = vpop.permute.xlu0 %235
  %237 = vrot.lane.b32.xlu0 %v77, 8
  %v238 = vpop.permute.xlu0 %237
  %239 = vrot.lane.b32.xlu0 %v78, 8
  %v240 = vpop.permute.xlu0 %239
  %241 = vrot.lane.b32.xlu0 %v79, 8
  %v242 = vpop.permute.xlu0 %241
  %243 = vrot.lane.b32.xlu0 %v80, 8
  %v244 = vpop.permute.xlu0 %243
  %245 = vrot.lane.b32.xlu0 %v81, 8
  %v246 = vpop.permute.xlu0 %245
  %247 = vrot.lane.b32.xlu0 %v82, 8
  %v248 = vpop.permute.xlu0 %247
  %249 = vrot.lane.b32.xlu0 %v83, 8
  %v250 = vpop.permute.xlu0 %249
  %251 = vrot.lane.b32.xlu0 %v84, 8
  %v252 = vpop.permute.xlu0 %251
  %253 = vrot.lane.b32.xlu0 %v85, 8
  %v254 = vpop.permute.xlu0 %253
  %255 = vrot.lane.b32.xlu0 %v86, 8
  %v256 = vpop.permute.xlu0 %255
  %257 = vrot.lane.b32.xlu0 %v87, 8
  %v258 = vpop.permute.xlu0 %257
  %259 = vrot.lane.b32.xlu0 %v88, 8
  %v260 = vpop.permute.xlu0 %259
  %261 = vrot.lane.b32.xlu0 %v89, 8
  %v262 = vpop.permute.xlu0 %261
  %263 = vrot.lane.b32.xlu0 %v90, 8
  %v264 = vpop.permute.xlu0 %263
  %265 = vrot.lane.b32.xlu0 %v91, 8
  %v266 = vpop.permute.xlu0 %265
  %267 = vrot.lane.b32.xlu0 %v92, 8
  %v268 = vpop.permute.xlu0 %267
  %269 = vrot.lane.b32.xlu0 %v93, 8
  %v270 = vpop.permute.xlu0 %269
  %271 = vrot.lane.b32.xlu0 %v94, 8
  %v272 = vpop.permute.xlu0 %271
  %273 = vrot.lane.b32.xlu0 %v95, 8
  %v274 = vpop.permute.xlu0 %273
  %275 = vrot.lane.b32.xlu0 %v96, 8
  %v276 = vpop.permute.xlu0 %275
  %277 = vrot.lane.b32.xlu0 %v97, 8
  %v278 = vpop.permute.xlu0 %277
  %279 = vrot.lane.b32.xlu0 %v98, 8
  %v280 = vpop.permute.xlu0 %279
  %281 = vrot.lane.b32.xlu0 %v99, 8
  %v282 = vpop.permute.xlu0 %281
  %283 = vrot.lane.b32.xlu0 %v100, 8
  %v284 = vpop.permute.xlu0 %283
  %285 = vrot.lane.b32.xlu0 %v101, 8
  %v286 = vpop.permute.xlu0 %285
  %287 = vrot.lane.b32.xlu0 %v102, 8
  %v288 = vpop.permute.xlu0 %287
  %289 = vrot.lane.b32.xlu0 %v103, 8
  %v290 = vpop.permute.xlu0 %289
  %291 = vrot.lane.b32.xlu0 %v104, 8
  %v292 = vpop.permute.xlu0 %291
  %293 = vrot.lane.b32.xlu0 %v105, 8
  %v294 = vpop.permute.xlu0 %293
  %295 = vrot.lane.b32.xlu0 %v106, 8
  %v296 = vpop.permute.xlu0 %295
  %297 = vrot.lane.b32.xlu0 %v107, 8
  %v298 = vpop.permute.xlu0 %297
  %299 = vrot.lane.b32.xlu0 %v108, 8
  %v300 = vpop.permute.xlu0 %299
  %vm365 = vcmask 97344
  %366 = vst.msk [vmem:[%s13] sm:$0xff] %vm365, %v174
  %367 = vst.msk [vmem:[%s13 + $0x8] sm:$0xff] %vm365, %v176
  %368 = vst.msk [vmem:[%s13 + $0x10] sm:$0xff] %vm365, %v178
  %369 = vst.msk [vmem:[%s13 + $0x18] sm:$0xff] %vm365, %v180
  %370 = vst.msk [vmem:[%s13 + $0x20] sm:$0xff] %vm365, %v182
  %371 = vst.msk [vmem:[%s13 + $0x28] sm:$0xff] %vm365, %v184
  %372 = vst.msk [vmem:[%s13 + $0x30] sm:$0xff] %vm365, %v186
  %373 = vst.msk [vmem:[%s13 + $0x38] sm:$0xff] %vm365, %v188
  %374 = vst.msk [vmem:[%s13 + $0x40] sm:$0xff] %vm365, %v190
  %375 = vst.msk [vmem:[%s13 + $0x48] sm:$0xff] %vm365, %v192
  %376 = vst.msk [vmem:[%s13 + $0x50] sm:$0xff] %vm365, %v194
  %377 = vst.msk [vmem:[%s13 + $0x58] sm:$0xff] %vm365, %v196
  %378 = vst.msk [vmem:[%s13 + $0x60] sm:$0xff] %vm365, %v198
  %379 = vst.msk [vmem:[%s13 + $0x68] sm:$0xff] %vm365, %v200
  %380 = vst.msk [vmem:[%s13 + $0x70] sm:$0xff] %vm365, %v202
  %381 = vst.msk [vmem:[%s13 + $0x78] sm:$0xff] %vm365, %v204
  %382 = vst.msk [vmem:[%s13 + $0x80] sm:$0xff] %vm365, %v206
  %383 = vst.msk [vmem:[%s13 + $0x88] sm:$0xff] %vm365, %v208
  %384 = vst.msk [vmem:[%s13 + $0x90] sm:$0xff] %vm365, %v210
  %385 = vst.msk [vmem:[%s13 + $0x98] sm:$0xff] %vm365, %v212
  %386 = vst.msk [vmem:[%s13 + $0xa0] sm:$0xff] %vm365, %v214
  %387 = vst.msk [vmem:[%s13 + $0xa8] sm:$0xff] %vm365, %v216
  %388 = vst.msk [vmem:[%s13 + $0xb0] sm:$0xff] %vm365, %v218
  %389 = vst.msk [vmem:[%s13 + $0xb8] sm:$0xff] %vm365, %v220
  %390 = vst.msk [vmem:[%s13 + $0xc0] sm:$0xff] %vm365, %v222
  %391 = vst.msk [vmem:[%s13 + $0xc8] sm:$0xff] %vm365, %v224
  %392 = vst.msk [vmem:[%s13 + $0xd0] sm:$0xff] %vm365, %v226
  %393 = vst.msk [vmem:[%s13 + $0xd8] sm:$0xff] %vm365, %v228
  %394 = vst.msk [vmem:[%s13 + $0xe0] sm:$0xff] %vm365, %v230
  %395 = vst.msk [vmem:[%s13 + $0xe8] sm:$0xff] %vm365, %v232
  %396 = vst.msk [vmem:[%s13 + $0xf0] sm:$0xff] %vm365, %v234
  %397 = vst.msk [vmem:[%s13 + $0xf8] sm:$0xff] %vm365, %v236
  %398 = vst.msk [vmem:[%s13 + $0x100] sm:$0xff] %vm365, %v238
  %399 = vst.msk [vmem:[%s13 + $0x108] sm:$0xff] %vm365, %v240
  %400 = vst.msk [vmem:[%s13 + $0x110] sm:$0xff] %vm365, %v242
  %401 = vst.msk [vmem:[%s13 + $0x118] sm:$0xff] %vm365, %v244
  %402 = vst.msk [vmem:[%s13 + $0x120] sm:$0xff] %vm365, %v246
  %403 = vst.msk [vmem:[%s13 + $0x128] sm:$0xff] %vm365, %v248
  %404 = vst.msk [vmem:[%s13 + $0x130] sm:$0xff] %vm365, %v250
  %405 = vst.msk [vmem:[%s13 + $0x138] sm:$0xff] %vm365, %v252
  %406 = vst.msk [vmem:[%s13 + $0x140] sm:$0xff] %vm365, %v254
  %407 = vst.msk [vmem:[%s13 + $0x148] sm:$0xff] %vm365, %v256
  %408 = vst.msk [vmem:[%s13 + $0x150] sm:$0xff] %vm365, %v258
  %409 = vst.msk [vmem:[%s13 + $0x158] sm:$0xff] %vm365, %v260
  %410 = vst.msk [vmem:[%s13 + $0x160] sm:$0xff] %vm365, %v262
  %411 = vst.msk [vmem:[%s13 + $0x168] sm:$0xff] %vm365, %v264
  %412 = vst.msk [vmem:[%s13 + $0x170] sm:$0xff] %vm365, %v266
  %413 = vst.msk [vmem:[%s13 + $0x178] sm:$0xff] %vm365, %v268
  %414 = vst.msk [vmem:[%s13 + $0x180] sm:$0xff] %vm365, %v270
  %415 = vst.msk [vmem:[%s13 + $0x188] sm:$0xff] %vm365, %v272
  %416 = vst.msk [vmem:[%s13 + $0x190] sm:$0xff] %vm365, %v274
  %417 = vst.msk [vmem:[%s13 + $0x198] sm:$0xff] %vm365, %v276
  %418 = vst.msk [vmem:[%s13 + $0x1a0] sm:$0xff] %vm365, %v278
  %419 = vst.msk [vmem:[%s13 + $0x1a8] sm:$0xff] %vm365, %v280
  %420 = vst.msk [vmem:[%s13 + $0x1b0] sm:$0xff] %vm365, %v282
  %421 = vst.msk [vmem:[%s13 + $0x1b8] sm:$0xff] %vm365, %v284
  %422 = vst.msk [vmem:[%s13 + $0x1c0] sm:$0xff] %vm365, %v286
  %423 = vst.msk [vmem:[%s13 + $0x1c8] sm:$0xff] %vm365, %v288
  %424 = vst.msk [vmem:[%s13 + $0x1d0] sm:$0xff] %vm365, %v290
  %425 = vst.msk [vmem:[%s13 + $0x1d8] sm:$0xff] %vm365, %v292
  %426 = vst.msk [vmem:[%s13 + $0x1e0] sm:$0xff] %vm365, %v294
  %427 = vst.msk [vmem:[%s13 + $0x1e8] sm:$0xff] %vm365, %v296
  %428 = vst.msk [vmem:[%s13 + $0x1f0] sm:$0xff] %vm365, %v298
  %429 = vst.msk [vmem:[%s13 + $0x1f8] sm:$0xff] %vm365, %v300
  %v430 = vld [vmem:[%s13] sm:$0xff]
  %v431 = vld [vmem:[%s13 + $0x8] sm:$0xff]
  %v432 = vld [vmem:[%s13 + $0x10] sm:$0xff]
  %v433 = vld [vmem:[%s13 + $0x18] sm:$0xff]
  %v434 = vld [vmem:[%s13 + $0x20] sm:$0xff]
  %v435 = vld [vmem:[%s13 + $0x28] sm:$0xff]
  %v436 = vld [vmem:[%s13 + $0x30] sm:$0xff]
  %v437 = vld [vmem:[%s13 + $0x38] sm:$0xff]
  %v438 = vld [vmem:[%s13 + $0x40] sm:$0xff]
  %v439 = vld [vmem:[%s13 + $0x48] sm:$0xff]
  %v440 = vld [vmem:[%s13 + $0x50] sm:$0xff]
  %v441 = vld [vmem:[%s13 + $0x58] sm:$0xff]
  %v442 = vld [vmem:[%s13 + $0x60] sm:$0xff]
  %v443 = vld [vmem:[%s13 + $0x68] sm:$0xff]
  %v444 = vld [vmem:[%s13 + $0x70] sm:$0xff]
  %v445 = vld [vmem:[%s13 + $0x78] sm:$0xff]
  %v446 = vld [vmem:[%s13 + $0x80] sm:$0xff]
  %v447 = vld [vmem:[%s13 + $0x88] sm:$0xff]
  %v448 = vld [vmem:[%s13 + $0x90] sm:$0xff]
  %v449 = vld [vmem:[%s13 + $0x98] sm:$0xff]
  %v450 = vld [vmem:[%s13 + $0xa0] sm:$0xff]
  %v451 = vld [vmem:[%s13 + $0xa8] sm:$0xff]
  %v452 = vld [vmem:[%s13 + $0xb0] sm:$0xff]
  %v453 = vld [vmem:[%s13 + $0xb8] sm:$0xff]
  %v454 = vld [vmem:[%s13 + $0xc0] sm:$0xff]
  %v455 = vld [vmem:[%s13 + $0xc8] sm:$0xff]
  %v456 = vld [vmem:[%s13 + $0xd0] sm:$0xff]
  %v457 = vld [vmem:[%s13 + $0xd8] sm:$0xff]
  %v458 = vld [vmem:[%s13 + $0xe0] sm:$0xff]
  %v459 = vld [vmem:[%s13 + $0xe8] sm:$0xff]
  %v460 = vld [vmem:[%s13 + $0xf0] sm:$0xff]
  %v461 = vld [vmem:[%s13 + $0xf8] sm:$0xff]
  %v462 = vld [vmem:[%s13 + $0x100] sm:$0xff]
  %v463 = vld [vmem:[%s13 + $0x108] sm:$0xff]
  %v464 = vld [vmem:[%s13 + $0x110] sm:$0xff]
  %v465 = vld [vmem:[%s13 + $0x118] sm:$0xff]
  %v466 = vld [vmem:[%s13 + $0x120] sm:$0xff]
  %v467 = vld [vmem:[%s13 + $0x128] sm:$0xff]
  %v468 = vld [vmem:[%s13 + $0x130] sm:$0xff]
  %v469 = vld [vmem:[%s13 + $0x138] sm:$0xff]
  %v470 = vld [vmem:[%s13 + $0x140] sm:$0xff]
  %v471 = vld [vmem:[%s13 + $0x148] sm:$0xff]
  %v472 = vld [vmem:[%s13 + $0x150] sm:$0xff]
  %v473 = vld [vmem:[%s13 + $0x158] sm:$0xff]
  %v474 = vld [vmem:[%s13 + $0x160] sm:$0xff]
  %v475 = vld [vmem:[%s13 + $0x168] sm:$0xff]
  %v476 = vld [vmem:[%s13 + $0x170] sm:$0xff]
  %v477 = vld [vmem:[%s13 + $0x178] sm:$0xff]
  %v478 = vld [vmem:[%s13 + $0x180] sm:$0xff]
  %v479 = vld [vmem:[%s13 + $0x188] sm:$0xff]
  %v480 = vld [vmem:[%s13 + $0x190] sm:$0xff]
  %v481 = vld [vmem:[%s13 + $0x198] sm:$0xff]
  %v482 = vld [vmem:[%s13 + $0x1a0] sm:$0xff]
  %v483 = vld [vmem:[%s13 + $0x1a8] sm:$0xff]
  %v484 = vld [vmem:[%s13 + $0x1b0] sm:$0xff]
  %v485 = vld [vmem:[%s13 + $0x1b8] sm:$0xff]
  %v486 = vld [vmem:[%s13 + $0x1c0] sm:$0xff]
  %v487 = vld [vmem:[%s13 + $0x1c8] sm:$0xff]
  %v488 = vld [vmem:[%s13 + $0x1d0] sm:$0xff]
  %v489 = vld [vmem:[%s13 + $0x1d8] sm:$0xff]
  %v490 = vld [vmem:[%s13 + $0x1e0] sm:$0xff]
  %v491 = vld [vmem:[%s13 + $0x1e8] sm:$0xff]
  %v492 = vld [vmem:[%s13 + $0x1f0] sm:$0xff]
  %v493 = vld [vmem:[%s13 + $0x1f8] sm:$0xff]
  %558 = vrot.lane.b32.xlu0 %v430, 120
  %v559 = vpop.permute.xlu0 %558
  %560 = vrot.lane.b32.xlu0 %v431, 120
  %v561 = vpop.permute.xlu0 %560
  %562 = vrot.lane.b32.xlu0 %v432, 120
  %v563 = vpop.permute.xlu0 %562
  %564 = vrot.lane.b32.xlu0 %v433, 120
  %v565 = vpop.permute.xlu0 %564
  %566 = vrot.lane.b32.xlu0 %v434, 120
  %v567 = vpop.permute.xlu0 %566
  %568 = vrot.lane.b32.xlu0 %v435, 120
  %v569 = vpop.permute.xlu0 %568
  %570 = vrot.lane.b32.xlu0 %v436, 120
  %v571 = vpop.permute.xlu0 %570
  %572 = vrot.lane.b32.xlu0 %v437, 120
  %v573 = vpop.permute.xlu0 %572
  %574 = vrot.lane.b32.xlu0 %v438, 120
  %v575 = vpop.permute.xlu0 %574
  %576 = vrot.lane.b32.xlu0 %v439, 120
  %v577 = vpop.permute.xlu0 %576
  %578 = vrot.lane.b32.xlu0 %v440, 120
  %v579 = vpop.permute.xlu0 %578
  %580 = vrot.lane.b32.xlu0 %v441, 120
  %v581 = vpop.permute.xlu0 %580
  %582 = vrot.lane.b32.xlu0 %v442, 120
  %v583 = vpop.permute.xlu0 %582
  %584 = vrot.lane.b32.xlu0 %v443, 120
  %v585 = vpop.permute.xlu0 %584
  %586 = vrot.lane.b32.xlu0 %v444, 120
  %v587 = vpop.permute.xlu0 %586
  %588 = vrot.lane.b32.xlu0 %v445, 120
  %v589 = vpop.permute.xlu0 %588
  %590 = vrot.lane.b32.xlu0 %v446, 120
  %v591 = vpop.permute.xlu0 %590
  %592 = vrot.lane.b32.xlu0 %v447, 120
  %v593 = vpop.permute.xlu0 %592
  %594 = vrot.lane.b32.xlu0 %v448, 120
  %v595 = vpop.permute.xlu0 %594
  %596 = vrot.lane.b32.xlu0 %v449, 120
  %v597 = vpop.permute.xlu0 %596
  %598 = vrot.lane.b32.xlu0 %v450, 120
  %v599 = vpop.permute.xlu0 %598
  %600 = vrot.lane.b32.xlu0 %v451, 120
  %v601 = vpop.permute.xlu0 %600
  %602 = vrot.lane.b32.xlu0 %v452, 120
  %v603 = vpop.permute.xlu0 %602
  %604 = vrot.lane.b32.xlu0 %v453, 120
  %v605 = vpop.permute.xlu0 %604
  %606 = vrot.lane.b32.xlu0 %v454, 120
  %v607 = vpop.permute.xlu0 %606
  %608 = vrot.lane.b32.xlu0 %v455, 120
  %v609 = vpop.permute.xlu0 %608
  %610 = vrot.lane.b32.xlu0 %v456, 120
  %v611 = vpop.permute.xlu0 %610
  %612 = vrot.lane.b32.xlu0 %v457, 120
  %v613 = vpop.permute.xlu0 %612
  %614 = vrot.lane.b32.xlu0 %v458, 120
  %v615 = vpop.permute.xlu0 %614
  %616 = vrot.lane.b32.xlu0 %v459, 120
  %v617 = vpop.permute.xlu0 %616
  %618 = vrot.lane.b32.xlu0 %v460, 120
  %v619 = vpop.permute.xlu0 %618
  %620 = vrot.lane.b32.xlu0 %v461, 120
  %v621 = vpop.permute.xlu0 %620
  %622 = vrot.lane.b32.xlu0 %v462, 120
  %v623 = vpop.permute.xlu0 %622
  %624 = vrot.lane.b32.xlu0 %v463, 120
  %v625 = vpop.permute.xlu0 %624
  %626 = vrot.lane.b32.xlu0 %v464, 120
  %v627 = vpop.permute.xlu0 %626
  %628 = vrot.lane.b32.xlu0 %v465, 120
  %v629 = vpop.permute.xlu0 %628
  %630 = vrot.lane.b32.xlu0 %v466, 120
  %v631 = vpop.permute.xlu0 %630
  %632 = vrot.lane.b32.xlu0 %v467, 120
  %v633 = vpop.permute.xlu0 %632
  %634 = vrot.lane.b32.xlu0 %v468, 120
  %v635 = vpop.permute.xlu0 %634
  %636 = vrot.lane.b32.xlu0 %v469, 120
  %v637 = vpop.permute.xlu0 %636
  %638 = vrot.lane.b32.xlu0 %v470, 120
  %v639 = vpop.permute.xlu0 %638
  %640 = vrot.lane.b32.xlu0 %v471, 120
  %v641 = vpop.permute.xlu0 %640
  %642 = vrot.lane.b32.xlu0 %v472, 120
  %v643 = vpop.permute.xlu0 %642
  %644 = vrot.lane.b32.xlu0 %v473, 120
  %v645 = vpop.permute.xlu0 %644
  %646 = vrot.lane.b32.xlu0 %v474, 120
  %v647 = vpop.permute.xlu0 %646
  %648 = vrot.lane.b32.xlu0 %v475, 120
  %v649 = vpop.permute.xlu0 %648
  %650 = vrot.lane.b32.xlu0 %v476, 120
  %v651 = vpop.permute.xlu0 %650
  %652 = vrot.lane.b32.xlu0 %v477, 120
  %v653 = vpop.permute.xlu0 %652
  %654 = vrot.lane.b32.xlu0 %v478, 120
  %v655 = vpop.permute.xlu0 %654
  %656 = vrot.lane.b32.xlu0 %v479, 120
  %v657 = vpop.permute.xlu0 %656
  %658 = vrot.lane.b32.xlu0 %v480, 120
  %v659 = vpop.permute.xlu0 %658
  %660 = vrot.lane.b32.xlu0 %v481, 120
  %v661 = vpop.permute.xlu0 %660
  %662 = vrot.lane.b32.xlu0 %v482, 120
  %v663 = vpop.permute.xlu0 %662
  %664 = vrot.lane.b32.xlu0 %v483, 120
  %v665 = vpop.permute.xlu0 %664
  %666 = vrot.lane.b32.xlu0 %v484, 120
  %v667 = vpop.permute.xlu0 %666
  %668 = vrot.lane.b32.xlu0 %v485, 120
  %v669 = vpop.permute.xlu0 %668
  %670 = vrot.lane.b32.xlu0 %v486, 120
  %v671 = vpop.permute.xlu0 %670
  %672 = vrot.lane.b32.xlu0 %v487, 120
  %v673 = vpop.permute.xlu0 %672
  %674 = vrot.lane.b32.xlu0 %v488, 120
  %v675 = vpop.permute.xlu0 %674
  %676 = vrot.lane.b32.xlu0 %v489, 120
  %v677 = vpop.permute.xlu0 %676
  %678 = vrot.lane.b32.xlu0 %v490, 120
  %v679 = vpop.permute.xlu0 %678
  %680 = vrot.lane.b32.xlu0 %v491, 120
  %v681 = vpop.permute.xlu0 %680
  %682 = vrot.lane.b32.xlu0 %v492, 120
  %v683 = vpop.permute.xlu0 %682
  %684 = vrot.lane.b32.xlu0 %v493, 120
  %v685 = vpop.permute.xlu0 %684
  %750 = vmatprep.subr.mxu0 0.0
  %751 = vmatpush1.msra.mxu0 %v589
  %752 = vmatprep.subr.mxu0 0.0
  %753 = vmatpush1.msra.mxu0 %v587
  %754 = vmatprep.subr.mxu0 0.0
  %755 = vmatpush1.msra.mxu0 %v585
  %756 = vmatprep.subr.mxu0 0.0
  %757 = vmatpush1.msra.mxu0 %v583
  %758 = vmatprep.subr.mxu0 0.0
  %759 = vmatpush1.msra.mxu0 %v581
  %760 = vmatprep.subr.mxu0 0.0
  %761 = vmatpush1.msra.mxu0 %v579
  %762 = vmatprep.subr.mxu0 0.0
  %763 = vmatpush1.msra.mxu0 %v577
  %764 = vmatprep.subr.mxu0 0.0
  %765 = vmatpush1.msra.mxu0 %v575
  %766 = vmatprep.subr.mxu0 0.0
  %767 = vmatpush1.msra.mxu0 %v573
  %768 = vmatprep.subr.mxu0 0.0
  %769 = vmatpush1.msra.mxu0 %v571
  %770 = vmatprep.subr.mxu0 0.0
  %771 = vmatpush1.msra.mxu0 %v569
  %772 = vmatprep.subr.mxu0 0.0
  %773 = vmatpush1.msra.mxu0 %v567
  %774 = vmatprep.subr.mxu0 0.0
  %775 = vmatpush1.msra.mxu0 %v565
  %776 = vmatprep.subr.mxu0 0.0
  %777 = vmatpush1.msra.mxu0 %v563
  %778 = vmatprep.subr.mxu0 0.0
  %779 = vmatpush1.msra.mxu0 %v561
  %780 = vmatprep.subr.mxu0 0.0
  %781 = vmatpush1.msra.mxu0 %v559
  %782 = vmatprep.subr.mxu0 0.0
  %783 = vmatpush2.msra.mxu0 %v621
  %784 = vmatprep.subr.mxu0 0.0
  %785 = vmatpush2.msra.mxu0 %v619
  %786 = vmatprep.subr.mxu0 0.0
  %787 = vmatpush2.msra.mxu0 %v617
  %788 = vmatprep.subr.mxu0 0.0
  %789 = vmatpush2.msra.mxu0 %v615
  %790 = vmatprep.subr.mxu0 0.0
  %791 = vmatpush2.msra.mxu0 %v613
  %792 = vmatprep.subr.mxu0 0.0
  %793 = vmatpush2.msra.mxu0 %v611
  %794 = vmatprep.subr.mxu0 0.0
  %795 = vmatpush2.msra.mxu0 %v609
  %796 = vmatprep.subr.mxu0 0.0
  %797 = vmatpush2.msra.mxu0 %v607
  %798 = vmatprep.subr.mxu0 0.0
  %799 = vmatpush2.msra.mxu0 %v605
  %800 = vmatprep.subr.mxu0 0.0
  %801 = vmatpush2.msra.mxu0 %v603
  %802 = vmatprep.subr.mxu0 0.0
  %803 = vmatpush2.msra.mxu0 %v601
  %804 = vmatprep.subr.mxu0 0.0
  %805 = vmatpush2.msra.mxu0 %v599
  %806 = vmatprep.subr.mxu0 0.0
  %807 = vmatpush2.msra.mxu0 %v597
  %808 = vmatprep.subr.mxu0 0.0
  %809 = vmatpush2.msra.mxu0 %v595
  %810 = vmatprep.subr.mxu0 0.0
  %811 = vmatpush2.msra.mxu0 %v593
  %812 = vmatprep.subr.mxu0 0.0
  %813 = vmatpush2.msra.mxu0 %v591
  %814 = vmatprep.mubr.f32.mxu0 1.0
  %815 = vmatmul.mubr.f32.gmra.mxu0 1.0
  %v816 = vpop.f32.mrf.mxu0
  %v817 = vadd.f32 0.0, %v816
  %v818 = vpop.f32.mrf.mxu0
  %819 = vdwg.mxu0
  %820 = vmatprep.subr.mxu0 0.0
  %821 = vmatpush1.msra.mxu0 %v653
  %822 = vmatprep.subr.mxu0 0.0
  %823 = vmatpush1.msra.mxu0 %v651
  %824 = vmatprep.subr.mxu0 0.0
  %825 = vmatpush1.msra.mxu0 %v649
  %826 = vmatprep.subr.mxu0 0.0
  %827 = vmatpush1.msra.mxu0 %v647
  %828 = vmatprep.subr.mxu0 0.0
  %829 = vmatpush1.msra.mxu0 %v645
  %830 = vmatprep.subr.mxu0 0.0
  %831 = vmatpush1.msra.mxu0 %v643
  %832 = vmatprep.subr.mxu0 0.0
  %833 = vmatpush1.msra.mxu0 %v641
  %834 = vmatprep.subr.mxu0 0.0
  %835 = vmatpush1.msra.mxu0 %v639
  %836 = vmatprep.subr.mxu0 0.0
  %837 = vmatpush1.msra.mxu0 %v637
  %838 = vmatprep.subr.mxu0 0.0
  %839 = vmatpush1.msra.mxu0 %v635
  %840 = vmatprep.subr.mxu0 0.0
  %841 = vmatpush1.msra.mxu0 %v633
  %842 = vmatprep.subr.mxu0 0.0
  %843 = vmatpush1.msra.mxu0 %v631
  %844 = vmatprep.subr.mxu0 0.0
  %845 = vmatpush1.msra.mxu0 %v629
  %846 = vmatprep.subr.mxu0 0.0
  %847 = vmatpush1.msra.mxu0 %v627
  %848 = vmatprep.subr.mxu0 0.0
  %849 = vmatpush1.msra.mxu0 %v625
  %850 = vmatprep.subr.mxu0 0.0
  %851 = vmatpush1.msra.mxu0 %v623
  %852 = vmatprep.subr.mxu0 0.0
  %853 = vmatpush2.msra.mxu0 %v685
  %854 = vmatprep.subr.mxu0 0.0
  %855 = vmatpush2.msra.mxu0 %v683
  %856 = vmatprep.subr.mxu0 0.0
  %857 = vmatpush2.msra.mxu0 %v681
  %858 = vmatprep.subr.mxu0 0.0
  %859 = vmatpush2.msra.mxu0 %v679
  %860 = vmatprep.subr.mxu0 0.0
  %861 = vmatpush2.msra.mxu0 %v677
  %862 = vmatprep.subr.mxu0 0.0
  %863 = vmatpush2.msra.mxu0 %v675
  %864 = vmatprep.subr.mxu0 0.0
  %865 = vmatpush2.msra.mxu0 %v673
  %866 = vmatprep.subr.mxu0 0.0
  %867 = vmatpush2.msra.mxu0 %v671
  %868 = vmatprep.subr.mxu0 0.0
  %869 = vmatpush2.msra.mxu0 %v669
  %870 = vmatprep.subr.mxu0 0.0
  %871 = vmatpush2.msra.mxu0 %v667
  %872 = vmatprep.subr.mxu0 0.0
  %873 = vmatpush2.msra.mxu0 %v665
  %874 = vmatprep.subr.mxu0 0.0
  %875 = vmatpush2.msra.mxu0 %v663
  %876 = vmatprep.subr.mxu0 0.0
  %877 = vmatpush2.msra.mxu0 %v661
  %878 = vmatprep.subr.mxu0 0.0
  %879 = vmatpush2.msra.mxu0 %v659
  %880 = vmatprep.subr.mxu0 0.0
  %881 = vmatpush2.msra.mxu0 %v657
  %882 = vmatprep.subr.mxu0 0.0
  %883 = vmatpush2.msra.mxu0 %v655
  %884 = vmatprep.mubr.f32.mxu0 1.0
  %885 = vmatmul.mubr.f32.gmra.mxu0 1.0
  %v886 = vpop.f32.mrf.mxu0
  %v887 = vadd.f32 %v817, %v886
  %v888 = vpop.f32.mrf.mxu0
  %889 = vdwg.mxu0
  %v890 = vmul.f32 %v430, %v430
  %v891 = vmul.f32 %v431, %v431
  %v892 = vmul.f32 %v432, %v432
  %v893 = vmul.f32 %v433, %v433
  %v894 = vmul.f32 %v434, %v434
  %v895 = vmul.f32 %v435, %v435
  %v896 = vmul.f32 %v436, %v436
  %v897 = vmul.f32 %v437, %v437
  %v898 = vmul.f32 %v438, %v438
  %v899 = vmul.f32 %v439, %v439
  %v900 = vmul.f32 %v440, %v440
  %v901 = vmul.f32 %v441, %v441
  %v902 = vmul.f32 %v442, %v442
  %v903 = vmul.f32 %v443, %v443
  %v904 = vmul.f32 %v444, %v444
  %v905 = vmul.f32 %v445, %v445
  %v906 = vmul.f32 %v446, %v446
  %v907 = vmul.f32 %v447, %v447
  %v908 = vmul.f32 %v448, %v448
  %v909 = vmul.f32 %v449, %v449
  %v910 = vmul.f32 %v450, %v450
  %v911 = vmul.f32 %v451, %v451
  %v912 = vmul.f32 %v452, %v452
  %v913 = vmul.f32 %v453, %v453
  %v914 = vmul.f32 %v454, %v454
  %v915 = vmul.f32 %v455, %v455
  %v916 = vmul.f32 %v456, %v456
  %v917 = vmul.f32 %v457, %v457
  %v918 = vmul.f32 %v458, %v458
  %v919 = vmul.f32 %v459, %v459
  %v920 = vmul.f32 %v460, %v460
  %v921 = vmul.f32 %v461, %v461
  %v922 = vmul.f32 %v462, %v462
  %v923 = vmul.f32 %v463, %v463
  %v924 = vmul.f32 %v464, %v464
  %v925 = vmul.f32 %v465, %v465
  %v926 = vmul.f32 %v466, %v466
  %v927 = vmul.f32 %v467, %v467
  %v928 = vmul.f32 %v468, %v468
  %v929 = vmul.f32 %v469, %v469
  %v930 = vmul.f32 %v470, %v470
  %v931 = vmul.f32 %v471, %v471
  %v932 = vmul.f32 %v472, %v472
  %v933 = vmul.f32 %v473, %v473
  %v934 = vmul.f32 %v474, %v474
  %v935 = vmul.f32 %v475, %v475
  %v936 = vmul.f32 %v476, %v476
  %v937 = vmul.f32 %v477, %v477
  %v938 = vmul.f32 %v478, %v478
  %v939 = vmul.f32 %v479, %v479
  %v940 = vmul.f32 %v480, %v480
  %v941 = vmul.f32 %v481, %v481
  %v942 = vmul.f32 %v482, %v482
  %v943 = vmul.f32 %v483, %v483
  %v944 = vmul.f32 %v484, %v484
  %v945 = vmul.f32 %v485, %v485
  %v946 = vmul.f32 %v486, %v486
  %v947 = vmul.f32 %v487, %v487
  %v948 = vmul.f32 %v488, %v488
  %v949 = vmul.f32 %v489, %v489
  %v950 = vmul.f32 %v490, %v490
  %v951 = vmul.f32 %v491, %v491
  %v952 = vmul.f32 %v492, %v492
  %v953 = vmul.f32 %v493, %v493
  %1018 = vrot.lane.b32.xlu0 %v890, 120
  %v1019 = vpop.permute.xlu0 %1018
  %1020 = vrot.lane.b32.xlu0 %v891, 120
  %v1021 = vpop.permute.xlu0 %1020
  %1022 = vrot.lane.b32.xlu0 %v892, 120
  %v1023 = vpop.permute.xlu0 %1022
  %1024 = vrot.lane.b32.xlu0 %v893, 120
  %v1025 = vpop.permute.xlu0 %1024
  %1026 = vrot.lane.b32.xlu0 %v894, 120
  %v1027 = vpop.permute.xlu0 %1026
  %1028 = vrot.lane.b32.xlu0 %v895, 120
  %v1029 = vpop.permute.xlu0 %1028
  %1030 = vrot.lane.b32.xlu0 %v896, 120
  %v1031 = vpop.permute.xlu0 %1030
  %1032 = vrot.lane.b32.xlu0 %v897, 120
  %v1033 = vpop.permute.xlu0 %1032
  %1034 = vrot.lane.b32.xlu0 %v898, 120
  %v1035 = vpop.permute.xlu0 %1034
  %1036 = vrot.lane.b32.xlu0 %v899, 120
  %v1037 = vpop.permute.xlu0 %1036
  %1038 = vrot.lane.b32.xlu0 %v900, 120
  %v1039 = vpop.permute.xlu0 %1038
  %1040 = vrot.lane.b32.xlu0 %v901, 120
  %v1041 = vpop.permute.xlu0 %1040
  %1042 = vrot.lane.b32.xlu0 %v902, 120
  %v1043 = vpop.permute.xlu0 %1042
  %1044 = vrot.lane.b32.xlu0 %v903, 120
  %v1045 = vpop.permute.xlu0 %1044
  %1046 = vrot.lane.b32.xlu0 %v904, 120
  %v1047 = vpop.permute.xlu0 %1046
  %1048 = vrot.lane.b32.xlu0 %v905, 120
  %v1049 = vpop.permute.xlu0 %1048
  %1050 = vrot.lane.b32.xlu0 %v906, 120
  %v1051 = vpop.permute.xlu0 %1050
  %1052 = vrot.lane.b32.xlu0 %v907, 120
  %v1053 = vpop.permute.xlu0 %1052
  %1054 = vrot.lane.b32.xlu0 %v908, 120
  %v1055 = vpop.permute.xlu0 %1054
  %1056 = vrot.lane.b32.xlu0 %v909, 120
  %v1057 = vpop.permute.xlu0 %1056
  %1058 = vrot.lane.b32.xlu0 %v910, 120
  %v1059 = vpop.permute.xlu0 %1058
  %1060 = vrot.lane.b32.xlu0 %v911, 120
  %v1061 = vpop.permute.xlu0 %1060
  %1062 = vrot.lane.b32.xlu0 %v912, 120
  %v1063 = vpop.permute.xlu0 %1062
  %1064 = vrot.lane.b32.xlu0 %v913, 120
  %v1065 = vpop.permute.xlu0 %1064
  %1066 = vrot.lane.b32.xlu0 %v914, 120
  %v1067 = vpop.permute.xlu0 %1066
  %1068 = vrot.lane.b32.xlu0 %v915, 120
  %v1069 = vpop.permute.xlu0 %1068
  %1070 = vrot.lane.b32.xlu0 %v916, 120
  %v1071 = vpop.permute.xlu0 %1070
  %1072 = vrot.lane.b32.xlu0 %v917, 120
  %v1073 = vpop.permute.xlu0 %1072
  %1074 = vrot.lane.b32.xlu0 %v918, 120
  %v1075 = vpop.permute.xlu0 %1074
  %1076 = vrot.lane.b32.xlu0 %v919, 120
  %v1077 = vpop.permute.xlu0 %1076
  %1078 = vrot.lane.b32.xlu0 %v920, 120
  %v1079 = vpop.permute.xlu0 %1078
  %1080 = vrot.lane.b32.xlu0 %v921, 120
  %v1081 = vpop.permute.xlu0 %1080
  %1082 = vrot.lane.b32.xlu0 %v922, 120
  %v1083 = vpop.permute.xlu0 %1082
  %1084 = vrot.lane.b32.xlu0 %v923, 120
  %v1085 = vpop.permute.xlu0 %1084
  %1086 = vrot.lane.b32.xlu0 %v924, 120
  %v1087 = vpop.permute.xlu0 %1086
  %1088 = vrot.lane.b32.xlu0 %v925, 120
  %v1089 = vpop.permute.xlu0 %1088
  %1090 = vrot.lane.b32.xlu0 %v926, 120
  %v1091 = vpop.permute.xlu0 %1090
  %1092 = vrot.lane.b32.xlu0 %v927, 120
  %v1093 = vpop.permute.xlu0 %1092
  %1094 = vrot.lane.b32.xlu0 %v928, 120
  %v1095 = vpop.permute.xlu0 %1094
  %1096 = vrot.lane.b32.xlu0 %v929, 120
  %v1097 = vpop.permute.xlu0 %1096
  %1098 = vrot.lane.b32.xlu0 %v930, 120
  %v1099 = vpop.permute.xlu0 %1098
  %1100 = vrot.lane.b32.xlu0 %v931, 120
  %v1101 = vpop.permute.xlu0 %1100
  %1102 = vrot.lane.b32.xlu0 %v932, 120
  %v1103 = vpop.permute.xlu0 %1102
  %1104 = vrot.lane.b32.xlu0 %v933, 120
  %v1105 = vpop.permute.xlu0 %1104
  %1106 = vrot.lane.b32.xlu0 %v934, 120
  %v1107 = vpop.permute.xlu0 %1106
  %1108 = vrot.lane.b32.xlu0 %v935, 120
  %v1109 = vpop.permute.xlu0 %1108
  %1110 = vrot.lane.b32.xlu0 %v936, 120
  %v1111 = vpop.permute.xlu0 %1110
  %1112 = vrot.lane.b32.xlu0 %v937, 120
  %v1113 = vpop.permute.xlu0 %1112
  %1114 = vrot.lane.b32.xlu0 %v938, 120
  %v1115 = vpop.permute.xlu0 %1114
  %1116 = vrot.lane.b32.xlu0 %v939, 120
  %v1117 = vpop.permute.xlu0 %1116
  %1118 = vrot.lane.b32.xlu0 %v940, 120
  %v1119 = vpop.permute.xlu0 %1118
  %1120 = vrot.lane.b32.xlu0 %v941, 120
  %v1121 = vpop.permute.xlu0 %1120
  %1122 = vrot.lane.b32.xlu0 %v942, 120
  %v1123 = vpop.permute.xlu0 %1122
  %1124 = vrot.lane.b32.xlu0 %v943, 120
  %v1125 = vpop.permute.xlu0 %1124
  %1126 = vrot.lane.b32.xlu0 %v944, 120
  %v1127 = vpop.permute.xlu0 %1126
  %1128 = vrot.lane.b32.xlu0 %v945, 120
  %v1129 = vpop.permute.xlu0 %1128
  %1130 = vrot.lane.b32.xlu0 %v946, 120
  %v1131 = vpop.permute.xlu0 %1130
  %1132 = vrot.lane.b32.xlu0 %v947, 120
  %v1133 = vpop.permute.xlu0 %1132
  %1134 = vrot.lane.b32.xlu0 %v948, 120
  %v1135 = vpop.permute.xlu0 %1134
  %1136 = vrot.lane.b32.xlu0 %v949, 120
  %v1137 = vpop.permute.xlu0 %1136
  %1138 = vrot.lane.b32.xlu0 %v950, 120
  %v1139 = vpop.permute.xlu0 %1138
  %1140 = vrot.lane.b32.xlu0 %v951, 120
  %v1141 = vpop.permute.xlu0 %1140
  %1142 = vrot.lane.b32.xlu0 %v952, 120
  %v1143 = vpop.permute.xlu0 %1142
  %1144 = vrot.lane.b32.xlu0 %v953, 120
  %v1145 = vpop.permute.xlu0 %1144
  %1210 = vmatprep.subr.mxu0 0.0
  %1211 = vmatpush1.msra.mxu0 %v1049
  %1212 = vmatprep.subr.mxu0 0.0
  %1213 = vmatpush1.msra.mxu0 %v1047
  %1214 = vmatprep.subr.mxu0 0.0
  %1215 = vmatpush1.msra.mxu0 %v1045
  %1216 = vmatprep.subr.mxu0 0.0
  %1217 = vmatpush1.msra.mxu0 %v1043
  %1218 = vmatprep.subr.mxu0 0.0
  %1219 = vmatpush1.msra.mxu0 %v1041
  %1220 = vmatprep.subr.mxu0 0.0
  %1221 = vmatpush1.msra.mxu0 %v1039
  %1222 = vmatprep.subr.mxu0 0.0
  %1223 = vmatpush1.msra.mxu0 %v1037
  %1224 = vmatprep.subr.mxu0 0.0
  %1225 = vmatpush1.msra.mxu0 %v1035
  %1226 = vmatprep.subr.mxu0 0.0
  %1227 = vmatpush1.msra.mxu0 %v1033
  %1228 = vmatprep.subr.mxu0 0.0
  %1229 = vmatpush1.msra.mxu0 %v1031
  %1230 = vmatprep.subr.mxu0 0.0
  %1231 = vmatpush1.msra.mxu0 %v1029
  %1232 = vmatprep.subr.mxu0 0.0
  %1233 = vmatpush1.msra.mxu0 %v1027
  %1234 = vmatprep.subr.mxu0 0.0
  %1235 = vmatpush1.msra.mxu0 %v1025
  %1236 = vmatprep.subr.mxu0 0.0
  %1237 = vmatpush1.msra.mxu0 %v1023
  %1238 = vmatprep.subr.mxu0 0.0
  %1239 = vmatpush1.msra.mxu0 %v1021
  %1240 = vmatprep.subr.mxu0 0.0
  %1241 = vmatpush1.msra.mxu0 %v1019
  %1242 = vmatprep.subr.mxu0 0.0
  %1243 = vmatpush2.msra.mxu0 %v1081
  %1244 = vmatprep.subr.mxu0 0.0
  %1245 = vmatpush2.msra.mxu0 %v1079
  %1246 = vmatprep.subr.mxu0 0.0
  %1247 = vmatpush2.msra.mxu0 %v1077
  %1248 = vmatprep.subr.mxu0 0.0
  %1249 = vmatpush2.msra.mxu0 %v1075
  %1250 = vmatprep.subr.mxu0 0.0
  %1251 = vmatpush2.msra.mxu0 %v1073
  %1252 = vmatprep.subr.mxu0 0.0
  %1253 = vmatpush2.msra.mxu0 %v1071
  %1254 = vmatprep.subr.mxu0 0.0
  %1255 = vmatpush2.msra.mxu0 %v1069
  %1256 = vmatprep.subr.mxu0 0.0
  %1257 = vmatpush2.msra.mxu0 %v1067
  %1258 = vmatprep.subr.mxu0 0.0
  %1259 = vmatpush2.msra.mxu0 %v1065
  %1260 = vmatprep.subr.mxu0 0.0
  %1261 = vmatpush2.msra.mxu0 %v1063
  %1262 = vmatprep.subr.mxu0 0.0
  %1263 = vmatpush2.msra.mxu0 %v1061
  %1264 = vmatprep.subr.mxu0 0.0
  %1265 = vmatpush2.msra.mxu0 %v1059
  %1266 = vmatprep.subr.mxu0 0.0
  %1267 = vmatpush2.msra.mxu0 %v1057
  %1268 = vmatprep.subr.mxu0 0.0
  %1269 = vmatpush2.msra.mxu0 %v1055
  %1270 = vmatprep.subr.mxu0 0.0
  %1271 = vmatpush2.msra.mxu0 %v1053
  %1272 = vmatprep.subr.mxu0 0.0
  %1273 = vmatpush2.msra.mxu0 %v1051
  %1274 = vmatprep.mubr.f32.mxu0 1.0
  %1275 = vmatmul.mubr.f32.gmra.mxu0 1.0
  %v1276 = vpop.f32.mrf.mxu0
  %v1277 = vadd.f32 0.0, %v1276
  %v1278 = vpop.f32.mrf.mxu0
  %1279 = vdwg.mxu0
  %1280 = vmatprep.subr.mxu0 0.0
  %1281 = vmatpush1.msra.mxu0 %v1113
  %1282 = vmatprep.subr.mxu0 0.0
  %1283 = vmatpush1.msra.mxu0 %v1111
  %1284 = vmatprep.subr.mxu0 0.0
  %1285 = vmatpush1.msra.mxu0 %v1109
  %1286 = vmatprep.subr.mxu0 0.0
  %1287 = vmatpush1.msra.mxu0 %v1107
  %1288 = vmatprep.subr.mxu0 0.0
  %1289 = vmatpush1.msra.mxu0 %v1105
  %1290 = vmatprep.subr.mxu0 0.0
  %1291 = vmatpush1.msra.mxu0 %v1103
  %1292 = vmatprep.subr.mxu0 0.0
  %1293 = vmatpush1.msra.mxu0 %v1101
  %1294 = vmatprep.subr.mxu0 0.0
  %1295 = vmatpush1.msra.mxu0 %v1099
  %1296 = vmatprep.subr.mxu0 0.0
  %1297 = vmatpush1.msra.mxu0 %v1097
  %1298 = vmatprep.subr.mxu0 0.0
  %1299 = vmatpush1.msra.mxu0 %v1095
  %1300 = vmatprep.subr.mxu0 0.0
  %1301 = vmatpush1.msra.mxu0 %v1093
  %1302 = vmatprep.subr.mxu0 0.0
  %1303 = vmatpush1.msra.mxu0 %v1091
  %1304 = vmatprep.subr.mxu0 0.0
  %1305 = vmatpush1.msra.mxu0 %v1089
  %1306 = vmatprep.subr.mxu0 0.0
  %1307 = vmatpush1.msra.mxu0 %v1087
  %1308 = vmatprep.subr.mxu0 0.0
  %1309 = vmatpush1.msra.mxu0 %v1085
  %1310 = vmatprep.subr.mxu0 0.0
  %1311 = vmatpush1.msra.mxu0 %v1083
  %1312 = vmatprep.subr.mxu0 0.0
  %1313 = vmatpush2.msra.mxu0 %v1145
  %1314 = vmatprep.subr.mxu0 0.0
  %1315 = vmatpush2.msra.mxu0 %v1143
  %1316 = vmatprep.subr.mxu0 0.0
  %1317 = vmatpush2.msra.mxu0 %v1141
  %1318 = vmatprep.subr.mxu0 0.0
  %1319 = vmatpush2.msra.mxu0 %v1139
  %1320 = vmatprep.subr.mxu0 0.0
  %1321 = vmatpush2.msra.mxu0 %v1137
  %1322 = vmatprep.subr.mxu0 0.0
  %1323 = vmatpush2.msra.mxu0 %v1135
  %1324 = vmatprep.subr.mxu0 0.0
  %1325 = vmatpush2.msra.mxu0 %v1133
  %1326 = vmatprep.subr.mxu0 0.0
  %1327 = vmatpush2.msra.mxu0 %v1131
  %1328 = vmatprep.subr.mxu0 0.0
  %1329 = vmatpush2.msra.mxu0 %v1129
  %1330 = vmatprep.subr.mxu0 0.0
  %1331 = vmatpush2.msra.mxu0 %v1127
  %1332 = vmatprep.subr.mxu0 0.0
  %1333 = vmatpush2.msra.mxu0 %v1125
  %1334 = vmatprep.subr.mxu0 0.0
  %1335 = vmatpush2.msra.mxu0 %v1123
  %1336 = vmatprep.subr.mxu0 0.0
  %1337 = vmatpush2.msra.mxu0 %v1121
  %1338 = vmatprep.subr.mxu0 0.0
  %1339 = vmatpush2.msra.mxu0 %v1119
  %1340 = vmatprep.subr.mxu0 0.0
  %1341 = vmatpush2.msra.mxu0 %v1117
  %1342 = vmatprep.subr.mxu0 0.0
  %1343 = vmatpush2.msra.mxu0 %v1115
  %1344 = vmatprep.mubr.f32.mxu0 1.0
  %1345 = vmatmul.mubr.f32.gmra.mxu0 1.0
  %v1346 = vpop.f32.mrf.mxu0
  %v1347 = vadd.f32 %v1277, %v1346
  %v1348 = vpop.f32.mrf.mxu0
  %1349 = vdwg.mxu0
  %v1350 = vmul.f32 %v887, 0.001953125
  %v1351 = vmul.f32 %v1347, 0.001953125
  %v1352 = vmul.f32 %v1350, %v1350
  %v1353 = vsub.f32 %v1351, %v1352
  %v1354 = vmax.f32 %v1353, 0.0
  %v1355 = vld [vmem:[%s1] sm:$0x1]
  %v1356 = vadd.f32 %v1354, 1e-05
  %v1357 = vrsqrt.pop %v1356
  %v1358 = vmul.f32 %v1355, %v1357
  %v1359 = vld [vmem:[%s2] sm:$0x1]
  %v1360 = vmul.f32 %v1350, %v1358
  %v1361 = vsub.f32 %v1359, %v1360
  %v1363 = vlaneseq
  %v1364 = vshrl.u32 %v1363, 7
  %v1365 = vsub.s32 0, %v1364
  %v1366 = vrot.slane %v1358, %v1365
  %1367 = vrot.lane.b32.xlu0 %v1366, 8
  %v1368 = vpop.permute.xlu0 %1367
  %v1370 = vmul.f32 %v430, %v1368
  %v1371 = vmul.f32 %v431, %v1368
  %v1372 = vmul.f32 %v432, %v1368
  %v1373 = vmul.f32 %v433, %v1368
  %v1374 = vmul.f32 %v434, %v1368
  %v1375 = vmul.f32 %v435, %v1368
  %v1376 = vmul.f32 %v436, %v1368
  %v1377 = vmul.f32 %v437, %v1368
  %v1378 = vmul.f32 %v438, %v1368
  %v1379 = vmul.f32 %v439, %v1368
  %v1380 = vmul.f32 %v440, %v1368
  %v1381 = vmul.f32 %v441, %v1368
  %v1382 = vmul.f32 %v442, %v1368
  %v1383 = vmul.f32 %v443, %v1368
  %v1384 = vmul.f32 %v444, %v1368
  %v1385 = vmul.f32 %v445, %v1368
  %v1386 = vmul.f32 %v446, %v1368
  %v1387 = vmul.f32 %v447, %v1368
  %v1388 = vmul.f32 %v448, %v1368
  %v1389 = vmul.f32 %v449, %v1368
  %v1390 = vmul.f32 %v450, %v1368
  %v1391 = vmul.f32 %v451, %v1368
  %v1392 = vmul.f32 %v452, %v1368
  %v1393 = vmul.f32 %v453, %v1368
  %v1394 = vmul.f32 %v454, %v1368
  %v1395 = vmul.f32 %v455, %v1368
  %v1396 = vmul.f32 %v456, %v1368
  %v1397 = vmul.f32 %v457, %v1368
  %v1398 = vmul.f32 %v458, %v1368
  %v1399 = vmul.f32 %v459, %v1368
  %v1400 = vmul.f32 %v460, %v1368
  %v1401 = vmul.f32 %v461, %v1368
  %v1402 = vmul.f32 %v462, %v1368
  %v1403 = vmul.f32 %v463, %v1368
  %v1404 = vmul.f32 %v464, %v1368
  %v1405 = vmul.f32 %v465, %v1368
  %v1406 = vmul.f32 %v466, %v1368
  %v1407 = vmul.f32 %v467, %v1368
  %v1408 = vmul.f32 %v468, %v1368
  %v1409 = vmul.f32 %v469, %v1368
  %v1410 = vmul.f32 %v470, %v1368
  %v1411 = vmul.f32 %v471, %v1368
  %v1412 = vmul.f32 %v472, %v1368
  %v1413 = vmul.f32 %v473, %v1368
  %v1414 = vmul.f32 %v474, %v1368
  %v1415 = vmul.f32 %v475, %v1368
  %v1416 = vmul.f32 %v476, %v1368
  %v1417 = vmul.f32 %v477, %v1368
  %v1418 = vmul.f32 %v478, %v1368
  %v1419 = vmul.f32 %v479, %v1368
  %v1420 = vmul.f32 %v480, %v1368
  %v1421 = vmul.f32 %v481, %v1368
  %v1422 = vmul.f32 %v482, %v1368
  %v1423 = vmul.f32 %v483, %v1368
  %v1424 = vmul.f32 %v484, %v1368
  %v1425 = vmul.f32 %v485, %v1368
  %v1426 = vmul.f32 %v486, %v1368
  %v1427 = vmul.f32 %v487, %v1368
  %v1428 = vmul.f32 %v488, %v1368
  %v1429 = vmul.f32 %v489, %v1368
  %v1430 = vmul.f32 %v490, %v1368
  %v1431 = vmul.f32 %v491, %v1368
  %v1432 = vmul.f32 %v492, %v1368
  %v1433 = vmul.f32 %v493, %v1368
  %v1435 = vlaneseq
  %v1436 = vshrl.u32 %v1435, 7
  %v1437 = vsub.s32 0, %v1436
  %v1438 = vrot.slane %v1361, %v1437
  %1439 = vrot.lane.b32.xlu0 %v1438, 8
  %v1440 = vpop.permute.xlu0 %1439
  %v1442 = vadd.f32 %v1370, %v1440
  %v1443 = vadd.f32 %v1371, %v1440
  %v1444 = vadd.f32 %v1372, %v1440
  %v1445 = vadd.f32 %v1373, %v1440
  %v1446 = vadd.f32 %v1374, %v1440
  %v1447 = vadd.f32 %v1375, %v1440
  %v1448 = vadd.f32 %v1376, %v1440
  %v1449 = vadd.f32 %v1377, %v1440
  %v1450 = vadd.f32 %v1378, %v1440
  %v1451 = vadd.f32 %v1379, %v1440
  %v1452 = vadd.f32 %v1380, %v1440
  %v1453 = vadd.f32 %v1381, %v1440
  %v1454 = vadd.f32 %v1382, %v1440
  %v1455 = vadd.f32 %v1383, %v1440
  %v1456 = vadd.f32 %v1384, %v1440
  %v1457 = vadd.f32 %v1385, %v1440
  %v1458 = vadd.f32 %v1386, %v1440
  %v1459 = vadd.f32 %v1387, %v1440
  %v1460 = vadd.f32 %v1388, %v1440
  %v1461 = vadd.f32 %v1389, %v1440
  %v1462 = vadd.f32 %v1390, %v1440
  %v1463 = vadd.f32 %v1391, %v1440
  %v1464 = vadd.f32 %v1392, %v1440
  %v1465 = vadd.f32 %v1393, %v1440
  %v1466 = vadd.f32 %v1394, %v1440
  %v1467 = vadd.f32 %v1395, %v1440
  %v1468 = vadd.f32 %v1396, %v1440
  %v1469 = vadd.f32 %v1397, %v1440
  %v1470 = vadd.f32 %v1398, %v1440
  %v1471 = vadd.f32 %v1399, %v1440
  %v1472 = vadd.f32 %v1400, %v1440
  %v1473 = vadd.f32 %v1401, %v1440
  %v1474 = vadd.f32 %v1402, %v1440
  %v1475 = vadd.f32 %v1403, %v1440
  %v1476 = vadd.f32 %v1404, %v1440
  %v1477 = vadd.f32 %v1405, %v1440
  %v1478 = vadd.f32 %v1406, %v1440
  %v1479 = vadd.f32 %v1407, %v1440
  %v1480 = vadd.f32 %v1408, %v1440
  %v1481 = vadd.f32 %v1409, %v1440
  %v1482 = vadd.f32 %v1410, %v1440
  %v1483 = vadd.f32 %v1411, %v1440
  %v1484 = vadd.f32 %v1412, %v1440
  %v1485 = vadd.f32 %v1413, %v1440
  %v1486 = vadd.f32 %v1414, %v1440
  %v1487 = vadd.f32 %v1415, %v1440
  %v1488 = vadd.f32 %v1416, %v1440
  %v1489 = vadd.f32 %v1417, %v1440
  %v1490 = vadd.f32 %v1418, %v1440
  %v1491 = vadd.f32 %v1419, %v1440
  %v1492 = vadd.f32 %v1420, %v1440
  %v1493 = vadd.f32 %v1421, %v1440
  %v1494 = vadd.f32 %v1422, %v1440
  %v1495 = vadd.f32 %v1423, %v1440
  %v1496 = vadd.f32 %v1424, %v1440
  %v1497 = vadd.f32 %v1425, %v1440
  %v1498 = vadd.f32 %v1426, %v1440
  %v1499 = vadd.f32 %v1427, %v1440
  %v1500 = vadd.f32 %v1428, %v1440
  %v1501 = vadd.f32 %v1429, %v1440
  %v1502 = vadd.f32 %v1430, %v1440
  %v1503 = vadd.f32 %v1431, %v1440
  %v1504 = vadd.f32 %v1432, %v1440
  %v1505 = vadd.f32 %v1433, %v1440
  %v1506 = vmax.f32 %v1442, 0.0
  %v1507 = vmax.f32 %v1443, 0.0
  %v1508 = vmax.f32 %v1444, 0.0
  %v1509 = vmax.f32 %v1445, 0.0
  %v1510 = vmax.f32 %v1446, 0.0
  %v1511 = vmax.f32 %v1447, 0.0
  %v1512 = vmax.f32 %v1448, 0.0
  %v1513 = vmax.f32 %v1449, 0.0
  %v1514 = vmax.f32 %v1450, 0.0
  %v1515 = vmax.f32 %v1451, 0.0
  %v1516 = vmax.f32 %v1452, 0.0
  %v1517 = vmax.f32 %v1453, 0.0
  %v1518 = vmax.f32 %v1454, 0.0
  %v1519 = vmax.f32 %v1455, 0.0
  %v1520 = vmax.f32 %v1456, 0.0
  %v1521 = vmax.f32 %v1457, 0.0
  %v1522 = vmax.f32 %v1458, 0.0
  %v1523 = vmax.f32 %v1459, 0.0
  %v1524 = vmax.f32 %v1460, 0.0
  %v1525 = vmax.f32 %v1461, 0.0
  %v1526 = vmax.f32 %v1462, 0.0
  %v1527 = vmax.f32 %v1463, 0.0
  %v1528 = vmax.f32 %v1464, 0.0
  %v1529 = vmax.f32 %v1465, 0.0
  %v1530 = vmax.f32 %v1466, 0.0
  %v1531 = vmax.f32 %v1467, 0.0
  %v1532 = vmax.f32 %v1468, 0.0
  %v1533 = vmax.f32 %v1469, 0.0
  %v1534 = vmax.f32 %v1470, 0.0
  %v1535 = vmax.f32 %v1471, 0.0
  %v1536 = vmax.f32 %v1472, 0.0
  %v1537 = vmax.f32 %v1473, 0.0
  %v1538 = vmax.f32 %v1474, 0.0
  %v1539 = vmax.f32 %v1475, 0.0
  %v1540 = vmax.f32 %v1476, 0.0
  %v1541 = vmax.f32 %v1477, 0.0
  %v1542 = vmax.f32 %v1478, 0.0
  %v1543 = vmax.f32 %v1479, 0.0
  %v1544 = vmax.f32 %v1480, 0.0
  %v1545 = vmax.f32 %v1481, 0.0
  %v1546 = vmax.f32 %v1482, 0.0
  %v1547 = vmax.f32 %v1483, 0.0
  %v1548 = vmax.f32 %v1484, 0.0
  %v1549 = vmax.f32 %v1485, 0.0
  %v1550 = vmax.f32 %v1486, 0.0
  %v1551 = vmax.f32 %v1487, 0.0
  %v1552 = vmax.f32 %v1488, 0.0
  %v1553 = vmax.f32 %v1489, 0.0
  %v1554 = vmax.f32 %v1490, 0.0
  %v1555 = vmax.f32 %v1491, 0.0
  %v1556 = vmax.f32 %v1492, 0.0
  %v1557 = vmax.f32 %v1493, 0.0
  %v1558 = vmax.f32 %v1494, 0.0
  %v1559 = vmax.f32 %v1495, 0.0
  %v1560 = vmax.f32 %v1496, 0.0
  %v1561 = vmax.f32 %v1497, 0.0
  %v1562 = vmax.f32 %v1498, 0.0
  %v1563 = vmax.f32 %v1499, 0.0
  %v1564 = vmax.f32 %v1500, 0.0
  %v1565 = vmax.f32 %v1501, 0.0
  %v1566 = vmax.f32 %v1502, 0.0
  %v1567 = vmax.f32 %v1503, 0.0
  %v1568 = vmax.f32 %v1504, 0.0
  %v1569 = vmax.f32 %v1505, 0.0
  %v1570 = vpack.c.bf16 %v1507, %v1506
  %v1571 = vpack.c.bf16 %v1509, %v1508
  %v1572 = vpack.c.bf16 %v1511, %v1510
  %v1573 = vpack.c.bf16 %v1513, %v1512
  %v1574 = vpack.c.bf16 %v1515, %v1514
  %v1575 = vpack.c.bf16 %v1517, %v1516
  %v1576 = vpack.c.bf16 %v1519, %v1518
  %v1577 = vpack.c.bf16 %v1521, %v1520
  %v1578 = vpack.c.bf16 %v1523, %v1522
  %v1579 = vpack.c.bf16 %v1525, %v1524
  %v1580 = vpack.c.bf16 %v1527, %v1526
  %v1581 = vpack.c.bf16 %v1529, %v1528
  %v1582 = vpack.c.bf16 %v1531, %v1530
  %v1583 = vpack.c.bf16 %v1533, %v1532
  %v1584 = vpack.c.bf16 %v1535, %v1534
  %v1585 = vpack.c.bf16 %v1537, %v1536
  %v1586 = vpack.c.bf16 %v1539, %v1538
  %v1587 = vpack.c.bf16 %v1541, %v1540
  %v1588 = vpack.c.bf16 %v1543, %v1542
  %v1589 = vpack.c.bf16 %v1545, %v1544
  %v1590 = vpack.c.bf16 %v1547, %v1546
  %v1591 = vpack.c.bf16 %v1549, %v1548
  %v1592 = vpack.c.bf16 %v1551, %v1550
  %v1593 = vpack.c.bf16 %v1553, %v1552
  %v1594 = vpack.c.bf16 %v1555, %v1554
  %v1595 = vpack.c.bf16 %v1557, %v1556
  %v1596 = vpack.c.bf16 %v1559, %v1558
  %v1597 = vpack.c.bf16 %v1561, %v1560
  %v1598 = vpack.c.bf16 %v1563, %v1562
  %v1599 = vpack.c.bf16 %v1565, %v1564
  %v1600 = vpack.c.bf16 %v1567, %v1566
  %v1601 = vpack.c.bf16 %v1569, %v1568
  %v1602 = vld [vmem:[%s3] sm:$0x3]
  %1635 = vrot.lane.b32.xlu0 %v1570, 120
  %v1636 = vpop.permute.xlu0 %1635
  %1637 = vrot.lane.b32.xlu0 %v1571, 120
  %v1638 = vpop.permute.xlu0 %1637
  %1639 = vrot.lane.b32.xlu0 %v1572, 120
  %v1640 = vpop.permute.xlu0 %1639
  %1641 = vrot.lane.b32.xlu0 %v1573, 120
  %v1642 = vpop.permute.xlu0 %1641
  %1643 = vrot.lane.b32.xlu0 %v1574, 120
  %v1644 = vpop.permute.xlu0 %1643
  %1645 = vrot.lane.b32.xlu0 %v1575, 120
  %v1646 = vpop.permute.xlu0 %1645
  %1647 = vrot.lane.b32.xlu0 %v1576, 120
  %v1648 = vpop.permute.xlu0 %1647
  %1649 = vrot.lane.b32.xlu0 %v1577, 120
  %v1650 = vpop.permute.xlu0 %1649
  %1651 = vrot.lane.b32.xlu0 %v1578, 120
  %v1652 = vpop.permute.xlu0 %1651
  %1653 = vrot.lane.b32.xlu0 %v1579, 120
  %v1654 = vpop.permute.xlu0 %1653
  %1655 = vrot.lane.b32.xlu0 %v1580, 120
  %v1656 = vpop.permute.xlu0 %1655
  %1657 = vrot.lane.b32.xlu0 %v1581, 120
  %v1658 = vpop.permute.xlu0 %1657
  %1659 = vrot.lane.b32.xlu0 %v1582, 120
  %v1660 = vpop.permute.xlu0 %1659
  %1661 = vrot.lane.b32.xlu0 %v1583, 120
  %v1662 = vpop.permute.xlu0 %1661
  %1663 = vrot.lane.b32.xlu0 %v1584, 120
  %v1664 = vpop.permute.xlu0 %1663
  %1665 = vrot.lane.b32.xlu0 %v1585, 120
  %v1666 = vpop.permute.xlu0 %1665
  %1667 = vrot.lane.b32.xlu0 %v1586, 120
  %v1668 = vpop.permute.xlu0 %1667
  %1669 = vrot.lane.b32.xlu0 %v1587, 120
  %v1670 = vpop.permute.xlu0 %1669
  %1671 = vrot.lane.b32.xlu0 %v1588, 120
  %v1672 = vpop.permute.xlu0 %1671
  %1673 = vrot.lane.b32.xlu0 %v1589, 120
  %v1674 = vpop.permute.xlu0 %1673
  %1675 = vrot.lane.b32.xlu0 %v1590, 120
  %v1676 = vpop.permute.xlu0 %1675
  %1677 = vrot.lane.b32.xlu0 %v1591, 120
  %v1678 = vpop.permute.xlu0 %1677
  %1679 = vrot.lane.b32.xlu0 %v1592, 120
  %v1680 = vpop.permute.xlu0 %1679
  %1681 = vrot.lane.b32.xlu0 %v1593, 120
  %v1682 = vpop.permute.xlu0 %1681
  %1683 = vrot.lane.b32.xlu0 %v1594, 120
  %v1684 = vpop.permute.xlu0 %1683
  %1685 = vrot.lane.b32.xlu0 %v1595, 120
  %v1686 = vpop.permute.xlu0 %1685
  %1687 = vrot.lane.b32.xlu0 %v1596, 120
  %v1688 = vpop.permute.xlu0 %1687
  %1689 = vrot.lane.b32.xlu0 %v1597, 120
  %v1690 = vpop.permute.xlu0 %1689
  %1691 = vrot.lane.b32.xlu0 %v1598, 120
  %v1692 = vpop.permute.xlu0 %1691
  %1693 = vrot.lane.b32.xlu0 %v1599, 120
  %v1694 = vpop.permute.xlu0 %1693
  %1695 = vrot.lane.b32.xlu0 %v1600, 120
  %v1696 = vpop.permute.xlu0 %1695
  %1697 = vrot.lane.b32.xlu0 %v1601, 120
  %v1698 = vpop.permute.xlu0 %1697
  %vm1699 = vcmask 31744
  %v1701 = vsel %vm1699, %v1636, 0
  %v1704 = vsel %vm1699, %v1638, 0
  %v1707 = vsel %vm1699, %v1640, 0
  %v1710 = vsel %vm1699, %v1642, 0
  %v1713 = vsel %vm1699, %v1644, 0
  %v1716 = vsel %vm1699, %v1646, 0
  %v1719 = vsel %vm1699, %v1648, 0
  %v1722 = vsel %vm1699, %v1650, 0
  %v1725 = vsel %vm1699, %v1652, 0
  %v1728 = vsel %vm1699, %v1654, 0
  %v1731 = vsel %vm1699, %v1656, 0
  %v1734 = vsel %vm1699, %v1658, 0
  %v1737 = vsel %vm1699, %v1660, 0
  %v1740 = vsel %vm1699, %v1662, 0
  %v1743 = vsel %vm1699, %v1664, 0
  %v1746 = vsel %vm1699, %v1666, 0
  %v1749 = vsel %vm1699, %v1668, 0
  %v1752 = vsel %vm1699, %v1670, 0
  %v1755 = vsel %vm1699, %v1672, 0
  %v1758 = vsel %vm1699, %v1674, 0
  %v1761 = vsel %vm1699, %v1676, 0
  %v1764 = vsel %vm1699, %v1678, 0
  %v1767 = vsel %vm1699, %v1680, 0
  %v1770 = vsel %vm1699, %v1682, 0
  %v1773 = vsel %vm1699, %v1684, 0
  %v1776 = vsel %vm1699, %v1686, 0
  %v1779 = vsel %vm1699, %v1688, 0
  %v1782 = vsel %vm1699, %v1690, 0
  %v1785 = vsel %vm1699, %v1692, 0
  %v1788 = vsel %vm1699, %v1694, 0
  %v1791 = vsel %vm1699, %v1696, 0
  %v1794 = vsel %vm1699, %v1698, 0
  %vm1796 = vcmask 1041408
  %v1798 = vsel %vm1796, %v1602, 0
  %1800 = vmatprep.subr.bf16.mxu0 0
  %1801 = vmatpush1.bf16.msra.mxu0 0
  %1802 = vmatprep.subr.bf16.mxu0 0
  %1803 = vmatpush1.bf16.msra.mxu0 0
  %1804 = vmatprep.subr.bf16.mxu0 0
  %1805 = vmatpush1.bf16.msra.mxu0 0
  %1806 = vmatprep.subr.bf16.mxu0 0
  %1807 = vmatpush1.bf16.msra.mxu0 0
  %1808 = vmatprep.subr.bf16.mxu0 0
  %1809 = vmatpush1.bf16.msra.mxu0 0
  %1810 = vmatprep.subr.bf16.mxu0 0
  %1811 = vmatpush1.bf16.msra.mxu0 0
  %1812 = vmatprep.subr.bf16.mxu0 0
  %1813 = vmatpush1.bf16.msra.mxu0 0
  %1814 = vmatprep.subr.bf16.mxu0 0
  %1815 = vmatpush1.bf16.msra.mxu0 %v1798
  %1816 = vmatprep.subr.bf16.mxu0 0
  %1817 = vmatpush2.bf16.msra.mxu0 0
  %1818 = vmatprep.subr.bf16.mxu0 0
  %1819 = vmatpush2.bf16.msra.mxu0 0
  %1820 = vmatprep.subr.bf16.mxu0 0
  %1821 = vmatpush2.bf16.msra.mxu0 0
  %1822 = vmatprep.subr.bf16.mxu0 0
  %1823 = vmatpush2.bf16.msra.mxu0 0
  %1824 = vmatprep.subr.bf16.mxu0 0
  %1825 = vmatpush2.bf16.msra.mxu0 0
  %1826 = vmatprep.subr.bf16.mxu0 0
  %1827 = vmatpush2.bf16.msra.mxu0 0
  %1828 = vmatprep.subr.bf16.mxu0 0
  %1829 = vmatpush2.bf16.msra.mxu0 0
  %1830 = vmatprep.subr.bf16.mxu0 0
  %1831 = vmatpush2.bf16.msra.mxu0 0
  %1832 = vmatprep.mubr.bf16.mxu0 0
  %1833 = vmatmul.mubr.bf16.gmra.mxu0 %v1701
  %v1834 = vpop.f32.mrf.mxu0
  %v1835 = vadd.f32 0.0, %v1834
  %v1836 = vpop.f32.mrf.mxu0
  %v1837 = vpop.f32.mrf.mxu0
  %v1838 = vadd.f32 0.0, %v1837
  %v1839 = vpop.f32.mrf.mxu0
  %1840 = vmatprep.mubr.bf16.mxu0 0
  %1841 = vmatmul.mubr.bf16.gmra.mxu0 %v1704
  %v1842 = vpop.f32.mrf.mxu0
  %v1843 = vadd.f32 0.0, %v1842
  %v1844 = vpop.f32.mrf.mxu0
  %v1845 = vpop.f32.mrf.mxu0
  %v1846 = vadd.f32 0.0, %v1845
  %v1847 = vpop.f32.mrf.mxu0
  %1848 = vmatprep.mubr.bf16.mxu0 0
  %1849 = vmatmul.mubr.bf16.gmra.mxu0 %v1707
  %v1850 = vpop.f32.mrf.mxu0
  %v1851 = vadd.f32 0.0, %v1850
  %v1852 = vpop.f32.mrf.mxu0
  %v1853 = vpop.f32.mrf.mxu0
  %v1854 = vadd.f32 0.0, %v1853
  %v1855 = vpop.f32.mrf.mxu0
  %1856 = vmatprep.mubr.bf16.mxu0 0
  %1857 = vmatmul.mubr.bf16.gmra.mxu0 %v1710
  %v1858 = vpop.f32.mrf.mxu0
  %v1859 = vadd.f32 0.0, %v1858
  %v1860 = vpop.f32.mrf.mxu0
  %v1861 = vpop.f32.mrf.mxu0
  %v1862 = vadd.f32 0.0, %v1861
  %v1863 = vpop.f32.mrf.mxu0
  %1864 = vmatprep.mubr.bf16.mxu0 0
  %1865 = vmatmul.mubr.bf16.gmra.mxu0 %v1713
  %v1866 = vpop.f32.mrf.mxu0
  %v1867 = vadd.f32 0.0, %v1866
  %v1868 = vpop.f32.mrf.mxu0
  %v1869 = vpop.f32.mrf.mxu0
  %v1870 = vadd.f32 0.0, %v1869
  %v1871 = vpop.f32.mrf.mxu0
  %1872 = vmatprep.mubr.bf16.mxu0 0
  %1873 = vmatmul.mubr.bf16.gmra.mxu0 %v1716
  %v1874 = vpop.f32.mrf.mxu0
  %v1875 = vadd.f32 0.0, %v1874
  %v1876 = vpop.f32.mrf.mxu0
  %v1877 = vpop.f32.mrf.mxu0
  %v1878 = vadd.f32 0.0, %v1877
  %v1879 = vpop.f32.mrf.mxu0
  %1880 = vmatprep.mubr.bf16.mxu0 0
  %1881 = vmatmul.mubr.bf16.gmra.mxu0 %v1719
  %v1882 = vpop.f32.mrf.mxu0
  %v1883 = vadd.f32 0.0, %v1882
  %v1884 = vpop.f32.mrf.mxu0
  %v1885 = vpop.f32.mrf.mxu0
  %v1886 = vadd.f32 0.0, %v1885
  %v1887 = vpop.f32.mrf.mxu0
  %1888 = vmatprep.mubr.bf16.mxu0 0
  %1889 = vmatmul.mubr.bf16.gmra.mxu0 %v1722
  %v1890 = vpop.f32.mrf.mxu0
  %v1891 = vadd.f32 0.0, %v1890
  %v1892 = vpop.f32.mrf.mxu0
  %v1893 = vpop.f32.mrf.mxu0
  %v1894 = vadd.f32 0.0, %v1893
  %v1895 = vpop.f32.mrf.mxu0
  %1896 = vmatprep.mubr.bf16.mxu0 0
  %1897 = vmatmul.mubr.bf16.gmra.mxu0 %v1725
  %v1898 = vpop.f32.mrf.mxu0
  %v1899 = vadd.f32 0.0, %v1898
  %v1900 = vpop.f32.mrf.mxu0
  %v1901 = vpop.f32.mrf.mxu0
  %v1902 = vadd.f32 0.0, %v1901
  %v1903 = vpop.f32.mrf.mxu0
  %1904 = vmatprep.mubr.bf16.mxu0 0
  %1905 = vmatmul.mubr.bf16.gmra.mxu0 %v1728
  %v1906 = vpop.f32.mrf.mxu0
  %v1907 = vadd.f32 0.0, %v1906
  %v1908 = vpop.f32.mrf.mxu0
  %v1909 = vpop.f32.mrf.mxu0
  %v1910 = vadd.f32 0.0, %v1909
  %v1911 = vpop.f32.mrf.mxu0
  %1912 = vmatprep.mubr.bf16.mxu0 0
  %1913 = vmatmul.mubr.bf16.gmra.mxu0 %v1731
  %v1914 = vpop.f32.mrf.mxu0
  %v1915 = vadd.f32 0.0, %v1914
  %v1916 = vpop.f32.mrf.mxu0
  %v1917 = vpop.f32.mrf.mxu0
  %v1918 = vadd.f32 0.0, %v1917
  %v1919 = vpop.f32.mrf.mxu0
  %1920 = vmatprep.mubr.bf16.mxu0 0
  %1921 = vmatmul.mubr.bf16.gmra.mxu0 %v1734
  %v1922 = vpop.f32.mrf.mxu0
  %v1923 = vadd.f32 0.0, %v1922
  %v1924 = vpop.f32.mrf.mxu0
  %v1925 = vpop.f32.mrf.mxu0
  %v1926 = vadd.f32 0.0, %v1925
  %v1927 = vpop.f32.mrf.mxu0
  %1928 = vmatprep.mubr.bf16.mxu0 0
  %1929 = vmatmul.mubr.bf16.gmra.mxu0 %v1737
  %v1930 = vpop.f32.mrf.mxu0
  %v1931 = vadd.f32 0.0, %v1930
  %v1932 = vpop.f32.mrf.mxu0
  %v1933 = vpop.f32.mrf.mxu0
  %v1934 = vadd.f32 0.0, %v1933
  %v1935 = vpop.f32.mrf.mxu0
  %1936 = vmatprep.mubr.bf16.mxu0 0
  %1937 = vmatmul.mubr.bf16.gmra.mxu0 %v1740
  %v1938 = vpop.f32.mrf.mxu0
  %v1939 = vadd.f32 0.0, %v1938
  %v1940 = vpop.f32.mrf.mxu0
  %v1941 = vpop.f32.mrf.mxu0
  %v1942 = vadd.f32 0.0, %v1941
  %v1943 = vpop.f32.mrf.mxu0
  %1944 = vmatprep.mubr.bf16.mxu0 0
  %1945 = vmatmul.mubr.bf16.gmra.mxu0 %v1743
  %v1946 = vpop.f32.mrf.mxu0
  %v1947 = vadd.f32 0.0, %v1946
  %v1948 = vpop.f32.mrf.mxu0
  %v1949 = vpop.f32.mrf.mxu0
  %v1950 = vadd.f32 0.0, %v1949
  %v1951 = vpop.f32.mrf.mxu0
  %1952 = vmatprep.mubr.bf16.mxu0 0
  %1953 = vmatmul.mubr.bf16.gmra.mxu0 %v1746
  %v1954 = vpop.f32.mrf.mxu0
  %v1955 = vadd.f32 0.0, %v1954
  %v1956 = vpop.f32.mrf.mxu0
  %v1957 = vpop.f32.mrf.mxu0
  %v1958 = vadd.f32 0.0, %v1957
  %v1959 = vpop.f32.mrf.mxu0
  %1960 = vmatprep.mubr.bf16.mxu0 0
  %1961 = vmatmul.mubr.bf16.gmra.mxu0 %v1749
  %v1962 = vpop.f32.mrf.mxu0
  %v1963 = vadd.f32 0.0, %v1962
  %v1964 = vpop.f32.mrf.mxu0
  %v1965 = vpop.f32.mrf.mxu0
  %v1966 = vadd.f32 0.0, %v1965
  %v1967 = vpop.f32.mrf.mxu0
  %1968 = vmatprep.mubr.bf16.mxu0 0
  %1969 = vmatmul.mubr.bf16.gmra.mxu0 %v1752
  %v1970 = vpop.f32.mrf.mxu0
  %v1971 = vadd.f32 0.0, %v1970
  %v1972 = vpop.f32.mrf.mxu0
  %v1973 = vpop.f32.mrf.mxu0
  %v1974 = vadd.f32 0.0, %v1973
  %v1975 = vpop.f32.mrf.mxu0
  %1976 = vmatprep.mubr.bf16.mxu0 0
  %1977 = vmatmul.mubr.bf16.gmra.mxu0 %v1755
  %v1978 = vpop.f32.mrf.mxu0
  %v1979 = vadd.f32 0.0, %v1978
  %v1980 = vpop.f32.mrf.mxu0
  %v1981 = vpop.f32.mrf.mxu0
  %v1982 = vadd.f32 0.0, %v1981
  %v1983 = vpop.f32.mrf.mxu0
  %1984 = vmatprep.mubr.bf16.mxu0 0
  %1985 = vmatmul.mubr.bf16.gmra.mxu0 %v1758
  %v1986 = vpop.f32.mrf.mxu0
  %v1987 = vadd.f32 0.0, %v1986
  %v1988 = vpop.f32.mrf.mxu0
  %v1989 = vpop.f32.mrf.mxu0
  %v1990 = vadd.f32 0.0, %v1989
  %v1991 = vpop.f32.mrf.mxu0
  %1992 = vmatprep.mubr.bf16.mxu0 0
  %1993 = vmatmul.mubr.bf16.gmra.mxu0 %v1761
  %v1994 = vpop.f32.mrf.mxu0
  %v1995 = vadd.f32 0.0, %v1994
  %v1996 = vpop.f32.mrf.mxu0
  %v1997 = vpop.f32.mrf.mxu0
  %v1998 = vadd.f32 0.0, %v1997
  %v1999 = vpop.f32.mrf.mxu0
  %2000 = vmatprep.mubr.bf16.mxu0 0
  %2001 = vmatmul.mubr.bf16.gmra.mxu0 %v1764
  %v2002 = vpop.f32.mrf.mxu0
  %v2003 = vadd.f32 0.0, %v2002
  %v2004 = vpop.f32.mrf.mxu0
  %v2005 = vpop.f32.mrf.mxu0
  %v2006 = vadd.f32 0.0, %v2005
  %v2007 = vpop.f32.mrf.mxu0
  %2008 = vmatprep.mubr.bf16.mxu0 0
  %2009 = vmatmul.mubr.bf16.gmra.mxu0 %v1767
  %v2010 = vpop.f32.mrf.mxu0
  %v2011 = vadd.f32 0.0, %v2010
  %v2012 = vpop.f32.mrf.mxu0
  %v2013 = vpop.f32.mrf.mxu0
  %v2014 = vadd.f32 0.0, %v2013
  %v2015 = vpop.f32.mrf.mxu0
  %2016 = vmatprep.mubr.bf16.mxu0 0
  %2017 = vmatmul.mubr.bf16.gmra.mxu0 %v1770
  %v2018 = vpop.f32.mrf.mxu0
  %v2019 = vadd.f32 0.0, %v2018
  %v2020 = vpop.f32.mrf.mxu0
  %v2021 = vpop.f32.mrf.mxu0
  %v2022 = vadd.f32 0.0, %v2021
  %v2023 = vpop.f32.mrf.mxu0
  %2024 = vmatprep.mubr.bf16.mxu0 0
  %2025 = vmatmul.mubr.bf16.gmra.mxu0 %v1773
  %v2026 = vpop.f32.mrf.mxu0
  %v2027 = vadd.f32 0.0, %v2026
  %v2028 = vpop.f32.mrf.mxu0
  %v2029 = vpop.f32.mrf.mxu0
  %v2030 = vadd.f32 0.0, %v2029
  %v2031 = vpop.f32.mrf.mxu0
  %2032 = vmatprep.mubr.bf16.mxu0 0
  %2033 = vmatmul.mubr.bf16.gmra.mxu0 %v1776
  %v2034 = vpop.f32.mrf.mxu0
  %v2035 = vadd.f32 0.0, %v2034
  %v2036 = vpop.f32.mrf.mxu0
  %v2037 = vpop.f32.mrf.mxu0
  %v2038 = vadd.f32 0.0, %v2037
  %v2039 = vpop.f32.mrf.mxu0
  %2040 = vmatprep.mubr.bf16.mxu0 0
  %2041 = vmatmul.mubr.bf16.gmra.mxu0 %v1779
  %v2042 = vpop.f32.mrf.mxu0
  %v2043 = vadd.f32 0.0, %v2042
  %v2044 = vpop.f32.mrf.mxu0
  %v2045 = vpop.f32.mrf.mxu0
  %v2046 = vadd.f32 0.0, %v2045
  %v2047 = vpop.f32.mrf.mxu0
  %2048 = vmatprep.mubr.bf16.mxu0 0
  %2049 = vmatmul.mubr.bf16.gmra.mxu0 %v1782
  %v2050 = vpop.f32.mrf.mxu0
  %v2051 = vadd.f32 0.0, %v2050
  %v2052 = vpop.f32.mrf.mxu0
  %v2053 = vpop.f32.mrf.mxu0
  %v2054 = vadd.f32 0.0, %v2053
  %v2055 = vpop.f32.mrf.mxu0
  %2056 = vmatprep.mubr.bf16.mxu0 0
  %2057 = vmatmul.mubr.bf16.gmra.mxu0 %v1785
  %v2058 = vpop.f32.mrf.mxu0
  %v2059 = vadd.f32 0.0, %v2058
  %v2060 = vpop.f32.mrf.mxu0
  %v2061 = vpop.f32.mrf.mxu0
  %v2062 = vadd.f32 0.0, %v2061
  %v2063 = vpop.f32.mrf.mxu0
  %2064 = vmatprep.mubr.bf16.mxu0 0
  %2065 = vmatmul.mubr.bf16.gmra.mxu0 %v1788
  %v2066 = vpop.f32.mrf.mxu0
  %v2067 = vadd.f32 0.0, %v2066
  %v2068 = vpop.f32.mrf.mxu0
  %v2069 = vpop.f32.mrf.mxu0
  %v2070 = vadd.f32 0.0, %v2069
  %v2071 = vpop.f32.mrf.mxu0
  %2072 = vmatprep.mubr.bf16.mxu0 0
  %2073 = vmatmul.mubr.bf16.gmra.mxu0 %v1791
  %v2074 = vpop.f32.mrf.mxu0
  %v2075 = vadd.f32 0.0, %v2074
  %v2076 = vpop.f32.mrf.mxu0
  %v2077 = vpop.f32.mrf.mxu0
  %v2078 = vadd.f32 0.0, %v2077
  %v2079 = vpop.f32.mrf.mxu0
  %2080 = vmatprep.mubr.bf16.mxu0 0
  %2081 = vmatmul.mubr.bf16.gmra.mxu0 %v1794
  %v2082 = vpop.f32.mrf.mxu0
  %v2083 = vadd.f32 0.0, %v2082
  %v2084 = vpop.f32.mrf.mxu0
  %v2085 = vpop.f32.mrf.mxu0
  %v2086 = vadd.f32 0.0, %v2085
  %v2087 = vpop.f32.mrf.mxu0
  %2088 = vdwg.mxu0
  %2089 = vmatprep.subr.mxu0 0.0
  %2090 = vmatpush1.msra.mxu0 %v1894
  %2091 = vmatprep.subr.mxu0 0.0
  %2092 = vmatpush1.msra.mxu0 %v1891
  %2093 = vmatprep.subr.mxu0 0.0
  %2094 = vmatpush1.msra.mxu0 %v1886
  %2095 = vmatprep.subr.mxu0 0.0
  %2096 = vmatpush1.msra.mxu0 %v1883
  %2097 = vmatprep.subr.mxu0 0.0
  %2098 = vmatpush1.msra.mxu0 %v1878
  %2099 = vmatprep.subr.mxu0 0.0
  %2100 = vmatpush1.msra.mxu0 %v1875
  %2101 = vmatprep.subr.mxu0 0.0
  %2102 = vmatpush1.msra.mxu0 %v1870
  %2103 = vmatprep.subr.mxu0 0.0
  %2104 = vmatpush1.msra.mxu0 %v1867
  %2105 = vmatprep.subr.mxu0 0.0
  %2106 = vmatpush1.msra.mxu0 %v1862
  %2107 = vmatprep.subr.mxu0 0.0
  %2108 = vmatpush1.msra.mxu0 %v1859
  %2109 = vmatprep.subr.mxu0 0.0
  %2110 = vmatpush1.msra.mxu0 %v1854
  %2111 = vmatprep.subr.mxu0 0.0
  %2112 = vmatpush1.msra.mxu0 %v1851
  %2113 = vmatprep.subr.mxu0 0.0
  %2114 = vmatpush1.msra.mxu0 %v1846
  %2115 = vmatprep.subr.mxu0 0.0
  %2116 = vmatpush1.msra.mxu0 %v1843
  %2117 = vmatprep.subr.mxu0 0.0
  %2118 = vmatpush1.msra.mxu0 %v1838
  %2119 = vmatprep.subr.mxu0 0.0
  %2120 = vmatpush1.msra.mxu0 %v1835
  %2121 = vmatprep.subr.mxu0 0.0
  %2122 = vmatpush2.msra.mxu0 %v1958
  %2123 = vmatprep.subr.mxu0 0.0
  %2124 = vmatpush2.msra.mxu0 %v1955
  %2125 = vmatprep.subr.mxu0 0.0
  %2126 = vmatpush2.msra.mxu0 %v1950
  %2127 = vmatprep.subr.mxu0 0.0
  %2128 = vmatpush2.msra.mxu0 %v1947
  %2129 = vmatprep.subr.mxu0 0.0
  %2130 = vmatpush2.msra.mxu0 %v1942
  %2131 = vmatprep.subr.mxu0 0.0
  %2132 = vmatpush2.msra.mxu0 %v1939
  %2133 = vmatprep.subr.mxu0 0.0
  %2134 = vmatpush2.msra.mxu0 %v1934
  %2135 = vmatprep.subr.mxu0 0.0
  %2136 = vmatpush2.msra.mxu0 %v1931
  %2137 = vmatprep.subr.mxu0 0.0
  %2138 = vmatpush2.msra.mxu0 %v1926
  %2139 = vmatprep.subr.mxu0 0.0
  %2140 = vmatpush2.msra.mxu0 %v1923
  %2141 = vmatprep.subr.mxu0 0.0
  %2142 = vmatpush2.msra.mxu0 %v1918
  %2143 = vmatprep.subr.mxu0 0.0
  %2144 = vmatpush2.msra.mxu0 %v1915
  %2145 = vmatprep.subr.mxu0 0.0
  %2146 = vmatpush2.msra.mxu0 %v1910
  %2147 = vmatprep.subr.mxu0 0.0
  %2148 = vmatpush2.msra.mxu0 %v1907
  %2149 = vmatprep.subr.mxu0 0.0
  %2150 = vmatpush2.msra.mxu0 %v1902
  %2151 = vmatprep.subr.mxu0 0.0
  %2152 = vmatpush2.msra.mxu0 %v1899
  %2153 = vmatprep.mubr.f32.mxu0 1.0
  %2154 = vmatmul.mubr.f32.gmra.mxu0 1.0
  %v2155 = vpop.f32.mrf.mxu0
  %v2156 = vadd.f32 0.0, %v2155
  %v2157 = vpop.f32.mrf.mxu0
  %2158 = vdwg.mxu0
  %2159 = vmatprep.subr.mxu0 0.0
  %2160 = vmatpush1.msra.mxu0 %v2022
  %2161 = vmatprep.subr.mxu0 0.0
  %2162 = vmatpush1.msra.mxu0 %v2019
  %2163 = vmatprep.subr.mxu0 0.0
  %2164 = vmatpush1.msra.mxu0 %v2014
  %2165 = vmatprep.subr.mxu0 0.0
  %2166 = vmatpush1.msra.mxu0 %v2011
  %2167 = vmatprep.subr.mxu0 0.0
  %2168 = vmatpush1.msra.mxu0 %v2006
  %2169 = vmatprep.subr.mxu0 0.0
  %2170 = vmatpush1.msra.mxu0 %v2003
  %2171 = vmatprep.subr.mxu0 0.0
  %2172 = vmatpush1.msra.mxu0 %v1998
  %2173 = vmatprep.subr.mxu0 0.0
  %2174 = vmatpush1.msra.mxu0 %v1995
  %2175 = vmatprep.subr.mxu0 0.0
  %2176 = vmatpush1.msra.mxu0 %v1990
  %2177 = vmatprep.subr.mxu0 0.0
  %2178 = vmatpush1.msra.mxu0 %v1987
  %2179 = vmatprep.subr.mxu0 0.0
  %2180 = vmatpush1.msra.mxu0 %v1982
  %2181 = vmatprep.subr.mxu0 0.0
  %2182 = vmatpush1.msra.mxu0 %v1979
  %2183 = vmatprep.subr.mxu0 0.0
  %2184 = vmatpush1.msra.mxu0 %v1974
  %2185 = vmatprep.subr.mxu0 0.0
  %2186 = vmatpush1.msra.mxu0 %v1971
  %2187 = vmatprep.subr.mxu0 0.0
  %2188 = vmatpush1.msra.mxu0 %v1966
  %2189 = vmatprep.subr.mxu0 0.0
  %2190 = vmatpush1.msra.mxu0 %v1963
  %2191 = vmatprep.subr.mxu0 0.0
  %2192 = vmatpush2.msra.mxu0 %v2086
  %2193 = vmatprep.subr.mxu0 0.0
  %2194 = vmatpush2.msra.mxu0 %v2083
  %2195 = vmatprep.subr.mxu0 0.0
  %2196 = vmatpush2.msra.mxu0 %v2078
  %2197 = vmatprep.subr.mxu0 0.0
  %2198 = vmatpush2.msra.mxu0 %v2075
  %2199 = vmatprep.subr.mxu0 0.0
  %2200 = vmatpush2.msra.mxu0 %v2070
  %2201 = vmatprep.subr.mxu0 0.0
  %2202 = vmatpush2.msra.mxu0 %v2067
  %2203 = vmatprep.subr.mxu0 0.0
  %2204 = vmatpush2.msra.mxu0 %v2062
  %2205 = vmatprep.subr.mxu0 0.0
  %2206 = vmatpush2.msra.mxu0 %v2059
  %2207 = vmatprep.subr.mxu0 0.0
  %2208 = vmatpush2.msra.mxu0 %v2054
  %2209 = vmatprep.subr.mxu0 0.0
  %2210 = vmatpush2.msra.mxu0 %v2051
  %2211 = vmatprep.subr.mxu0 0.0
  %2212 = vmatpush2.msra.mxu0 %v2046
  %2213 = vmatprep.subr.mxu0 0.0
  %2214 = vmatpush2.msra.mxu0 %v2043
  %2215 = vmatprep.subr.mxu0 0.0
  %2216 = vmatpush2.msra.mxu0 %v2038
  %2217 = vmatprep.subr.mxu0 0.0
  %2218 = vmatpush2.msra.mxu0 %v2035
  %2219 = vmatprep.subr.mxu0 0.0
  %2220 = vmatpush2.msra.mxu0 %v2030
  %2221 = vmatprep.subr.mxu0 0.0
  %2222 = vmatpush2.msra.mxu0 %v2027
  %2223 = vmatprep.mubr.f32.mxu0 1.0
  %2224 = vmatmul.mubr.f32.gmra.mxu0 1.0
  %v2225 = vpop.f32.mrf.mxu0
  %v2226 = vadd.f32 %v2156, %v2225
  %v2227 = vpop.f32.mrf.mxu0
  %2228 = vdwg.mxu0
  %v2229 = vmul.f32 %v1835, %v1835
  %v2230 = vmul.f32 %v1838, %v1838
  %v2231 = vmul.f32 %v1843, %v1843
  %v2232 = vmul.f32 %v1846, %v1846
  %v2233 = vmul.f32 %v1851, %v1851
  %v2234 = vmul.f32 %v1854, %v1854
  %v2235 = vmul.f32 %v1859, %v1859
  %v2236 = vmul.f32 %v1862, %v1862
  %v2237 = vmul.f32 %v1867, %v1867
  %v2238 = vmul.f32 %v1870, %v1870
  %v2239 = vmul.f32 %v1875, %v1875
  %v2240 = vmul.f32 %v1878, %v1878
  %v2241 = vmul.f32 %v1883, %v1883
  %v2242 = vmul.f32 %v1886, %v1886
  %v2243 = vmul.f32 %v1891, %v1891
  %v2244 = vmul.f32 %v1894, %v1894
  %v2245 = vmul.f32 %v1899, %v1899
  %v2246 = vmul.f32 %v1902, %v1902
  %v2247 = vmul.f32 %v1907, %v1907
  %v2248 = vmul.f32 %v1910, %v1910
  %v2249 = vmul.f32 %v1915, %v1915
  %v2250 = vmul.f32 %v1918, %v1918
  %v2251 = vmul.f32 %v1923, %v1923
  %v2252 = vmul.f32 %v1926, %v1926
  %v2253 = vmul.f32 %v1931, %v1931
  %v2254 = vmul.f32 %v1934, %v1934
  %v2255 = vmul.f32 %v1939, %v1939
  %v2256 = vmul.f32 %v1942, %v1942
  %v2257 = vmul.f32 %v1947, %v1947
  %v2258 = vmul.f32 %v1950, %v1950
  %v2259 = vmul.f32 %v1955, %v1955
  %v2260 = vmul.f32 %v1958, %v1958
  %v2261 = vmul.f32 %v1963, %v1963
  %v2262 = vmul.f32 %v1966, %v1966
  %v2263 = vmul.f32 %v1971, %v1971
  %v2264 = vmul.f32 %v1974, %v1974
  %v2265 = vmul.f32 %v1979, %v1979
  %v2266 = vmul.f32 %v1982, %v1982
  %v2267 = vmul.f32 %v1987, %v1987
  %v2268 = vmul.f32 %v1990, %v1990
  %v2269 = vmul.f32 %v1995, %v1995
  %v2270 = vmul.f32 %v1998, %v1998
  %v2271 = vmul.f32 %v2003, %v2003
  %v2272 = vmul.f32 %v2006, %v2006
  %v2273 = vmul.f32 %v2011, %v2011
  %v2274 = vmul.f32 %v2014, %v2014
  %v2275 = vmul.f32 %v2019, %v2019
  %v2276 = vmul.f32 %v2022, %v2022
  %v2277 = vmul.f32 %v2027, %v2027
  %v2278 = vmul.f32 %v2030, %v2030
  %v2279 = vmul.f32 %v2035, %v2035
  %v2280 = vmul.f32 %v2038, %v2038
  %v2281 = vmul.f32 %v2043, %v2043
  %v2282 = vmul.f32 %v2046, %v2046
  %v2283 = vmul.f32 %v2051, %v2051
  %v2284 = vmul.f32 %v2054, %v2054
  %v2285 = vmul.f32 %v2059, %v2059
  %v2286 = vmul.f32 %v2062, %v2062
  %v2287 = vmul.f32 %v2067, %v2067
  %v2288 = vmul.f32 %v2070, %v2070
  %v2289 = vmul.f32 %v2075, %v2075
  %v2290 = vmul.f32 %v2078, %v2078
  %v2291 = vmul.f32 %v2083, %v2083
  %v2292 = vmul.f32 %v2086, %v2086
  %2293 = vmatprep.subr.mxu0 0.0
  %2294 = vmatpush1.msra.mxu0 %v2244
  %2295 = vmatprep.subr.mxu0 0.0
  %2296 = vmatpush1.msra.mxu0 %v2243
  %2297 = vmatprep.subr.mxu0 0.0
  %2298 = vmatpush1.msra.mxu0 %v2242
  %2299 = vmatprep.subr.mxu0 0.0
  %2300 = vmatpush1.msra.mxu0 %v2241
  %2301 = vmatprep.subr.mxu0 0.0
  %2302 = vmatpush1.msra.mxu0 %v2240
  %2303 = vmatprep.subr.mxu0 0.0
  %2304 = vmatpush1.msra.mxu0 %v2239
  %2305 = vmatprep.subr.mxu0 0.0
  %2306 = vmatpush1.msra.mxu0 %v2238
  %2307 = vmatprep.subr.mxu0 0.0
  %2308 = vmatpush1.msra.mxu0 %v2237
  %2309 = vmatprep.subr.mxu0 0.0
  %2310 = vmatpush1.msra.mxu0 %v2236
  %2311 = vmatprep.subr.mxu0 0.0
  %2312 = vmatpush1.msra.mxu0 %v2235
  %2313 = vmatprep.subr.mxu0 0.0
  %2314 = vmatpush1.msra.mxu0 %v2234
  %2315 = vmatprep.subr.mxu0 0.0
  %2316 = vmatpush1.msra.mxu0 %v2233
  %2317 = vmatprep.subr.mxu0 0.0
  %2318 = vmatpush1.msra.mxu0 %v2232
  %2319 = vmatprep.subr.mxu0 0.0
  %2320 = vmatpush1.msra.mxu0 %v2231
  %2321 = vmatprep.subr.mxu0 0.0
  %2322 = vmatpush1.msra.mxu0 %v2230
  %2323 = vmatprep.subr.mxu0 0.0
  %2324 = vmatpush1.msra.mxu0 %v2229
  %2325 = vmatprep.subr.mxu0 0.0
  %2326 = vmatpush2.msra.mxu0 %v2260
  %2327 = vmatprep.subr.mxu0 0.0
  %2328 = vmatpush2.msra.mxu0 %v2259
  %2329 = vmatprep.subr.mxu0 0.0
  %2330 = vmatpush2.msra.mxu0 %v2258
  %2331 = vmatprep.subr.mxu0 0.0
  %2332 = vmatpush2.msra.mxu0 %v2257
  %2333 = vmatprep.subr.mxu0 0.0
  %2334 = vmatpush2.msra.mxu0 %v2256
  %2335 = vmatprep.subr.mxu0 0.0
  %2336 = vmatpush2.msra.mxu0 %v2255
  %2337 = vmatprep.subr.mxu0 0.0
  %2338 = vmatpush2.msra.mxu0 %v2254
  %2339 = vmatprep.subr.mxu0 0.0
  %2340 = vmatpush2.msra.mxu0 %v2253
  %2341 = vmatprep.subr.mxu0 0.0
  %2342 = vmatpush2.msra.mxu0 %v2252
  %2343 = vmatprep.subr.mxu0 0.0
  %2344 = vmatpush2.msra.mxu0 %v2251
  %2345 = vmatprep.subr.mxu0 0.0
  %2346 = vmatpush2.msra.mxu0 %v2250
  %2347 = vmatprep.subr.mxu0 0.0
  %2348 = vmatpush2.msra.mxu0 %v2249
  %2349 = vmatprep.subr.mxu0 0.0
  %2350 = vmatpush2.msra.mxu0 %v2248
  %2351 = vmatprep.subr.mxu0 0.0
  %2352 = vmatpush2.msra.mxu0 %v2247
  %2353 = vmatprep.subr.mxu0 0.0
  %2354 = vmatpush2.msra.mxu0 %v2246
  %2355 = vmatprep.subr.mxu0 0.0
  %2356 = vmatpush2.msra.mxu0 %v2245
  %2357 = vmatprep.mubr.f32.mxu0 1.0
  %2358 = vmatmul.mubr.f32.gmra.mxu0 1.0
  %v2359 = vpop.f32.mrf.mxu0
  %v2360 = vadd.f32 0.0, %v2359
  %v2361 = vpop.f32.mrf.mxu0
  %2362 = vdwg.mxu0
  %2363 = vmatprep.subr.mxu0 0.0
  %2364 = vmatpush1.msra.mxu0 %v2276
  %2365 = vmatprep.subr.mxu0 0.0
  %2366 = vmatpush1.msra.mxu0 %v2275
  %2367 = vmatprep.subr.mxu0 0.0
  %2368 = vmatpush1.msra.mxu0 %v2274
  %2369 = vmatprep.subr.mxu0 0.0
  %2370 = vmatpush1.msra.mxu0 %v2273
  %2371 = vmatprep.subr.mxu0 0.0
  %2372 = vmatpush1.msra.mxu0 %v2272
  %2373 = vmatprep.subr.mxu0 0.0
  %2374 = vmatpush1.msra.mxu0 %v2271
  %2375 = vmatprep.subr.mxu0 0.0
  %2376 = vmatpush1.msra.mxu0 %v2270
  %2377 = vmatprep.subr.mxu0 0.0
  %2378 = vmatpush1.msra.mxu0 %v2269
  %2379 = vmatprep.subr.mxu0 0.0
  %2380 = vmatpush1.msra.mxu0 %v2268
  %2381 = vmatprep.subr.mxu0 0.0
  %2382 = vmatpush1.msra.mxu0 %v2267
  %2383 = vmatprep.subr.mxu0 0.0
  %2384 = vmatpush1.msra.mxu0 %v2266
  %2385 = vmatprep.subr.mxu0 0.0
  %2386 = vmatpush1.msra.mxu0 %v2265
  %2387 = vmatprep.subr.mxu0 0.0
  %2388 = vmatpush1.msra.mxu0 %v2264
  %2389 = vmatprep.subr.mxu0 0.0
  %2390 = vmatpush1.msra.mxu0 %v2263
  %2391 = vmatprep.subr.mxu0 0.0
  %2392 = vmatpush1.msra.mxu0 %v2262
  %2393 = vmatprep.subr.mxu0 0.0
  %2394 = vmatpush1.msra.mxu0 %v2261
  %2395 = vmatprep.subr.mxu0 0.0
  %2396 = vmatpush2.msra.mxu0 %v2292
  %2397 = vmatprep.subr.mxu0 0.0
  %2398 = vmatpush2.msra.mxu0 %v2291
  %2399 = vmatprep.subr.mxu0 0.0
  %2400 = vmatpush2.msra.mxu0 %v2290
  %2401 = vmatprep.subr.mxu0 0.0
  %2402 = vmatpush2.msra.mxu0 %v2289
  %2403 = vmatprep.subr.mxu0 0.0
  %2404 = vmatpush2.msra.mxu0 %v2288
  %2405 = vmatprep.subr.mxu0 0.0
  %2406 = vmatpush2.msra.mxu0 %v2287
  %2407 = vmatprep.subr.mxu0 0.0
  %2408 = vmatpush2.msra.mxu0 %v2286
  %2409 = vmatprep.subr.mxu0 0.0
  %2410 = vmatpush2.msra.mxu0 %v2285
  %2411 = vmatprep.subr.mxu0 0.0
  %2412 = vmatpush2.msra.mxu0 %v2284
  %2413 = vmatprep.subr.mxu0 0.0
  %2414 = vmatpush2.msra.mxu0 %v2283
  %2415 = vmatprep.subr.mxu0 0.0
  %2416 = vmatpush2.msra.mxu0 %v2282
  %2417 = vmatprep.subr.mxu0 0.0
  %2418 = vmatpush2.msra.mxu0 %v2281
  %2419 = vmatprep.subr.mxu0 0.0
  %2420 = vmatpush2.msra.mxu0 %v2280
  %2421 = vmatprep.subr.mxu0 0.0
  %2422 = vmatpush2.msra.mxu0 %v2279
  %2423 = vmatprep.subr.mxu0 0.0
  %2424 = vmatpush2.msra.mxu0 %v2278
  %2425 = vmatprep.subr.mxu0 0.0
  %2426 = vmatpush2.msra.mxu0 %v2277
  %2427 = vmatprep.mubr.f32.mxu0 1.0
  %2428 = vmatmul.mubr.f32.gmra.mxu0 1.0
  %v2429 = vpop.f32.mrf.mxu0
  %v2430 = vadd.f32 %v2360, %v2429
  %v2431 = vpop.f32.mrf.mxu0
  %2432 = vdwg.mxu0
  %v2433 = vmul.f32 %v2226, 0.001953125
  %v2434 = vmul.f32 %v2430, 0.001953125
  %v2435 = vmul.f32 %v2433, %v2433
  %v2436 = vsub.f32 %v2434, %v2435
  %v2437 = vmax.f32 %v2436, 0.0
  %v2438 = vld [vmem:[%s4] sm:$0x1]
  %v2439 = vadd.f32 %v2437, 1e-05
  %v2440 = vrsqrt.pop %v2439
  %v2441 = vmul.f32 %v2438, %v2440
  %v2442 = vld [vmem:[%s5] sm:$0x1]
  %v2443 = vmul.f32 %v2433, %v2441
  %v2444 = vsub.f32 %v2442, %v2443
  %v2446 = vlaneseq
  %v2447 = vshrl.u32 %v2446, 7
  %v2448 = vsub.s32 0, %v2447
  %v2449 = vrot.slane %v2441, %v2448
  %v2451 = vmul.f32 %v1835, %v2449
  %v2452 = vmul.f32 %v1838, %v2449
  %v2453 = vmul.f32 %v1843, %v2449
  %v2454 = vmul.f32 %v1846, %v2449
  %v2455 = vmul.f32 %v1851, %v2449
  %v2456 = vmul.f32 %v1854, %v2449
  %v2457 = vmul.f32 %v1859, %v2449
  %v2458 = vmul.f32 %v1862, %v2449
  %v2459 = vmul.f32 %v1867, %v2449
  %v2460 = vmul.f32 %v1870, %v2449
  %v2461 = vmul.f32 %v1875, %v2449
  %v2462 = vmul.f32 %v1878, %v2449
  %v2463 = vmul.f32 %v1883, %v2449
  %v2464 = vmul.f32 %v1886, %v2449
  %v2465 = vmul.f32 %v1891, %v2449
  %v2466 = vmul.f32 %v1894, %v2449
  %v2467 = vmul.f32 %v1899, %v2449
  %v2468 = vmul.f32 %v1902, %v2449
  %v2469 = vmul.f32 %v1907, %v2449
  %v2470 = vmul.f32 %v1910, %v2449
  %v2471 = vmul.f32 %v1915, %v2449
  %v2472 = vmul.f32 %v1918, %v2449
  %v2473 = vmul.f32 %v1923, %v2449
  %v2474 = vmul.f32 %v1926, %v2449
  %v2475 = vmul.f32 %v1931, %v2449
  %v2476 = vmul.f32 %v1934, %v2449
  %v2477 = vmul.f32 %v1939, %v2449
  %v2478 = vmul.f32 %v1942, %v2449
  %v2479 = vmul.f32 %v1947, %v2449
  %v2480 = vmul.f32 %v1950, %v2449
  %v2481 = vmul.f32 %v1955, %v2449
  %v2482 = vmul.f32 %v1958, %v2449
  %v2483 = vmul.f32 %v1963, %v2449
  %v2484 = vmul.f32 %v1966, %v2449
  %v2485 = vmul.f32 %v1971, %v2449
  %v2486 = vmul.f32 %v1974, %v2449
  %v2487 = vmul.f32 %v1979, %v2449
  %v2488 = vmul.f32 %v1982, %v2449
  %v2489 = vmul.f32 %v1987, %v2449
  %v2490 = vmul.f32 %v1990, %v2449
  %v2491 = vmul.f32 %v1995, %v2449
  %v2492 = vmul.f32 %v1998, %v2449
  %v2493 = vmul.f32 %v2003, %v2449
  %v2494 = vmul.f32 %v2006, %v2449
  %v2495 = vmul.f32 %v2011, %v2449
  %v2496 = vmul.f32 %v2014, %v2449
  %v2497 = vmul.f32 %v2019, %v2449
  %v2498 = vmul.f32 %v2022, %v2449
  %v2499 = vmul.f32 %v2027, %v2449
  %v2500 = vmul.f32 %v2030, %v2449
  %v2501 = vmul.f32 %v2035, %v2449
  %v2502 = vmul.f32 %v2038, %v2449
  %v2503 = vmul.f32 %v2043, %v2449
  %v2504 = vmul.f32 %v2046, %v2449
  %v2505 = vmul.f32 %v2051, %v2449
  %v2506 = vmul.f32 %v2054, %v2449
  %v2507 = vmul.f32 %v2059, %v2449
  %v2508 = vmul.f32 %v2062, %v2449
  %v2509 = vmul.f32 %v2067, %v2449
  %v2510 = vmul.f32 %v2070, %v2449
  %v2511 = vmul.f32 %v2075, %v2449
  %v2512 = vmul.f32 %v2078, %v2449
  %v2513 = vmul.f32 %v2083, %v2449
  %v2514 = vmul.f32 %v2086, %v2449
  %v2516 = vlaneseq
  %v2517 = vshrl.u32 %v2516, 7
  %v2518 = vsub.s32 0, %v2517
  %v2519 = vrot.slane %v2444, %v2518
  %v2521 = vadd.f32 %v2451, %v2519
  %v2522 = vadd.f32 %v2452, %v2519
  %v2523 = vadd.f32 %v2453, %v2519
  %v2524 = vadd.f32 %v2454, %v2519
  %v2525 = vadd.f32 %v2455, %v2519
  %v2526 = vadd.f32 %v2456, %v2519
  %v2527 = vadd.f32 %v2457, %v2519
  %v2528 = vadd.f32 %v2458, %v2519
  %v2529 = vadd.f32 %v2459, %v2519
  %v2530 = vadd.f32 %v2460, %v2519
  %v2531 = vadd.f32 %v2461, %v2519
  %v2532 = vadd.f32 %v2462, %v2519
  %v2533 = vadd.f32 %v2463, %v2519
  %v2534 = vadd.f32 %v2464, %v2519
  %v2535 = vadd.f32 %v2465, %v2519
  %v2536 = vadd.f32 %v2466, %v2519
  %v2537 = vadd.f32 %v2467, %v2519
  %v2538 = vadd.f32 %v2468, %v2519
  %v2539 = vadd.f32 %v2469, %v2519
  %v2540 = vadd.f32 %v2470, %v2519
  %v2541 = vadd.f32 %v2471, %v2519
  %v2542 = vadd.f32 %v2472, %v2519
  %v2543 = vadd.f32 %v2473, %v2519
  %v2544 = vadd.f32 %v2474, %v2519
  %v2545 = vadd.f32 %v2475, %v2519
  %v2546 = vadd.f32 %v2476, %v2519
  %v2547 = vadd.f32 %v2477, %v2519
  %v2548 = vadd.f32 %v2478, %v2519
  %v2549 = vadd.f32 %v2479, %v2519
  %v2550 = vadd.f32 %v2480, %v2519
  %v2551 = vadd.f32 %v2481, %v2519
  %v2552 = vadd.f32 %v2482, %v2519
  %v2553 = vadd.f32 %v2483, %v2519
  %v2554 = vadd.f32 %v2484, %v2519
  %v2555 = vadd.f32 %v2485, %v2519
  %v2556 = vadd.f32 %v2486, %v2519
  %v2557 = vadd.f32 %v2487, %v2519
  %v2558 = vadd.f32 %v2488, %v2519
  %v2559 = vadd.f32 %v2489, %v2519
  %v2560 = vadd.f32 %v2490, %v2519
  %v2561 = vadd.f32 %v2491, %v2519
  %v2562 = vadd.f32 %v2492, %v2519
  %v2563 = vadd.f32 %v2493, %v2519
  %v2564 = vadd.f32 %v2494, %v2519
  %v2565 = vadd.f32 %v2495, %v2519
  %v2566 = vadd.f32 %v2496, %v2519
  %v2567 = vadd.f32 %v2497, %v2519
  %v2568 = vadd.f32 %v2498, %v2519
  %v2569 = vadd.f32 %v2499, %v2519
  %v2570 = vadd.f32 %v2500, %v2519
  %v2571 = vadd.f32 %v2501, %v2519
  %v2572 = vadd.f32 %v2502, %v2519
  %v2573 = vadd.f32 %v2503, %v2519
  %v2574 = vadd.f32 %v2504, %v2519
  %v2575 = vadd.f32 %v2505, %v2519
  %v2576 = vadd.f32 %v2506, %v2519
  %v2577 = vadd.f32 %v2507, %v2519
  %v2578 = vadd.f32 %v2508, %v2519
  %v2579 = vadd.f32 %v2509, %v2519
  %v2580 = vadd.f32 %v2510, %v2519
  %v2581 = vadd.f32 %v2511, %v2519
  %v2582 = vadd.f32 %v2512, %v2519
  %v2583 = vadd.f32 %v2513, %v2519
  %v2584 = vadd.f32 %v2514, %v2519
  %v2585 = vmax.f32 %v2521, 0.0
  %v2586 = vmax.f32 %v2522, 0.0
  %v2587 = vmax.f32 %v2523, 0.0
  %v2588 = vmax.f32 %v2524, 0.0
  %v2589 = vmax.f32 %v2525, 0.0
  %v2590 = vmax.f32 %v2526, 0.0
  %v2591 = vmax.f32 %v2527, 0.0
  %v2592 = vmax.f32 %v2528, 0.0
  %v2593 = vmax.f32 %v2529, 0.0
  %v2594 = vmax.f32 %v2530, 0.0
  %v2595 = vmax.f32 %v2531, 0.0
  %v2596 = vmax.f32 %v2532, 0.0
  %v2597 = vmax.f32 %v2533, 0.0
  %v2598 = vmax.f32 %v2534, 0.0
  %v2599 = vmax.f32 %v2535, 0.0
  %v2600 = vmax.f32 %v2536, 0.0
  %v2601 = vmax.f32 %v2537, 0.0
  %v2602 = vmax.f32 %v2538, 0.0
  %v2603 = vmax.f32 %v2539, 0.0
  %v2604 = vmax.f32 %v2540, 0.0
  %v2605 = vmax.f32 %v2541, 0.0
  %v2606 = vmax.f32 %v2542, 0.0
  %v2607 = vmax.f32 %v2543, 0.0
  %v2608 = vmax.f32 %v2544, 0.0
  %v2609 = vmax.f32 %v2545, 0.0
  %v2610 = vmax.f32 %v2546, 0.0
  %v2611 = vmax.f32 %v2547, 0.0
  %v2612 = vmax.f32 %v2548, 0.0
  %v2613 = vmax.f32 %v2549, 0.0
  %v2614 = vmax.f32 %v2550, 0.0
  %v2615 = vmax.f32 %v2551, 0.0
  %v2616 = vmax.f32 %v2552, 0.0
  %v2617 = vmax.f32 %v2553, 0.0
  %v2618 = vmax.f32 %v2554, 0.0
  %v2619 = vmax.f32 %v2555, 0.0
  %v2620 = vmax.f32 %v2556, 0.0
  %v2621 = vmax.f32 %v2557, 0.0
  %v2622 = vmax.f32 %v2558, 0.0
  %v2623 = vmax.f32 %v2559, 0.0
  %v2624 = vmax.f32 %v2560, 0.0
  %v2625 = vmax.f32 %v2561, 0.0
  %v2626 = vmax.f32 %v2562, 0.0
  %v2627 = vmax.f32 %v2563, 0.0
  %v2628 = vmax.f32 %v2564, 0.0
  %v2629 = vmax.f32 %v2565, 0.0
  %v2630 = vmax.f32 %v2566, 0.0
  %v2631 = vmax.f32 %v2567, 0.0
  %v2632 = vmax.f32 %v2568, 0.0
  %v2633 = vmax.f32 %v2569, 0.0
  %v2634 = vmax.f32 %v2570, 0.0
  %v2635 = vmax.f32 %v2571, 0.0
  %v2636 = vmax.f32 %v2572, 0.0
  %v2637 = vmax.f32 %v2573, 0.0
  %v2638 = vmax.f32 %v2574, 0.0
  %v2639 = vmax.f32 %v2575, 0.0
  %v2640 = vmax.f32 %v2576, 0.0
  %v2641 = vmax.f32 %v2577, 0.0
  %v2642 = vmax.f32 %v2578, 0.0
  %v2643 = vmax.f32 %v2579, 0.0
  %v2644 = vmax.f32 %v2580, 0.0
  %v2645 = vmax.f32 %v2581, 0.0
  %v2646 = vmax.f32 %v2582, 0.0
  %v2647 = vmax.f32 %v2583, 0.0
  %v2648 = vmax.f32 %v2584, 0.0
  %v2649 = vpack.c.bf16 %v2586, %v2585
  %v2650 = vpack.c.bf16 %v2588, %v2587
  %v2651 = vpack.c.bf16 %v2590, %v2589
  %v2652 = vpack.c.bf16 %v2592, %v2591
  %v2653 = vpack.c.bf16 %v2594, %v2593
  %v2654 = vpack.c.bf16 %v2596, %v2595
  %v2655 = vpack.c.bf16 %v2598, %v2597
  %v2656 = vpack.c.bf16 %v2600, %v2599
  %v2657 = vpack.c.bf16 %v2602, %v2601
  %v2658 = vpack.c.bf16 %v2604, %v2603
  %v2659 = vpack.c.bf16 %v2606, %v2605
  %v2660 = vpack.c.bf16 %v2608, %v2607
  %v2661 = vpack.c.bf16 %v2610, %v2609
  %v2662 = vpack.c.bf16 %v2612, %v2611
  %v2663 = vpack.c.bf16 %v2614, %v2613
  %v2664 = vpack.c.bf16 %v2616, %v2615
  %v2665 = vpack.c.bf16 %v2618, %v2617
  %v2666 = vpack.c.bf16 %v2620, %v2619
  %v2667 = vpack.c.bf16 %v2622, %v2621
  %v2668 = vpack.c.bf16 %v2624, %v2623
  %v2669 = vpack.c.bf16 %v2626, %v2625
  %v2670 = vpack.c.bf16 %v2628, %v2627
  %v2671 = vpack.c.bf16 %v2630, %v2629
  %v2672 = vpack.c.bf16 %v2632, %v2631
  %v2673 = vpack.c.bf16 %v2634, %v2633
  %v2674 = vpack.c.bf16 %v2636, %v2635
  %v2675 = vpack.c.bf16 %v2638, %v2637
  %v2676 = vpack.c.bf16 %v2640, %v2639
  %v2677 = vpack.c.bf16 %v2642, %v2641
  %v2678 = vpack.c.bf16 %v2644, %v2643
  %v2679 = vpack.c.bf16 %v2646, %v2645
  %v2680 = vpack.c.bf16 %v2648, %v2647
  %v2681 = vld [vmem:[%s6] sm:$0xf]
  %vm2682 = vcmask 64512
  %v2684 = vsel %vm2682, %v2649, 0
  %v2687 = vsel %vm2682, %v2650, 0
  %v2690 = vsel %vm2682, %v2651, 0
  %v2693 = vsel %vm2682, %v2652, 0
  %v2696 = vsel %vm2682, %v2653, 0
  %v2699 = vsel %vm2682, %v2654, 0
  %v2702 = vsel %vm2682, %v2655, 0
  %v2705 = vsel %vm2682, %v2656, 0
  %v2708 = vsel %vm2682, %v2657, 0
  %v2711 = vsel %vm2682, %v2658, 0
  %v2714 = vsel %vm2682, %v2659, 0
  %v2717 = vsel %vm2682, %v2660, 0
  %v2720 = vsel %vm2682, %v2661, 0
  %v2723 = vsel %vm2682, %v2662, 0
  %v2726 = vsel %vm2682, %v2663, 0
  %v2729 = vsel %vm2682, %v2664, 0
  %v2732 = vsel %vm2682, %v2665, 0
  %v2735 = vsel %vm2682, %v2666, 0
  %v2738 = vsel %vm2682, %v2667, 0
  %v2741 = vsel %vm2682, %v2668, 0
  %v2744 = vsel %vm2682, %v2669, 0
  %v2747 = vsel %vm2682, %v2670, 0
  %v2750 = vsel %vm2682, %v2671, 0
  %v2753 = vsel %vm2682, %v2672, 0
  %v2756 = vsel %vm2682, %v2673, 0
  %v2759 = vsel %vm2682, %v2674, 0
  %v2762 = vsel %vm2682, %v2675, 0
  %v2765 = vsel %vm2682, %v2676, 0
  %v2768 = vsel %vm2682, %v2677, 0
  %v2771 = vsel %vm2682, %v2678, 0
  %v2774 = vsel %vm2682, %v2679, 0
  %v2777 = vsel %vm2682, %v2680, 0
  %vm2779 = vcmask 1043456
  %v2781 = vsel %vm2779, %v2681, 0
  %2783 = vmatprep.subr.bf16.mxu0 0
  %2784 = vmatpush1.bf16.msra.mxu0 0
  %2785 = vmatprep.subr.bf16.mxu0 0
  %2786 = vmatpush1.bf16.msra.mxu0 0
  %2787 = vmatprep.subr.bf16.mxu0 0
  %2788 = vmatpush1.bf16.msra.mxu0 0
  %2789 = vmatprep.subr.bf16.mxu0 0
  %2790 = vmatpush1.bf16.msra.mxu0 0
  %2791 = vmatprep.subr.bf16.mxu0 0
  %2792 = vmatpush1.bf16.msra.mxu0 0
  %2793 = vmatprep.subr.bf16.mxu0 0
  %2794 = vmatpush1.bf16.msra.mxu0 0
  %2795 = vmatprep.subr.bf16.mxu0 0
  %2796 = vmatpush1.bf16.msra.mxu0 0
  %2797 = vmatprep.subr.bf16.mxu0 0
  %2798 = vmatpush1.bf16.msra.mxu0 %v2781
  %2799 = vmatprep.subr.bf16.mxu0 0
  %2800 = vmatpush2.bf16.msra.mxu0 0
  %2801 = vmatprep.subr.bf16.mxu0 0
  %2802 = vmatpush2.bf16.msra.mxu0 0
  %2803 = vmatprep.subr.bf16.mxu0 0
  %2804 = vmatpush2.bf16.msra.mxu0 0
  %2805 = vmatprep.subr.bf16.mxu0 0
  %2806 = vmatpush2.bf16.msra.mxu0 0
  %2807 = vmatprep.subr.bf16.mxu0 0
  %2808 = vmatpush2.bf16.msra.mxu0 0
  %2809 = vmatprep.subr.bf16.mxu0 0
  %2810 = vmatpush2.bf16.msra.mxu0 0
  %2811 = vmatprep.subr.bf16.mxu0 0
  %2812 = vmatpush2.bf16.msra.mxu0 0
  %2813 = vmatprep.subr.bf16.mxu0 0
  %2814 = vmatpush2.bf16.msra.mxu0 0
  %2815 = vmatprep.mubr.bf16.mxu0 0
  %2816 = vmatmul.mubr.bf16.gmra.mxu0 %v2684
  %v2817 = vpop.f32.mrf.mxu0
  %v2818 = vadd.f32 0.0, %v2817
  %v2819 = vpop.f32.mrf.mxu0
  %v2820 = vpop.f32.mrf.mxu0
  %v2821 = vadd.f32 0.0, %v2820
  %v2822 = vpop.f32.mrf.mxu0
  %2823 = vmatprep.mubr.bf16.mxu0 0
  %2824 = vmatmul.mubr.bf16.gmra.mxu0 %v2687
  %v2825 = vpop.f32.mrf.mxu0
  %v2826 = vadd.f32 0.0, %v2825
  %v2827 = vpop.f32.mrf.mxu0
  %v2828 = vpop.f32.mrf.mxu0
  %v2829 = vadd.f32 0.0, %v2828
  %v2830 = vpop.f32.mrf.mxu0
  %2831 = vmatprep.mubr.bf16.mxu0 0
  %2832 = vmatmul.mubr.bf16.gmra.mxu0 %v2690
  %v2833 = vpop.f32.mrf.mxu0
  %v2834 = vadd.f32 0.0, %v2833
  %v2835 = vpop.f32.mrf.mxu0
  %v2836 = vpop.f32.mrf.mxu0
  %v2837 = vadd.f32 0.0, %v2836
  %v2838 = vpop.f32.mrf.mxu0
  %2839 = vmatprep.mubr.bf16.mxu0 0
  %2840 = vmatmul.mubr.bf16.gmra.mxu0 %v2693
  %v2841 = vpop.f32.mrf.mxu0
  %v2842 = vadd.f32 0.0, %v2841
  %v2843 = vpop.f32.mrf.mxu0
  %v2844 = vpop.f32.mrf.mxu0
  %v2845 = vadd.f32 0.0, %v2844
  %v2846 = vpop.f32.mrf.mxu0
  %2847 = vmatprep.mubr.bf16.mxu0 0
  %2848 = vmatmul.mubr.bf16.gmra.mxu0 %v2696
  %v2849 = vpop.f32.mrf.mxu0
  %v2850 = vadd.f32 0.0, %v2849
  %v2851 = vpop.f32.mrf.mxu0
  %v2852 = vpop.f32.mrf.mxu0
  %v2853 = vadd.f32 0.0, %v2852
  %v2854 = vpop.f32.mrf.mxu0
  %2855 = vmatprep.mubr.bf16.mxu0 0
  %2856 = vmatmul.mubr.bf16.gmra.mxu0 %v2699
  %v2857 = vpop.f32.mrf.mxu0
  %v2858 = vadd.f32 0.0, %v2857
  %v2859 = vpop.f32.mrf.mxu0
  %v2860 = vpop.f32.mrf.mxu0
  %v2861 = vadd.f32 0.0, %v2860
  %v2862 = vpop.f32.mrf.mxu0
  %2863 = vmatprep.mubr.bf16.mxu0 0
  %2864 = vmatmul.mubr.bf16.gmra.mxu0 %v2702
  %v2865 = vpop.f32.mrf.mxu0
  %v2866 = vadd.f32 0.0, %v2865
  %v2867 = vpop.f32.mrf.mxu0
  %v2868 = vpop.f32.mrf.mxu0
  %v2869 = vadd.f32 0.0, %v2868
  %v2870 = vpop.f32.mrf.mxu0
  %2871 = vmatprep.mubr.bf16.mxu0 0
  %2872 = vmatmul.mubr.bf16.gmra.mxu0 %v2705
  %v2873 = vpop.f32.mrf.mxu0
  %v2874 = vadd.f32 0.0, %v2873
  %v2875 = vpop.f32.mrf.mxu0
  %v2876 = vpop.f32.mrf.mxu0
  %v2877 = vadd.f32 0.0, %v2876
  %v2878 = vpop.f32.mrf.mxu0
  %2879 = vmatprep.mubr.bf16.mxu0 0
  %2880 = vmatmul.mubr.bf16.gmra.mxu0 %v2708
  %v2881 = vpop.f32.mrf.mxu0
  %v2882 = vadd.f32 0.0, %v2881
  %v2883 = vpop.f32.mrf.mxu0
  %v2884 = vpop.f32.mrf.mxu0
  %v2885 = vadd.f32 0.0, %v2884
  %v2886 = vpop.f32.mrf.mxu0
  %2887 = vmatprep.mubr.bf16.mxu0 0
  %2888 = vmatmul.mubr.bf16.gmra.mxu0 %v2711
  %v2889 = vpop.f32.mrf.mxu0
  %v2890 = vadd.f32 0.0, %v2889
  %v2891 = vpop.f32.mrf.mxu0
  %v2892 = vpop.f32.mrf.mxu0
  %v2893 = vadd.f32 0.0, %v2892
  %v2894 = vpop.f32.mrf.mxu0
  %2895 = vmatprep.mubr.bf16.mxu0 0
  %2896 = vmatmul.mubr.bf16.gmra.mxu0 %v2714
  %v2897 = vpop.f32.mrf.mxu0
  %v2898 = vadd.f32 0.0, %v2897
  %v2899 = vpop.f32.mrf.mxu0
  %v2900 = vpop.f32.mrf.mxu0
  %v2901 = vadd.f32 0.0, %v2900
  %v2902 = vpop.f32.mrf.mxu0
  %2903 = vmatprep.mubr.bf16.mxu0 0
  %2904 = vmatmul.mubr.bf16.gmra.mxu0 %v2717
  %v2905 = vpop.f32.mrf.mxu0
  %v2906 = vadd.f32 0.0, %v2905
  %v2907 = vpop.f32.mrf.mxu0
  %v2908 = vpop.f32.mrf.mxu0
  %v2909 = vadd.f32 0.0, %v2908
  %v2910 = vpop.f32.mrf.mxu0
  %2911 = vmatprep.mubr.bf16.mxu0 0
  %2912 = vmatmul.mubr.bf16.gmra.mxu0 %v2720
  %v2913 = vpop.f32.mrf.mxu0
  %v2914 = vadd.f32 0.0, %v2913
  %v2915 = vpop.f32.mrf.mxu0
  %v2916 = vpop.f32.mrf.mxu0
  %v2917 = vadd.f32 0.0, %v2916
  %v2918 = vpop.f32.mrf.mxu0
  %2919 = vmatprep.mubr.bf16.mxu0 0
  %2920 = vmatmul.mubr.bf16.gmra.mxu0 %v2723
  %v2921 = vpop.f32.mrf.mxu0
  %v2922 = vadd.f32 0.0, %v2921
  %v2923 = vpop.f32.mrf.mxu0
  %v2924 = vpop.f32.mrf.mxu0
  %v2925 = vadd.f32 0.0, %v2924
  %v2926 = vpop.f32.mrf.mxu0
  %2927 = vmatprep.mubr.bf16.mxu0 0
  %2928 = vmatmul.mubr.bf16.gmra.mxu0 %v2726
  %v2929 = vpop.f32.mrf.mxu0
  %v2930 = vadd.f32 0.0, %v2929
  %v2931 = vpop.f32.mrf.mxu0
  %v2932 = vpop.f32.mrf.mxu0
  %v2933 = vadd.f32 0.0, %v2932
  %v2934 = vpop.f32.mrf.mxu0
  %2935 = vmatprep.mubr.bf16.mxu0 0
  %2936 = vmatmul.mubr.bf16.gmra.mxu0 %v2729
  %v2937 = vpop.f32.mrf.mxu0
  %v2938 = vadd.f32 0.0, %v2937
  %v2939 = vpop.f32.mrf.mxu0
  %v2940 = vpop.f32.mrf.mxu0
  %v2941 = vadd.f32 0.0, %v2940
  %v2942 = vpop.f32.mrf.mxu0
  %2943 = vmatprep.mubr.bf16.mxu0 0
  %2944 = vmatmul.mubr.bf16.gmra.mxu0 %v2732
  %v2945 = vpop.f32.mrf.mxu0
  %v2946 = vadd.f32 0.0, %v2945
  %v2947 = vpop.f32.mrf.mxu0
  %v2948 = vpop.f32.mrf.mxu0
  %v2949 = vadd.f32 0.0, %v2948
  %v2950 = vpop.f32.mrf.mxu0
  %2951 = vmatprep.mubr.bf16.mxu0 0
  %2952 = vmatmul.mubr.bf16.gmra.mxu0 %v2735
  %v2953 = vpop.f32.mrf.mxu0
  %v2954 = vadd.f32 0.0, %v2953
  %v2955 = vpop.f32.mrf.mxu0
  %v2956 = vpop.f32.mrf.mxu0
  %v2957 = vadd.f32 0.0, %v2956
  %v2958 = vpop.f32.mrf.mxu0
  %2959 = vmatprep.mubr.bf16.mxu0 0
  %2960 = vmatmul.mubr.bf16.gmra.mxu0 %v2738
  %v2961 = vpop.f32.mrf.mxu0
  %v2962 = vadd.f32 0.0, %v2961
  %v2963 = vpop.f32.mrf.mxu0
  %v2964 = vpop.f32.mrf.mxu0
  %v2965 = vadd.f32 0.0, %v2964
  %v2966 = vpop.f32.mrf.mxu0
  %2967 = vmatprep.mubr.bf16.mxu0 0
  %2968 = vmatmul.mubr.bf16.gmra.mxu0 %v2741
  %v2969 = vpop.f32.mrf.mxu0
  %v2970 = vadd.f32 0.0, %v2969
  %v2971 = vpop.f32.mrf.mxu0
  %v2972 = vpop.f32.mrf.mxu0
  %v2973 = vadd.f32 0.0, %v2972
  %v2974 = vpop.f32.mrf.mxu0
  %2975 = vmatprep.mubr.bf16.mxu0 0
  %2976 = vmatmul.mubr.bf16.gmra.mxu0 %v2744
  %v2977 = vpop.f32.mrf.mxu0
  %v2978 = vadd.f32 0.0, %v2977
  %v2979 = vpop.f32.mrf.mxu0
  %v2980 = vpop.f32.mrf.mxu0
  %v2981 = vadd.f32 0.0, %v2980
  %v2982 = vpop.f32.mrf.mxu0
  %2983 = vmatprep.mubr.bf16.mxu0 0
  %2984 = vmatmul.mubr.bf16.gmra.mxu0 %v2747
  %v2985 = vpop.f32.mrf.mxu0
  %v2986 = vadd.f32 0.0, %v2985
  %v2987 = vpop.f32.mrf.mxu0
  %v2988 = vpop.f32.mrf.mxu0
  %v2989 = vadd.f32 0.0, %v2988
  %v2990 = vpop.f32.mrf.mxu0
  %2991 = vmatprep.mubr.bf16.mxu0 0
  %2992 = vmatmul.mubr.bf16.gmra.mxu0 %v2750
  %v2993 = vpop.f32.mrf.mxu0
  %v2994 = vadd.f32 0.0, %v2993
  %v2995 = vpop.f32.mrf.mxu0
  %v2996 = vpop.f32.mrf.mxu0
  %v2997 = vadd.f32 0.0, %v2996
  %v2998 = vpop.f32.mrf.mxu0
  %2999 = vmatprep.mubr.bf16.mxu0 0
  %3000 = vmatmul.mubr.bf16.gmra.mxu0 %v2753
  %v3001 = vpop.f32.mrf.mxu0
  %v3002 = vadd.f32 0.0, %v3001
  %v3003 = vpop.f32.mrf.mxu0
  %v3004 = vpop.f32.mrf.mxu0
  %v3005 = vadd.f32 0.0, %v3004
  %v3006 = vpop.f32.mrf.mxu0
  %3007 = vmatprep.mubr.bf16.mxu0 0
  %3008 = vmatmul.mubr.bf16.gmra.mxu0 %v2756
  %v3009 = vpop.f32.mrf.mxu0
  %v3010 = vadd.f32 0.0, %v3009
  %v3011 = vpop.f32.mrf.mxu0
  %v3012 = vpop.f32.mrf.mxu0
  %v3013 = vadd.f32 0.0, %v3012
  %v3014 = vpop.f32.mrf.mxu0
  %3015 = vmatprep.mubr.bf16.mxu0 0
  %3016 = vmatmul.mubr.bf16.gmra.mxu0 %v2759
  %v3017 = vpop.f32.mrf.mxu0
  %v3018 = vadd.f32 0.0, %v3017
  %v3019 = vpop.f32.mrf.mxu0
  %v3020 = vpop.f32.mrf.mxu0
  %v3021 = vadd.f32 0.0, %v3020
  %v3022 = vpop.f32.mrf.mxu0
  %3023 = vmatprep.mubr.bf16.mxu0 0
  %3024 = vmatmul.mubr.bf16.gmra.mxu0 %v2762
  %v3025 = vpop.f32.mrf.mxu0
  %v3026 = vadd.f32 0.0, %v3025
  %v3027 = vpop.f32.mrf.mxu0
  %v3028 = vpop.f32.mrf.mxu0
  %v3029 = vadd.f32 0.0, %v3028
  %v3030 = vpop.f32.mrf.mxu0
  %3031 = vmatprep.mubr.bf16.mxu0 0
  %3032 = vmatmul.mubr.bf16.gmra.mxu0 %v2765
  %v3033 = vpop.f32.mrf.mxu0
  %v3034 = vadd.f32 0.0, %v3033
  %v3035 = vpop.f32.mrf.mxu0
  %v3036 = vpop.f32.mrf.mxu0
  %v3037 = vadd.f32 0.0, %v3036
  %v3038 = vpop.f32.mrf.mxu0
  %3039 = vmatprep.mubr.bf16.mxu0 0
  %3040 = vmatmul.mubr.bf16.gmra.mxu0 %v2768
  %v3041 = vpop.f32.mrf.mxu0
  %v3042 = vadd.f32 0.0, %v3041
  %v3043 = vpop.f32.mrf.mxu0
  %v3044 = vpop.f32.mrf.mxu0
  %v3045 = vadd.f32 0.0, %v3044
  %v3046 = vpop.f32.mrf.mxu0
  %3047 = vmatprep.mubr.bf16.mxu0 0
  %3048 = vmatmul.mubr.bf16.gmra.mxu0 %v2771
  %v3049 = vpop.f32.mrf.mxu0
  %v3050 = vadd.f32 0.0, %v3049
  %v3051 = vpop.f32.mrf.mxu0
  %v3052 = vpop.f32.mrf.mxu0
  %v3053 = vadd.f32 0.0, %v3052
  %v3054 = vpop.f32.mrf.mxu0
  %3055 = vmatprep.mubr.bf16.mxu0 0
  %3056 = vmatmul.mubr.bf16.gmra.mxu0 %v2774
  %v3057 = vpop.f32.mrf.mxu0
  %v3058 = vadd.f32 0.0, %v3057
  %v3059 = vpop.f32.mrf.mxu0
  %v3060 = vpop.f32.mrf.mxu0
  %v3061 = vadd.f32 0.0, %v3060
  %v3062 = vpop.f32.mrf.mxu0
  %3063 = vmatprep.mubr.bf16.mxu0 0
  %3064 = vmatmul.mubr.bf16.gmra.mxu0 %v2777
  %v3065 = vpop.f32.mrf.mxu0
  %v3066 = vadd.f32 0.0, %v3065
  %v3067 = vpop.f32.mrf.mxu0
  %v3068 = vpop.f32.mrf.mxu0
  %v3069 = vadd.f32 0.0, %v3068
  %v3070 = vpop.f32.mrf.mxu0
  %3071 = vdwg.mxu0
  %3136 = vrot.lane.b32.xlu0 %v2818, 112
  %v3137 = vpop.permute.xlu0 %3136
  %3138 = vrot.lane.b32.xlu0 %v2821, 112
  %v3139 = vpop.permute.xlu0 %3138
  %3140 = vrot.lane.b32.xlu0 %v2826, 112
  %v3141 = vpop.permute.xlu0 %3140
  %3142 = vrot.lane.b32.xlu0 %v2829, 112
  %v3143 = vpop.permute.xlu0 %3142
  %3144 = vrot.lane.b32.xlu0 %v2834, 112
  %v3145 = vpop.permute.xlu0 %3144
  %3146 = vrot.lane.b32.xlu0 %v2837, 112
  %v3147 = vpop.permute.xlu0 %3146
  %3148 = vrot.lane.b32.xlu0 %v2842, 112
  %v3149 = vpop.permute.xlu0 %3148
  %3150 = vrot.lane.b32.xlu0 %v2845, 112
  %v3151 = vpop.permute.xlu0 %3150
  %3152 = vrot.lane.b32.xlu0 %v2850, 112
  %v3153 = vpop.permute.xlu0 %3152
  %3154 = vrot.lane.b32.xlu0 %v2853, 112
  %v3155 = vpop.permute.xlu0 %3154
  %3156 = vrot.lane.b32.xlu0 %v2858, 112
  %v3157 = vpop.permute.xlu0 %3156
  %3158 = vrot.lane.b32.xlu0 %v2861, 112
  %v3159 = vpop.permute.xlu0 %3158
  %3160 = vrot.lane.b32.xlu0 %v2866, 112
  %v3161 = vpop.permute.xlu0 %3160
  %3162 = vrot.lane.b32.xlu0 %v2869, 112
  %v3163 = vpop.permute.xlu0 %3162
  %3164 = vrot.lane.b32.xlu0 %v2874, 112
  %v3165 = vpop.permute.xlu0 %3164
  %3166 = vrot.lane.b32.xlu0 %v2877, 112
  %v3167 = vpop.permute.xlu0 %3166
  %3168 = vrot.lane.b32.xlu0 %v2882, 112
  %v3169 = vpop.permute.xlu0 %3168
  %3170 = vrot.lane.b32.xlu0 %v2885, 112
  %v3171 = vpop.permute.xlu0 %3170
  %3172 = vrot.lane.b32.xlu0 %v2890, 112
  %v3173 = vpop.permute.xlu0 %3172
  %3174 = vrot.lane.b32.xlu0 %v2893, 112
  %v3175 = vpop.permute.xlu0 %3174
  %3176 = vrot.lane.b32.xlu0 %v2898, 112
  %v3177 = vpop.permute.xlu0 %3176
  %3178 = vrot.lane.b32.xlu0 %v2901, 112
  %v3179 = vpop.permute.xlu0 %3178
  %3180 = vrot.lane.b32.xlu0 %v2906, 112
  %v3181 = vpop.permute.xlu0 %3180
  %3182 = vrot.lane.b32.xlu0 %v2909, 112
  %v3183 = vpop.permute.xlu0 %3182
  %3184 = vrot.lane.b32.xlu0 %v2914, 112
  %v3185 = vpop.permute.xlu0 %3184
  %3186 = vrot.lane.b32.xlu0 %v2917, 112
  %v3187 = vpop.permute.xlu0 %3186
  %3188 = vrot.lane.b32.xlu0 %v2922, 112
  %v3189 = vpop.permute.xlu0 %3188
  %3190 = vrot.lane.b32.xlu0 %v2925, 112
  %v3191 = vpop.permute.xlu0 %3190
  %3192 = vrot.lane.b32.xlu0 %v2930, 112
  %v3193 = vpop.permute.xlu0 %3192
  %3194 = vrot.lane.b32.xlu0 %v2933, 112
  %v3195 = vpop.permute.xlu0 %3194
  %3196 = vrot.lane.b32.xlu0 %v2938, 112
  %v3197 = vpop.permute.xlu0 %3196
  %3198 = vrot.lane.b32.xlu0 %v2941, 112
  %v3199 = vpop.permute.xlu0 %3198
  %3200 = vrot.lane.b32.xlu0 %v2946, 112
  %v3201 = vpop.permute.xlu0 %3200
  %3202 = vrot.lane.b32.xlu0 %v2949, 112
  %v3203 = vpop.permute.xlu0 %3202
  %3204 = vrot.lane.b32.xlu0 %v2954, 112
  %v3205 = vpop.permute.xlu0 %3204
  %3206 = vrot.lane.b32.xlu0 %v2957, 112
  %v3207 = vpop.permute.xlu0 %3206
  %3208 = vrot.lane.b32.xlu0 %v2962, 112
  %v3209 = vpop.permute.xlu0 %3208
  %3210 = vrot.lane.b32.xlu0 %v2965, 112
  %v3211 = vpop.permute.xlu0 %3210
  %3212 = vrot.lane.b32.xlu0 %v2970, 112
  %v3213 = vpop.permute.xlu0 %3212
  %3214 = vrot.lane.b32.xlu0 %v2973, 112
  %v3215 = vpop.permute.xlu0 %3214
  %3216 = vrot.lane.b32.xlu0 %v2978, 112
  %v3217 = vpop.permute.xlu0 %3216
  %3218 = vrot.lane.b32.xlu0 %v2981, 112
  %v3219 = vpop.permute.xlu0 %3218
  %3220 = vrot.lane.b32.xlu0 %v2986, 112
  %v3221 = vpop.permute.xlu0 %3220
  %3222 = vrot.lane.b32.xlu0 %v2989, 112
  %v3223 = vpop.permute.xlu0 %3222
  %3224 = vrot.lane.b32.xlu0 %v2994, 112
  %v3225 = vpop.permute.xlu0 %3224
  %3226 = vrot.lane.b32.xlu0 %v2997, 112
  %v3227 = vpop.permute.xlu0 %3226
  %3228 = vrot.lane.b32.xlu0 %v3002, 112
  %v3229 = vpop.permute.xlu0 %3228
  %3230 = vrot.lane.b32.xlu0 %v3005, 112
  %v3231 = vpop.permute.xlu0 %3230
  %3232 = vrot.lane.b32.xlu0 %v3010, 112
  %v3233 = vpop.permute.xlu0 %3232
  %3234 = vrot.lane.b32.xlu0 %v3013, 112
  %v3235 = vpop.permute.xlu0 %3234
  %3236 = vrot.lane.b32.xlu0 %v3018, 112
  %v3237 = vpop.permute.xlu0 %3236
  %3238 = vrot.lane.b32.xlu0 %v3021, 112
  %v3239 = vpop.permute.xlu0 %3238
  %3240 = vrot.lane.b32.xlu0 %v3026, 112
  %v3241 = vpop.permute.xlu0 %3240
  %3242 = vrot.lane.b32.xlu0 %v3029, 112
  %v3243 = vpop.permute.xlu0 %3242
  %3244 = vrot.lane.b32.xlu0 %v3034, 112
  %v3245 = vpop.permute.xlu0 %3244
  %3246 = vrot.lane.b32.xlu0 %v3037, 112
  %v3247 = vpop.permute.xlu0 %3246
  %3248 = vrot.lane.b32.xlu0 %v3042, 112
  %v3249 = vpop.permute.xlu0 %3248
  %3250 = vrot.lane.b32.xlu0 %v3045, 112
  %v3251 = vpop.permute.xlu0 %3250
  %3252 = vrot.lane.b32.xlu0 %v3050, 112
  %v3253 = vpop.permute.xlu0 %3252
  %3254 = vrot.lane.b32.xlu0 %v3053, 112
  %v3255 = vpop.permute.xlu0 %3254
  %3256 = vrot.lane.b32.xlu0 %v3058, 112
  %v3257 = vpop.permute.xlu0 %3256
  %3258 = vrot.lane.b32.xlu0 %v3061, 112
  %v3259 = vpop.permute.xlu0 %3258
  %3260 = vrot.lane.b32.xlu0 %v3066, 112
  %v3261 = vpop.permute.xlu0 %3260
  %3262 = vrot.lane.b32.xlu0 %v3069, 112
  %v3263 = vpop.permute.xlu0 %3262
  %3328 = vst.msk [vmem:[#allocation2] sm:$0xff] %vm1699, %v3137
  %3329 = vst.msk [vmem:[#allocation2 + $0x8] sm:$0xff] %vm1699, %v3139
  %3330 = vst.msk [vmem:[#allocation2 + $0x10] sm:$0xff] %vm1699, %v3141
  %3331 = vst.msk [vmem:[#allocation2 + $0x18] sm:$0xff] %vm1699, %v3143
  %3332 = vst.msk [vmem:[#allocation2 + $0x20] sm:$0xff] %vm1699, %v3145
  %3333 = vst.msk [vmem:[#allocation2 + $0x28] sm:$0xff] %vm1699, %v3147
  %3334 = vst.msk [vmem:[#allocation2 + $0x30] sm:$0xff] %vm1699, %v3149
  %3335 = vst.msk [vmem:[#allocation2 + $0x38] sm:$0xff] %vm1699, %v3151
  %3336 = vst.msk [vmem:[#allocation2 + $0x40] sm:$0xff] %vm1699, %v3153
  %3337 = vst.msk [vmem:[#allocation2 + $0x48] sm:$0xff] %vm1699, %v3155
  %3338 = vst.msk [vmem:[#allocation2 + $0x50] sm:$0xff] %vm1699, %v3157
  %3339 = vst.msk [vmem:[#allocation2 + $0x58] sm:$0xff] %vm1699, %v3159
  %3340 = vst.msk [vmem:[#allocation2 + $0x60] sm:$0xff] %vm1699, %v3161
  %3341 = vst.msk [vmem:[#allocation2 + $0x68] sm:$0xff] %vm1699, %v3163
  %3342 = vst.msk [vmem:[#allocation2 + $0x70] sm:$0xff] %vm1699, %v3165
  %3343 = vst.msk [vmem:[#allocation2 + $0x78] sm:$0xff] %vm1699, %v3167
  %3344 = vst.msk [vmem:[#allocation2 + $0x80] sm:$0xff] %vm1699, %v3169
  %3345 = vst.msk [vmem:[#allocation2 + $0x88] sm:$0xff] %vm1699, %v3171
  %3346 = vst.msk [vmem:[#allocation2 + $0x90] sm:$0xff] %vm1699, %v3173
  %3347 = vst.msk [vmem:[#allocation2 + $0x98] sm:$0xff] %vm1699, %v3175
  %3348 = vst.msk [vmem:[#allocation2 + $0xa0] sm:$0xff] %vm1699, %v3177
  %3349 = vst.msk [vmem:[#allocation2 + $0xa8] sm:$0xff] %vm1699, %v3179
  %3350 = vst.msk [vmem:[#allocation2 + $0xb0] sm:$0xff] %vm1699, %v3181
  %3351 = vst.msk [vmem:[#allocation2 + $0xb8] sm:$0xff] %vm1699, %v3183
  %3352 = vst.msk [vmem:[#allocation2 + $0xc0] sm:$0xff] %vm1699, %v3185
  %3353 = vst.msk [vmem:[#allocation2 + $0xc8] sm:$0xff] %vm1699, %v3187
  %3354 = vst.msk [vmem:[#allocation2 + $0xd0] sm:$0xff] %vm1699, %v3189
  %3355 = vst.msk [vmem:[#allocation2 + $0xd8] sm:$0xff] %vm1699, %v3191
  %3356 = vst.msk [vmem:[#allocation2 + $0xe0] sm:$0xff] %vm1699, %v3193
  %3357 = vst.msk [vmem:[#allocation2 + $0xe8] sm:$0xff] %vm1699, %v3195
  %3358 = vst.msk [vmem:[#allocation2 + $0xf0] sm:$0xff] %vm1699, %v3197
  %3359 = vst.msk [vmem:[#allocation2 + $0xf8] sm:$0xff] %vm1699, %v3199
  %3360 = vst.msk [vmem:[#allocation2 + $0x100] sm:$0xff] %vm1699, %v3201
  %3361 = vst.msk [vmem:[#allocation2 + $0x108] sm:$0xff] %vm1699, %v3203
  %3362 = vst.msk [vmem:[#allocation2 + $0x110] sm:$0xff] %vm1699, %v3205
  %3363 = vst.msk [vmem:[#allocation2 + $0x118] sm:$0xff] %vm1699, %v3207
  %3364 = vst.msk [vmem:[#allocation2 + $0x120] sm:$0xff] %vm1699, %v3209
  %3365 = vst.msk [vmem:[#allocation2 + $0x128] sm:$0xff] %vm1699, %v3211
  %3366 = vst.msk [vmem:[#allocation2 + $0x130] sm:$0xff] %vm1699, %v3213
  %3367 = vst.msk [vmem:[#allocation2 + $0x138] sm:$0xff] %vm1699, %v3215
  %3368 = vst.msk [vmem:[#allocation2 + $0x140] sm:$0xff] %vm1699, %v3217
  %3369 = vst.msk [vmem:[#allocation2 + $0x148] sm:$0xff] %vm1699, %v3219
  %3370 = vst.msk [vmem:[#allocation2 + $0x150] sm:$0xff] %vm1699, %v3221
  %3371 = vst.msk [vmem:[#allocation2 + $0x158] sm:$0xff] %vm1699, %v3223
  %3372 = vst.msk [vmem:[#allocation2 + $0x160] sm:$0xff] %vm1699, %v3225
  %3373 = vst.msk [vmem:[#allocation2 + $0x168] sm:$0xff] %vm1699, %v3227
  %3374 = vst.msk [vmem:[#allocation2 + $0x170] sm:$0xff] %vm1699, %v3229
  %3375 = vst.msk [vmem:[#allocation2 + $0x178] sm:$0xff] %vm1699, %v3231
  %3376 = vst.msk [vmem:[#allocation2 + $0x180] sm:$0xff] %vm1699, %v3233
  %3377 = vst.msk [vmem:[#allocation2 + $0x188] sm:$0xff] %vm1699, %v3235
  %3378 = vst.msk [vmem:[#allocation2 + $0x190] sm:$0xff] %vm1699, %v3237
  %3379 = vst.msk [vmem:[#allocation2 + $0x198] sm:$0xff] %vm1699, %v3239
  %3380 = vst.msk [vmem:[#allocation2 + $0x1a0] sm:$0xff] %vm1699, %v3241
  %3381 = vst.msk [vmem:[#allocation2 + $0x1a8] sm:$0xff] %vm1699, %v3243
  %3382 = vst.msk [vmem:[#allocation2 + $0x1b0] sm:$0xff] %vm1699, %v3245
  %3383 = vst.msk [vmem:[#allocation2 + $0x1b8] sm:$0xff] %vm1699, %v3247
  %3384 = vst.msk [vmem:[#allocation2 + $0x1c0] sm:$0xff] %vm1699, %v3249
  %3385 = vst.msk [vmem:[#allocation2 + $0x1c8] sm:$0xff] %vm1699, %v3251
  %3386 = vst.msk [vmem:[#allocation2 + $0x1d0] sm:$0xff] %vm1699, %v3253
  %3387 = vst.msk [vmem:[#allocation2 + $0x1d8] sm:$0xff] %vm1699, %v3255
  %3388 = vst.msk [vmem:[#allocation2 + $0x1e0] sm:$0xff] %vm1699, %v3257
  %3389 = vst.msk [vmem:[#allocation2 + $0x1e8] sm:$0xff] %vm1699, %v3259
  %3390 = vst.msk [vmem:[#allocation2 + $0x1f0] sm:$0xff] %vm1699, %v3261
  %3391 = vst.msk [vmem:[#allocation2 + $0x1f8] sm:$0xff] %vm1699, %v3263
  %s3392 = scalar_lea.vmem [#allocation2], 16
  %v3393 = vld [vmem:[%s3392 + $0x1] sm:$0xff]
  %v3394 = vld [vmem:[%s3392 + $0x9] sm:$0x7f]
  %v3395 = vld [vmem:[%s3392 + $0x11] sm:$0xff]
  %v3396 = vld [vmem:[%s3392 + $0x19] sm:$0x7f]
  %v3397 = vld [vmem:[%s3392 + $0x21] sm:$0xff]
  %v3398 = vld [vmem:[%s3392 + $0x29] sm:$0x7f]
  %v3399 = vld [vmem:[%s3392 + $0x31] sm:$0xff]
  %v3400 = vld [vmem:[%s3392 + $0x39] sm:$0x7f]
  %v3401 = vld [vmem:[%s3392 + $0x41] sm:$0xff]
  %v3402 = vld [vmem:[%s3392 + $0x49] sm:$0x7f]
  %v3403 = vld [vmem:[%s3392 + $0x51] sm:$0xff]
  %v3404 = vld [vmem:[%s3392 + $0x59] sm:$0x7f]
  %v3405 = vld [vmem:[%s3392 + $0x61] sm:$0xff]
  %v3406 = vld [vmem:[%s3392 + $0x69] sm:$0x7f]
  %v3407 = vld [vmem:[%s3392 + $0x71] sm:$0xff]
  %v3408 = vld [vmem:[%s3392 + $0x79] sm:$0x7f]
  %v3409 = vld [vmem:[%s3392 + $0x81] sm:$0xff]
  %v3410 = vld [vmem:[%s3392 + $0x89] sm:$0x7f]
  %v3411 = vld [vmem:[%s3392 + $0x91] sm:$0xff]
  %v3412 = vld [vmem:[%s3392 + $0x99] sm:$0x7f]
  %v3413 = vld [vmem:[%s3392 + $0xa1] sm:$0xff]
  %v3414 = vld [vmem:[%s3392 + $0xa9] sm:$0x7f]
  %v3415 = vld [vmem:[%s3392 + $0xb1] sm:$0xff]
  %v3416 = vld [vmem:[%s3392 + $0xb9] sm:$0x7f]
  %v3417 = vld [vmem:[%s3392 + $0xc1] sm:$0xff]
  %v3418 = vld [vmem:[%s3392 + $0xc9] sm:$0x7f]
  %v3419 = vld [vmem:[%s3392 + $0xd1] sm:$0xff]
  %v3420 = vld [vmem:[%s3392 + $0xd9] sm:$0x7f]
  %v3421 = vld [vmem:[%s3392 + $0xe1] sm:$0xff]
  %v3422 = vld [vmem:[%s3392 + $0xe9] sm:$0x7f]
  %v3423 = vld [vmem:[%s3392 + $0x101] sm:$0xff]
  %v3424 = vld [vmem:[%s3392 + $0x109] sm:$0x7f]
  %v3425 = vld [vmem:[%s3392 + $0x111] sm:$0xff]
  %v3426 = vld [vmem:[%s3392 + $0x119] sm:$0x7f]
  %v3427 = vld [vmem:[%s3392 + $0x121] sm:$0xff]
  %v3428 = vld [vmem:[%s3392 + $0x129] sm:$0x7f]
  %v3429 = vld [vmem:[%s3392 + $0x131] sm:$0xff]
  %v3430 = vld [vmem:[%s3392 + $0x139] sm:$0x7f]
  %v3431 = vld [vmem:[%s3392 + $0x141] sm:$0xff]
  %v3432 = vld [vmem:[%s3392 + $0x149] sm:$0x7f]
  %v3433 = vld [vmem:[%s3392 + $0x151] sm:$0xff]
  %v3434 = vld [vmem:[%s3392 + $0x159] sm:$0x7f]
  %v3435 = vld [vmem:[%s3392 + $0x161] sm:$0xff]
  %v3436 = vld [vmem:[%s3392 + $0x169] sm:$0x7f]
  %v3437 = vld [vmem:[%s3392 + $0x171] sm:$0xff]
  %v3438 = vld [vmem:[%s3392 + $0x179] sm:$0x7f]
  %v3439 = vld [vmem:[%s3392 + $0x181] sm:$0xff]
  %v3440 = vld [vmem:[%s3392 + $0x189] sm:$0x7f]
  %v3441 = vld [vmem:[%s3392 + $0x191] sm:$0xff]
  %v3442 = vld [vmem:[%s3392 + $0x199] sm:$0x7f]
  %v3443 = vld [vmem:[%s3392 + $0x1a1] sm:$0xff]
  %v3444 = vld [vmem:[%s3392 + $0x1a9] sm:$0x7f]
  %v3445 = vld [vmem:[%s3392 + $0x1b1] sm:$0xff]
  %v3446 = vld [vmem:[%s3392 + $0x1b9] sm:$0x7f]
  %v3447 = vld [vmem:[%s3392 + $0x1c1] sm:$0xff]
  %v3448 = vld [vmem:[%s3392 + $0x1c9] sm:$0x7f]
  %v3449 = vld [vmem:[%s3392 + $0x1d1] sm:$0xff]
  %v3450 = vld [vmem:[%s3392 + $0x1d9] sm:$0x7f]
  %v3451 = vld [vmem:[%s3392 + $0x1e1] sm:$0xff]
  %v3452 = vld [vmem:[%s3392 + $0x1e9] sm:$0x7f]
  %v3453 = vadd.f32 %v3393, %v2818
  %v3454 = vadd.f32 %v3394, %v2821
  %v3455 = vadd.f32 %v3395, %v2826
  %v3456 = vadd.f32 %v3396, %v2829
  %v3457 = vadd.f32 %v3397, %v2834
  %v3458 = vadd.f32 %v3398, %v2837
  %v3459 = vadd.f32 %v3399, %v2842
  %v3460 = vadd.f32 %v3400, %v2845
  %v3461 = vadd.f32 %v3401, %v2850
  %v3462 = vadd.f32 %v3402, %v2853
  %v3463 = vadd.f32 %v3403, %v2858
  %v3464 = vadd.f32 %v3404, %v2861
  %v3465 = vadd.f32 %v3405, %v2866
  %v3466 = vadd.f32 %v3406, %v2869
  %v3467 = vadd.f32 %v3407, %v2874
  %v3468 = vadd.f32 %v3408, %v2877
  %v3469 = vadd.f32 %v3409, %v2882
  %v3470 = vadd.f32 %v3410, %v2885
  %v3471 = vadd.f32 %v3411, %v2890
  %v3472 = vadd.f32 %v3412, %v2893
  %v3473 = vadd.f32 %v3413, %v2898
  %v3474 = vadd.f32 %v3414, %v2901
  %v3475 = vadd.f32 %v3415, %v2906
  %v3476 = vadd.f32 %v3416, %v2909
  %v3477 = vadd.f32 %v3417, %v2914
  %v3478 = vadd.f32 %v3418, %v2917
  %v3479 = vadd.f32 %v3419, %v2922
  %v3480 = vadd.f32 %v3420, %v2925
  %v3481 = vadd.f32 %v3421, %v2930
  %v3482 = vadd.f32 %v3422, %v2933
  %v3483 = vadd.f32 %v3423, %v2946
  %v3484 = vadd.f32 %v3424, %v2949
  %v3485 = vadd.f32 %v3425, %v2954
  %v3486 = vadd.f32 %v3426, %v2957
  %v3487 = vadd.f32 %v3427, %v2962
  %v3488 = vadd.f32 %v3428, %v2965
  %v3489 = vadd.f32 %v3429, %v2970
  %v3490 = vadd.f32 %v3430, %v2973
  %v3491 = vadd.f32 %v3431, %v2978
  %v3492 = vadd.f32 %v3432, %v2981
  %v3493 = vadd.f32 %v3433, %v2986
  %v3494 = vadd.f32 %v3434, %v2989
  %v3495 = vadd.f32 %v3435, %v2994
  %v3496 = vadd.f32 %v3436, %v2997
  %v3497 = vadd.f32 %v3437, %v3002
  %v3498 = vadd.f32 %v3438, %v3005
  %v3499 = vadd.f32 %v3439, %v3010
  %v3500 = vadd.f32 %v3440, %v3013
  %v3501 = vadd.f32 %v3441, %v3018
  %v3502 = vadd.f32 %v3442, %v3021
  %v3503 = vadd.f32 %v3443, %v3026
  %v3504 = vadd.f32 %v3444, %v3029
  %v3505 = vadd.f32 %v3445, %v3034
  %v3506 = vadd.f32 %v3446, %v3037
  %v3507 = vadd.f32 %v3447, %v3042
  %v3508 = vadd.f32 %v3448, %v3045
  %v3509 = vadd.f32 %v3449, %v3050
  %v3510 = vadd.f32 %v3450, %v3053
  %v3511 = vadd.f32 %v3451, %v3058
  %v3512 = vadd.f32 %v3452, %v3061
  %3513 = vst.msk [vmem:[%s3392 + $0x1] sm:$0xff] %vm1699, %v3453
  %vm3514 = vcmask 30720
  %3515 = vst.msk [vmem:[%s3392 + $0x9] sm:$0x7f] %vm3514, %v3454
  %3516 = vst.msk [vmem:[%s3392 + $0x11] sm:$0xff] %vm1699, %v3455
  %3517 = vst.msk [vmem:[%s3392 + $0x19] sm:$0x7f] %vm3514, %v3456
  %3518 = vst.msk [vmem:[%s3392 + $0x21] sm:$0xff] %vm1699, %v3457
  %3519 = vst.msk [vmem:[%s3392 + $0x29] sm:$0x7f] %vm3514, %v3458
  %3520 = vst.msk [vmem:[%s3392 + $0x31] sm:$0xff] %vm1699, %v3459
  %3521 = vst.msk [vmem:[%s3392 + $0x39] sm:$0x7f] %vm3514, %v3460
  %3522 = vst.msk [vmem:[%s3392 + $0x41] sm:$0xff] %vm1699, %v3461
  %3523 = vst.msk [vmem:[%s3392 + $0x49] sm:$0x7f] %vm3514, %v3462
  %3524 = vst.msk [vmem:[%s3392 + $0x51] sm:$0xff] %vm1699, %v3463
  %3525 = vst.msk [vmem:[%s3392 + $0x59] sm:$0x7f] %vm3514, %v3464
  %3526 = vst.msk [vmem:[%s3392 + $0x61] sm:$0xff] %vm1699, %v3465
  %3527 = vst.msk [vmem:[%s3392 + $0x69] sm:$0x7f] %vm3514, %v3466
  %3528 = vst.msk [vmem:[%s3392 + $0x71] sm:$0xff] %vm1699, %v3467
  %3529 = vst.msk [vmem:[%s3392 + $0x79] sm:$0x7f] %vm3514, %v3468
  %3530 = vst.msk [vmem:[%s3392 + $0x81] sm:$0xff] %vm1699, %v3469
  %3531 = vst.msk [vmem:[%s3392 + $0x89] sm:$0x7f] %vm3514, %v3470
  %3532 = vst.msk [vmem:[%s3392 + $0x91] sm:$0xff] %vm1699, %v3471
  %3533 = vst.msk [vmem:[%s3392 + $0x99] sm:$0x7f] %vm3514, %v3472
  %3534 = vst.msk [vmem:[%s3392 + $0xa1] sm:$0xff] %vm1699, %v3473
  %3535 = vst.msk [vmem:[%s3392 + $0xa9] sm:$0x7f] %vm3514, %v3474
  %3536 = vst.msk [vmem:[%s3392 + $0xb1] sm:$0xff] %vm1699, %v3475
  %3537 = vst.msk [vmem:[%s3392 + $0xb9] sm:$0x7f] %vm3514, %v3476
  %3538 = vst.msk [vmem:[%s3392 + $0xc1] sm:$0xff] %vm1699, %v3477
  %3539 = vst.msk [vmem:[%s3392 + $0xc9] sm:$0x7f] %vm3514, %v3478
  %3540 = vst.msk [vmem:[%s3392 + $0xd1] sm:$0xff] %vm1699, %v3479
  %3541 = vst.msk [vmem:[%s3392 + $0xd9] sm:$0x7f] %vm3514, %v3480
  %3542 = vst.msk [vmem:[%s3392 + $0xe1] sm:$0xff] %vm1699, %v3481
  %3543 = vst.msk [vmem:[%s3392 + $0xe9] sm:$0x7f] %vm3514, %v3482
  %3544 = vst.msk [vmem:[%s3392 + $0x101] sm:$0xff] %vm1699, %v3483
  %3545 = vst.msk [vmem:[%s3392 + $0x109] sm:$0x7f] %vm3514, %v3484
  %3546 = vst.msk [vmem:[%s3392 + $0x111] sm:$0xff] %vm1699, %v3485
  %3547 = vst.msk [vmem:[%s3392 + $0x119] sm:$0x7f] %vm3514, %v3486
  %3548 = vst.msk [vmem:[%s3392 + $0x121] sm:$0xff] %vm1699, %v3487
  %3549 = vst.msk [vmem:[%s3392 + $0x129] sm:$0x7f] %vm3514, %v3488
  %3550 = vst.msk [vmem:[%s3392 + $0x131] sm:$0xff] %vm1699, %v3489
  %3551 = vst.msk [vmem:[%s3392 + $0x139] sm:$0x7f] %vm3514, %v3490
  %3552 = vst.msk [vmem:[%s3392 + $0x141] sm:$0xff] %vm1699, %v3491
  %3553 = vst.msk [vmem:[%s3392 + $0x149] sm:$0x7f] %vm3514, %v3492
  %3554 = vst.msk [vmem:[%s3392 + $0x151] sm:$0xff] %vm1699, %v3493
  %3555 = vst.msk [vmem:[%s3392 + $0x159] sm:$0x7f] %vm3514, %v3494
  %3556 = vst.msk [vmem:[%s3392 + $0x161] sm:$0xff] %vm1699, %v3495
  %3557 = vst.msk [vmem:[%s3392 + $0x169] sm:$0x7f] %vm3514, %v3496
  %3558 = vst.msk [vmem:[%s3392 + $0x171] sm:$0xff] %vm1699, %v3497
  %3559 = vst.msk [vmem:[%s3392 + $0x179] sm:$0x7f] %vm3514, %v3498
  %3560 = vst.msk [vmem:[%s3392 + $0x181] sm:$0xff] %vm1699, %v3499
  %3561 = vst.msk [vmem:[%s3392 + $0x189] sm:$0x7f] %vm3514, %v3500
  %3562 = vst.msk [vmem:[%s3392 + $0x191] sm:$0xff] %vm1699, %v3501
  %3563 = vst.msk [vmem:[%s3392 + $0x199] sm:$0x7f] %vm3514, %v3502
  %3564 = vst.msk [vmem:[%s3392 + $0x1a1] sm:$0xff] %vm1699, %v3503
  %3565 = vst.msk [vmem:[%s3392 + $0x1a9] sm:$0x7f] %vm3514, %v3504
  %3566 = vst.msk [vmem:[%s3392 + $0x1b1] sm:$0xff] %vm1699, %v3505
  %3567 = vst.msk [vmem:[%s3392 + $0x1b9] sm:$0x7f] %vm3514, %v3506
  %3568 = vst.msk [vmem:[%s3392 + $0x1c1] sm:$0xff] %vm1699, %v3507
  %3569 = vst.msk [vmem:[%s3392 + $0x1c9] sm:$0x7f] %vm3514, %v3508
  %3570 = vst.msk [vmem:[%s3392 + $0x1d1] sm:$0xff] %vm1699, %v3509
  %3571 = vst.msk [vmem:[%s3392 + $0x1d9] sm:$0x7f] %vm3514, %v3510
  %3572 = vst.msk [vmem:[%s3392 + $0x1e1] sm:$0xff] %vm1699, %v3511
  %3573 = vst.msk [vmem:[%s3392 + $0x1e9] sm:$0x7f] %vm3514, %v3512
  %v3574 = vld [vmem:[%s3392] sm:$0xff]
  %v3575 = vld [vmem:[%s3392 + $0x8] sm:$0xff]
  %v3576 = vld [vmem:[%s3392 + $0x10] sm:$0xff]
  %v3577 = vld [vmem:[%s3392 + $0x18] sm:$0xff]
  %v3578 = vld [vmem:[%s3392 + $0x20] sm:$0xff]
  %v3579 = vld [vmem:[%s3392 + $0x28] sm:$0xff]
  %v3580 = vld [vmem:[%s3392 + $0x30] sm:$0xff]
  %v3581 = vld [vmem:[%s3392 + $0x38] sm:$0xff]
  %v3582 = vld [vmem:[%s3392 + $0x40] sm:$0xff]
  %v3583 = vld [vmem:[%s3392 + $0x48] sm:$0xff]
  %v3584 = vld [vmem:[%s3392 + $0x50] sm:$0xff]
  %v3585 = vld [vmem:[%s3392 + $0x58] sm:$0xff]
  %v3586 = vld [vmem:[%s3392 + $0x60] sm:$0xff]
  %v3587 = vld [vmem:[%s3392 + $0x68] sm:$0xff]
  %v3588 = vld [vmem:[%s3392 + $0x70] sm:$0xff]
  %v3589 = vld [vmem:[%s3392 + $0x78] sm:$0xff]
  %v3590 = vld [vmem:[%s3392 + $0x80] sm:$0xff]
  %v3591 = vld [vmem:[%s3392 + $0x88] sm:$0xff]
  %v3592 = vld [vmem:[%s3392 + $0x90] sm:$0xff]
  %v3593 = vld [vmem:[%s3392 + $0x98] sm:$0xff]
  %v3594 = vld [vmem:[%s3392 + $0xa0] sm:$0xff]
  %v3595 = vld [vmem:[%s3392 + $0xa8] sm:$0xff]
  %v3596 = vld [vmem:[%s3392 + $0xb0] sm:$0xff]
  %v3597 = vld [vmem:[%s3392 + $0xb8] sm:$0xff]
  %v3598 = vld [vmem:[%s3392 + $0xc0] sm:$0xff]
  %v3599 = vld [vmem:[%s3392 + $0xc8] sm:$0xff]
  %v3600 = vld [vmem:[%s3392 + $0xd0] sm:$0xff]
  %v3601 = vld [vmem:[%s3392 + $0xd8] sm:$0xff]
  %v3602 = vld [vmem:[%s3392 + $0xe0] sm:$0xff]
  %v3603 = vld [vmem:[%s3392 + $0xe8] sm:$0xff]
  %v3604 = vld [vmem:[%s3392 + $0x100] sm:$0xff]
  %v3605 = vld [vmem:[%s3392 + $0x108] sm:$0xff]
  %v3606 = vld [vmem:[%s3392 + $0x110] sm:$0xff]
  %v3607 = vld [vmem:[%s3392 + $0x118] sm:$0xff]
  %v3608 = vld [vmem:[%s3392 + $0x120] sm:$0xff]
  %v3609 = vld [vmem:[%s3392 + $0x128] sm:$0xff]
  %v3610 = vld [vmem:[%s3392 + $0x130] sm:$0xff]
  %v3611 = vld [vmem:[%s3392 + $0x138] sm:$0xff]
  %v3612 = vld [vmem:[%s3392 + $0x140] sm:$0xff]
  %v3613 = vld [vmem:[%s3392 + $0x148] sm:$0xff]
  %v3614 = vld [vmem:[%s3392 + $0x150] sm:$0xff]
  %v3615 = vld [vmem:[%s3392 + $0x158] sm:$0xff]
  %v3616 = vld [vmem:[%s3392 + $0x160] sm:$0xff]
  %v3617 = vld [vmem:[%s3392 + $0x168] sm:$0xff]
  %v3618 = vld [vmem:[%s3392 + $0x170] sm:$0xff]
  %v3619 = vld [vmem:[%s3392 + $0x178] sm:$0xff]
  %v3620 = vld [vmem:[%s3392 + $0x180] sm:$0xff]
  %v3621 = vld [vmem:[%s3392 + $0x188] sm:$0xff]
  %v3622 = vld [vmem:[%s3392 + $0x190] sm:$0xff]
  %v3623 = vld [vmem:[%s3392 + $0x198] sm:$0xff]
  %v3624 = vld [vmem:[%s3392 + $0x1a0] sm:$0xff]
  %v3625 = vld [vmem:[%s3392 + $0x1a8] sm:$0xff]
  %v3626 = vld [vmem:[%s3392 + $0x1b0] sm:$0xff]
  %v3627 = vld [vmem:[%s3392 + $0x1b8] sm:$0xff]
  %v3628 = vld [vmem:[%s3392 + $0x1c0] sm:$0xff]
  %v3629 = vld [vmem:[%s3392 + $0x1c8] sm:$0xff]
  %v3630 = vld [vmem:[%s3392 + $0x1d0] sm:$0xff]
  %v3631 = vld [vmem:[%s3392 + $0x1d8] sm:$0xff]
  %v3632 = vld [vmem:[%s3392 + $0x1e0] sm:$0xff]
  %v3633 = vld [vmem:[%s3392 + $0x1e8] sm:$0xff]
  %3634 = vrot.lane.b32.xlu0 %v2818, 124
  %v3635 = vpop.permute.xlu0 %3634
  %3636 = vrot.lane.b32.xlu0 %v2821, 124
  %v3637 = vpop.permute.xlu0 %3636
  %3638 = vrot.lane.b32.xlu0 %v2826, 124
  %v3639 = vpop.permute.xlu0 %3638
  %3640 = vrot.lane.b32.xlu0 %v2829, 124
  %v3641 = vpop.permute.xlu0 %3640
  %3642 = vrot.lane.b32.xlu0 %v2834, 124
  %v3643 = vpop.permute.xlu0 %3642
  %3644 = vrot.lane.b32.xlu0 %v2837, 124
  %v3645 = vpop.permute.xlu0 %3644
  %3646 = vrot.lane.b32.xlu0 %v2842, 124
  %v3647 = vpop.permute.xlu0 %3646
  %3648 = vrot.lane.b32.xlu0 %v2845, 124
  %v3649 = vpop.permute.xlu0 %3648
  %3650 = vrot.lane.b32.xlu0 %v2850, 124
  %v3651 = vpop.permute.xlu0 %3650
  %3652 = vrot.lane.b32.xlu0 %v2853, 124
  %v3653 = vpop.permute.xlu0 %3652
  %3654 = vrot.lane.b32.xlu0 %v2858, 124
  %v3655 = vpop.permute.xlu0 %3654
  %3656 = vrot.lane.b32.xlu0 %v2861, 124
  %v3657 = vpop.permute.xlu0 %3656
  %3658 = vrot.lane.b32.xlu0 %v2866, 124
  %v3659 = vpop.permute.xlu0 %3658
  %3660 = vrot.lane.b32.xlu0 %v2869, 124
  %v3661 = vpop.permute.xlu0 %3660
  %3662 = vrot.lane.b32.xlu0 %v2874, 124
  %v3663 = vpop.permute.xlu0 %3662
  %3664 = vrot.lane.b32.xlu0 %v2877, 124
  %v3665 = vpop.permute.xlu0 %3664
  %3666 = vrot.lane.b32.xlu0 %v2882, 124
  %v3667 = vpop.permute.xlu0 %3666
  %3668 = vrot.lane.b32.xlu0 %v2885, 124
  %v3669 = vpop.permute.xlu0 %3668
  %3670 = vrot.lane.b32.xlu0 %v2890, 124
  %v3671 = vpop.permute.xlu0 %3670
  %3672 = vrot.lane.b32.xlu0 %v2893, 124
  %v3673 = vpop.permute.xlu0 %3672
  %3674 = vrot.lane.b32.xlu0 %v2898, 124
  %v3675 = vpop.permute.xlu0 %3674
  %3676 = vrot.lane.b32.xlu0 %v2901, 124
  %v3677 = vpop.permute.xlu0 %3676
  %3678 = vrot.lane.b32.xlu0 %v2906, 124
  %v3679 = vpop.permute.xlu0 %3678
  %3680 = vrot.lane.b32.xlu0 %v2909, 124
  %v3681 = vpop.permute.xlu0 %3680
  %3682 = vrot.lane.b32.xlu0 %v2914, 124
  %v3683 = vpop.permute.xlu0 %3682
  %3684 = vrot.lane.b32.xlu0 %v2917, 124
  %v3685 = vpop.permute.xlu0 %3684
  %3686 = vrot.lane.b32.xlu0 %v2922, 124
  %v3687 = vpop.permute.xlu0 %3686
  %3688 = vrot.lane.b32.xlu0 %v2925, 124
  %v3689 = vpop.permute.xlu0 %3688
  %3690 = vrot.lane.b32.xlu0 %v2930, 124
  %v3691 = vpop.permute.xlu0 %3690
  %3692 = vrot.lane.b32.xlu0 %v2933, 124
  %v3693 = vpop.permute.xlu0 %3692
  %3694 = vrot.lane.b32.xlu0 %v2946, 124
  %v3695 = vpop.permute.xlu0 %3694
  %3696 = vrot.lane.b32.xlu0 %v2949, 124
  %v3697 = vpop.permute.xlu0 %3696
  %3698 = vrot.lane.b32.xlu0 %v2954, 124
  %v3699 = vpop.permute.xlu0 %3698
  %3700 = vrot.lane.b32.xlu0 %v2957, 124
  %v3701 = vpop.permute.xlu0 %3700
  %3702 = vrot.lane.b32.xlu0 %v2962, 124
  %v3703 = vpop.permute.xlu0 %3702
  %3704 = vrot.lane.b32.xlu0 %v2965, 124
  %v3705 = vpop.permute.xlu0 %3704
  %3706 = vrot.lane.b32.xlu0 %v2970, 124
  %v3707 = vpop.permute.xlu0 %3706
  %3708 = vrot.lane.b32.xlu0 %v2973, 124
  %v3709 = vpop.permute.xlu0 %3708
  %3710 = vrot.lane.b32.xlu0 %v2978, 124
  %v3711 = vpop.permute.xlu0 %3710
  %3712 = vrot.lane.b32.xlu0 %v2981, 124
  %v3713 = vpop.permute.xlu0 %3712
  %3714 = vrot.lane.b32.xlu0 %v2986, 124
  %v3715 = vpop.permute.xlu0 %3714
  %3716 = vrot.lane.b32.xlu0 %v2989, 124
  %v3717 = vpop.permute.xlu0 %3716
  %3718 = vrot.lane.b32.xlu0 %v2994, 124
  %v3719 = vpop.permute.xlu0 %3718
  %3720 = vrot.lane.b32.xlu0 %v2997, 124
  %v3721 = vpop.permute.xlu0 %3720
  %3722 = vrot.lane.b32.xlu0 %v3002, 124
  %v3723 = vpop.permute.xlu0 %3722
  %3724 = vrot.lane.b32.xlu0 %v3005, 124
  %v3725 = vpop.permute.xlu0 %3724
  %3726 = vrot.lane.b32.xlu0 %v3010, 124
  %v3727 = vpop.permute.xlu0 %3726
  %3728 = vrot.lane.b32.xlu0 %v3013, 124
  %v3729 = vpop.permute.xlu0 %3728
  %3730 = vrot.lane.b32.xlu0 %v3018, 124
  %v3731 = vpop.permute.xlu0 %3730
  %3732 = vrot.lane.b32.xlu0 %v3021, 124
  %v3733 = vpop.permute.xlu0 %3732
  %3734 = vrot.lane.b32.xlu0 %v3026, 124
  %v3735 = vpop.permute.xlu0 %3734
  %3736 = vrot.lane.b32.xlu0 %v3029, 124
  %v3737 = vpop.permute.xlu0 %3736
  %3738 = vrot.lane.b32.xlu0 %v3034, 124
  %v3739 = vpop.permute.xlu0 %3738
  %3740 = vrot.lane.b32.xlu0 %v3037, 124
  %v3741 = vpop.permute.xlu0 %3740
  %3742 = vrot.lane.b32.xlu0 %v3042, 124
  %v3743 = vpop.permute.xlu0 %3742
  %3744 = vrot.lane.b32.xlu0 %v3045, 124
  %v3745 = vpop.permute.xlu0 %3744
  %3746 = vrot.lane.b32.xlu0 %v3050, 124
  %v3747 = vpop.permute.xlu0 %3746
  %3748 = vrot.lane.b32.xlu0 %v3053, 124
  %v3749 = vpop.permute.xlu0 %3748
  %3750 = vrot.lane.b32.xlu0 %v3058, 124
  %v3751 = vpop.permute.xlu0 %3750
  %3752 = vrot.lane.b32.xlu0 %v3061, 124
  %v3753 = vpop.permute.xlu0 %3752
  %v3814 = vadd.f32 %v3574, %v3635
  %v3815 = vadd.f32 %v3575, %v3637
  %v3816 = vadd.f32 %v3576, %v3639
  %v3817 = vadd.f32 %v3577, %v3641
  %v3818 = vadd.f32 %v3578, %v3643
  %v3819 = vadd.f32 %v3579, %v3645
  %v3820 = vadd.f32 %v3580, %v3647
  %v3821 = vadd.f32 %v3581, %v3649
  %v3822 = vadd.f32 %v3582, %v3651
  %v3823 = vadd.f32 %v3583, %v3653
  %v3824 = vadd.f32 %v3584, %v3655
  %v3825 = vadd.f32 %v3585, %v3657
  %v3826 = vadd.f32 %v3586, %v3659
  %v3827 = vadd.f32 %v3587, %v3661
  %v3828 = vadd.f32 %v3588, %v3663
  %v3829 = vadd.f32 %v3589, %v3665
  %v3830 = vadd.f32 %v3590, %v3667
  %v3831 = vadd.f32 %v3591, %v3669
  %v3832 = vadd.f32 %v3592, %v3671
  %v3833 = vadd.f32 %v3593, %v3673
  %v3834 = vadd.f32 %v3594, %v3675
  %v3835 = vadd.f32 %v3595, %v3677
  %v3836 = vadd.f32 %v3596, %v3679
  %v3837 = vadd.f32 %v3597, %v3681
  %v3838 = vadd.f32 %v3598, %v3683
  %v3839 = vadd.f32 %v3599, %v3685
  %v3840 = vadd.f32 %v3600, %v3687
  %v3841 = vadd.f32 %v3601, %v3689
  %v3842 = vadd.f32 %v3602, %v3691
  %v3843 = vadd.f32 %v3603, %v3693
  %v3844 = vadd.f32 %v3604, %v3695
  %v3845 = vadd.f32 %v3605, %v3697
  %v3846 = vadd.f32 %v3606, %v3699
  %v3847 = vadd.f32 %v3607, %v3701
  %v3848 = vadd.f32 %v3608, %v3703
  %v3849 = vadd.f32 %v3609, %v3705
  %v3850 = vadd.f32 %v3610, %v3707
  %v3851 = vadd.f32 %v3611, %v3709
  %v3852 = vadd.f32 %v3612, %v3711
  %v3853 = vadd.f32 %v3613, %v3713
  %v3854 = vadd.f32 %v3614, %v3715
  %v3855 = vadd.f32 %v3615, %v3717
  %v3856 = vadd.f32 %v3616, %v3719
  %v3857 = vadd.f32 %v3617, %v3721
  %v3858 = vadd.f32 %v3618, %v3723
  %v3859 = vadd.f32 %v3619, %v3725
  %v3860 = vadd.f32 %v3620, %v3727
  %v3861 = vadd.f32 %v3621, %v3729
  %v3862 = vadd.f32 %v3622, %v3731
  %v3863 = vadd.f32 %v3623, %v3733
  %v3864 = vadd.f32 %v3624, %v3735
  %v3865 = vadd.f32 %v3625, %v3737
  %v3866 = vadd.f32 %v3626, %v3739
  %v3867 = vadd.f32 %v3627, %v3741
  %v3868 = vadd.f32 %v3628, %v3743
  %v3869 = vadd.f32 %v3629, %v3745
  %v3870 = vadd.f32 %v3630, %v3747
  %v3871 = vadd.f32 %v3631, %v3749
  %v3872 = vadd.f32 %v3632, %v3751
  %v3873 = vadd.f32 %v3633, %v3753
  %3874 = vst.msk [vmem:[%s3392] sm:$0xff] %vm1699, %v3814
  %3875 = vst.msk [vmem:[%s3392 + $0x8] sm:$0xff] %vm1699, %v3815
  %3876 = vst.msk [vmem:[%s3392 + $0x10] sm:$0xff] %vm1699, %v3816
  %3877 = vst.msk [vmem:[%s3392 + $0x18] sm:$0xff] %vm1699, %v3817
  %3878 = vst.msk [vmem:[%s3392 + $0x20] sm:$0xff] %vm1699, %v3818
  %3879 = vst.msk [vmem:[%s3392 + $0x28] sm:$0xff] %vm1699, %v3819
  %3880 = vst.msk [vmem:[%s3392 + $0x30] sm:$0xff] %vm1699, %v3820
  %3881 = vst.msk [vmem:[%s3392 + $0x38] sm:$0xff] %vm1699, %v3821
  %3882 = vst.msk [vmem:[%s3392 + $0x40] sm:$0xff] %vm1699, %v3822
  %3883 = vst.msk [vmem:[%s3392 + $0x48] sm:$0xff] %vm1699, %v3823
  %3884 = vst.msk [vmem:[%s3392 + $0x50] sm:$0xff] %vm1699, %v3824
  %3885 = vst.msk [vmem:[%s3392 + $0x58] sm:$0xff] %vm1699, %v3825
  %3886 = vst.msk [vmem:[%s3392 + $0x60] sm:$0xff] %vm1699, %v3826
  %3887 = vst.msk [vmem:[%s3392 + $0x68] sm:$0xff] %vm1699, %v3827
  %3888 = vst.msk [vmem:[%s3392 + $0x70] sm:$0xff] %vm1699, %v3828
  %3889 = vst.msk [vmem:[%s3392 + $0x78] sm:$0xff] %vm1699, %v3829
  %3890 = vst.msk [vmem:[%s3392 + $0x80] sm:$0xff] %vm1699, %v3830
  %3891 = vst.msk [vmem:[%s3392 + $0x88] sm:$0xff] %vm1699, %v3831
  %3892 = vst.msk [vmem:[%s3392 + $0x90] sm:$0xff] %vm1699, %v3832
  %3893 = vst.msk [vmem:[%s3392 + $0x98] sm:$0xff] %vm1699, %v3833
  %3894 = vst.msk [vmem:[%s3392 + $0xa0] sm:$0xff] %vm1699, %v3834
  %3895 = vst.msk [vmem:[%s3392 + $0xa8] sm:$0xff] %vm1699, %v3835
  %3896 = vst.msk [vmem:[%s3392 + $0xb0] sm:$0xff] %vm1699, %v3836
  %3897 = vst.msk [vmem:[%s3392 + $0xb8] sm:$0xff] %vm1699, %v3837
  %3898 = vst.msk [vmem:[%s3392 + $0xc0] sm:$0xff] %vm1699, %v3838
  %3899 = vst.msk [vmem:[%s3392 + $0xc8] sm:$0xff] %vm1699, %v3839
  %3900 = vst.msk [vmem:[%s3392 + $0xd0] sm:$0xff] %vm1699, %v3840
  %3901 = vst.msk [vmem:[%s3392 + $0xd8] sm:$0xff] %vm1699, %v3841
  %3902 = vst.msk [vmem:[%s3392 + $0xe0] sm:$0xff] %vm1699, %v3842
  %3903 = vst.msk [vmem:[%s3392 + $0xe8] sm:$0xff] %vm1699, %v3843
  %3904 = vst.msk [vmem:[%s3392 + $0x100] sm:$0xff] %vm1699, %v3844
  %3905 = vst.msk [vmem:[%s3392 + $0x108] sm:$0xff] %vm1699, %v3845
  %3906 = vst.msk [vmem:[%s3392 + $0x110] sm:$0xff] %vm1699, %v3846
  %3907 = vst.msk [vmem:[%s3392 + $0x118] sm:$0xff] %vm1699, %v3847
  %3908 = vst.msk [vmem:[%s3392 + $0x120] sm:$0xff] %vm1699, %v3848
  %3909 = vst.msk [vmem:[%s3392 + $0x128] sm:$0xff] %vm1699, %v3849
  %3910 = vst.msk [vmem:[%s3392 + $0x130] sm:$0xff] %vm1699, %v3850
  %3911 = vst.msk [vmem:[%s3392 + $0x138] sm:$0xff] %vm1699, %v3851
  %3912 = vst.msk [vmem:[%s3392 + $0x140] sm:$0xff] %vm1699, %v3852
  %3913 = vst.msk [vmem:[%s3392 + $0x148] sm:$0xff] %vm1699, %v3853
  %3914 = vst.msk [vmem:[%s3392 + $0x150] sm:$0xff] %vm1699, %v3854
  %3915 = vst.msk [vmem:[%s3392 + $0x158] sm:$0xff] %vm1699, %v3855
  %3916 = vst.msk [vmem:[%s3392 + $0x160] sm:$0xff] %vm1699, %v3856
  %3917 = vst.msk [vmem:[%s3392 + $0x168] sm:$0xff] %vm1699, %v3857
  %3918 = vst.msk [vmem:[%s3392 + $0x170] sm:$0xff] %vm1699, %v3858
  %3919 = vst.msk [vmem:[%s3392 + $0x178] sm:$0xff] %vm1699, %v3859
  %3920 = vst.msk [vmem:[%s3392 + $0x180] sm:$0xff] %vm1699, %v3860
  %3921 = vst.msk [vmem:[%s3392 + $0x188] sm:$0xff] %vm1699, %v3861
  %3922 = vst.msk [vmem:[%s3392 + $0x190] sm:$0xff] %vm1699, %v3862
  %3923 = vst.msk [vmem:[%s3392 + $0x198] sm:$0xff] %vm1699, %v3863
  %3924 = vst.msk [vmem:[%s3392 + $0x1a0] sm:$0xff] %vm1699, %v3864
  %3925 = vst.msk [vmem:[%s3392 + $0x1a8] sm:$0xff] %vm1699, %v3865
  %3926 = vst.msk [vmem:[%s3392 + $0x1b0] sm:$0xff] %vm1699, %v3866
  %3927 = vst.msk [vmem:[%s3392 + $0x1b8] sm:$0xff] %vm1699, %v3867
  %3928 = vst.msk [vmem:[%s3392 + $0x1c0] sm:$0xff] %vm1699, %v3868
  %3929 = vst.msk [vmem:[%s3392 + $0x1c8] sm:$0xff] %vm1699, %v3869
  %3930 = vst.msk [vmem:[%s3392 + $0x1d0] sm:$0xff] %vm1699, %v3870
  %3931 = vst.msk [vmem:[%s3392 + $0x1d8] sm:$0xff] %vm1699, %v3871
  %3932 = vst.msk [vmem:[%s3392 + $0x1e0] sm:$0xff] %vm1699, %v3872
  %3933 = vst.msk [vmem:[%s3392 + $0x1e8] sm:$0xff] %vm1699, %v3873
  %v3934 = vld [vmem:[%s3392] sm:$0xff]
  %v3935 = vld [vmem:[%s3392 + $0x8] sm:$0x7f]
  %v3936 = vld [vmem:[%s3392 + $0x10] sm:$0xff]
  %v3937 = vld [vmem:[%s3392 + $0x18] sm:$0x7f]
  %v3938 = vld [vmem:[%s3392 + $0x20] sm:$0xff]
  %v3939 = vld [vmem:[%s3392 + $0x28] sm:$0x7f]
  %v3940 = vld [vmem:[%s3392 + $0x30] sm:$0xff]
  %v3941 = vld [vmem:[%s3392 + $0x38] sm:$0x7f]
  %v3942 = vld [vmem:[%s3392 + $0x40] sm:$0xff]
  %v3943 = vld [vmem:[%s3392 + $0x48] sm:$0x7f]
  %v3944 = vld [vmem:[%s3392 + $0x50] sm:$0xff]
  %v3945 = vld [vmem:[%s3392 + $0x58] sm:$0x7f]
  %v3946 = vld [vmem:[%s3392 + $0x60] sm:$0xff]
  %v3947 = vld [vmem:[%s3392 + $0x68] sm:$0x7f]
  %v3948 = vld [vmem:[%s3392 + $0x70] sm:$0xff]
  %v3949 = vld [vmem:[%s3392 + $0x78] sm:$0x7f]
  %v3950 = vld [vmem:[%s3392 + $0x80] sm:$0xff]
  %v3951 = vld [vmem:[%s3392 + $0x88] sm:$0x7f]
  %v3952 = vld [vmem:[%s3392 + $0x90] sm:$0xff]
  %v3953 = vld [vmem:[%s3392 + $0x98] sm:$0x7f]
  %v3954 = vld [vmem:[%s3392 + $0xa0] sm:$0xff]
  %v3955 = vld [vmem:[%s3392 + $0xa8] sm:$0x7f]
  %v3956 = vld [vmem:[%s3392 + $0xb0] sm:$0xff]
  %v3957 = vld [vmem:[%s3392 + $0xb8] sm:$0x7f]
  %v3958 = vld [vmem:[%s3392 + $0xc0] sm:$0xff]
  %v3959 = vld [vmem:[%s3392 + $0xc8] sm:$0x7f]
  %v3960 = vld [vmem:[%s3392 + $0xd0] sm:$0xff]
  %v3961 = vld [vmem:[%s3392 + $0xd8] sm:$0x7f]
  %v3962 = vld [vmem:[%s3392 + $0xe0] sm:$0xff]
  %v3963 = vld [vmem:[%s3392 + $0xe8] sm:$0x7f]
  %v3964 = vld [vmem:[%s3392 + $0x100] sm:$0xff]
  %v3965 = vld [vmem:[%s3392 + $0x108] sm:$0x7f]
  %v3966 = vld [vmem:[%s3392 + $0x110] sm:$0xff]
  %v3967 = vld [vmem:[%s3392 + $0x118] sm:$0x7f]
  %v3968 = vld [vmem:[%s3392 + $0x120] sm:$0xff]
  %v3969 = vld [vmem:[%s3392 + $0x128] sm:$0x7f]
  %v3970 = vld [vmem:[%s3392 + $0x130] sm:$0xff]
  %v3971 = vld [vmem:[%s3392 + $0x138] sm:$0x7f]
  %v3972 = vld [vmem:[%s3392 + $0x140] sm:$0xff]
  %v3973 = vld [vmem:[%s3392 + $0x148] sm:$0x7f]
  %v3974 = vld [vmem:[%s3392 + $0x150] sm:$0xff]
  %v3975 = vld [vmem:[%s3392 + $0x158] sm:$0x7f]
  %v3976 = vld [vmem:[%s3392 + $0x160] sm:$0xff]
  %v3977 = vld [vmem:[%s3392 + $0x168] sm:$0x7f]
  %v3978 = vld [vmem:[%s3392 + $0x170] sm:$0xff]
  %v3979 = vld [vmem:[%s3392 + $0x178] sm:$0x7f]
  %v3980 = vld [vmem:[%s3392 + $0x180] sm:$0xff]
  %v3981 = vld [vmem:[%s3392 + $0x188] sm:$0x7f]
  %v3982 = vld [vmem:[%s3392 + $0x190] sm:$0xff]
  %v3983 = vld [vmem:[%s3392 + $0x198] sm:$0x7f]
  %v3984 = vld [vmem:[%s3392 + $0x1a0] sm:$0xff]
  %v3985 = vld [vmem:[%s3392 + $0x1a8] sm:$0x7f]
  %v3986 = vld [vmem:[%s3392 + $0x1b0] sm:$0xff]
  %v3987 = vld [vmem:[%s3392 + $0x1b8] sm:$0x7f]
  %v3988 = vld [vmem:[%s3392 + $0x1c0] sm:$0xff]
  %v3989 = vld [vmem:[%s3392 + $0x1c8] sm:$0x7f]
  %v3990 = vld [vmem:[%s3392 + $0x1d0] sm:$0xff]
  %v3991 = vld [vmem:[%s3392 + $0x1d8] sm:$0x7f]
  %v3992 = vld [vmem:[%s3392 + $0x1e0] sm:$0xff]
  %v3993 = vld [vmem:[%s3392 + $0x1e8] sm:$0x7f]
  %vm3994 = vcmask 1046528
  %v3995 = vrot.slane %v2818, 1
  %v3996 = vrot.slane %v2821, 1
  %v3997 = vsel %vm3994, %v3995, %v3996
  %v3998 = vrot.slane %v2826, 1
  %v3999 = vrot.slane %v2829, 1
  %v4000 = vsel %vm3994, %v3998, %v3999
  %v4001 = vrot.slane %v2834, 1
  %v4002 = vrot.slane %v2837, 1
  %v4003 = vsel %vm3994, %v4001, %v4002
  %v4004 = vrot.slane %v2842, 1
  %v4005 = vrot.slane %v2845, 1
  %v4006 = vsel %vm3994, %v4004, %v4005
  %v4007 = vrot.slane %v2850, 1
  %v4008 = vrot.slane %v2853, 1
  %v4009 = vsel %vm3994, %v4007, %v4008
  %v4010 = vrot.slane %v2858, 1
  %v4011 = vrot.slane %v2861, 1
  %v4012 = vsel %vm3994, %v4010, %v4011
  %v4013 = vrot.slane %v2866, 1
  %v4014 = vrot.slane %v2869, 1
  %v4015 = vsel %vm3994, %v4013, %v4014
  %v4016 = vrot.slane %v2874, 1
  %v4017 = vrot.slane %v2877, 1
  %v4018 = vsel %vm3994, %v4016, %v4017
  %v4019 = vrot.slane %v2882, 1
  %v4020 = vrot.slane %v2885, 1
  %v4021 = vsel %vm3994, %v4019, %v4020
  %v4022 = vrot.slane %v2890, 1
  %v4023 = vrot.slane %v2893, 1
  %v4024 = vsel %vm3994, %v4022, %v4023
  %v4025 = vrot.slane %v2898, 1
  %v4026 = vrot.slane %v2901, 1
  %v4027 = vsel %vm3994, %v4025, %v4026
  %v4028 = vrot.slane %v2906, 1
  %v4029 = vrot.slane %v2909, 1
  %v4030 = vsel %vm3994, %v4028, %v4029
  %v4031 = vrot.slane %v2914, 1
  %v4032 = vrot.slane %v2917, 1
  %v4033 = vsel %vm3994, %v4031, %v4032
  %v4034 = vrot.slane %v2922, 1
  %v4035 = vrot.slane %v2925, 1
  %v4036 = vsel %vm3994, %v4034, %v4035
  %v4037 = vrot.slane %v2930, 1
  %v4038 = vrot.slane %v2933, 1
  %v4039 = vsel %vm3994, %v4037, %v4038
  %v4040 = vrot.slane %v2946, 1
  %v4041 = vrot.slane %v2949, 1
  %v4042 = vsel %vm3994, %v4040, %v4041
  %v4043 = vrot.slane %v2954, 1
  %v4044 = vrot.slane %v2957, 1
  %v4045 = vsel %vm3994, %v4043, %v4044
  %v4046 = vrot.slane %v2962, 1
  %v4047 = vrot.slane %v2965, 1
  %v4048 = vsel %vm3994, %v4046, %v4047
  %v4049 = vrot.slane %v2970, 1
  %v4050 = vrot.slane %v2973, 1
  %v4051 = vsel %vm3994, %v4049, %v4050
  %v4052 = vrot.slane %v2978, 1
  %v4053 = vrot.slane %v2981, 1
  %v4054 = vsel %vm3994, %v4052, %v4053
  %v4055 = vrot.slane %v2986, 1
  %v4056 = vrot.slane %v2989, 1
  %v4057 = vsel %vm3994, %v4055, %v4056
  %v4058 = vrot.slane %v2994, 1
  %v4059 = vrot.slane %v2997, 1
  %v4060 = vsel %vm3994, %v4058, %v4059
  %v4061 = vrot.slane %v3002, 1
  %v4062 = vrot.slane %v3005, 1
  %v4063 = vsel %vm3994, %v4061, %v4062
  %v4064 = vrot.slane %v3010, 1
  %v4065 = vrot.slane %v3013, 1
  %v4066 = vsel %vm3994, %v4064, %v4065
  %v4067 = vrot.slane %v3018, 1
  %v4068 = vrot.slane %v3021, 1
  %v4069 = vsel %vm3994, %v4067, %v4068
  %v4070 = vrot.slane %v3026, 1
  %v4071 = vrot.slane %v3029, 1
  %v4072 = vsel %vm3994, %v4070, %v4071
  %v4073 = vrot.slane %v3034, 1
  %v4074 = vrot.slane %v3037, 1
  %v4075 = vsel %vm3994, %v4073, %v4074
  %v4076 = vrot.slane %v3042, 1
  %v4077 = vrot.slane %v3045, 1
  %v4078 = vsel %vm3994, %v4076, %v4077
  %v4079 = vrot.slane %v3050, 1
  %v4080 = vrot.slane %v3053, 1
  %v4081 = vsel %vm3994, %v4079, %v4080
  %v4082 = vrot.slane %v3058, 1
  %v4083 = vrot.slane %v3061, 1
  %v4084 = vsel %vm3994, %v4082, %v4083
  %4085 = vrot.lane.b32.xlu0 %v3997, 120
  %v4086 = vpop.permute.xlu0 %4085
  %4087 = vrot.lane.b32.xlu0 %v3996, 120
  %v4088 = vpop.permute.xlu0 %4087
  %4089 = vrot.lane.b32.xlu0 %v4000, 120
  %v4090 = vpop.permute.xlu0 %4089
  %4091 = vrot.lane.b32.xlu0 %v3999, 120
  %v4092 = vpop.permute.xlu0 %4091
  %4093 = vrot.lane.b32.xlu0 %v4003, 120
  %v4094 = vpop.permute.xlu0 %4093
  %4095 = vrot.lane.b32.xlu0 %v4002, 120
  %v4096 = vpop.permute.xlu0 %4095
  %4097 = vrot.lane.b32.xlu0 %v4006, 120
  %v4098 = vpop.permute.xlu0 %4097
  %4099 = vrot.lane.b32.xlu0 %v4005, 120
  %v4100 = vpop.permute.xlu0 %4099
  %4101 = vrot.lane.b32.xlu0 %v4009, 120
  %v4102 = vpop.permute.xlu0 %4101
  %4103 = vrot.lane.b32.xlu0 %v4008, 120
  %v4104 = vpop.permute.xlu0 %4103
  %4105 = vrot.lane.b32.xlu0 %v4012, 120
  %v4106 = vpop.permute.xlu0 %4105
  %4107 = vrot.lane.b32.xlu0 %v4011, 120
  %v4108 = vpop.permute.xlu0 %4107
  %4109 = vrot.lane.b32.xlu0 %v4015, 120
  %v4110 = vpop.permute.xlu0 %4109
  %4111 = vrot.lane.b32.xlu0 %v4014, 120
  %v4112 = vpop.permute.xlu0 %4111
  %4113 = vrot.lane.b32.xlu0 %v4018, 120
  %v4114 = vpop.permute.xlu0 %4113
  %4115 = vrot.lane.b32.xlu0 %v4017, 120
  %v4116 = vpop.permute.xlu0 %4115
  %4117 = vrot.lane.b32.xlu0 %v4021, 120
  %v4118 = vpop.permute.xlu0 %4117
  %4119 = vrot.lane.b32.xlu0 %v4020, 120
  %v4120 = vpop.permute.xlu0 %4119
  %4121 = vrot.lane.b32.xlu0 %v4024, 120
  %v4122 = vpop.permute.xlu0 %4121
  %4123 = vrot.lane.b32.xlu0 %v4023, 120
  %v4124 = vpop.permute.xlu0 %4123
  %4125 = vrot.lane.b32.xlu0 %v4027, 120
  %v4126 = vpop.permute.xlu0 %4125
  %4127 = vrot.lane.b32.xlu0 %v4026, 120
  %v4128 = vpop.permute.xlu0 %4127
  %4129 = vrot.lane.b32.xlu0 %v4030, 120
  %v4130 = vpop.permute.xlu0 %4129
  %4131 = vrot.lane.b32.xlu0 %v4029, 120
  %v4132 = vpop.permute.xlu0 %4131
  %4133 = vrot.lane.b32.xlu0 %v4033, 120
  %v4134 = vpop.permute.xlu0 %4133
  %4135 = vrot.lane.b32.xlu0 %v4032, 120
  %v4136 = vpop.permute.xlu0 %4135
  %4137 = vrot.lane.b32.xlu0 %v4036, 120
  %v4138 = vpop.permute.xlu0 %4137
  %4139 = vrot.lane.b32.xlu0 %v4035, 120
  %v4140 = vpop.permute.xlu0 %4139
  %4141 = vrot.lane.b32.xlu0 %v4039, 120
  %v4142 = vpop.permute.xlu0 %4141
  %4143 = vrot.lane.b32.xlu0 %v4038, 120
  %v4144 = vpop.permute.xlu0 %4143
  %4145 = vrot.lane.b32.xlu0 %v4042, 120
  %v4146 = vpop.permute.xlu0 %4145
  %4147 = vrot.lane.b32.xlu0 %v4041, 120
  %v4148 = vpop.permute.xlu0 %4147
  %4149 = vrot.lane.b32.xlu0 %v4045, 120
  %v4150 = vpop.permute.xlu0 %4149
  %4151 = vrot.lane.b32.xlu0 %v4044, 120
  %v4152 = vpop.permute.xlu0 %4151
  %4153 = vrot.lane.b32.xlu0 %v4048, 120
  %v4154 = vpop.permute.xlu0 %4153
  %4155 = vrot.lane.b32.xlu0 %v4047, 120
  %v4156 = vpop.permute.xlu0 %4155
  %4157 = vrot.lane.b32.xlu0 %v4051, 120
  %v4158 = vpop.permute.xlu0 %4157
  %4159 = vrot.lane.b32.xlu0 %v4050, 120
  %v4160 = vpop.permute.xlu0 %4159
  %4161 = vrot.lane.b32.xlu0 %v4054, 120
  %v4162 = vpop.permute.xlu0 %4161
  %4163 = vrot.lane.b32.xlu0 %v4053, 120
  %v4164 = vpop.permute.xlu0 %4163
  %4165 = vrot.lane.b32.xlu0 %v4057, 120
  %v4166 = vpop.permute.xlu0 %4165
  %4167 = vrot.lane.b32.xlu0 %v4056, 120
  %v4168 = vpop.permute.xlu0 %4167
  %4169 = vrot.lane.b32.xlu0 %v4060, 120
  %v4170 = vpop.permute.xlu0 %4169
  %4171 = vrot.lane.b32.xlu0 %v4059, 120
  %v4172 = vpop.permute.xlu0 %4171
  %4173 = vrot.lane.b32.xlu0 %v4063, 120
  %v4174 = vpop.permute.xlu0 %4173
  %4175 = vrot.lane.b32.xlu0 %v4062, 120
  %v4176 = vpop.permute.xlu0 %4175
  %4177 = vrot.lane.b32.xlu0 %v4066, 120
  %v4178 = vpop.permute.xlu0 %4177
  %4179 = vrot.lane.b32.xlu0 %v4065, 120
  %v4180 = vpop.permute.xlu0 %4179
  %4181 = vrot.lane.b32.xlu0 %v4069, 120
  %v4182 = vpop.permute.xlu0 %4181
  %4183 = vrot.lane.b32.xlu0 %v4068, 120
  %v4184 = vpop.permute.xlu0 %4183
  %4185 = vrot.lane.b32.xlu0 %v4072, 120
  %v4186 = vpop.permute.xlu0 %4185
  %4187 = vrot.lane.b32.xlu0 %v4071, 120
  %v4188 = vpop.permute.xlu0 %4187
  %4189 = vrot.lane.b32.xlu0 %v4075, 120
  %v4190 = vpop.permute.xlu0 %4189
  %4191 = vrot.lane.b32.xlu0 %v4074, 120
  %v4192 = vpop.permute.xlu0 %4191
  %4193 = vrot.lane.b32.xlu0 %v4078, 120
  %v4194 = vpop.permute.xlu0 %4193
  %4195 = vrot.lane.b32.xlu0 %v4077, 120
  %v4196 = vpop.permute.xlu0 %4195
  %4197 = vrot.lane.b32.xlu0 %v4081, 120
  %v4198 = vpop.permute.xlu0 %4197
  %4199 = vrot.lane.b32.xlu0 %v4080, 120
  %v4200 = vpop.permute.xlu0 %4199
  %4201 = vrot.lane.b32.xlu0 %v4084, 120
  %v4202 = vpop.permute.xlu0 %4201
  %4203 = vrot.lane.b32.xlu0 %v4083, 120
  %v4204 = vpop.permute.xlu0 %4203
  %v4265 = vadd.f32 %v3934, %v4086
  %v4266 = vadd.f32 %v3935, %v4088
  %v4267 = vadd.f32 %v3936, %v4090
  %v4268 = vadd.f32 %v3937, %v4092
  %v4269 = vadd.f32 %v3938, %v4094
  %v4270 = vadd.f32 %v3939, %v4096
  %v4271 = vadd.f32 %v3940, %v4098
  %v4272 = vadd.f32 %v3941, %v4100
  %v4273 = vadd.f32 %v3942, %v4102
  %v4274 = vadd.f32 %v3943, %v4104
  %v4275 = vadd.f32 %v3944, %v4106
  %v4276 = vadd.f32 %v3945, %v4108
  %v4277 = vadd.f32 %v3946, %v4110
  %v4278 = vadd.f32 %v3947, %v4112
  %v4279 = vadd.f32 %v3948, %v4114
  %v4280 = vadd.f32 %v3949, %v4116
  %v4281 = vadd.f32 %v3950, %v4118
  %v4282 = vadd.f32 %v3951, %v4120
  %v4283 = vadd.f32 %v3952, %v4122
  %v4284 = vadd.f32 %v3953, %v4124
  %v4285 = vadd.f32 %v3954, %v4126
  %v4286 = vadd.f32 %v3955, %v4128
  %v4287 = vadd.f32 %v3956, %v4130
  %v4288 = vadd.f32 %v3957, %v4132
  %v4289 = vadd.f32 %v3958, %v4134
  %v4290 = vadd.f32 %v3959, %v4136
  %v4291 = vadd.f32 %v3960, %v4138
  %v4292 = vadd.f32 %v3961, %v4140
  %v4293 = vadd.f32 %v3962, %v4142
  %v4294 = vadd.f32 %v3963, %v4144
  %v4295 = vadd.f32 %v3964, %v4146
  %v4296 = vadd.f32 %v3965, %v4148
  %v4297 = vadd.f32 %v3966, %v4150
  %v4298 = vadd.f32 %v3967, %v4152
  %v4299 = vadd.f32 %v3968, %v4154
  %v4300 = vadd.f32 %v3969, %v4156
  %v4301 = vadd.f32 %v3970, %v4158
  %v4302 = vadd.f32 %v3971, %v4160
  %v4303 = vadd.f32 %v3972, %v4162
  %v4304 = vadd.f32 %v3973, %v4164
  %v4305 = vadd.f32 %v3974, %v4166
  %v4306 = vadd.f32 %v3975, %v4168
  %v4307 = vadd.f32 %v3976, %v4170
  %v4308 = vadd.f32 %v3977, %v4172
  %v4309 = vadd.f32 %v3978, %v4174
  %v4310 = vadd.f32 %v3979, %v4176
  %v4311 = vadd.f32 %v3980, %v4178
  %v4312 = vadd.f32 %v3981, %v4180
  %v4313 = vadd.f32 %v3982, %v4182
  %v4314 = vadd.f32 %v3983, %v4184
  %v4315 = vadd.f32 %v3984, %v4186
  %v4316 = vadd.f32 %v3985, %v4188
  %v4317 = vadd.f32 %v3986, %v4190
  %v4318 = vadd.f32 %v3987, %v4192
  %v4319 = vadd.f32 %v3988, %v4194
  %v4320 = vadd.f32 %v3989, %v4196
  %v4321 = vadd.f32 %v3990, %v4198
  %v4322 = vadd.f32 %v3991, %v4200
  %v4323 = vadd.f32 %v3992, %v4202
  %v4324 = vadd.f32 %v3993, %v4204
  %4325 = vst.msk [vmem:[%s3392] sm:$0xff] %vm1699, %v4265
  %4326 = vst.msk [vmem:[%s3392 + $0x8] sm:$0x7f] %vm3514, %v4266
  %4327 = vst.msk [vmem:[%s3392 + $0x10] sm:$0xff] %vm1699, %v4267
  %4328 = vst.msk [vmem:[%s3392 + $0x18] sm:$0x7f] %vm3514, %v4268
  %4329 = vst.msk [vmem:[%s3392 + $0x20] sm:$0xff] %vm1699, %v4269
  %4330 = vst.msk [vmem:[%s3392 + $0x28] sm:$0x7f] %vm3514, %v4270
  %4331 = vst.msk [vmem:[%s3392 + $0x30] sm:$0xff] %vm1699, %v4271
  %4332 = vst.msk [vmem:[%s3392 + $0x38] sm:$0x7f] %vm3514, %v4272
  %4333 = vst.msk [vmem:[%s3392 + $0x40] sm:$0xff] %vm1699, %v4273
  %4334 = vst.msk [vmem:[%s3392 + $0x48] sm:$0x7f] %vm3514, %v4274
  %4335 = vst.msk [vmem:[%s3392 + $0x50] sm:$0xff] %vm1699, %v4275
  %4336 = vst.msk [vmem:[%s3392 + $0x58] sm:$0x7f] %vm3514, %v4276
  %4337 = vst.msk [vmem:[%s3392 + $0x60] sm:$0xff] %vm1699, %v4277
  %4338 = vst.msk [vmem:[%s3392 + $0x68] sm:$0x7f] %vm3514, %v4278
  %4339 = vst.msk [vmem:[%s3392 + $0x70] sm:$0xff] %vm1699, %v4279
  %4340 = vst.msk [vmem:[%s3392 + $0x78] sm:$0x7f] %vm3514, %v4280
  %4341 = vst.msk [vmem:[%s3392 + $0x80] sm:$0xff] %vm1699, %v4281
  %4342 = vst.msk [vmem:[%s3392 + $0x88] sm:$0x7f] %vm3514, %v4282
  %4343 = vst.msk [vmem:[%s3392 + $0x90] sm:$0xff] %vm1699, %v4283
  %4344 = vst.msk [vmem:[%s3392 + $0x98] sm:$0x7f] %vm3514, %v4284
  %4345 = vst.msk [vmem:[%s3392 + $0xa0] sm:$0xff] %vm1699, %v4285
  %4346 = vst.msk [vmem:[%s3392 + $0xa8] sm:$0x7f] %vm3514, %v4286
  %4347 = vst.msk [vmem:[%s3392 + $0xb0] sm:$0xff] %vm1699, %v4287
  %4348 = vst.msk [vmem:[%s3392 + $0xb8] sm:$0x7f] %vm3514, %v4288
  %4349 = vst.msk [vmem:[%s3392 + $0xc0] sm:$0xff] %vm1699, %v4289
  %4350 = vst.msk [vmem:[%s3392 + $0xc8] sm:$0x7f] %vm3514, %v4290
  %4351 = vst.msk [vmem:[%s3392 + $0xd0] sm:$0xff] %vm1699, %v4291
  %4352 = vst.msk [vmem:[%s3392 + $0xd8] sm:$0x7f] %vm3514, %v4292
  %4353 = vst.msk [vmem:[%s3392 + $0xe0] sm:$0xff] %vm1699, %v4293
  %4354 = vst.msk [vmem:[%s3392 + $0xe8] sm:$0x7f] %vm3514, %v4294
  %4355 = vst.msk [vmem:[%s3392 + $0x100] sm:$0xff] %vm1699, %v4295
  %4356 = vst.msk [vmem:[%s3392 + $0x108] sm:$0x7f] %vm3514, %v4296
  %4357 = vst.msk [vmem:[%s3392 + $0x110] sm:$0xff] %vm1699, %v4297
  %4358 = vst.msk [vmem:[%s3392 + $0x118] sm:$0x7f] %vm3514, %v4298
  %4359 = vst.msk [vmem:[%s3392 + $0x120] sm:$0xff] %vm1699, %v4299
  %4360 = vst.msk [vmem:[%s3392 + $0x128] sm:$0x7f] %vm3514, %v4300
  %4361 = vst.msk [vmem:[%s3392 + $0x130] sm:$0xff] %vm1699, %v4301
  %4362 = vst.msk [vmem:[%s3392 + $0x138] sm:$0x7f] %vm3514, %v4302
  %4363 = vst.msk [vmem:[%s3392 + $0x140] sm:$0xff] %vm1699, %v4303
  %4364 = vst.msk [vmem:[%s3392 + $0x148] sm:$0x7f] %vm3514, %v4304
  %4365 = vst.msk [vmem:[%s3392 + $0x150] sm:$0xff] %vm1699, %v4305
  %4366 = vst.msk [vmem:[%s3392 + $0x158] sm:$0x7f] %vm3514, %v4306
  %4367 = vst.msk [vmem:[%s3392 + $0x160] sm:$0xff] %vm1699, %v4307
  %4368 = vst.msk [vmem:[%s3392 + $0x168] sm:$0x7f] %vm3514, %v4308
  %4369 = vst.msk [vmem:[%s3392 + $0x170] sm:$0xff] %vm1699, %v4309
  %4370 = vst.msk [vmem:[%s3392 + $0x178] sm:$0x7f] %vm3514, %v4310
  %4371 = vst.msk [vmem:[%s3392 + $0x180] sm:$0xff] %vm1699, %v4311
  %4372 = vst.msk [vmem:[%s3392 + $0x188] sm:$0x7f] %vm3514, %v4312
  %4373 = vst.msk [vmem:[%s3392 + $0x190] sm:$0xff] %vm1699, %v4313
  %4374 = vst.msk [vmem:[%s3392 + $0x198] sm:$0x7f] %vm3514, %v4314
  %4375 = vst.msk [vmem:[%s3392 + $0x1a0] sm:$0xff] %vm1699, %v4315
  %4376 = vst.msk [vmem:[%s3392 + $0x1a8] sm:$0x7f] %vm3514, %v4316
  %4377 = vst.msk [vmem:[%s3392 + $0x1b0] sm:$0xff] %vm1699, %v4317
  %4378 = vst.msk [vmem:[%s3392 + $0x1b8] sm:$0x7f] %vm3514, %v4318
  %4379 = vst.msk [vmem:[%s3392 + $0x1c0] sm:$0xff] %vm1699, %v4319
  %4380 = vst.msk [vmem:[%s3392 + $0x1c8] sm:$0x7f] %vm3514, %v4320
  %4381 = vst.msk [vmem:[%s3392 + $0x1d0] sm:$0xff] %vm1699, %v4321
  %4382 = vst.msk [vmem:[%s3392 + $0x1d8] sm:$0x7f] %vm3514, %v4322
  %4383 = vst.msk [vmem:[%s3392 + $0x1e0] sm:$0xff] %vm1699, %v4323
  %4384 = vst.msk [vmem:[%s3392 + $0x1e8] sm:$0x7f] %vm3514, %v4324
  %v4385 = vld [vmem:[#allocation2 + $0x1] sm:$0xff]
  %v4386 = vld [vmem:[#allocation2 + $0x9] sm:$0x7f]
  %v4387 = vld [vmem:[#allocation2 + $0x11] sm:$0xff]
  %v4388 = vld [vmem:[#allocation2 + $0x19] sm:$0x7f]
  %v4389 = vld [vmem:[#allocation2 + $0x21] sm:$0xff]
  %v4390 = vld [vmem:[#allocation2 + $0x29] sm:$0x7f]
  %v4391 = vld [vmem:[#allocation2 + $0x31] sm:$0xff]
  %v4392 = vld [vmem:[#allocation2 + $0x39] sm:$0x7f]
  %v4393 = vld [vmem:[#allocation2 + $0x41] sm:$0xff]
  %v4394 = vld [vmem:[#allocation2 + $0x49] sm:$0x7f]
  %v4395 = vld [vmem:[#allocation2 + $0x51] sm:$0xff]
  %v4396 = vld [vmem:[#allocation2 + $0x59] sm:$0x7f]
  %v4397 = vld [vmem:[#allocation2 + $0x61] sm:$0xff]
  %v4398 = vld [vmem:[#allocation2 + $0x69] sm:$0x7f]
  %v4399 = vld [vmem:[#allocation2 + $0x71] sm:$0xff]
  %v4400 = vld [vmem:[#allocation2 + $0x79] sm:$0x7f]
  %v4401 = vld [vmem:[#allocation2 + $0x81] sm:$0xff]
  %v4402 = vld [vmem:[#allocation2 + $0x89] sm:$0x7f]
  %v4403 = vld [vmem:[#allocation2 + $0x91] sm:$0xff]
  %v4404 = vld [vmem:[#allocation2 + $0x99] sm:$0x7f]
  %v4405 = vld [vmem:[#allocation2 + $0xa1] sm:$0xff]
  %v4406 = vld [vmem:[#allocation2 + $0xa9] sm:$0x7f]
  %v4407 = vld [vmem:[#allocation2 + $0xb1] sm:$0xff]
  %v4408 = vld [vmem:[#allocation2 + $0xb9] sm:$0x7f]
  %v4409 = vld [vmem:[#allocation2 + $0xc1] sm:$0xff]
  %v4410 = vld [vmem:[#allocation2 + $0xc9] sm:$0x7f]
  %v4411 = vld [vmem:[#allocation2 + $0xd1] sm:$0xff]
  %v4412 = vld [vmem:[#allocation2 + $0xd9] sm:$0x7f]
  %v4413 = vld [vmem:[#allocation2 + $0xe1] sm:$0xff]
  %v4414 = vld [vmem:[#allocation2 + $0xe9] sm:$0x7f]
  %v4415 = vld [vmem:[#allocation2 + $0xf1] sm:$0xff]
  %v4416 = vld [vmem:[#allocation2 + $0xf9] sm:$0x7f]
  %v4417 = vld [vmem:[#allocation2 + $0x101] sm:$0xff]
  %v4418 = vld [vmem:[#allocation2 + $0x109] sm:$0x7f]
  %v4419 = vld [vmem:[#allocation2 + $0x111] sm:$0xff]
  %v4420 = vld [vmem:[#allocation2 + $0x119] sm:$0x7f]
  %v4421 = vld [vmem:[#allocation2 + $0x121] sm:$0xff]
  %v4422 = vld [vmem:[#allocation2 + $0x129] sm:$0x7f]
  %v4423 = vld [vmem:[#allocation2 + $0x131] sm:$0xff]
  %v4424 = vld [vmem:[#allocation2 + $0x139] sm:$0x7f]
  %v4425 = vld [vmem:[#allocation2 + $0x141] sm:$0xff]
  %v4426 = vld [vmem:[#allocation2 + $0x149] sm:$0x7f]
  %v4427 = vld [vmem:[#allocation2 + $0x151] sm:$0xff]
  %v4428 = vld [vmem:[#allocation2 + $0x159] sm:$0x7f]
  %v4429 = vld [vmem:[#allocation2 + $0x161] sm:$0xff]
  %v4430 = vld [vmem:[#allocation2 + $0x169] sm:$0x7f]
  %v4431 = vld [vmem:[#allocation2 + $0x171] sm:$0xff]
  %v4432 = vld [vmem:[#allocation2 + $0x179] sm:$0x7f]
  %v4433 = vld [vmem:[#allocation2 + $0x181] sm:$0xff]
  %v4434 = vld [vmem:[#allocation2 + $0x189] sm:$0x7f]
  %v4435 = vld [vmem:[#allocation2 + $0x191] sm:$0xff]
  %v4436 = vld [vmem:[#allocation2 + $0x199] sm:$0x7f]
  %v4437 = vld [vmem:[#allocation2 + $0x1a1] sm:$0xff]
  %v4438 = vld [vmem:[#allocation2 + $0x1a9] sm:$0x7f]
  %v4439 = vld [vmem:[#allocation2 + $0x1b1] sm:$0xff]
  %v4440 = vld [vmem:[#allocation2 + $0x1b9] sm:$0x7f]
  %v4441 = vld [vmem:[#allocation2 + $0x1c1] sm:$0xff]
  %v4442 = vld [vmem:[#allocation2 + $0x1c9] sm:$0x7f]
  %v4443 = vld [vmem:[#allocation2 + $0x1d1] sm:$0xff]
  %v4444 = vld [vmem:[#allocation2 + $0x1d9] sm:$0x7f]
  %v4445 = vld [vmem:[#allocation2 + $0x1e1] sm:$0xff]
  %v4446 = vld [vmem:[#allocation2 + $0x1e9] sm:$0x7f]
  %v4447 = vld [vmem:[#allocation2 + $0x1f1] sm:$0xff]
  %v4448 = vld [vmem:[#allocation2 + $0x1f9] sm:$0x7f]
  %4449 = vrot.lane.b32.xlu0 %v2818, 116
  %v4450 = vpop.permute.xlu0 %4449
  %4451 = vrot.lane.b32.xlu0 %v2821, 116
  %v4452 = vpop.permute.xlu0 %4451
  %4453 = vrot.lane.b32.xlu0 %v2826, 116
  %v4454 = vpop.permute.xlu0 %4453
  %4455 = vrot.lane.b32.xlu0 %v2829, 116
  %v4456 = vpop.permute.xlu0 %4455
  %4457 = vrot.lane.b32.xlu0 %v2834, 116
  %v4458 = vpop.permute.xlu0 %4457
  %4459 = vrot.lane.b32.xlu0 %v2837, 116
  %v4460 = vpop.permute.xlu0 %4459
  %4461 = vrot.lane.b32.xlu0 %v2842, 116
  %v4462 = vpop.permute.xlu0 %4461
  %4463 = vrot.lane.b32.xlu0 %v2845, 116
  %v4464 = vpop.permute.xlu0 %4463
  %4465 = vrot.lane.b32.xlu0 %v2850, 116
  %v4466 = vpop.permute.xlu0 %4465
  %4467 = vrot.lane.b32.xlu0 %v2853, 116
  %v4468 = vpop.permute.xlu0 %4467
  %4469 = vrot.lane.b32.xlu0 %v2858, 116
  %v4470 = vpop.permute.xlu0 %4469
  %4471 = vrot.lane.b32.xlu0 %v2861, 116
  %v4472 = vpop.permute.xlu0 %4471
  %4473 = vrot.lane.b32.xlu0 %v2866, 116
  %v4474 = vpop.permute.xlu0 %4473
  %4475 = vrot.lane.b32.xlu0 %v2869, 116
  %v4476 = vpop.permute.xlu0 %4475
  %4477 = vrot.lane.b32.xlu0 %v2874, 116
  %v4478 = vpop.permute.xlu0 %4477
  %4479 = vrot.lane.b32.xlu0 %v2877, 116
  %v4480 = vpop.permute.xlu0 %4479
  %4481 = vrot.lane.b32.xlu0 %v2882, 116
  %v4482 = vpop.permute.xlu0 %4481
  %4483 = vrot.lane.b32.xlu0 %v2885, 116
  %v4484 = vpop.permute.xlu0 %4483
  %4485 = vrot.lane.b32.xlu0 %v2890, 116
  %v4486 = vpop.permute.xlu0 %4485
  %4487 = vrot.lane.b32.xlu0 %v2893, 116
  %v4488 = vpop.permute.xlu0 %4487
  %4489 = vrot.lane.b32.xlu0 %v2898, 116
  %v4490 = vpop.permute.xlu0 %4489
  %4491 = vrot.lane.b32.xlu0 %v2901, 116
  %v4492 = vpop.permute.xlu0 %4491
  %4493 = vrot.lane.b32.xlu0 %v2906, 116
  %v4494 = vpop.permute.xlu0 %4493
  %4495 = vrot.lane.b32.xlu0 %v2909, 116
  %v4496 = vpop.permute.xlu0 %4495
  %4497 = vrot.lane.b32.xlu0 %v2914, 116
  %v4498 = vpop.permute.xlu0 %4497
  %4499 = vrot.lane.b32.xlu0 %v2917, 116
  %v4500 = vpop.permute.xlu0 %4499
  %4501 = vrot.lane.b32.xlu0 %v2922, 116
  %v4502 = vpop.permute.xlu0 %4501
  %4503 = vrot.lane.b32.xlu0 %v2925, 116
  %v4504 = vpop.permute.xlu0 %4503
  %4505 = vrot.lane.b32.xlu0 %v2930, 116
  %v4506 = vpop.permute.xlu0 %4505
  %4507 = vrot.lane.b32.xlu0 %v2933, 116
  %v4508 = vpop.permute.xlu0 %4507
  %4509 = vrot.lane.b32.xlu0 %v2938, 116
  %v4510 = vpop.permute.xlu0 %4509
  %4511 = vrot.lane.b32.xlu0 %v2941, 116
  %v4512 = vpop.permute.xlu0 %4511
  %4513 = vrot.lane.b32.xlu0 %v2946, 116
  %v4514 = vpop.permute.xlu0 %4513
  %4515 = vrot.lane.b32.xlu0 %v2949, 116
  %v4516 = vpop.permute.xlu0 %4515
  %4517 = vrot.lane.b32.xlu0 %v2954, 116
  %v4518 = vpop.permute.xlu0 %4517
  %4519 = vrot.lane.b32.xlu0 %v2957, 116
  %v4520 = vpop.permute.xlu0 %4519
  %4521 = vrot.lane.b32.xlu0 %v2962, 116
  %v4522 = vpop.permute.xlu0 %4521
  %4523 = vrot.lane.b32.xlu0 %v2965, 116
  %v4524 = vpop.permute.xlu0 %4523
  %4525 = vrot.lane.b32.xlu0 %v2970, 116
  %v4526 = vpop.permute.xlu0 %4525
  %4527 = vrot.lane.b32.xlu0 %v2973, 116
  %v4528 = vpop.permute.xlu0 %4527
  %4529 = vrot.lane.b32.xlu0 %v2978, 116
  %v4530 = vpop.permute.xlu0 %4529
  %4531 = vrot.lane.b32.xlu0 %v2981, 116
  %v4532 = vpop.permute.xlu0 %4531
  %4533 = vrot.lane.b32.xlu0 %v2986, 116
  %v4534 = vpop.permute.xlu0 %4533
  %4535 = vrot.lane.b32.xlu0 %v2989, 116
  %v4536 = vpop.permute.xlu0 %4535
  %4537 = vrot.lane.b32.xlu0 %v2994, 116
  %v4538 = vpop.permute.xlu0 %4537
  %4539 = vrot.lane.b32.xlu0 %v2997, 116
  %v4540 = vpop.permute.xlu0 %4539
  %4541 = vrot.lane.b32.xlu0 %v3002, 116
  %v4542 = vpop.permute.xlu0 %4541
  %4543 = vrot.lane.b32.xlu0 %v3005, 116
  %v4544 = vpop.permute.xlu0 %4543
  %4545 = vrot.lane.b32.xlu0 %v3010, 116
  %v4546 = vpop.permute.xlu0 %4545
  %4547 = vrot.lane.b32.xlu0 %v3013, 116
  %v4548 = vpop.permute.xlu0 %4547
  %4549 = vrot.lane.b32.xlu0 %v3018, 116
  %v4550 = vpop.permute.xlu0 %4549
  %4551 = vrot.lane.b32.xlu0 %v3021, 116
  %v4552 = vpop.permute.xlu0 %4551
  %4553 = vrot.lane.b32.xlu0 %v3026, 116
  %v4554 = vpop.permute.xlu0 %4553
  %4555 = vrot.lane.b32.xlu0 %v3029, 116
  %v4556 = vpop.permute.xlu0 %4555
  %4557 = vrot.lane.b32.xlu0 %v3034, 116
  %v4558 = vpop.permute.xlu0 %4557
  %4559 = vrot.lane.b32.xlu0 %v3037, 116
  %v4560 = vpop.permute.xlu0 %4559
  %4561 = vrot.lane.b32.xlu0 %v3042, 116
  %v4562 = vpop.permute.xlu0 %4561
  %4563 = vrot.lane.b32.xlu0 %v3045, 116
  %v4564 = vpop.permute.xlu0 %4563
  %4565 = vrot.lane.b32.xlu0 %v3050, 116
  %v4566 = vpop.permute.xlu0 %4565
  %4567 = vrot.lane.b32.xlu0 %v3053, 116
  %v4568 = vpop.permute.xlu0 %4567
  %4569 = vrot.lane.b32.xlu0 %v3058, 116
  %v4570 = vpop.permute.xlu0 %4569
  %4571 = vrot.lane.b32.xlu0 %v3061, 116
  %v4572 = vpop.permute.xlu0 %4571
  %4573 = vrot.lane.b32.xlu0 %v3066, 116
  %v4574 = vpop.permute.xlu0 %4573
  %4575 = vrot.lane.b32.xlu0 %v3069, 116
  %v4576 = vpop.permute.xlu0 %4575
  %v4641 = vadd.f32 %v4385, %v4450
  %v4642 = vadd.f32 %v4386, %v4452
  %v4643 = vadd.f32 %v4387, %v4454
  %v4644 = vadd.f32 %v4388, %v4456
  %v4645 = vadd.f32 %v4389, %v4458
  %v4646 = vadd.f32 %v4390, %v4460
  %v4647 = vadd.f32 %v4391, %v4462
  %v4648 = vadd.f32 %v4392, %v4464
  %v4649 = vadd.f32 %v4393, %v4466
  %v4650 = vadd.f32 %v4394, %v4468
  %v4651 = vadd.f32 %v4395, %v4470
  %v4652 = vadd.f32 %v4396, %v4472
  %v4653 = vadd.f32 %v4397, %v4474
  %v4654 = vadd.f32 %v4398, %v4476
  %v4655 = vadd.f32 %v4399, %v4478
  %v4656 = vadd.f32 %v4400, %v4480
  %v4657 = vadd.f32 %v4401, %v4482
  %v4658 = vadd.f32 %v4402, %v4484
  %v4659 = vadd.f32 %v4403, %v4486
  %v4660 = vadd.f32 %v4404, %v4488
  %v4661 = vadd.f32 %v4405, %v4490
  %v4662 = vadd.f32 %v4406, %v4492
  %v4663 = vadd.f32 %v4407, %v4494
  %v4664 = vadd.f32 %v4408, %v4496
  %v4665 = vadd.f32 %v4409, %v4498
  %v4666 = vadd.f32 %v4410, %v4500
  %v4667 = vadd.f32 %v4411, %v4502
  %v4668 = vadd.f32 %v4412, %v4504
  %v4669 = vadd.f32 %v4413, %v4506
  %v4670 = vadd.f32 %v4414, %v4508
  %v4671 = vadd.f32 %v4415, %v4510
  %v4672 = vadd.f32 %v4416, %v4512
  %v4673 = vadd.f32 %v4417, %v4514
  %v4674 = vadd.f32 %v4418, %v4516
  %v4675 = vadd.f32 %v4419, %v4518
  %v4676 = vadd.f32 %v4420, %v4520
  %v4677 = vadd.f32 %v4421, %v4522
  %v4678 = vadd.f32 %v4422, %v4524
  %v4679 = vadd.f32 %v4423, %v4526
  %v4680 = vadd.f32 %v4424, %v4528
  %v4681 = vadd.f32 %v4425, %v4530
  %v4682 = vadd.f32 %v4426, %v4532
  %v4683 = vadd.f32 %v4427, %v4534
  %v4684 = vadd.f32 %v4428, %v4536
  %v4685 = vadd.f32 %v4429, %v4538
  %v4686 = vadd.f32 %v4430, %v4540
  %v4687 = vadd.f32 %v4431, %v4542
  %v4688 = vadd.f32 %v4432, %v4544
  %v4689 = vadd.f32 %v4433, %v4546
  %v4690 = vadd.f32 %v4434, %v4548
  %v4691 = vadd.f32 %v4435, %v4550
  %v4692 = vadd.f32 %v4436, %v4552
  %v4693 = vadd.f32 %v4437, %v4554
  %v4694 = vadd.f32 %v4438, %v4556
  %v4695 = vadd.f32 %v4439, %v4558
  %v4696 = vadd.f32 %v4440, %v4560
  %v4697 = vadd.f32 %v4441, %v4562
  %v4698 = vadd.f32 %v4442, %v4564
  %v4699 = vadd.f32 %v4443, %v4566
  %v4700 = vadd.f32 %v4444, %v4568
  %v4701 = vadd.f32 %v4445, %v4570
  %v4702 = vadd.f32 %v4446, %v4572
  %v4703 = vadd.f32 %v4447, %v4574
  %v4704 = vadd.f32 %v4448, %v4576
  %4705 = vst.msk [vmem:[#allocation2 + $0x1] sm:$0xff] %vm1699, %v4641
  %4706 = vst.msk [vmem:[#allocation2 + $0x9] sm:$0x7f] %vm3514, %v4642
  %4707 = vst.msk [vmem:[#allocation2 + $0x11] sm:$0xff] %vm1699, %v4643
  %4708 = vst.msk [vmem:[#allocation2 + $0x19] sm:$0x7f] %vm3514, %v4644
  %4709 = vst.msk [vmem:[#allocation2 + $0x21] sm:$0xff] %vm1699, %v4645
  %4710 = vst.msk [vmem:[#allocation2 + $0x29] sm:$0x7f] %vm3514, %v4646
  %4711 = vst.msk [vmem:[#allocation2 + $0x31] sm:$0xff] %vm1699, %v4647
  %4712 = vst.msk [vmem:[#allocation2 + $0x39] sm:$0x7f] %vm3514, %v4648
  %4713 = vst.msk [vmem:[#allocation2 + $0x41] sm:$0xff] %vm1699, %v4649
  %4714 = vst.msk [vmem:[#allocation2 + $0x49] sm:$0x7f] %vm3514, %v4650
  %4715 = vst.msk [vmem:[#allocation2 + $0x51] sm:$0xff] %vm1699, %v4651
  %4716 = vst.msk [vmem:[#allocation2 + $0x59] sm:$0x7f] %vm3514, %v4652
  %4717 = vst.msk [vmem:[#allocation2 + $0x61] sm:$0xff] %vm1699, %v4653
  %4718 = vst.msk [vmem:[#allocation2 + $0x69] sm:$0x7f] %vm3514, %v4654
  %4719 = vst.msk [vmem:[#allocation2 + $0x71] sm:$0xff] %vm1699, %v4655
  %4720 = vst.msk [vmem:[#allocation2 + $0x79] sm:$0x7f] %vm3514, %v4656
  %4721 = vst.msk [vmem:[#allocation2 + $0x81] sm:$0xff] %vm1699, %v4657
  %4722 = vst.msk [vmem:[#allocation2 + $0x89] sm:$0x7f] %vm3514, %v4658
  %4723 = vst.msk [vmem:[#allocation2 + $0x91] sm:$0xff] %vm1699, %v4659
  %4724 = vst.msk [vmem:[#allocation2 + $0x99] sm:$0x7f] %vm3514, %v4660
  %4725 = vst.msk [vmem:[#allocation2 + $0xa1] sm:$0xff] %vm1699, %v4661
  %4726 = vst.msk [vmem:[#allocation2 + $0xa9] sm:$0x7f] %vm3514, %v4662
  %4727 = vst.msk [vmem:[#allocation2 + $0xb1] sm:$0xff] %vm1699, %v4663
  %4728 = vst.msk [vmem:[#allocation2 + $0xb9] sm:$0x7f] %vm3514, %v4664
  %4729 = vst.msk [vmem:[#allocation2 + $0xc1] sm:$0xff] %vm1699, %v4665
  %4730 = vst.msk [vmem:[#allocation2 + $0xc9] sm:$0x7f] %vm3514, %v4666
  %4731 = vst.msk [vmem:[#allocation2 + $0xd1] sm:$0xff] %vm1699, %v4667
  %4732 = vst.msk [vmem:[#allocation2 + $0xd9] sm:$0x7f] %vm3514, %v4668
  %4733 = vst.msk [vmem:[#allocation2 + $0xe1] sm:$0xff] %vm1699, %v4669
  %4734 = vst.msk [vmem:[#allocation2 + $0xe9] sm:$0x7f] %vm3514, %v4670
  %4735 = vst.msk [vmem:[#allocation2 + $0xf1] sm:$0xff] %vm1699, %v4671
  %4736 = vst.msk [vmem:[#allocation2 + $0xf9] sm:$0x7f] %vm3514, %v4672
  %4737 = vst.msk [vmem:[#allocation2 + $0x101] sm:$0xff] %vm1699, %v4673
  %4738 = vst.msk [vmem:[#allocation2 + $0x109] sm:$0x7f] %vm3514, %v4674
  %4739 = vst.msk [vmem:[#allocation2 + $0x111] sm:$0xff] %vm1699, %v4675
  %4740 = vst.msk [vmem:[#allocation2 + $0x119] sm:$0x7f] %vm3514, %v4676
  %4741 = vst.msk [vmem:[#allocation2 + $0x121] sm:$0xff] %vm1699, %v4677
  %4742 = vst.msk [vmem:[#allocation2 + $0x129] sm:$0x7f] %vm3514, %v4678
  %4743 = vst.msk [vmem:[#allocation2 + $0x131] sm:$0xff] %vm1699, %v4679
  %4744 = vst.msk [vmem:[#allocation2 + $0x139] sm:$0x7f] %vm3514, %v4680
  %4745 = vst.msk [vmem:[#allocation2 + $0x141] sm:$0xff] %vm1699, %v4681
  %4746 = vst.msk [vmem:[#allocation2 + $0x149] sm:$0x7f] %vm3514, %v4682
  %4747 = vst.msk [vmem:[#allocation2 + $0x151] sm:$0xff] %vm1699, %v4683
  %4748 = vst.msk [vmem:[#allocation2 + $0x159] sm:$0x7f] %vm3514, %v4684
  %4749 = vst.msk [vmem:[#allocation2 + $0x161] sm:$0xff] %vm1699, %v4685
  %4750 = vst.msk [vmem:[#allocation2 + $0x169] sm:$0x7f] %vm3514, %v4686
  %4751 = vst.msk [vmem:[#allocation2 + $0x171] sm:$0xff] %vm1699, %v4687
  %4752 = vst.msk [vmem:[#allocation2 + $0x179] sm:$0x7f] %vm3514, %v4688
  %4753 = vst.msk [vmem:[#allocation2 + $0x181] sm:$0xff] %vm1699, %v4689
  %4754 = vst.msk [vmem:[#allocation2 + $0x189] sm:$0x7f] %vm3514, %v4690
  %4755 = vst.msk [vmem:[#allocation2 + $0x191] sm:$0xff] %vm1699, %v4691
  %4756 = vst.msk [vmem:[#allocation2 + $0x199] sm:$0x7f] %vm3514, %v4692
  %4757 = vst.msk [vmem:[#allocation2 + $0x1a1] sm:$0xff] %vm1699, %v4693
  %4758 = vst.msk [vmem:[#allocation2 + $0x1a9] sm:$0x7f] %vm3514, %v4694
  %4759 = vst.msk [vmem:[#allocation2 + $0x1b1] sm:$0xff] %vm1699, %v4695
  %4760 = vst.msk [vmem:[#allocation2 + $0x1b9] sm:$0x7f] %vm3514, %v4696
  %4761 = vst.msk [vmem:[#allocation2 + $0x1c1] sm:$0xff] %vm1699, %v4697
  %4762 = vst.msk [vmem:[#allocation2 + $0x1c9] sm:$0x7f] %vm3514, %v4698
  %4763 = vst.msk [vmem:[#allocation2 + $0x1d1] sm:$0xff] %vm1699, %v4699
  %4764 = vst.msk [vmem:[#allocation2 + $0x1d9] sm:$0x7f] %vm3514, %v4700
  %4765 = vst.msk [vmem:[#allocation2 + $0x1e1] sm:$0xff] %vm1699, %v4701
  %4766 = vst.msk [vmem:[#allocation2 + $0x1e9] sm:$0x7f] %vm3514, %v4702
  %4767 = vst.msk [vmem:[#allocation2 + $0x1f1] sm:$0xff] %vm1699, %v4703
  %4768 = vst.msk [vmem:[#allocation2 + $0x1f9] sm:$0x7f] %vm3514, %v4704
  %v4769 = vld [vmem:[#allocation2] sm:$0xff]
  %v4770 = vld [vmem:[#allocation2 + $0x8] sm:$0x7f]
  %v4771 = vld [vmem:[#allocation2 + $0x10] sm:$0xff]
  %v4772 = vld [vmem:[#allocation2 + $0x18] sm:$0x7f]
  %v4773 = vld [vmem:[#allocation2 + $0x20] sm:$0xff]
  %v4774 = vld [vmem:[#allocation2 + $0x28] sm:$0x7f]
  %v4775 = vld [vmem:[#allocation2 + $0x30] sm:$0xff]
  %v4776 = vld [vmem:[#allocation2 + $0x38] sm:$0x7f]
  %v4777 = vld [vmem:[#allocation2 + $0x40] sm:$0xff]
  %v4778 = vld [vmem:[#allocation2 + $0x48] sm:$0x7f]
  %v4779 = vld [vmem:[#allocation2 + $0x50] sm:$0xff]
  %v4780 = vld [vmem:[#allocation2 + $0x58] sm:$0x7f]
  %v4781 = vld [vmem:[#allocation2 + $0x60] sm:$0xff]
  %v4782 = vld [vmem:[#allocation2 + $0x68] sm:$0x7f]
  %v4783 = vld [vmem:[#allocation2 + $0x70] sm:$0xff]
  %v4784 = vld [vmem:[#allocation2 + $0x78] sm:$0x7f]
  %v4785 = vld [vmem:[#allocation2 + $0x80] sm:$0xff]
  %v4786 = vld [vmem:[#allocation2 + $0x88] sm:$0x7f]
  %v4787 = vld [vmem:[#allocation2 + $0x90] sm:$0xff]
  %v4788 = vld [vmem:[#allocation2 + $0x98] sm:$0x7f]
  %v4789 = vld [vmem:[#allocation2 + $0xa0] sm:$0xff]
  %v4790 = vld [vmem:[#allocation2 + $0xa8] sm:$0x7f]
  %v4791 = vld [vmem:[#allocation2 + $0xb0] sm:$0xff]
  %v4792 = vld [vmem:[#allocation2 + $0xb8] sm:$0x7f]
  %v4793 = vld [vmem:[#allocation2 + $0xc0] sm:$0xff]
  %v4794 = vld [vmem:[#allocation2 + $0xc8] sm:$0x7f]
  %v4795 = vld [vmem:[#allocation2 + $0xd0] sm:$0xff]
  %v4796 = vld [vmem:[#allocation2 + $0xd8] sm:$0x7f]
  %v4797 = vld [vmem:[#allocation2 + $0xe0] sm:$0xff]
  %v4798 = vld [vmem:[#allocation2 + $0xe8] sm:$0x7f]
  %v4799 = vld [vmem:[#allocation2 + $0xf0] sm:$0xff]
  %v4800 = vld [vmem:[#allocation2 + $0xf8] sm:$0x7f]
  %v4801 = vld [vmem:[#allocation2 + $0x100] sm:$0xff]
  %v4802 = vld [vmem:[#allocation2 + $0x108] sm:$0x7f]
  %v4803 = vld [vmem:[#allocation2 + $0x110] sm:$0xff]
  %v4804 = vld [vmem:[#allocation2 + $0x118] sm:$0x7f]
  %v4805 = vld [vmem:[#allocation2 + $0x120] sm:$0xff]
  %v4806 = vld [vmem:[#allocation2 + $0x128] sm:$0x7f]
  %v4807 = vld [vmem:[#allocation2 + $0x130] sm:$0xff]
  %v4808 = vld [vmem:[#allocation2 + $0x138] sm:$0x7f]
  %v4809 = vld [vmem:[#allocation2 + $0x140] sm:$0xff]
  %v4810 = vld [vmem:[#allocation2 + $0x148] sm:$0x7f]
  %v4811 = vld [vmem:[#allocation2 + $0x150] sm:$0xff]
  %v4812 = vld [vmem:[#allocation2 + $0x158] sm:$0x7f]
  %v4813 = vld [vmem:[#allocation2 + $0x160] sm:$0xff]
  %v4814 = vld [vmem:[#allocation2 + $0x168] sm:$0x7f]
  %v4815 = vld [vmem:[#allocation2 + $0x170] sm:$0xff]
  %v4816 = vld [vmem:[#allocation2 + $0x178] sm:$0x7f]
  %v4817 = vld [vmem:[#allocation2 + $0x180] sm:$0xff]
  %v4818 = vld [vmem:[#allocation2 + $0x188] sm:$0x7f]
  %v4819 = vld [vmem:[#allocation2 + $0x190] sm:$0xff]
  %v4820 = vld [vmem:[#allocation2 + $0x198] sm:$0x7f]
  %v4821 = vld [vmem:[#allocation2 + $0x1a0] sm:$0xff]
  %v4822 = vld [vmem:[#allocation2 + $0x1a8] sm:$0x7f]
  %v4823 = vld [vmem:[#allocation2 + $0x1b0] sm:$0xff]
  %v4824 = vld [vmem:[#allocation2 + $0x1b8] sm:$0x7f]
  %v4825 = vld [vmem:[#allocation2 + $0x1c0] sm:$0xff]
  %v4826 = vld [vmem:[#allocation2 + $0x1c8] sm:$0x7f]
  %v4827 = vld [vmem:[#allocation2 + $0x1d0] sm:$0xff]
  %v4828 = vld [vmem:[#allocation2 + $0x1d8] sm:$0x7f]
  %v4829 = vld [vmem:[#allocation2 + $0x1e0] sm:$0xff]
  %v4830 = vld [vmem:[#allocation2 + $0x1e8] sm:$0x7f]
  %v4831 = vld [vmem:[#allocation2 + $0x1f0] sm:$0xff]
  %v4832 = vld [vmem:[#allocation2 + $0x1f8] sm:$0x7f]
  %v4833 = vrot.slane %v2938, 1
  %v4834 = vrot.slane %v2941, 1
  %v4835 = vsel %vm3994, %v4833, %v4834
  %v4836 = vrot.slane %v3066, 1
  %v4837 = vrot.slane %v3069, 1
  %v4838 = vsel %vm3994, %v4836, %v4837
  %4839 = vrot.lane.b32.xlu0 %v3997, 108
  %v4840 = vpop.permute.xlu0 %4839
  %4841 = vrot.lane.b32.xlu0 %v3996, 108
  %v4842 = vpop.permute.xlu0 %4841
  %4843 = vrot.lane.b32.xlu0 %v4000, 108
  %v4844 = vpop.permute.xlu0 %4843
  %4845 = vrot.lane.b32.xlu0 %v3999, 108
  %v4846 = vpop.permute.xlu0 %4845
  %4847 = vrot.lane.b32.xlu0 %v4003, 108
  %v4848 = vpop.permute.xlu0 %4847
  %4849 = vrot.lane.b32.xlu0 %v4002, 108
  %v4850 = vpop.permute.xlu0 %4849
  %4851 = vrot.lane.b32.xlu0 %v4006, 108
  %v4852 = vpop.permute.xlu0 %4851
  %4853 = vrot.lane.b32.xlu0 %v4005, 108
  %v4854 = vpop.permute.xlu0 %4853
  %4855 = vrot.lane.b32.xlu0 %v4009, 108
  %v4856 = vpop.permute.xlu0 %4855
  %4857 = vrot.lane.b32.xlu0 %v4008, 108
  %v4858 = vpop.permute.xlu0 %4857
  %4859 = vrot.lane.b32.xlu0 %v4012, 108
  %v4860 = vpop.permute.xlu0 %4859
  %4861 = vrot.lane.b32.xlu0 %v4011, 108
  %v4862 = vpop.permute.xlu0 %4861
  %4863 = vrot.lane.b32.xlu0 %v4015, 108
  %v4864 = vpop.permute.xlu0 %4863
  %4865 = vrot.lane.b32.xlu0 %v4014, 108
  %v4866 = vpop.permute.xlu0 %4865
  %4867 = vrot.lane.b32.xlu0 %v4018, 108
  %v4868 = vpop.permute.xlu0 %4867
  %4869 = vrot.lane.b32.xlu0 %v4017, 108
  %v4870 = vpop.permute.xlu0 %4869
  %4871 = vrot.lane.b32.xlu0 %v4021, 108
  %v4872 = vpop.permute.xlu0 %4871
  %4873 = vrot.lane.b32.xlu0 %v4020, 108
  %v4874 = vpop.permute.xlu0 %4873
  %4875 = vrot.lane.b32.xlu0 %v4024, 108
  %v4876 = vpop.permute.xlu0 %4875
  %4877 = vrot.lane.b32.xlu0 %v4023, 108
  %v4878 = vpop.permute.xlu0 %4877
  %4879 = vrot.lane.b32.xlu0 %v4027, 108
  %v4880 = vpop.permute.xlu0 %4879
  %4881 = vrot.lane.b32.xlu0 %v4026, 108
  %v4882 = vpop.permute.xlu0 %4881
  %4883 = vrot.lane.b32.xlu0 %v4030, 108
  %v4884 = vpop.permute.xlu0 %4883
  %4885 = vrot.lane.b32.xlu0 %v4029, 108
  %v4886 = vpop.permute.xlu0 %4885
  %4887 = vrot.lane.b32.xlu0 %v4033, 108
  %v4888 = vpop.permute.xlu0 %4887
  %4889 = vrot.lane.b32.xlu0 %v4032, 108
  %v4890 = vpop.permute.xlu0 %4889
  %4891 = vrot.lane.b32.xlu0 %v4036, 108
  %v4892 = vpop.permute.xlu0 %4891
  %4893 = vrot.lane.b32.xlu0 %v4035, 108
  %v4894 = vpop.permute.xlu0 %4893
  %4895 = vrot.lane.b32.xlu0 %v4039, 108
  %v4896 = vpop.permute.xlu0 %4895
  %4897 = vrot.lane.b32.xlu0 %v4038, 108
  %v4898 = vpop.permute.xlu0 %4897
  %4899 = vrot.lane.b32.xlu0 %v4835, 108
  %v4900 = vpop.permute.xlu0 %4899
  %4901 = vrot.lane.b32.xlu0 %v4834, 108
  %v4902 = vpop.permute.xlu0 %4901
  %4903 = vrot.lane.b32.xlu0 %v4042, 108
  %v4904 = vpop.permute.xlu0 %4903
  %4905 = vrot.lane.b32.xlu0 %v4041, 108
  %v4906 = vpop.permute.xlu0 %4905
  %4907 = vrot.lane.b32.xlu0 %v4045, 108
  %v4908 = vpop.permute.xlu0 %4907
  %4909 = vrot.lane.b32.xlu0 %v4044, 108
  %v4910 = vpop.permute.xlu0 %4909
  %4911 = vrot.lane.b32.xlu0 %v4048, 108
  %v4912 = vpop.permute.xlu0 %4911
  %4913 = vrot.lane.b32.xlu0 %v4047, 108
  %v4914 = vpop.permute.xlu0 %4913
  %4915 = vrot.lane.b32.xlu0 %v4051, 108
  %v4916 = vpop.permute.xlu0 %4915
  %4917 = vrot.lane.b32.xlu0 %v4050, 108
  %v4918 = vpop.permute.xlu0 %4917
  %4919 = vrot.lane.b32.xlu0 %v4054, 108
  %v4920 = vpop.permute.xlu0 %4919
  %4921 = vrot.lane.b32.xlu0 %v4053, 108
  %v4922 = vpop.permute.xlu0 %4921
  %4923 = vrot.lane.b32.xlu0 %v4057, 108
  %v4924 = vpop.permute.xlu0 %4923
  %4925 = vrot.lane.b32.xlu0 %v4056, 108
  %v4926 = vpop.permute.xlu0 %4925
  %4927 = vrot.lane.b32.xlu0 %v4060, 108
  %v4928 = vpop.permute.xlu0 %4927
  %4929 = vrot.lane.b32.xlu0 %v4059, 108
  %v4930 = vpop.permute.xlu0 %4929
  %4931 = vrot.lane.b32.xlu0 %v4063, 108
  %v4932 = vpop.permute.xlu0 %4931
  %4933 = vrot.lane.b32.xlu0 %v4062, 108
  %v4934 = vpop.permute.xlu0 %4933
  %4935 = vrot.lane.b32.xlu0 %v4066, 108
  %v4936 = vpop.permute.xlu0 %4935
  %4937 = vrot.lane.b32.xlu0 %v4065, 108
  %v4938 = vpop.permute.xlu0 %4937
  %4939 = vrot.lane.b32.xlu0 %v4069, 108
  %v4940 = vpop.permute.xlu0 %4939
  %4941 = vrot.lane.b32.xlu0 %v4068, 108
  %v4942 = vpop.permute.xlu0 %4941
  %4943 = vrot.lane.b32.xlu0 %v4072, 108
  %v4944 = vpop.permute.xlu0 %4943
  %4945 = vrot.lane.b32.xlu0 %v4071, 108
  %v4946 = vpop.permute.xlu0 %4945
  %4947 = vrot.lane.b32.xlu0 %v4075, 108
  %v4948 = vpop.permute.xlu0 %4947
  %4949 = vrot.lane.b32.xlu0 %v4074, 108
  %v4950 = vpop.permute.xlu0 %4949
  %4951 = vrot.lane.b32.xlu0 %v4078, 108
  %v4952 = vpop.permute.xlu0 %4951
  %4953 = vrot.lane.b32.xlu0 %v4077, 108
  %v4954 = vpop.permute.xlu0 %4953
  %4955 = vrot.lane.b32.xlu0 %v4081, 108
  %v4956 = vpop.permute.xlu0 %4955
  %4957 = vrot.lane.b32.xlu0 %v4080, 108
  %v4958 = vpop.permute.xlu0 %4957
  %4959 = vrot.lane.b32.xlu0 %v4084, 108
  %v4960 = vpop.permute.xlu0 %4959
  %4961 = vrot.lane.b32.xlu0 %v4083, 108
  %v4962 = vpop.permute.xlu0 %4961
  %4963 = vrot.lane.b32.xlu0 %v4838, 108
  %v4964 = vpop.permute.xlu0 %4963
  %4965 = vrot.lane.b32.xlu0 %v4837, 108
  %v4966 = vpop.permute.xlu0 %4965
  %v5031 = vadd.f32 %v4769, %v4840
  %v5032 = vadd.f32 %v4770, %v4842
  %v5033 = vadd.f32 %v4771, %v4844
  %v5034 = vadd.f32 %v4772, %v4846
  %v5035 = vadd.f32 %v4773, %v4848
  %v5036 = vadd.f32 %v4774, %v4850
  %v5037 = vadd.f32 %v4775, %v4852
  %v5038 = vadd.f32 %v4776, %v4854
  %v5039 = vadd.f32 %v4777, %v4856
  %v5040 = vadd.f32 %v4778, %v4858
  %v5041 = vadd.f32 %v4779, %v4860
  %v5042 = vadd.f32 %v4780, %v4862
  %v5043 = vadd.f32 %v4781, %v4864
  %v5044 = vadd.f32 %v4782, %v4866
  %v5045 = vadd.f32 %v4783, %v4868
  %v5046 = vadd.f32 %v4784, %v4870
  %v5047 = vadd.f32 %v4785, %v4872
  %v5048 = vadd.f32 %v4786, %v4874
  %v5049 = vadd.f32 %v4787, %v4876
  %v5050 = vadd.f32 %v4788, %v4878
  %v5051 = vadd.f32 %v4789, %v4880
  %v5052 = vadd.f32 %v4790, %v4882
  %v5053 = vadd.f32 %v4791, %v4884
  %v5054 = vadd.f32 %v4792, %v4886
  %v5055 = vadd.f32 %v4793, %v4888
  %v5056 = vadd.f32 %v4794, %v4890
  %v5057 = vadd.f32 %v4795, %v4892
  %v5058 = vadd.f32 %v4796, %v4894
  %v5059 = vadd.f32 %v4797, %v4896
  %v5060 = vadd.f32 %v4798, %v4898
  %v5061 = vadd.f32 %v4799, %v4900
  %v5062 = vadd.f32 %v4800, %v4902
  %v5063 = vadd.f32 %v4801, %v4904
  %v5064 = vadd.f32 %v4802, %v4906
  %v5065 = vadd.f32 %v4803, %v4908
  %v5066 = vadd.f32 %v4804, %v4910
  %v5067 = vadd.f32 %v4805, %v4912
  %v5068 = vadd.f32 %v4806, %v4914
  %v5069 = vadd.f32 %v4807, %v4916
  %v5070 = vadd.f32 %v4808, %v4918
  %v5071 = vadd.f32 %v4809, %v4920
  %v5072 = vadd.f32 %v4810, %v4922
  %v5073 = vadd.f32 %v4811, %v4924
  %v5074 = vadd.f32 %v4812, %v4926
  %v5075 = vadd.f32 %v4813, %v4928
  %v5076 = vadd.f32 %v4814, %v4930
  %v5077 = vadd.f32 %v4815, %v4932
  %v5078 = vadd.f32 %v4816, %v4934
  %v5079 = vadd.f32 %v4817, %v4936
  %v5080 = vadd.f32 %v4818, %v4938
  %v5081 = vadd.f32 %v4819, %v4940
  %v5082 = vadd.f32 %v4820, %v4942
  %v5083 = vadd.f32 %v4821, %v4944
  %v5084 = vadd.f32 %v4822, %v4946
  %v5085 = vadd.f32 %v4823, %v4948
  %v5086 = vadd.f32 %v4824, %v4950
  %v5087 = vadd.f32 %v4825, %v4952
  %v5088 = vadd.f32 %v4826, %v4954
  %v5089 = vadd.f32 %v4827, %v4956
  %v5090 = vadd.f32 %v4828, %v4958
  %v5091 = vadd.f32 %v4829, %v4960
  %v5092 = vadd.f32 %v4830, %v4962
  %v5093 = vadd.f32 %v4831, %v4964
  %v5094 = vadd.f32 %v4832, %v4966
  %5095 = vst.msk [vmem:[#allocation2] sm:$0xff] %vm1699, %v5031
  %5096 = vst.msk [vmem:[#allocation2 + $0x8] sm:$0x7f] %vm3514, %v5032
  %5097 = vst.msk [vmem:[#allocation2 + $0x10] sm:$0xff] %vm1699, %v5033
  %5098 = vst.msk [vmem:[#allocation2 + $0x18] sm:$0x7f] %vm3514, %v5034
  %5099 = vst.msk [vmem:[#allocation2 + $0x20] sm:$0xff] %vm1699, %v5035
  %5100 = vst.msk [vmem:[#allocation2 + $0x28] sm:$0x7f] %vm3514, %v5036
  %5101 = vst.msk [vmem:[#allocation2 + $0x30] sm:$0xff] %vm1699, %v5037
  %5102 = vst.msk [vmem:[#allocation2 + $0x38] sm:$0x7f] %vm3514, %v5038
  %5103 = vst.msk [vmem:[#allocation2 + $0x40] sm:$0xff] %vm1699, %v5039
  %5104 = vst.msk [vmem:[#allocation2 + $0x48] sm:$0x7f] %vm3514, %v5040
  %5105 = vst.msk [vmem:[#allocation2 + $0x50] sm:$0xff] %vm1699, %v5041
  %5106 = vst.msk [vmem:[#allocation2 + $0x58] sm:$0x7f] %vm3514, %v5042
  %5107 = vst.msk [vmem:[#allocation2 + $0x60] sm:$0xff] %vm1699, %v5043
  %5108 = vst.msk [vmem:[#allocation2 + $0x68] sm:$0x7f] %vm3514, %v5044
  %5109 = vst.msk [vmem:[#allocation2 + $0x70] sm:$0xff] %vm1699, %v5045
  %5110 = vst.msk [vmem:[#allocation2 + $0x78] sm:$0x7f] %vm3514, %v5046
  %5111 = vst.msk [vmem:[#allocation2 + $0x80] sm:$0xff] %vm1699, %v5047
  %5112 = vst.msk [vmem:[#allocation2 + $0x88] sm:$0x7f] %vm3514, %v5048
  %5113 = vst.msk [vmem:[#allocation2 + $0x90] sm:$0xff] %vm1699, %v5049
  %5114 = vst.msk [vmem:[#allocation2 + $0x98] sm:$0x7f] %vm3514, %v5050
  %5115 = vst.msk [vmem:[#allocation2 + $0xa0] sm:$0xff] %vm1699, %v5051
  %5116 = vst.msk [vmem:[#allocation2 + $0xa8] sm:$0x7f] %vm3514, %v5052
  %5117 = vst.msk [vmem:[#allocation2 + $0xb0] sm:$0xff] %vm1699, %v5053
  %5118 = vst.msk [vmem:[#allocation2 + $0xb8] sm:$0x7f] %vm3514, %v5054
  %5119 = vst.msk [vmem:[#allocation2 + $0xc0] sm:$0xff] %vm1699, %v5055
  %5120 = vst.msk [vmem:[#allocation2 + $0xc8] sm:$0x7f] %vm3514, %v5056
  %5121 = vst.msk [vmem:[#allocation2 + $0xd0] sm:$0xff] %vm1699, %v5057
  %5122 = vst.msk [vmem:[#allocation2 + $0xd8] sm:$0x7f] %vm3514, %v5058
  %5123 = vst.msk [vmem:[#allocation2 + $0xe0] sm:$0xff] %vm1699, %v5059
  %5124 = vst.msk [vmem:[#allocation2 + $0xe8] sm:$0x7f] %vm3514, %v5060
  %5125 = vst.msk [vmem:[#allocation2 + $0xf0] sm:$0xff] %vm1699, %v5061
  %5126 = vst.msk [vmem:[#allocation2 + $0xf8] sm:$0x7f] %vm3514, %v5062
  %5127 = vst.msk [vmem:[#allocation2 + $0x100] sm:$0xff] %vm1699, %v5063
  %5128 = vst.msk [vmem:[#allocation2 + $0x108] sm:$0x7f] %vm3514, %v5064
  %5129 = vst.msk [vmem:[#allocation2 + $0x110] sm:$0xff] %vm1699, %v5065
  %5130 = vst.msk [vmem:[#allocation2 + $0x118] sm:$0x7f] %vm3514, %v5066
  %5131 = vst.msk [vmem:[#allocation2 + $0x120] sm:$0xff] %vm1699, %v5067
  %5132 = vst.msk [vmem:[#allocation2 + $0x128] sm:$0x7f] %vm3514, %v5068
  %5133 = vst.msk [vmem:[#allocation2 + $0x130] sm:$0xff] %vm1699, %v5069
  %5134 = vst.msk [vmem:[#allocation2 + $0x138] sm:$0x7f] %vm3514, %v5070
  %5135 = vst.msk [vmem:[#allocation2 + $0x140] sm:$0xff] %vm1699, %v5071
  %5136 = vst.msk [vmem:[#allocation2 + $0x148] sm:$0x7f] %vm3514, %v5072
  %5137 = vst.msk [vmem:[#allocation2 + $0x150] sm:$0xff] %vm1699, %v5073
  %5138 = vst.msk [vmem:[#allocation2 + $0x158] sm:$0x7f] %vm3514, %v5074
  %5139 = vst.msk [vmem:[#allocation2 + $0x160] sm:$0xff] %vm1699, %v5075
  %5140 = vst.msk [vmem:[#allocation2 + $0x168] sm:$0x7f] %vm3514, %v5076
  %5141 = vst.msk [vmem:[#allocation2 + $0x170] sm:$0xff] %vm1699, %v5077
  %5142 = vst.msk [vmem:[#allocation2 + $0x178] sm:$0x7f] %vm3514, %v5078
  %5143 = vst.msk [vmem:[#allocation2 + $0x180] sm:$0xff] %vm1699, %v5079
  %5144 = vst.msk [vmem:[#allocation2 + $0x188] sm:$0x7f] %vm3514, %v5080
  %5145 = vst.msk [vmem:[#allocation2 + $0x190] sm:$0xff] %vm1699, %v5081
  %5146 = vst.msk [vmem:[#allocation2 + $0x198] sm:$0x7f] %vm3514, %v5082
  %5147 = vst.msk [vmem:[#allocation2 + $0x1a0] sm:$0xff] %vm1699, %v5083
  %5148 = vst.msk [vmem:[#allocation2 + $0x1a8] sm:$0x7f] %vm3514, %v5084
  %5149 = vst.msk [vmem:[#allocation2 + $0x1b0] sm:$0xff] %vm1699, %v5085
  %5150 = vst.msk [vmem:[#allocation2 + $0x1b8] sm:$0x7f] %vm3514, %v5086
  %5151 = vst.msk [vmem:[#allocation2 + $0x1c0] sm:$0xff] %vm1699, %v5087
  %5152 = vst.msk [vmem:[#allocation2 + $0x1c8] sm:$0x7f] %vm3514, %v5088
  %5153 = vst.msk [vmem:[#allocation2 + $0x1d0] sm:$0xff] %vm1699, %v5089
  %5154 = vst.msk [vmem:[#allocation2 + $0x1d8] sm:$0x7f] %vm3514, %v5090
  %5155 = vst.msk [vmem:[#allocation2 + $0x1e0] sm:$0xff] %vm1699, %v5091
  %5156 = vst.msk [vmem:[#allocation2 + $0x1e8] sm:$0x7f] %vm3514, %v5092
  %5157 = vst.msk [vmem:[#allocation2 + $0x1f0] sm:$0xff] %vm1699, %v5093
  %5158 = vst.msk [vmem:[#allocation2 + $0x1f8] sm:$0x7f] %vm3514, %v5094
  %v5159 = vld [vmem:[#allocation2 + $0x1] sm:$0xff]
  %v5160 = vld [vmem:[#allocation2 + $0x9] sm:$0x7f]
  %v5161 = vld [vmem:[#allocation2 + $0x11] sm:$0xff]
  %v5162 = vld [vmem:[#allocation2 + $0x19] sm:$0x7f]
  %v5163 = vld [vmem:[#allocation2 + $0x21] sm:$0xff]
  %v5164 = vld [vmem:[#allocation2 + $0x29] sm:$0x7f]
  %v5165 = vld [vmem:[#allocation2 + $0x31] sm:$0xff]
  %v5166 = vld [vmem:[#allocation2 + $0x39] sm:$0x7f]
  %v5167 = vld [vmem:[#allocation2 + $0x41] sm:$0xff]
  %v5168 = vld [vmem:[#allocation2 + $0x49] sm:$0x7f]
  %v5169 = vld [vmem:[#allocation2 + $0x51] sm:$0xff]
  %v5170 = vld [vmem:[#allocation2 + $0x59] sm:$0x7f]
  %v5171 = vld [vmem:[#allocation2 + $0x61] sm:$0xff]
  %v5172 = vld [vmem:[#allocation2 + $0x69] sm:$0x7f]
  %v5173 = vld [vmem:[#allocation2 + $0x71] sm:$0xff]
  %v5174 = vld [vmem:[#allocation2 + $0x79] sm:$0x7f]
  %v5175 = vld [vmem:[#allocation2 + $0x81] sm:$0xff]
  %v5176 = vld [vmem:[#allocation2 + $0x89] sm:$0x7f]
  %v5177 = vld [vmem:[#allocation2 + $0x91] sm:$0xff]
  %v5178 = vld [vmem:[#allocation2 + $0x99] sm:$0x7f]
  %v5179 = vld [vmem:[#allocation2 + $0xa1] sm:$0xff]
  %v5180 = vld [vmem:[#allocation2 + $0xa9] sm:$0x7f]
  %v5181 = vld [vmem:[#allocation2 + $0xb1] sm:$0xff]
  %v5182 = vld [vmem:[#allocation2 + $0xb9] sm:$0x7f]
  %v5183 = vld [vmem:[#allocation2 + $0xc1] sm:$0xff]
  %v5184 = vld [vmem:[#allocation2 + $0xc9] sm:$0x7f]
  %v5185 = vld [vmem:[#allocation2 + $0xd1] sm:$0xff]
  %v5186 = vld [vmem:[#allocation2 + $0xd9] sm:$0x7f]
  %v5187 = vld [vmem:[#allocation2 + $0xe1] sm:$0xff]
  %v5188 = vld [vmem:[#allocation2 + $0xe9] sm:$0x7f]
  %v5189 = vld [vmem:[#allocation2 + $0x101] sm:$0xff]
  %v5190 = vld [vmem:[#allocation2 + $0x109] sm:$0x7f]
  %v5191 = vld [vmem:[#allocation2 + $0x111] sm:$0xff]
  %v5192 = vld [vmem:[#allocation2 + $0x119] sm:$0x7f]
  %v5193 = vld [vmem:[#allocation2 + $0x121] sm:$0xff]
  %v5194 = vld [vmem:[#allocation2 + $0x129] sm:$0x7f]
  %v5195 = vld [vmem:[#allocation2 + $0x131] sm:$0xff]
  %v5196 = vld [vmem:[#allocation2 + $0x139] sm:$0x7f]
  %v5197 = vld [vmem:[#allocation2 + $0x141] sm:$0xff]
  %v5198 = vld [vmem:[#allocation2 + $0x149] sm:$0x7f]
  %v5199 = vld [vmem:[#allocation2 + $0x151] sm:$0xff]
  %v5200 = vld [vmem:[#allocation2 + $0x159] sm:$0x7f]
  %v5201 = vld [vmem:[#allocation2 + $0x161] sm:$0xff]
  %v5202 = vld [vmem:[#allocation2 + $0x169] sm:$0x7f]
  %v5203 = vld [vmem:[#allocation2 + $0x171] sm:$0xff]
  %v5204 = vld [vmem:[#allocation2 + $0x179] sm:$0x7f]
  %v5205 = vld [vmem:[#allocation2 + $0x181] sm:$0xff]
  %v5206 = vld [vmem:[#allocation2 + $0x189] sm:$0x7f]
  %v5207 = vld [vmem:[#allocation2 + $0x191] sm:$0xff]
  %v5208 = vld [vmem:[#allocation2 + $0x199] sm:$0x7f]
  %v5209 = vld [vmem:[#allocation2 + $0x1a1] sm:$0xff]
  %v5210 = vld [vmem:[#allocation2 + $0x1a9] sm:$0x7f]
  %v5211 = vld [vmem:[#allocation2 + $0x1b1] sm:$0xff]
  %v5212 = vld [vmem:[#allocation2 + $0x1b9] sm:$0x7f]
  %v5213 = vld [vmem:[#allocation2 + $0x1c1] sm:$0xff]
  %v5214 = vld [vmem:[#allocation2 + $0x1c9] sm:$0x7f]
  %v5215 = vld [vmem:[#allocation2 + $0x1d1] sm:$0xff]
  %v5216 = vld [vmem:[#allocation2 + $0x1d9] sm:$0x7f]
  %v5217 = vld [vmem:[#allocation2 + $0x1e1] sm:$0xff]
  %v5218 = vld [vmem:[#allocation2 + $0x1e9] sm:$0x7f]
  %5219 = vrot.lane.b32.xlu0 %v2826, 104
  %v5220 = vpop.permute.xlu0 %5219
  %5221 = vrot.lane.b32.xlu0 %v2829, 104
  %v5222 = vpop.permute.xlu0 %5221
  %5223 = vrot.lane.b32.xlu0 %v2834, 104
  %v5224 = vpop.permute.xlu0 %5223
  %5225 = vrot.lane.b32.xlu0 %v2837, 104
  %v5226 = vpop.permute.xlu0 %5225
  %5227 = vrot.lane.b32.xlu0 %v2842, 104
  %v5228 = vpop.permute.xlu0 %5227
  %5229 = vrot.lane.b32.xlu0 %v2845, 104
  %v5230 = vpop.permute.xlu0 %5229
  %5231 = vrot.lane.b32.xlu0 %v2850, 104
  %v5232 = vpop.permute.xlu0 %5231
  %5233 = vrot.lane.b32.xlu0 %v2853, 104
  %v5234 = vpop.permute.xlu0 %5233
  %5235 = vrot.lane.b32.xlu0 %v2858, 104
  %v5236 = vpop.permute.xlu0 %5235
  %5237 = vrot.lane.b32.xlu0 %v2861, 104
  %v5238 = vpop.permute.xlu0 %5237
  %5239 = vrot.lane.b32.xlu0 %v2866, 104
  %v5240 = vpop.permute.xlu0 %5239
  %5241 = vrot.lane.b32.xlu0 %v2869, 104
  %v5242 = vpop.permute.xlu0 %5241
  %5243 = vrot.lane.b32.xlu0 %v2874, 104
  %v5244 = vpop.permute.xlu0 %5243
  %5245 = vrot.lane.b32.xlu0 %v2877, 104
  %v5246 = vpop.permute.xlu0 %5245
  %5247 = vrot.lane.b32.xlu0 %v2882, 104
  %v5248 = vpop.permute.xlu0 %5247
  %5249 = vrot.lane.b32.xlu0 %v2885, 104
  %v5250 = vpop.permute.xlu0 %5249
  %5251 = vrot.lane.b32.xlu0 %v2890, 104
  %v5252 = vpop.permute.xlu0 %5251
  %5253 = vrot.lane.b32.xlu0 %v2893, 104
  %v5254 = vpop.permute.xlu0 %5253
  %5255 = vrot.lane.b32.xlu0 %v2898, 104
  %v5256 = vpop.permute.xlu0 %5255
  %5257 = vrot.lane.b32.xlu0 %v2901, 104
  %v5258 = vpop.permute.xlu0 %5257
  %5259 = vrot.lane.b32.xlu0 %v2906, 104
  %v5260 = vpop.permute.xlu0 %5259
  %5261 = vrot.lane.b32.xlu0 %v2909, 104
  %v5262 = vpop.permute.xlu0 %5261
  %5263 = vrot.lane.b32.xlu0 %v2914, 104
  %v5264 = vpop.permute.xlu0 %5263
  %5265 = vrot.lane.b32.xlu0 %v2917, 104
  %v5266 = vpop.permute.xlu0 %5265
  %5267 = vrot.lane.b32.xlu0 %v2922, 104
  %v5268 = vpop.permute.xlu0 %5267
  %5269 = vrot.lane.b32.xlu0 %v2925, 104
  %v5270 = vpop.permute.xlu0 %5269
  %5271 = vrot.lane.b32.xlu0 %v2930, 104
  %v5272 = vpop.permute.xlu0 %5271
  %5273 = vrot.lane.b32.xlu0 %v2933, 104
  %v5274 = vpop.permute.xlu0 %5273
  %5275 = vrot.lane.b32.xlu0 %v2938, 104
  %v5276 = vpop.permute.xlu0 %5275
  %5277 = vrot.lane.b32.xlu0 %v2941, 104
  %v5278 = vpop.permute.xlu0 %5277
  %5279 = vrot.lane.b32.xlu0 %v2954, 104
  %v5280 = vpop.permute.xlu0 %5279
  %5281 = vrot.lane.b32.xlu0 %v2957, 104
  %v5282 = vpop.permute.xlu0 %5281
  %5283 = vrot.lane.b32.xlu0 %v2962, 104
  %v5284 = vpop.permute.xlu0 %5283
  %5285 = vrot.lane.b32.xlu0 %v2965, 104
  %v5286 = vpop.permute.xlu0 %5285
  %5287 = vrot.lane.b32.xlu0 %v2970, 104
  %v5288 = vpop.permute.xlu0 %5287
  %5289 = vrot.lane.b32.xlu0 %v2973, 104
  %v5290 = vpop.permute.xlu0 %5289
  %5291 = vrot.lane.b32.xlu0 %v2978, 104
  %v5292 = vpop.permute.xlu0 %5291
  %5293 = vrot.lane.b32.xlu0 %v2981, 104
  %v5294 = vpop.permute.xlu0 %5293
  %5295 = vrot.lane.b32.xlu0 %v2986, 104
  %v5296 = vpop.permute.xlu0 %5295
  %5297 = vrot.lane.b32.xlu0 %v2989, 104
  %v5298 = vpop.permute.xlu0 %5297
  %5299 = vrot.lane.b32.xlu0 %v2994, 104
  %v5300 = vpop.permute.xlu0 %5299
  %5301 = vrot.lane.b32.xlu0 %v2997, 104
  %v5302 = vpop.permute.xlu0 %5301
  %5303 = vrot.lane.b32.xlu0 %v3002, 104
  %v5304 = vpop.permute.xlu0 %5303
  %5305 = vrot.lane.b32.xlu0 %v3005, 104
  %v5306 = vpop.permute.xlu0 %5305
  %5307 = vrot.lane.b32.xlu0 %v3010, 104
  %v5308 = vpop.permute.xlu0 %5307
  %5309 = vrot.lane.b32.xlu0 %v3013, 104
  %v5310 = vpop.permute.xlu0 %5309
  %5311 = vrot.lane.b32.xlu0 %v3018, 104
  %v5312 = vpop.permute.xlu0 %5311
  %5313 = vrot.lane.b32.xlu0 %v3021, 104
  %v5314 = vpop.permute.xlu0 %5313
  %5315 = vrot.lane.b32.xlu0 %v3026, 104
  %v5316 = vpop.permute.xlu0 %5315
  %5317 = vrot.lane.b32.xlu0 %v3029, 104
  %v5318 = vpop.permute.xlu0 %5317
  %5319 = vrot.lane.b32.xlu0 %v3034, 104
  %v5320 = vpop.permute.xlu0 %5319
  %5321 = vrot.lane.b32.xlu0 %v3037, 104
  %v5322 = vpop.permute.xlu0 %5321
  %5323 = vrot.lane.b32.xlu0 %v3042, 104
  %v5324 = vpop.permute.xlu0 %5323
  %5325 = vrot.lane.b32.xlu0 %v3045, 104
  %v5326 = vpop.permute.xlu0 %5325
  %5327 = vrot.lane.b32.xlu0 %v3050, 104
  %v5328 = vpop.permute.xlu0 %5327
  %5329 = vrot.lane.b32.xlu0 %v3053, 104
  %v5330 = vpop.permute.xlu0 %5329
  %5331 = vrot.lane.b32.xlu0 %v3058, 104
  %v5332 = vpop.permute.xlu0 %5331
  %5333 = vrot.lane.b32.xlu0 %v3061, 104
  %v5334 = vpop.permute.xlu0 %5333
  %5335 = vrot.lane.b32.xlu0 %v3066, 104
  %v5336 = vpop.permute.xlu0 %5335
  %5337 = vrot.lane.b32.xlu0 %v3069, 104
  %v5338 = vpop.permute.xlu0 %5337
  %v5399 = vadd.f32 %v5159, %v5220
  %v5400 = vadd.f32 %v5160, %v5222
  %v5401 = vadd.f32 %v5161, %v5224
  %v5402 = vadd.f32 %v5162, %v5226
  %v5403 = vadd.f32 %v5163, %v5228
  %v5404 = vadd.f32 %v5164, %v5230
  %v5405 = vadd.f32 %v5165, %v5232
  %v5406 = vadd.f32 %v5166, %v5234
  %v5407 = vadd.f32 %v5167, %v5236
  %v5408 = vadd.f32 %v5168, %v5238
  %v5409 = vadd.f32 %v5169, %v5240
  %v5410 = vadd.f32 %v5170, %v5242
  %v5411 = vadd.f32 %v5171, %v5244
  %v5412 = vadd.f32 %v5172, %v5246
  %v5413 = vadd.f32 %v5173, %v5248
  %v5414 = vadd.f32 %v5174, %v5250
  %v5415 = vadd.f32 %v5175, %v5252
  %v5416 = vadd.f32 %v5176, %v5254
  %v5417 = vadd.f32 %v5177, %v5256
  %v5418 = vadd.f32 %v5178, %v5258
  %v5419 = vadd.f32 %v5179, %v5260
  %v5420 = vadd.f32 %v5180, %v5262
  %v5421 = vadd.f32 %v5181, %v5264
  %v5422 = vadd.f32 %v5182, %v5266
  %v5423 = vadd.f32 %v5183, %v5268
  %v5424 = vadd.f32 %v5184, %v5270
  %v5425 = vadd.f32 %v5185, %v5272
  %v5426 = vadd.f32 %v5186, %v5274
  %v5427 = vadd.f32 %v5187, %v5276
  %v5428 = vadd.f32 %v5188, %v5278
  %v5429 = vadd.f32 %v5189, %v5280
  %v5430 = vadd.f32 %v5190, %v5282
  %v5431 = vadd.f32 %v5191, %v5284
  %v5432 = vadd.f32 %v5192, %v5286
  %v5433 = vadd.f32 %v5193, %v5288
  %v5434 = vadd.f32 %v5194, %v5290
  %v5435 = vadd.f32 %v5195, %v5292
  %v5436 = vadd.f32 %v5196, %v5294
  %v5437 = vadd.f32 %v5197, %v5296
  %v5438 = vadd.f32 %v5198, %v5298
  %v5439 = vadd.f32 %v5199, %v5300
  %v5440 = vadd.f32 %v5200, %v5302
  %v5441 = vadd.f32 %v5201, %v5304
  %v5442 = vadd.f32 %v5202, %v5306
  %v5443 = vadd.f32 %v5203, %v5308
  %v5444 = vadd.f32 %v5204, %v5310
  %v5445 = vadd.f32 %v5205, %v5312
  %v5446 = vadd.f32 %v5206, %v5314
  %v5447 = vadd.f32 %v5207, %v5316
  %v5448 = vadd.f32 %v5208, %v5318
  %v5449 = vadd.f32 %v5209, %v5320
  %v5450 = vadd.f32 %v5210, %v5322
  %v5451 = vadd.f32 %v5211, %v5324
  %v5452 = vadd.f32 %v5212, %v5326
  %v5453 = vadd.f32 %v5213, %v5328
  %v5454 = vadd.f32 %v5214, %v5330
  %v5455 = vadd.f32 %v5215, %v5332
  %v5456 = vadd.f32 %v5216, %v5334
  %v5457 = vadd.f32 %v5217, %v5336
  %v5458 = vadd.f32 %v5218, %v5338
  %5459 = vst.msk [vmem:[#allocation2 + $0x1] sm:$0xff] %vm1699, %v5399
  %5460 = vst.msk [vmem:[#allocation2 + $0x9] sm:$0x7f] %vm3514, %v5400
  %5461 = vst.msk [vmem:[#allocation2 + $0x11] sm:$0xff] %vm1699, %v5401
  %5462 = vst.msk [vmem:[#allocation2 + $0x19] sm:$0x7f] %vm3514, %v5402
  %5463 = vst.msk [vmem:[#allocation2 + $0x21] sm:$0xff] %vm1699, %v5403
  %5464 = vst.msk [vmem:[#allocation2 + $0x29] sm:$0x7f] %vm3514, %v5404
  %5465 = vst.msk [vmem:[#allocation2 + $0x31] sm:$0xff] %vm1699, %v5405
  %5466 = vst.msk [vmem:[#allocation2 + $0x39] sm:$0x7f] %vm3514, %v5406
  %5467 = vst.msk [vmem:[#allocation2 + $0x41] sm:$0xff] %vm1699, %v5407
  %5468 = vst.msk [vmem:[#allocation2 + $0x49] sm:$0x7f] %vm3514, %v5408
  %5469 = vst.msk [vmem:[#allocation2 + $0x51] sm:$0xff] %vm1699, %v5409
  %5470 = vst.msk [vmem:[#allocation2 + $0x59] sm:$0x7f] %vm3514, %v5410
  %5471 = vst.msk [vmem:[#allocation2 + $0x61] sm:$0xff] %vm1699, %v5411
  %5472 = vst.msk [vmem:[#allocation2 + $0x69] sm:$0x7f] %vm3514, %v5412
  %5473 = vst.msk [vmem:[#allocation2 + $0x71] sm:$0xff] %vm1699, %v5413
  %5474 = vst.msk [vmem:[#allocation2 + $0x79] sm:$0x7f] %vm3514, %v5414
  %5475 = vst.msk [vmem:[#allocation2 + $0x81] sm:$0xff] %vm1699, %v5415
  %5476 = vst.msk [vmem:[#allocation2 + $0x89] sm:$0x7f] %vm3514, %v5416
  %5477 = vst.msk [vmem:[#allocation2 + $0x91] sm:$0xff] %vm1699, %v5417
  %5478 = vst.msk [vmem:[#allocation2 + $0x99] sm:$0x7f] %vm3514, %v5418
  %5479 = vst.msk [vmem:[#allocation2 + $0xa1] sm:$0xff] %vm1699, %v5419
  %5480 = vst.msk [vmem:[#allocation2 + $0xa9] sm:$0x7f] %vm3514, %v5420
  %5481 = vst.msk [vmem:[#allocation2 + $0xb1] sm:$0xff] %vm1699, %v5421
  %5482 = vst.msk [vmem:[#allocation2 + $0xb9] sm:$0x7f] %vm3514, %v5422
  %5483 = vst.msk [vmem:[#allocation2 + $0xc1] sm:$0xff] %vm1699, %v5423
  %5484 = vst.msk [vmem:[#allocation2 + $0xc9] sm:$0x7f] %vm3514, %v5424
  %5485 = vst.msk [vmem:[#allocation2 + $0xd1] sm:$0xff] %vm1699, %v5425
  %5486 = vst.msk [vmem:[#allocation2 + $0xd9] sm:$0x7f] %vm3514, %v5426
  %5487 = vst.msk [vmem:[#allocation2 + $0xe1] sm:$0xff] %vm1699, %v5427
  %5488 = vst.msk [vmem:[#allocation2 + $0xe9] sm:$0x7f] %vm3514, %v5428
  %5489 = vst.msk [vmem:[#allocation2 + $0x101] sm:$0xff] %vm1699, %v5429
  %5490 = vst.msk [vmem:[#allocation2 + $0x109] sm:$0x7f] %vm3514, %v5430
  %5491 = vst.msk [vmem:[#allocation2 + $0x111] sm:$0xff] %vm1699, %v5431
  %5492 = vst.msk [vmem:[#allocation2 + $0x119] sm:$0x7f] %vm3514, %v5432
  %5493 = vst.msk [vmem:[#allocation2 + $0x121] sm:$0xff] %vm1699, %v5433
  %5494 = vst.msk [vmem:[#allocation2 + $0x129] sm:$0x7f] %vm3514, %v5434
  %5495 = vst.msk [vmem:[#allocation2 + $0x131] sm:$0xff] %vm1699, %v5435
  %5496 = vst.msk [vmem:[#allocation2 + $0x139] sm:$0x7f] %vm3514, %v5436
  %5497 = vst.msk [vmem:[#allocation2 + $0x141] sm:$0xff] %vm1699, %v5437
  %5498 = vst.msk [vmem:[#allocation2 + $0x149] sm:$0x7f] %vm3514, %v5438
  %5499 = vst.msk [vmem:[#allocation2 + $0x151] sm:$0xff] %vm1699, %v5439
  %5500 = vst.msk [vmem:[#allocation2 + $0x159] sm:$0x7f] %vm3514, %v5440
  %5501 = vst.msk [vmem:[#allocation2 + $0x161] sm:$0xff] %vm1699, %v5441
  %5502 = vst.msk [vmem:[#allocation2 + $0x169] sm:$0x7f] %vm3514, %v5442
  %5503 = vst.msk [vmem:[#allocation2 + $0x171] sm:$0xff] %vm1699, %v5443
  %5504 = vst.msk [vmem:[#allocation2 + $0x179] sm:$0x7f] %vm3514, %v5444
  %5505 = vst.msk [vmem:[#allocation2 + $0x181] sm:$0xff] %vm1699, %v5445
  %5506 = vst.msk [vmem:[#allocation2 + $0x189] sm:$0x7f] %vm3514, %v5446
  %5507 = vst.msk [vmem:[#allocation2 + $0x191] sm:$0xff] %vm1699, %v5447
  %5508 = vst.msk [vmem:[#allocation2 + $0x199] sm:$0x7f] %vm3514, %v5448
  %5509 = vst.msk [vmem:[#allocation2 + $0x1a1] sm:$0xff] %vm1699, %v5449
  %5510 = vst.msk [vmem:[#allocation2 + $0x1a9] sm:$0x7f] %vm3514, %v5450
  %5511 = vst.msk [vmem:[#allocation2 + $0x1b1] sm:$0xff] %vm1699, %v5451
  %5512 = vst.msk [vmem:[#allocation2 + $0x1b9] sm:$0x7f] %vm3514, %v5452
  %5513 = vst.msk [vmem:[#allocation2 + $0x1c1] sm:$0xff] %vm1699, %v5453
  %5514 = vst.msk [vmem:[#allocation2 + $0x1c9] sm:$0x7f] %vm3514, %v5454
  %5515 = vst.msk [vmem:[#allocation2 + $0x1d1] sm:$0xff] %vm1699, %v5455
  %5516 = vst.msk [vmem:[#allocation2 + $0x1d9] sm:$0x7f] %vm3514, %v5456
  %5517 = vst.msk [vmem:[#allocation2 + $0x1e1] sm:$0xff] %vm1699, %v5457
  %5518 = vst.msk [vmem:[#allocation2 + $0x1e9] sm:$0x7f] %vm3514, %v5458
  %v5519 = vld [vmem:[#allocation2] sm:$0xff]
  %v5520 = vld [vmem:[#allocation2 + $0x8] sm:$0xff]
  %v5521 = vld [vmem:[#allocation2 + $0x10] sm:$0xff]
  %v5522 = vld [vmem:[#allocation2 + $0x18] sm:$0xff]
  %v5523 = vld [vmem:[#allocation2 + $0x20] sm:$0xff]
  %v5524 = vld [vmem:[#allocation2 + $0x28] sm:$0xff]
  %v5525 = vld [vmem:[#allocation2 + $0x30] sm:$0xff]
  %v5526 = vld [vmem:[#allocation2 + $0x38] sm:$0xff]
  %v5527 = vld [vmem:[#allocation2 + $0x40] sm:$0xff]
  %v5528 = vld [vmem:[#allocation2 + $0x48] sm:$0xff]
  %v5529 = vld [vmem:[#allocation2 + $0x50] sm:$0xff]
  %v5530 = vld [vmem:[#allocation2 + $0x58] sm:$0xff]
  %v5531 = vld [vmem:[#allocation2 + $0x60] sm:$0xff]
  %v5532 = vld [vmem:[#allocation2 + $0x68] sm:$0xff]
  %v5533 = vld [vmem:[#allocation2 + $0x70] sm:$0xff]
  %v5534 = vld [vmem:[#allocation2 + $0x78] sm:$0xff]
  %v5535 = vld [vmem:[#allocation2 + $0x80] sm:$0xff]
  %v5536 = vld [vmem:[#allocation2 + $0x88] sm:$0xff]
  %v5537 = vld [vmem:[#allocation2 + $0x90] sm:$0xff]
  %v5538 = vld [vmem:[#allocation2 + $0x98] sm:$0xff]
  %v5539 = vld [vmem:[#allocation2 + $0xa0] sm:$0xff]
  %v5540 = vld [vmem:[#allocation2 + $0xa8] sm:$0xff]
  %v5541 = vld [vmem:[#allocation2 + $0xb0] sm:$0xff]
  %v5542 = vld [vmem:[#allocation2 + $0xb8] sm:$0xff]
  %v5543 = vld [vmem:[#allocation2 + $0xc0] sm:$0xff]
  %v5544 = vld [vmem:[#allocation2 + $0xc8] sm:$0xff]
  %v5545 = vld [vmem:[#allocation2 + $0xd0] sm:$0xff]
  %v5546 = vld [vmem:[#allocation2 + $0xd8] sm:$0xff]
  %v5547 = vld [vmem:[#allocation2 + $0xe0] sm:$0xff]
  %v5548 = vld [vmem:[#allocation2 + $0xe8] sm:$0xff]
  %v5549 = vld [vmem:[#allocation2 + $0x100] sm:$0xff]
  %v5550 = vld [vmem:[#allocation2 + $0x108] sm:$0xff]
  %v5551 = vld [vmem:[#allocation2 + $0x110] sm:$0xff]
  %v5552 = vld [vmem:[#allocation2 + $0x118] sm:$0xff]
  %v5553 = vld [vmem:[#allocation2 + $0x120] sm:$0xff]
  %v5554 = vld [vmem:[#allocation2 + $0x128] sm:$0xff]
  %v5555 = vld [vmem:[#allocation2 + $0x130] sm:$0xff]
  %v5556 = vld [vmem:[#allocation2 + $0x138] sm:$0xff]
  %v5557 = vld [vmem:[#allocation2 + $0x140] sm:$0xff]
  %v5558 = vld [vmem:[#allocation2 + $0x148] sm:$0xff]
  %v5559 = vld [vmem:[#allocation2 + $0x150] sm:$0xff]
  %v5560 = vld [vmem:[#allocation2 + $0x158] sm:$0xff]
  %v5561 = vld [vmem:[#allocation2 + $0x160] sm:$0xff]
  %v5562 = vld [vmem:[#allocation2 + $0x168] sm:$0xff]
  %v5563 = vld [vmem:[#allocation2 + $0x170] sm:$0xff]
  %v5564 = vld [vmem:[#allocation2 + $0x178] sm:$0xff]
  %v5565 = vld [vmem:[#allocation2 + $0x180] sm:$0xff]
  %v5566 = vld [vmem:[#allocation2 + $0x188] sm:$0xff]
  %v5567 = vld [vmem:[#allocation2 + $0x190] sm:$0xff]
  %v5568 = vld [vmem:[#allocation2 + $0x198] sm:$0xff]
  %v5569 = vld [vmem:[#allocation2 + $0x1a0] sm:$0xff]
  %v5570 = vld [vmem:[#allocation2 + $0x1a8] sm:$0xff]
  %v5571 = vld [vmem:[#allocation2 + $0x1b0] sm:$0xff]
  %v5572 = vld [vmem:[#allocation2 + $0x1b8] sm:$0xff]
  %v5573 = vld [vmem:[#allocation2 + $0x1c0] sm:$0xff]
  %v5574 = vld [vmem:[#allocation2 + $0x1c8] sm:$0xff]
  %v5575 = vld [vmem:[#allocation2 + $0x1d0] sm:$0xff]
  %v5576 = vld [vmem:[#allocation2 + $0x1d8] sm:$0xff]
  %v5577 = vld [vmem:[#allocation2 + $0x1e0] sm:$0xff]
  %v5578 = vld [vmem:[#allocation2 + $0x1e8] sm:$0xff]
  %5579 = vrot.lane.b32.xlu0 %v2826, 100
  %v5580 = vpop.permute.xlu0 %5579
  %5581 = vrot.lane.b32.xlu0 %v2829, 100
  %v5582 = vpop.permute.xlu0 %5581
  %5583 = vrot.lane.b32.xlu0 %v2834, 100
  %v5584 = vpop.permute.xlu0 %5583
  %5585 = vrot.lane.b32.xlu0 %v2837, 100
  %v5586 = vpop.permute.xlu0 %5585
  %5587 = vrot.lane.b32.xlu0 %v2842, 100
  %v5588 = vpop.permute.xlu0 %5587
  %5589 = vrot.lane.b32.xlu0 %v2845, 100
  %v5590 = vpop.permute.xlu0 %5589
  %5591 = vrot.lane.b32.xlu0 %v2850, 100
  %v5592 = vpop.permute.xlu0 %5591
  %5593 = vrot.lane.b32.xlu0 %v2853, 100
  %v5594 = vpop.permute.xlu0 %5593
  %5595 = vrot.lane.b32.xlu0 %v2858, 100
  %v5596 = vpop.permute.xlu0 %5595
  %5597 = vrot.lane.b32.xlu0 %v2861, 100
  %v5598 = vpop.permute.xlu0 %5597
  %5599 = vrot.lane.b32.xlu0 %v2866, 100
  %v5600 = vpop.permute.xlu0 %5599
  %5601 = vrot.lane.b32.xlu0 %v2869, 100
  %v5602 = vpop.permute.xlu0 %5601
  %5603 = vrot.lane.b32.xlu0 %v2874, 100
  %v5604 = vpop.permute.xlu0 %5603
  %5605 = vrot.lane.b32.xlu0 %v2877, 100
  %v5606 = vpop.permute.xlu0 %5605
  %5607 = vrot.lane.b32.xlu0 %v2882, 100
  %v5608 = vpop.permute.xlu0 %5607
  %5609 = vrot.lane.b32.xlu0 %v2885, 100
  %v5610 = vpop.permute.xlu0 %5609
  %5611 = vrot.lane.b32.xlu0 %v2890, 100
  %v5612 = vpop.permute.xlu0 %5611
  %5613 = vrot.lane.b32.xlu0 %v2893, 100
  %v5614 = vpop.permute.xlu0 %5613
  %5615 = vrot.lane.b32.xlu0 %v2898, 100
  %v5616 = vpop.permute.xlu0 %5615
  %5617 = vrot.lane.b32.xlu0 %v2901, 100
  %v5618 = vpop.permute.xlu0 %5617
  %5619 = vrot.lane.b32.xlu0 %v2906, 100
  %v5620 = vpop.permute.xlu0 %5619
  %5621 = vrot.lane.b32.xlu0 %v2909, 100
  %v5622 = vpop.permute.xlu0 %5621
  %5623 = vrot.lane.b32.xlu0 %v2914, 100
  %v5624 = vpop.permute.xlu0 %5623
  %5625 = vrot.lane.b32.xlu0 %v2917, 100
  %v5626 = vpop.permute.xlu0 %5625
  %5627 = vrot.lane.b32.xlu0 %v2922, 100
  %v5628 = vpop.permute.xlu0 %5627
  %5629 = vrot.lane.b32.xlu0 %v2925, 100
  %v5630 = vpop.permute.xlu0 %5629
  %5631 = vrot.lane.b32.xlu0 %v2930, 100
  %v5632 = vpop.permute.xlu0 %5631
  %5633 = vrot.lane.b32.xlu0 %v2933, 100
  %v5634 = vpop.permute.xlu0 %5633
  %5635 = vrot.lane.b32.xlu0 %v2938, 100
  %v5636 = vpop.permute.xlu0 %5635
  %5637 = vrot.lane.b32.xlu0 %v2941, 100
  %v5638 = vpop.permute.xlu0 %5637
  %5639 = vrot.lane.b32.xlu0 %v2954, 100
  %v5640 = vpop.permute.xlu0 %5639
  %5641 = vrot.lane.b32.xlu0 %v2957, 100
  %v5642 = vpop.permute.xlu0 %5641
  %5643 = vrot.lane.b32.xlu0 %v2962, 100
  %v5644 = vpop.permute.xlu0 %5643
  %5645 = vrot.lane.b32.xlu0 %v2965, 100
  %v5646 = vpop.permute.xlu0 %5645
  %5647 = vrot.lane.b32.xlu0 %v2970, 100
  %v5648 = vpop.permute.xlu0 %5647
  %5649 = vrot.lane.b32.xlu0 %v2973, 100
  %v5650 = vpop.permute.xlu0 %5649
  %5651 = vrot.lane.b32.xlu0 %v2978, 100
  %v5652 = vpop.permute.xlu0 %5651
  %5653 = vrot.lane.b32.xlu0 %v2981, 100
  %v5654 = vpop.permute.xlu0 %5653
  %5655 = vrot.lane.b32.xlu0 %v2986, 100
  %v5656 = vpop.permute.xlu0 %5655
  %5657 = vrot.lane.b32.xlu0 %v2989, 100
  %v5658 = vpop.permute.xlu0 %5657
  %5659 = vrot.lane.b32.xlu0 %v2994, 100
  %v5660 = vpop.permute.xlu0 %5659
  %5661 = vrot.lane.b32.xlu0 %v2997, 100
  %v5662 = vpop.permute.xlu0 %5661
  %5663 = vrot.lane.b32.xlu0 %v3002, 100
  %v5664 = vpop.permute.xlu0 %5663
  %5665 = vrot.lane.b32.xlu0 %v3005, 100
  %v5666 = vpop.permute.xlu0 %5665
  %5667 = vrot.lane.b32.xlu0 %v3010, 100
  %v5668 = vpop.permute.xlu0 %5667
  %5669 = vrot.lane.b32.xlu0 %v3013, 100
  %v5670 = vpop.permute.xlu0 %5669
  %5671 = vrot.lane.b32.xlu0 %v3018, 100
  %v5672 = vpop.permute.xlu0 %5671
  %5673 = vrot.lane.b32.xlu0 %v3021, 100
  %v5674 = vpop.permute.xlu0 %5673
  %5675 = vrot.lane.b32.xlu0 %v3026, 100
  %v5676 = vpop.permute.xlu0 %5675
  %5677 = vrot.lane.b32.xlu0 %v3029, 100
  %v5678 = vpop.permute.xlu0 %5677
  %5679 = vrot.lane.b32.xlu0 %v3034, 100
  %v5680 = vpop.permute.xlu0 %5679
  %5681 = vrot.lane.b32.xlu0 %v3037, 100
  %v5682 = vpop.permute.xlu0 %5681
  %5683 = vrot.lane.b32.xlu0 %v3042, 100
  %v5684 = vpop.permute.xlu0 %5683
  %5685 = vrot.lane.b32.xlu0 %v3045, 100
  %v5686 = vpop.permute.xlu0 %5685
  %5687 = vrot.lane.b32.xlu0 %v3050, 100
  %v5688 = vpop.permute.xlu0 %5687
  %5689 = vrot.lane.b32.xlu0 %v3053, 100
  %v5690 = vpop.permute.xlu0 %5689
  %5691 = vrot.lane.b32.xlu0 %v3058, 100
  %v5692 = vpop.permute.xlu0 %5691
  %5693 = vrot.lane.b32.xlu0 %v3061, 100
  %v5694 = vpop.permute.xlu0 %5693
  %5695 = vrot.lane.b32.xlu0 %v3066, 100
  %v5696 = vpop.permute.xlu0 %5695
  %5697 = vrot.lane.b32.xlu0 %v3069, 100
  %v5698 = vpop.permute.xlu0 %5697
  %v5759 = vadd.f32 %v5519, %v5580
  %v5760 = vadd.f32 %v5520, %v5582
  %v5761 = vadd.f32 %v5521, %v5584
  %v5762 = vadd.f32 %v5522, %v5586
  %v5763 = vadd.f32 %v5523, %v5588
  %v5764 = vadd.f32 %v5524, %v5590
  %v5765 = vadd.f32 %v5525, %v5592
  %v5766 = vadd.f32 %v5526, %v5594
  %v5767 = vadd.f32 %v5527, %v5596
  %v5768 = vadd.f32 %v5528, %v5598
  %v5769 = vadd.f32 %v5529, %v5600
  %v5770 = vadd.f32 %v5530, %v5602
  %v5771 = vadd.f32 %v5531, %v5604
  %v5772 = vadd.f32 %v5532, %v5606
  %v5773 = vadd.f32 %v5533, %v5608
  %v5774 = vadd.f32 %v5534, %v5610
  %v5775 = vadd.f32 %v5535, %v5612
  %v5776 = vadd.f32 %v5536, %v5614
  %v5777 = vadd.f32 %v5537, %v5616
  %v5778 = vadd.f32 %v5538, %v5618
  %v5779 = vadd.f32 %v5539, %v5620
  %v5780 = vadd.f32 %v5540, %v5622
  %v5781 = vadd.f32 %v5541, %v5624
  %v5782 = vadd.f32 %v5542, %v5626
  %v5783 = vadd.f32 %v5543, %v5628
  %v5784 = vadd.f32 %v5544, %v5630
  %v5785 = vadd.f32 %v5545, %v5632
  %v5786 = vadd.f32 %v5546, %v5634
  %v5787 = vadd.f32 %v5547, %v5636
  %v5788 = vadd.f32 %v5548, %v5638
  %v5789 = vadd.f32 %v5549, %v5640
  %v5790 = vadd.f32 %v5550, %v5642
  %v5791 = vadd.f32 %v5551, %v5644
  %v5792 = vadd.f32 %v5552, %v5646
  %v5793 = vadd.f32 %v5553, %v5648
  %v5794 = vadd.f32 %v5554, %v5650
  %v5795 = vadd.f32 %v5555, %v5652
  %v5796 = vadd.f32 %v5556, %v5654
  %v5797 = vadd.f32 %v5557, %v5656
  %v5798 = vadd.f32 %v5558, %v5658
  %v5799 = vadd.f32 %v5559, %v5660
  %v5800 = vadd.f32 %v5560, %v5662
  %v5801 = vadd.f32 %v5561, %v5664
  %v5802 = vadd.f32 %v5562, %v5666
  %v5803 = vadd.f32 %v5563, %v5668
  %v5804 = vadd.f32 %v5564, %v5670
  %v5805 = vadd.f32 %v5565, %v5672
  %v5806 = vadd.f32 %v5566, %v5674
  %v5807 = vadd.f32 %v5567, %v5676
  %v5808 = vadd.f32 %v5568, %v5678
  %v5809 = vadd.f32 %v5569, %v5680
  %v5810 = vadd.f32 %v5570, %v5682
  %v5811 = vadd.f32 %v5571, %v5684
  %v5812 = vadd.f32 %v5572, %v5686
  %v5813 = vadd.f32 %v5573, %v5688
  %v5814 = vadd.f32 %v5574, %v5690
  %v5815 = vadd.f32 %v5575, %v5692
  %v5816 = vadd.f32 %v5576, %v5694
  %v5817 = vadd.f32 %v5577, %v5696
  %v5818 = vadd.f32 %v5578, %v5698
  %5819 = vst.msk [vmem:[#allocation2] sm:$0xff] %vm1699, %v5759
  %5820 = vst.msk [vmem:[#allocation2 + $0x8] sm:$0xff] %vm1699, %v5760
  %5821 = vst.msk [vmem:[#allocation2 + $0x10] sm:$0xff] %vm1699, %v5761
  %5822 = vst.msk [vmem:[#allocation2 + $0x18] sm:$0xff] %vm1699, %v5762
  %5823 = vst.msk [vmem:[#allocation2 + $0x20] sm:$0xff] %vm1699, %v5763
  %5824 = vst.msk [vmem:[#allocation2 + $0x28] sm:$0xff] %vm1699, %v5764
  %5825 = vst.msk [vmem:[#allocation2 + $0x30] sm:$0xff] %vm1699, %v5765
  %5826 = vst.msk [vmem:[#allocation2 + $0x38] sm:$0xff] %vm1699, %v5766
  %5827 = vst.msk [vmem:[#allocation2 + $0x40] sm:$0xff] %vm1699, %v5767
  %5828 = vst.msk [vmem:[#allocation2 + $0x48] sm:$0xff] %vm1699, %v5768
  %5829 = vst.msk [vmem:[#allocation2 + $0x50] sm:$0xff] %vm1699, %v5769
  %5830 = vst.msk [vmem:[#allocation2 + $0x58] sm:$0xff] %vm1699, %v5770
  %5831 = vst.msk [vmem:[#allocation2 + $0x60] sm:$0xff] %vm1699, %v5771
  %5832 = vst.msk [vmem:[#allocation2 + $0x68] sm:$0xff] %vm1699, %v5772
  %5833 = vst.msk [vmem:[#allocation2 + $0x70] sm:$0xff] %vm1699, %v5773
  %5834 = vst.msk [vmem:[#allocation2 + $0x78] sm:$0xff] %vm1699, %v5774
  %5835 = vst.msk [vmem:[#allocation2 + $0x80] sm:$0xff] %vm1699, %v5775
  %5836 = vst.msk [vmem:[#allocation2 + $0x88] sm:$0xff] %vm1699, %v5776
  %5837 = vst.msk [vmem:[#allocation2 + $0x90] sm:$0xff] %vm1699, %v5777
  %5838 = vst.msk [vmem:[#allocation2 + $0x98] sm:$0xff] %vm1699, %v5778
  %5839 = vst.msk [vmem:[#allocation2 + $0xa0] sm:$0xff] %vm1699, %v5779
  %5840 = vst.msk [vmem:[#allocation2 + $0xa8] sm:$0xff] %vm1699, %v5780
  %5841 = vst.msk [vmem:[#allocation2 + $0xb0] sm:$0xff] %vm1699, %v5781
  %5842 = vst.msk [vmem:[#allocation2 + $0xb8] sm:$0xff] %vm1699, %v5782
  %5843 = vst.msk [vmem:[#allocation2 + $0xc0] sm:$0xff] %vm1699, %v5783
  %5844 = vst.msk [vmem:[#allocation2 + $0xc8] sm:$0xff] %vm1699, %v5784
  %5845 = vst.msk [vmem:[#allocation2 + $0xd0] sm:$0xff] %vm1699, %v5785
  %5846 = vst.msk [vmem:[#allocation2 + $0xd8] sm:$0xff] %vm1699, %v5786
  %5847 = vst.msk [vmem:[#allocation2 + $0xe0] sm:$0xff] %vm1699, %v5787
  %5848 = vst.msk [vmem:[#allocation2 + $0xe8] sm:$0xff] %vm1699, %v5788
  %5849 = vst.msk [vmem:[#allocation2 + $0x100] sm:$0xff] %vm1699, %v5789
  %5850 = vst.msk [vmem:[#allocation2 + $0x108] sm:$0xff] %vm1699, %v5790
  %5851 = vst.msk [vmem:[#allocation2 + $0x110] sm:$0xff] %vm1699, %v5791
  %5852 = vst.msk [vmem:[#allocation2 + $0x118] sm:$0xff] %vm1699, %v5792
  %5853 = vst.msk [vmem:[#allocation2 + $0x120] sm:$0xff] %vm1699, %v5793
  %5854 = vst.msk [vmem:[#allocation2 + $0x128] sm:$0xff] %vm1699, %v5794
  %5855 = vst.msk [vmem:[#allocation2 + $0x130] sm:$0xff] %vm1699, %v5795
  %5856 = vst.msk [vmem:[#allocation2 + $0x138] sm:$0xff] %vm1699, %v5796
  %5857 = vst.msk [vmem:[#allocation2 + $0x140] sm:$0xff] %vm1699, %v5797
  %5858 = vst.msk [vmem:[#allocation2 + $0x148] sm:$0xff] %vm1699, %v5798
  %5859 = vst.msk [vmem:[#allocation2 + $0x150] sm:$0xff] %vm1699, %v5799
  %5860 = vst.msk [vmem:[#allocation2 + $0x158] sm:$0xff] %vm1699, %v5800
  %5861 = vst.msk [vmem:[#allocation2 + $0x160] sm:$0xff] %vm1699, %v5801
  %5862 = vst.msk [vmem:[#allocation2 + $0x168] sm:$0xff] %vm1699, %v5802
  %5863 = vst.msk [vmem:[#allocation2 + $0x170] sm:$0xff] %vm1699, %v5803
  %5864 = vst.msk [vmem:[#allocation2 + $0x178] sm:$0xff] %vm1699, %v5804
  %5865 = vst.msk [vmem:[#allocation2 + $0x180] sm:$0xff] %vm1699, %v5805
  %5866 = vst.msk [vmem:[#allocation2 + $0x188] sm:$0xff] %vm1699, %v5806
  %5867 = vst.msk [vmem:[#allocation2 + $0x190] sm:$0xff] %vm1699, %v5807
  %5868 = vst.msk [vmem:[#allocation2 + $0x198] sm:$0xff] %vm1699, %v5808
  %5869 = vst.msk [vmem:[#allocation2 + $0x1a0] sm:$0xff] %vm1699, %v5809
  %5870 = vst.msk [vmem:[#allocation2 + $0x1a8] sm:$0xff] %vm1699, %v5810
  %5871 = vst.msk [vmem:[#allocation2 + $0x1b0] sm:$0xff] %vm1699, %v5811
  %5872 = vst.msk [vmem:[#allocation2 + $0x1b8] sm:$0xff] %vm1699, %v5812
  %5873 = vst.msk [vmem:[#allocation2 + $0x1c0] sm:$0xff] %vm1699, %v5813
  %5874 = vst.msk [vmem:[#allocation2 + $0x1c8] sm:$0xff] %vm1699, %v5814
  %5875 = vst.msk [vmem:[#allocation2 + $0x1d0] sm:$0xff] %vm1699, %v5815
  %5876 = vst.msk [vmem:[#allocation2 + $0x1d8] sm:$0xff] %vm1699, %v5816
  %5877 = vst.msk [vmem:[#allocation2 + $0x1e0] sm:$0xff] %vm1699, %v5817
  %5878 = vst.msk [vmem:[#allocation2 + $0x1e8] sm:$0xff] %vm1699, %v5818
  %v5879 = vld [vmem:[#allocation2] sm:$0xff]
  %v5880 = vld [vmem:[#allocation2 + $0x8] sm:$0x7f]
  %v5881 = vld [vmem:[#allocation2 + $0x10] sm:$0xff]
  %v5882 = vld [vmem:[#allocation2 + $0x18] sm:$0x7f]
  %v5883 = vld [vmem:[#allocation2 + $0x20] sm:$0xff]
  %v5884 = vld [vmem:[#allocation2 + $0x28] sm:$0x7f]
  %v5885 = vld [vmem:[#allocation2 + $0x30] sm:$0xff]
  %v5886 = vld [vmem:[#allocation2 + $0x38] sm:$0x7f]
  %v5887 = vld [vmem:[#allocation2 + $0x40] sm:$0xff]
  %v5888 = vld [vmem:[#allocation2 + $0x48] sm:$0x7f]
  %v5889 = vld [vmem:[#allocation2 + $0x50] sm:$0xff]
  %v5890 = vld [vmem:[#allocation2 + $0x58] sm:$0x7f]
  %v5891 = vld [vmem:[#allocation2 + $0x60] sm:$0xff]
  %v5892 = vld [vmem:[#allocation2 + $0x68] sm:$0x7f]
  %v5893 = vld [vmem:[#allocation2 + $0x70] sm:$0xff]
  %v5894 = vld [vmem:[#allocation2 + $0x78] sm:$0x7f]
  %v5895 = vld [vmem:[#allocation2 + $0x80] sm:$0xff]
  %v5896 = vld [vmem:[#allocation2 + $0x88] sm:$0x7f]
  %v5897 = vld [vmem:[#allocation2 + $0x90] sm:$0xff]
  %v5898 = vld [vmem:[#allocation2 + $0x98] sm:$0x7f]
  %v5899 = vld [vmem:[#allocation2 + $0xa0] sm:$0xff]
  %v5900 = vld [vmem:[#allocation2 + $0xa8] sm:$0x7f]
  %v5901 = vld [vmem:[#allocation2 + $0xb0] sm:$0xff]
  %v5902 = vld [vmem:[#allocation2 + $0xb8] sm:$0x7f]
  %v5903 = vld [vmem:[#allocation2 + $0xc0] sm:$0xff]
  %v5904 = vld [vmem:[#allocation2 + $0xc8] sm:$0x7f]
  %v5905 = vld [vmem:[#allocation2 + $0xd0] sm:$0xff]
  %v5906 = vld [vmem:[#allocation2 + $0xd8] sm:$0x7f]
  %v5907 = vld [vmem:[#allocation2 + $0xe0] sm:$0xff]
  %v5908 = vld [vmem:[#allocation2 + $0xe8] sm:$0x7f]
  %v5909 = vld [vmem:[#allocation2 + $0x100] sm:$0xff]
  %v5910 = vld [vmem:[#allocation2 + $0x108] sm:$0x7f]
  %v5911 = vld [vmem:[#allocation2 + $0x110] sm:$0xff]
  %v5912 = vld [vmem:[#allocation2 + $0x118] sm:$0x7f]
  %v5913 = vld [vmem:[#allocation2 + $0x120] sm:$0xff]
  %v5914 = vld [vmem:[#allocation2 + $0x128] sm:$0x7f]
  %v5915 = vld [vmem:[#allocation2 + $0x130] sm:$0xff]
  %v5916 = vld [vmem:[#allocation2 + $0x138] sm:$0x7f]
  %v5917 = vld [vmem:[#allocation2 + $0x140] sm:$0xff]
  %v5918 = vld [vmem:[#allocation2 + $0x148] sm:$0x7f]
  %v5919 = vld [vmem:[#allocation2 + $0x150] sm:$0xff]
  %v5920 = vld [vmem:[#allocation2 + $0x158] sm:$0x7f]
  %v5921 = vld [vmem:[#allocation2 + $0x160] sm:$0xff]
  %v5922 = vld [vmem:[#allocation2 + $0x168] sm:$0x7f]
  %v5923 = vld [vmem:[#allocation2 + $0x170] sm:$0xff]
  %v5924 = vld [vmem:[#allocation2 + $0x178] sm:$0x7f]
  %v5925 = vld [vmem:[#allocation2 + $0x180] sm:$0xff]
  %v5926 = vld [vmem:[#allocation2 + $0x188] sm:$0x7f]
  %v5927 = vld [vmem:[#allocation2 + $0x190] sm:$0xff]
  %v5928 = vld [vmem:[#allocation2 + $0x198] sm:$0x7f]
  %v5929 = vld [vmem:[#allocation2 + $0x1a0] sm:$0xff]
  %v5930 = vld [vmem:[#allocation2 + $0x1a8] sm:$0x7f]
  %v5931 = vld [vmem:[#allocation2 + $0x1b0] sm:$0xff]
  %v5932 = vld [vmem:[#allocation2 + $0x1b8] sm:$0x7f]
  %v5933 = vld [vmem:[#allocation2 + $0x1c0] sm:$0xff]
  %v5934 = vld [vmem:[#allocation2 + $0x1c8] sm:$0x7f]
  %v5935 = vld [vmem:[#allocation2 + $0x1d0] sm:$0xff]
  %v5936 = vld [vmem:[#allocation2 + $0x1d8] sm:$0x7f]
  %v5937 = vld [vmem:[#allocation2 + $0x1e0] sm:$0xff]
  %v5938 = vld [vmem:[#allocation2 + $0x1e8] sm:$0x7f]
  %5939 = vrot.lane.b32.xlu0 %v4000, 96
  %v5940 = vpop.permute.xlu0 %5939
  %5941 = vrot.lane.b32.xlu0 %v3999, 96
  %v5942 = vpop.permute.xlu0 %5941
  %5943 = vrot.lane.b32.xlu0 %v4003, 96
  %v5944 = vpop.permute.xlu0 %5943
  %5945 = vrot.lane.b32.xlu0 %v4002, 96
  %v5946 = vpop.permute.xlu0 %5945
  %5947 = vrot.lane.b32.xlu0 %v4006, 96
  %v5948 = vpop.permute.xlu0 %5947
  %5949 = vrot.lane.b32.xlu0 %v4005, 96
  %v5950 = vpop.permute.xlu0 %5949
  %5951 = vrot.lane.b32.xlu0 %v4009, 96
  %v5952 = vpop.permute.xlu0 %5951
  %5953 = vrot.lane.b32.xlu0 %v4008, 96
  %v5954 = vpop.permute.xlu0 %5953
  %5955 = vrot.lane.b32.xlu0 %v4012, 96
  %v5956 = vpop.permute.xlu0 %5955
  %5957 = vrot.lane.b32.xlu0 %v4011, 96
  %v5958 = vpop.permute.xlu0 %5957
  %5959 = vrot.lane.b32.xlu0 %v4015, 96
  %v5960 = vpop.permute.xlu0 %5959
  %5961 = vrot.lane.b32.xlu0 %v4014, 96
  %v5962 = vpop.permute.xlu0 %5961
  %5963 = vrot.lane.b32.xlu0 %v4018, 96
  %v5964 = vpop.permute.xlu0 %5963
  %5965 = vrot.lane.b32.xlu0 %v4017, 96
  %v5966 = vpop.permute.xlu0 %5965
  %5967 = vrot.lane.b32.xlu0 %v4021, 96
  %v5968 = vpop.permute.xlu0 %5967
  %5969 = vrot.lane.b32.xlu0 %v4020, 96
  %v5970 = vpop.permute.xlu0 %5969
  %5971 = vrot.lane.b32.xlu0 %v4024, 96
  %v5972 = vpop.permute.xlu0 %5971
  %5973 = vrot.lane.b32.xlu0 %v4023, 96
  %v5974 = vpop.permute.xlu0 %5973
  %5975 = vrot.lane.b32.xlu0 %v4027, 96
  %v5976 = vpop.permute.xlu0 %5975
  %5977 = vrot.lane.b32.xlu0 %v4026, 96
  %v5978 = vpop.permute.xlu0 %5977
  %5979 = vrot.lane.b32.xlu0 %v4030, 96
  %v5980 = vpop.permute.xlu0 %5979
  %5981 = vrot.lane.b32.xlu0 %v4029, 96
  %v5982 = vpop.permute.xlu0 %5981
  %5983 = vrot.lane.b32.xlu0 %v4033, 96
  %v5984 = vpop.permute.xlu0 %5983
  %5985 = vrot.lane.b32.xlu0 %v4032, 96
  %v5986 = vpop.permute.xlu0 %5985
  %5987 = vrot.lane.b32.xlu0 %v4036, 96
  %v5988 = vpop.permute.xlu0 %5987
  %5989 = vrot.lane.b32.xlu0 %v4035, 96
  %v5990 = vpop.permute.xlu0 %5989
  %5991 = vrot.lane.b32.xlu0 %v4039, 96
  %v5992 = vpop.permute.xlu0 %5991
  %5993 = vrot.lane.b32.xlu0 %v4038, 96
  %v5994 = vpop.permute.xlu0 %5993
  %5995 = vrot.lane.b32.xlu0 %v4835, 96
  %v5996 = vpop.permute.xlu0 %5995
  %5997 = vrot.lane.b32.xlu0 %v4834, 96
  %v5998 = vpop.permute.xlu0 %5997
  %5999 = vrot.lane.b32.xlu0 %v4045, 96
  %v6000 = vpop.permute.xlu0 %5999
  %6001 = vrot.lane.b32.xlu0 %v4044, 96
  %v6002 = vpop.permute.xlu0 %6001
  %6003 = vrot.lane.b32.xlu0 %v4048, 96
  %v6004 = vpop.permute.xlu0 %6003
  %6005 = vrot.lane.b32.xlu0 %v4047, 96
  %v6006 = vpop.permute.xlu0 %6005
  %6007 = vrot.lane.b32.xlu0 %v4051, 96
  %v6008 = vpop.permute.xlu0 %6007
  %6009 = vrot.lane.b32.xlu0 %v4050, 96
  %v6010 = vpop.permute.xlu0 %6009
  %6011 = vrot.lane.b32.xlu0 %v4054, 96
  %v6012 = vpop.permute.xlu0 %6011
  %6013 = vrot.lane.b32.xlu0 %v4053, 96
  %v6014 = vpop.permute.xlu0 %6013
  %6015 = vrot.lane.b32.xlu0 %v4057, 96
  %v6016 = vpop.permute.xlu0 %6015
  %6017 = vrot.lane.b32.xlu0 %v4056, 96
  %v6018 = vpop.permute.xlu0 %6017
  %6019 = vrot.lane.b32.xlu0 %v4060, 96
  %v6020 = vpop.permute.xlu0 %6019
  %6021 = vrot.lane.b32.xlu0 %v4059, 96
  %v6022 = vpop.permute.xlu0 %6021
  %6023 = vrot.lane.b32.xlu0 %v4063, 96
  %v6024 = vpop.permute.xlu0 %6023
  %6025 = vrot.lane.b32.xlu0 %v4062, 96
  %v6026 = vpop.permute.xlu0 %6025
  %6027 = vrot.lane.b32.xlu0 %v4066, 96
  %v6028 = vpop.permute.xlu0 %6027
  %6029 = vrot.lane.b32.xlu0 %v4065, 96
  %v6030 = vpop.permute.xlu0 %6029
  %6031 = vrot.lane.b32.xlu0 %v4069, 96
  %v6032 = vpop.permute.xlu0 %6031
  %6033 = vrot.lane.b32.xlu0 %v4068, 96
  %v6034 = vpop.permute.xlu0 %6033
  %6035 = vrot.lane.b32.xlu0 %v4072, 96
  %v6036 = vpop.permute.xlu0 %6035
  %6037 = vrot.lane.b32.xlu0 %v4071, 96
  %v6038 = vpop.permute.xlu0 %6037
  %6039 = vrot.lane.b32.xlu0 %v4075, 96
  %v6040 = vpop.permute.xlu0 %6039
  %6041 = vrot.lane.b32.xlu0 %v4074, 96
  %v6042 = vpop.permute.xlu0 %6041
  %6043 = vrot.lane.b32.xlu0 %v4078, 96
  %v6044 = vpop.permute.xlu0 %6043
  %6045 = vrot.lane.b32.xlu0 %v4077, 96
  %v6046 = vpop.permute.xlu0 %6045
  %6047 = vrot.lane.b32.xlu0 %v4081, 96
  %v6048 = vpop.permute.xlu0 %6047
  %6049 = vrot.lane.b32.xlu0 %v4080, 96
  %v6050 = vpop.permute.xlu0 %6049
  %6051 = vrot.lane.b32.xlu0 %v4084, 96
  %v6052 = vpop.permute.xlu0 %6051
  %6053 = vrot.lane.b32.xlu0 %v4083, 96
  %v6054 = vpop.permute.xlu0 %6053
  %6055 = vrot.lane.b32.xlu0 %v4838, 96
  %v6056 = vpop.permute.xlu0 %6055
  %6057 = vrot.lane.b32.xlu0 %v4837, 96
  %v6058 = vpop.permute.xlu0 %6057
  %v6119 = vadd.f32 %v5879, %v5940
  %v6120 = vadd.f32 %v5880, %v5942
  %v6121 = vadd.f32 %v5881, %v5944
  %v6122 = vadd.f32 %v5882, %v5946
  %v6123 = vadd.f32 %v5883, %v5948
  %v6124 = vadd.f32 %v5884, %v5950
  %v6125 = vadd.f32 %v5885, %v5952
  %v6126 = vadd.f32 %v5886, %v5954
  %v6127 = vadd.f32 %v5887, %v5956
  %v6128 = vadd.f32 %v5888, %v5958
  %v6129 = vadd.f32 %v5889, %v5960
  %v6130 = vadd.f32 %v5890, %v5962
  %v6131 = vadd.f32 %v5891, %v5964
  %v6132 = vadd.f32 %v5892, %v5966
  %v6133 = vadd.f32 %v5893, %v5968
  %v6134 = vadd.f32 %v5894, %v5970
  %v6135 = vadd.f32 %v5895, %v5972
  %v6136 = vadd.f32 %v5896, %v5974
  %v6137 = vadd.f32 %v5897, %v5976
  %v6138 = vadd.f32 %v5898, %v5978
  %v6139 = vadd.f32 %v5899, %v5980
  %v6140 = vadd.f32 %v5900, %v5982
  %v6141 = vadd.f32 %v5901, %v5984
  %v6142 = vadd.f32 %v5902, %v5986
  %v6143 = vadd.f32 %v5903, %v5988
  %v6144 = vadd.f32 %v5904, %v5990
  %v6145 = vadd.f32 %v5905, %v5992
  %v6146 = vadd.f32 %v5906, %v5994
  %v6147 = vadd.f32 %v5907, %v5996
  %v6148 = vadd.f32 %v5908, %v5998
  %v6149 = vadd.f32 %v5909, %v6000
  %v6150 = vadd.f32 %v5910, %v6002
  %v6151 = vadd.f32 %v5911, %v6004
  %v6152 = vadd.f32 %v5912, %v6006
  %v6153 = vadd.f32 %v5913, %v6008
  %v6154 = vadd.f32 %v5914, %v6010
  %v6155 = vadd.f32 %v5915, %v6012
  %v6156 = vadd.f32 %v5916, %v6014
  %v6157 = vadd.f32 %v5917, %v6016
  %v6158 = vadd.f32 %v5918, %v6018
  %v6159 = vadd.f32 %v5919, %v6020
  %v6160 = vadd.f32 %v5920, %v6022
  %v6161 = vadd.f32 %v5921, %v6024
  %v6162 = vadd.f32 %v5922, %v6026
  %v6163 = vadd.f32 %v5923, %v6028
  %v6164 = vadd.f32 %v5924, %v6030
  %v6165 = vadd.f32 %v5925, %v6032
  %v6166 = vadd.f32 %v5926, %v6034
  %v6167 = vadd.f32 %v5927, %v6036
  %v6168 = vadd.f32 %v5928, %v6038
  %v6169 = vadd.f32 %v5929, %v6040
  %v6170 = vadd.f32 %v5930, %v6042
  %v6171 = vadd.f32 %v5931, %v6044
  %v6172 = vadd.f32 %v5932, %v6046
  %v6173 = vadd.f32 %v5933, %v6048
  %v6174 = vadd.f32 %v5934, %v6050
  %v6175 = vadd.f32 %v5935, %v6052
  %v6176 = vadd.f32 %v5936, %v6054
  %v6177 = vadd.f32 %v5937, %v6056
  %v6178 = vadd.f32 %v5938, %v6058
  %6179 = vst.msk [vmem:[#allocation2] sm:$0xff] %vm1699, %v6119
  %6180 = vst.msk [vmem:[#allocation2 + $0x8] sm:$0x7f] %vm3514, %v6120
  %6181 = vst.msk [vmem:[#allocation2 + $0x10] sm:$0xff] %vm1699, %v6121
  %6182 = vst.msk [vmem:[#allocation2 + $0x18] sm:$0x7f] %vm3514, %v6122
  %6183 = vst.msk [vmem:[#allocation2 + $0x20] sm:$0xff] %vm1699, %v6123
  %6184 = vst.msk [vmem:[#allocation2 + $0x28] sm:$0x7f] %vm3514, %v6124
  %6185 = vst.msk [vmem:[#allocation2 + $0x30] sm:$0xff] %vm1699, %v6125
  %6186 = vst.msk [vmem:[#allocation2 + $0x38] sm:$0x7f] %vm3514, %v6126
  %6187 = vst.msk [vmem:[#allocation2 + $0x40] sm:$0xff] %vm1699, %v6127
  %6188 = vst.msk [vmem:[#allocation2 + $0x48] sm:$0x7f] %vm3514, %v6128
  %6189 = vst.msk [vmem:[#allocation2 + $0x50] sm:$0xff] %vm1699, %v6129
  %6190 = vst.msk [vmem:[#allocation2 + $0x58] sm:$0x7f] %vm3514, %v6130
  %6191 = vst.msk [vmem:[#allocation2 + $0x60] sm:$0xff] %vm1699, %v6131
  %6192 = vst.msk [vmem:[#allocation2 + $0x68] sm:$0x7f] %vm3514, %v6132
  %6193 = vst.msk [vmem:[#allocation2 + $0x70] sm:$0xff] %vm1699, %v6133
  %6194 = vst.msk [vmem:[#allocation2 + $0x78] sm:$0x7f] %vm3514, %v6134
  %6195 = vst.msk [vmem:[#allocation2 + $0x80] sm:$0xff] %vm1699, %v6135
  %6196 = vst.msk [vmem:[#allocation2 + $0x88] sm:$0x7f] %vm3514, %v6136
  %6197 = vst.msk [vmem:[#allocation2 + $0x90] sm:$0xff] %vm1699, %v6137
  %6198 = vst.msk [vmem:[#allocation2 + $0x98] sm:$0x7f] %vm3514, %v6138
  %6199 = vst.msk [vmem:[#allocation2 + $0xa0] sm:$0xff] %vm1699, %v6139
  %6200 = vst.msk [vmem:[#allocation2 + $0xa8] sm:$0x7f] %vm3514, %v6140
  %6201 = vst.msk [vmem:[#allocation2 + $0xb0] sm:$0xff] %vm1699, %v6141
  %6202 = vst.msk [vmem:[#allocation2 + $0xb8] sm:$0x7f] %vm3514, %v6142
  %6203 = vst.msk [vmem:[#allocation2 + $0xc0] sm:$0xff] %vm1699, %v6143
  %6204 = vst.msk [vmem:[#allocation2 + $0xc8] sm:$0x7f] %vm3514, %v6144
  %6205 = vst.msk [vmem:[#allocation2 + $0xd0] sm:$0xff] %vm1699, %v6145
  %6206 = vst.msk [vmem:[#allocation2 + $0xd8] sm:$0x7f] %vm3514, %v6146
  %6207 = vst.msk [vmem:[#allocation2 + $0xe0] sm:$0xff] %vm1699, %v6147
  %6208 = vst.msk [vmem:[#allocation2 + $0xe8] sm:$0x7f] %vm3514, %v6148
  %6209 = vst.msk [vmem:[#allocation2 + $0x100] sm:$0xff] %vm1699, %v6149
  %6210 = vst.msk [vmem:[#allocation2 + $0x108] sm:$0x7f] %vm3514, %v6150
  %6211 = vst.msk [vmem:[#allocation2 + $0x110] sm:$0xff] %vm1699, %v6151
  %6212 = vst.msk [vmem:[#allocation2 + $0x118] sm:$0x7f] %vm3514, %v6152
  %6213 = vst.msk [vmem:[#allocation2 + $0x120] sm:$0xff] %vm1699, %v6153
  %6214 = vst.msk [vmem:[#allocation2 + $0x128] sm:$0x7f] %vm3514, %v6154
  %6215 = vst.msk [vmem:[#allocation2 + $0x130] sm:$0xff] %vm1699, %v6155
  %6216 = vst.msk [vmem:[#allocation2 + $0x138] sm:$0x7f] %vm3514, %v6156
  %6217 = vst.msk [vmem:[#allocation2 + $0x140] sm:$0xff] %vm1699, %v6157
  %6218 = vst.msk [vmem:[#allocation2 + $0x148] sm:$0x7f] %vm3514, %v6158
  %6219 = vst.msk [vmem:[#allocation2 + $0x150] sm:$0xff] %vm1699, %v6159
  %6220 = vst.msk [vmem:[#allocation2 + $0x158] sm:$0x7f] %vm3514, %v6160
  %6221 = vst.msk [vmem:[#allocation2 + $0x160] sm:$0xff] %vm1699, %v6161
  %6222 = vst.msk [vmem:[#allocation2 + $0x168] sm:$0x7f] %vm3514, %v6162
  %6223 = vst.msk [vmem:[#allocation2 + $0x170] sm:$0xff] %vm1699, %v6163
  %6224 = vst.msk [vmem:[#allocation2 + $0x178] sm:$0x7f] %vm3514, %v6164
  %6225 = vst.msk [vmem:[#allocation2 + $0x180] sm:$0xff] %vm1699, %v6165
  %6226 = vst.msk [vmem:[#allocation2 + $0x188] sm:$0x7f] %vm3514, %v6166
  %6227 = vst.msk [vmem:[#allocation2 + $0x190] sm:$0xff] %vm1699, %v6167
  %6228 = vst.msk [vmem:[#allocation2 + $0x198] sm:$0x7f] %vm3514, %v6168
  %6229 = vst.msk [vmem:[#allocation2 + $0x1a0] sm:$0xff] %vm1699, %v6169
  %6230 = vst.msk [vmem:[#allocation2 + $0x1a8] sm:$0x7f] %vm3514, %v6170
  %6231 = vst.msk [vmem:[#allocation2 + $0x1b0] sm:$0xff] %vm1699, %v6171
  %6232 = vst.msk [vmem:[#allocation2 + $0x1b8] sm:$0x7f] %vm3514, %v6172
  %6233 = vst.msk [vmem:[#allocation2 + $0x1c0] sm:$0xff] %vm1699, %v6173
  %6234 = vst.msk [vmem:[#allocation2 + $0x1c8] sm:$0x7f] %vm3514, %v6174
  %6235 = vst.msk [vmem:[#allocation2 + $0x1d0] sm:$0xff] %vm1699, %v6175
  %6236 = vst.msk [vmem:[#allocation2 + $0x1d8] sm:$0x7f] %vm3514, %v6176
  %6237 = vst.msk [vmem:[#allocation2 + $0x1e0] sm:$0xff] %vm1699, %v6177
  %6238 = vst.msk [vmem:[#allocation2 + $0x1e8] sm:$0x7f] %vm3514, %v6178
  %v6239 = vld [vmem:[#allocation2] sm:$0xff]
  %v6240 = vld [vmem:[#allocation2 + $0x8] sm:$0xff]
  %v6241 = vld [vmem:[#allocation2 + $0x10] sm:$0xff]
  %v6242 = vld [vmem:[#allocation2 + $0x18] sm:$0xff]
  %v6243 = vld [vmem:[#allocation2 + $0x20] sm:$0xff]
  %v6244 = vld [vmem:[#allocation2 + $0x28] sm:$0xff]
  %v6245 = vld [vmem:[#allocation2 + $0x30] sm:$0xff]
  %v6246 = vld [vmem:[#allocation2 + $0x38] sm:$0xff]
  %v6247 = vld [vmem:[#allocation2 + $0x40] sm:$0xff]
  %v6248 = vld [vmem:[#allocation2 + $0x48] sm:$0xff]
  %v6249 = vld [vmem:[#allocation2 + $0x50] sm:$0xff]
  %v6250 = vld [vmem:[#allocation2 + $0x58] sm:$0xff]
  %v6251 = vld [vmem:[#allocation2 + $0x60] sm:$0xff]
  %v6252 = vld [vmem:[#allocation2 + $0x68] sm:$0xff]
  %v6253 = vld [vmem:[#allocation2 + $0x70] sm:$0xff]
  %v6254 = vld [vmem:[#allocation2 + $0x78] sm:$0xff]
  %v6255 = vld [vmem:[#allocation2 + $0x80] sm:$0xff]
  %v6256 = vld [vmem:[#allocation2 + $0x88] sm:$0xff]
  %v6257 = vld [vmem:[#allocation2 + $0x90] sm:$0xff]
  %v6258 = vld [vmem:[#allocation2 + $0x98] sm:$0xff]
  %v6259 = vld [vmem:[#allocation2 + $0xa0] sm:$0xff]
  %v6260 = vld [vmem:[#allocation2 + $0xa8] sm:$0xff]
  %v6261 = vld [vmem:[#allocation2 + $0xb0] sm:$0xff]
  %v6262 = vld [vmem:[#allocation2 + $0xb8] sm:$0xff]
  %v6263 = vld [vmem:[#allocation2 + $0xc0] sm:$0xff]
  %v6264 = vld [vmem:[#allocation2 + $0xc8] sm:$0xff]
  %v6265 = vld [vmem:[#allocation2 + $0xd0] sm:$0xff]
  %v6266 = vld [vmem:[#allocation2 + $0xd8] sm:$0xff]
  %v6267 = vld [vmem:[#allocation2 + $0xe0] sm:$0xff]
  %v6268 = vld [vmem:[#allocation2 + $0xe8] sm:$0xff]
  %v6269 = vld [vmem:[#allocation2 + $0xf0] sm:$0xff]
  %v6270 = vld [vmem:[#allocation2 + $0xf8] sm:$0xff]
  %v6271 = vld [vmem:[#allocation2 + $0x100] sm:$0xff]
  %v6272 = vld [vmem:[#allocation2 + $0x108] sm:$0xff]
  %v6273 = vld [vmem:[#allocation2 + $0x110] sm:$0xff]
  %v6274 = vld [vmem:[#allocation2 + $0x118] sm:$0xff]
  %v6275 = vld [vmem:[#allocation2 + $0x120] sm:$0xff]
  %v6276 = vld [vmem:[#allocation2 + $0x128] sm:$0xff]
  %v6277 = vld [vmem:[#allocation2 + $0x130] sm:$0xff]
  %v6278 = vld [vmem:[#allocation2 + $0x138] sm:$0xff]
  %v6279 = vld [vmem:[#allocation2 + $0x140] sm:$0xff]
  %v6280 = vld [vmem:[#allocation2 + $0x148] sm:$0xff]
  %v6281 = vld [vmem:[#allocation2 + $0x150] sm:$0xff]
  %v6282 = vld [vmem:[#allocation2 + $0x158] sm:$0xff]
  %v6283 = vld [vmem:[#allocation2 + $0x160] sm:$0xff]
  %v6284 = vld [vmem:[#allocation2 + $0x168] sm:$0xff]
  %v6285 = vld [vmem:[#allocation2 + $0x170] sm:$0xff]
  %v6286 = vld [vmem:[#allocation2 + $0x178] sm:$0xff]
  %v6287 = vld [vmem:[#allocation2 + $0x180] sm:$0xff]
  %v6288 = vld [vmem:[#allocation2 + $0x188] sm:$0xff]
  %v6289 = vld [vmem:[#allocation2 + $0x190] sm:$0xff]
  %v6290 = vld [vmem:[#allocation2 + $0x198] sm:$0xff]
  %v6291 = vld [vmem:[#allocation2 + $0x1a0] sm:$0xff]
  %v6292 = vld [vmem:[#allocation2 + $0x1a8] sm:$0xff]
  %v6293 = vld [vmem:[#allocation2 + $0x1b0] sm:$0xff]
  %v6294 = vld [vmem:[#allocation2 + $0x1b8] sm:$0xff]
  %v6295 = vld [vmem:[#allocation2 + $0x1c0] sm:$0xff]
  %v6296 = vld [vmem:[#allocation2 + $0x1c8] sm:$0xff]
  %v6297 = vld [vmem:[#allocation2 + $0x1d0] sm:$0xff]
  %v6298 = vld [vmem:[#allocation2 + $0x1d8] sm:$0xff]
  %v6299 = vld [vmem:[#allocation2 + $0x1e0] sm:$0xff]
  %v6300 = vld [vmem:[#allocation2 + $0x1e8] sm:$0xff]
  %v6301 = vld [vmem:[#allocation2 + $0x1f0] sm:$0xff]
  %v6302 = vld [vmem:[#allocation2 + $0x1f8] sm:$0xff]
  %6367 = vrot.lane.b32.xlu0 %v6239, 4
  %v6368 = vpop.permute.xlu0 %6367
  %6369 = vrot.lane.b32.xlu0 %v6240, 4
  %v6370 = vpop.permute.xlu0 %6369
  %6371 = vrot.lane.b32.xlu0 %v6241, 4
  %v6372 = vpop.permute.xlu0 %6371
  %6373 = vrot.lane.b32.xlu0 %v6242, 4
  %v6374 = vpop.permute.xlu0 %6373
  %6375 = vrot.lane.b32.xlu0 %v6243, 4
  %v6376 = vpop.permute.xlu0 %6375
  %6377 = vrot.lane.b32.xlu0 %v6244, 4
  %v6378 = vpop.permute.xlu0 %6377
  %6379 = vrot.lane.b32.xlu0 %v6245, 4
  %v6380 = vpop.permute.xlu0 %6379
  %6381 = vrot.lane.b32.xlu0 %v6246, 4
  %v6382 = vpop.permute.xlu0 %6381
  %6383 = vrot.lane.b32.xlu0 %v6247, 4
  %v6384 = vpop.permute.xlu0 %6383
  %6385 = vrot.lane.b32.xlu0 %v6248, 4
  %v6386 = vpop.permute.xlu0 %6385
  %6387 = vrot.lane.b32.xlu0 %v6249, 4
  %v6388 = vpop.permute.xlu0 %6387
  %6389 = vrot.lane.b32.xlu0 %v6250, 4
  %v6390 = vpop.permute.xlu0 %6389
  %6391 = vrot.lane.b32.xlu0 %v6251, 4
  %v6392 = vpop.permute.xlu0 %6391
  %6393 = vrot.lane.b32.xlu0 %v6252, 4
  %v6394 = vpop.permute.xlu0 %6393
  %6395 = vrot.lane.b32.xlu0 %v6253, 4
  %v6396 = vpop.permute.xlu0 %6395
  %6397 = vrot.lane.b32.xlu0 %v6254, 4
  %v6398 = vpop.permute.xlu0 %6397
  %6399 = vrot.lane.b32.xlu0 %v6255, 4
  %v6400 = vpop.permute.xlu0 %6399
  %6401 = vrot.lane.b32.xlu0 %v6256, 4
  %v6402 = vpop.permute.xlu0 %6401
  %6403 = vrot.lane.b32.xlu0 %v6257, 4
  %v6404 = vpop.permute.xlu0 %6403
  %6405 = vrot.lane.b32.xlu0 %v6258, 4
  %v6406 = vpop.permute.xlu0 %6405
  %6407 = vrot.lane.b32.xlu0 %v6259, 4
  %v6408 = vpop.permute.xlu0 %6407
  %6409 = vrot.lane.b32.xlu0 %v6260, 4
  %v6410 = vpop.permute.xlu0 %6409
  %6411 = vrot.lane.b32.xlu0 %v6261, 4
  %v6412 = vpop.permute.xlu0 %6411
  %6413 = vrot.lane.b32.xlu0 %v6262, 4
  %v6414 = vpop.permute.xlu0 %6413
  %6415 = vrot.lane.b32.xlu0 %v6263, 4
  %v6416 = vpop.permute.xlu0 %6415
  %6417 = vrot.lane.b32.xlu0 %v6264, 4
  %v6418 = vpop.permute.xlu0 %6417
  %6419 = vrot.lane.b32.xlu0 %v6265, 4
  %v6420 = vpop.permute.xlu0 %6419
  %6421 = vrot.lane.b32.xlu0 %v6266, 4
  %v6422 = vpop.permute.xlu0 %6421
  %6423 = vrot.lane.b32.xlu0 %v6267, 4
  %v6424 = vpop.permute.xlu0 %6423
  %6425 = vrot.lane.b32.xlu0 %v6268, 4
  %v6426 = vpop.permute.xlu0 %6425
  %6427 = vrot.lane.b32.xlu0 %v6269, 4
  %v6428 = vpop.permute.xlu0 %6427
  %6429 = vrot.lane.b32.xlu0 %v6270, 4
  %v6430 = vpop.permute.xlu0 %6429
  %6431 = vrot.lane.b32.xlu0 %v6271, 4
  %v6432 = vpop.permute.xlu0 %6431
  %6433 = vrot.lane.b32.xlu0 %v6272, 4
  %v6434 = vpop.permute.xlu0 %6433
  %6435 = vrot.lane.b32.xlu0 %v6273, 4
  %v6436 = vpop.permute.xlu0 %6435
  %6437 = vrot.lane.b32.xlu0 %v6274, 4
  %v6438 = vpop.permute.xlu0 %6437
  %6439 = vrot.lane.b32.xlu0 %v6275, 4
  %v6440 = vpop.permute.xlu0 %6439
  %6441 = vrot.lane.b32.xlu0 %v6276, 4
  %v6442 = vpop.permute.xlu0 %6441
  %6443 = vrot.lane.b32.xlu0 %v6277, 4
  %v6444 = vpop.permute.xlu0 %6443
  %6445 = vrot.lane.b32.xlu0 %v6278, 4
  %v6446 = vpop.permute.xlu0 %6445
  %6447 = vrot.lane.b32.xlu0 %v6279, 4
  %v6448 = vpop.permute.xlu0 %6447
  %6449 = vrot.lane.b32.xlu0 %v6280, 4
  %v6450 = vpop.permute.xlu0 %6449
  %6451 = vrot.lane.b32.xlu0 %v6281, 4
  %v6452 = vpop.permute.xlu0 %6451
  %6453 = vrot.lane.b32.xlu0 %v6282, 4
  %v6454 = vpop.permute.xlu0 %6453
  %6455 = vrot.lane.b32.xlu0 %v6283, 4
  %v6456 = vpop.permute.xlu0 %6455
  %6457 = vrot.lane.b32.xlu0 %v6284, 4
  %v6458 = vpop.permute.xlu0 %6457
  %6459 = vrot.lane.b32.xlu0 %v6285, 4
  %v6460 = vpop.permute.xlu0 %6459
  %6461 = vrot.lane.b32.xlu0 %v6286, 4
  %v6462 = vpop.permute.xlu0 %6461
  %6463 = vrot.lane.b32.xlu0 %v6287, 4
  %v6464 = vpop.permute.xlu0 %6463
  %6465 = vrot.lane.b32.xlu0 %v6288, 4
  %v6466 = vpop.permute.xlu0 %6465
  %6467 = vrot.lane.b32.xlu0 %v6289, 4
  %v6468 = vpop.permute.xlu0 %6467
  %6469 = vrot.lane.b32.xlu0 %v6290, 4
  %v6470 = vpop.permute.xlu0 %6469
  %6471 = vrot.lane.b32.xlu0 %v6291, 4
  %v6472 = vpop.permute.xlu0 %6471
  %6473 = vrot.lane.b32.xlu0 %v6292, 4
  %v6474 = vpop.permute.xlu0 %6473
  %6475 = vrot.lane.b32.xlu0 %v6293, 4
  %v6476 = vpop.permute.xlu0 %6475
  %6477 = vrot.lane.b32.xlu0 %v6294, 4
  %v6478 = vpop.permute.xlu0 %6477
  %6479 = vrot.lane.b32.xlu0 %v6295, 4
  %v6480 = vpop.permute.xlu0 %6479
  %6481 = vrot.lane.b32.xlu0 %v6296, 4
  %v6482 = vpop.permute.xlu0 %6481
  %6483 = vrot.lane.b32.xlu0 %v6297, 4
  %v6484 = vpop.permute.xlu0 %6483
  %6485 = vrot.lane.b32.xlu0 %v6298, 4
  %v6486 = vpop.permute.xlu0 %6485
  %6487 = vrot.lane.b32.xlu0 %v6299, 4
  %v6488 = vpop.permute.xlu0 %6487
  %6489 = vrot.lane.b32.xlu0 %v6300, 4
  %v6490 = vpop.permute.xlu0 %6489
  %6491 = vrot.lane.b32.xlu0 %v6301, 4
  %v6492 = vpop.permute.xlu0 %6491
  %6493 = vrot.lane.b32.xlu0 %v6302, 4
  %v6494 = vpop.permute.xlu0 %6493
  %vm6559 = vcmask 64544
  %6560 = vst.msk [vmem:[%s13] sm:$0xff] %vm6559, %v6368
  %6561 = vst.msk [vmem:[%s13 + $0x8] sm:$0xff] %vm6559, %v6370
  %6562 = vst.msk [vmem:[%s13 + $0x10] sm:$0xff] %vm6559, %v6372
  %6563 = vst.msk [vmem:[%s13 + $0x18] sm:$0xff] %vm6559, %v6374
  %6564 = vst.msk [vmem:[%s13 + $0x20] sm:$0xff] %vm6559, %v6376
  %6565 = vst.msk [vmem:[%s13 + $0x28] sm:$0xff] %vm6559, %v6378
  %6566 = vst.msk [vmem:[%s13 + $0x30] sm:$0xff] %vm6559, %v6380
  %6567 = vst.msk [vmem:[%s13 + $0x38] sm:$0xff] %vm6559, %v6382
  %6568 = vst.msk [vmem:[%s13 + $0x40] sm:$0xff] %vm6559, %v6384
  %6569 = vst.msk [vmem:[%s13 + $0x48] sm:$0xff] %vm6559, %v6386
  %6570 = vst.msk [vmem:[%s13 + $0x50] sm:$0xff] %vm6559, %v6388
  %6571 = vst.msk [vmem:[%s13 + $0x58] sm:$0xff] %vm6559, %v6390
  %6572 = vst.msk [vmem:[%s13 + $0x60] sm:$0xff] %vm6559, %v6392
  %6573 = vst.msk [vmem:[%s13 + $0x68] sm:$0xff] %vm6559, %v6394
  %6574 = vst.msk [vmem:[%s13 + $0x70] sm:$0xff] %vm6559, %v6396
  %6575 = vst.msk [vmem:[%s13 + $0x78] sm:$0xff] %vm6559, %v6398
  %6576 = vst.msk [vmem:[%s13 + $0x80] sm:$0xff] %vm6559, %v6400
  %6577 = vst.msk [vmem:[%s13 + $0x88] sm:$0xff] %vm6559, %v6402
  %6578 = vst.msk [vmem:[%s13 + $0x90] sm:$0xff] %vm6559, %v6404
  %6579 = vst.msk [vmem:[%s13 + $0x98] sm:$0xff] %vm6559, %v6406
  %6580 = vst.msk [vmem:[%s13 + $0xa0] sm:$0xff] %vm6559, %v6408
  %6581 = vst.msk [vmem:[%s13 + $0xa8] sm:$0xff] %vm6559, %v6410
  %6582 = vst.msk [vmem:[%s13 + $0xb0] sm:$0xff] %vm6559, %v6412
  %6583 = vst.msk [vmem:[%s13 + $0xb8] sm:$0xff] %vm6559, %v6414
  %6584 = vst.msk [vmem:[%s13 + $0xc0] sm:$0xff] %vm6559, %v6416
  %6585 = vst.msk [vmem:[%s13 + $0xc8] sm:$0xff] %vm6559, %v6418
  %6586 = vst.msk [vmem:[%s13 + $0xd0] sm:$0xff] %vm6559, %v6420
  %6587 = vst.msk [vmem:[%s13 + $0xd8] sm:$0xff] %vm6559, %v6422
  %6588 = vst.msk [vmem:[%s13 + $0xe0] sm:$0xff] %vm6559, %v6424
  %6589 = vst.msk [vmem:[%s13 + $0xe8] sm:$0xff] %vm6559, %v6426
  %6590 = vst.msk [vmem:[%s13 + $0xf0] sm:$0xff] %vm6559, %v6428
  %6591 = vst.msk [vmem:[%s13 + $0xf8] sm:$0xff] %vm6559, %v6430
  %6592 = vst.msk [vmem:[%s13 + $0x100] sm:$0xff] %vm6559, %v6432
  %6593 = vst.msk [vmem:[%s13 + $0x108] sm:$0xff] %vm6559, %v6434
  %6594 = vst.msk [vmem:[%s13 + $0x110] sm:$0xff] %vm6559, %v6436
  %6595 = vst.msk [vmem:[%s13 + $0x118] sm:$0xff] %vm6559, %v6438
  %6596 = vst.msk [vmem:[%s13 + $0x120] sm:$0xff] %vm6559, %v6440
  %6597 = vst.msk [vmem:[%s13 + $0x128] sm:$0xff] %vm6559, %v6442
  %6598 = vst.msk [vmem:[%s13 + $0x130] sm:$0xff] %vm6559, %v6444
  %6599 = vst.msk [vmem:[%s13 + $0x138] sm:$0xff] %vm6559, %v6446
  %6600 = vst.msk [vmem:[%s13 + $0x140] sm:$0xff] %vm6559, %v6448
  %6601 = vst.msk [vmem:[%s13 + $0x148] sm:$0xff] %vm6559, %v6450
  %6602 = vst.msk [vmem:[%s13 + $0x150] sm:$0xff] %vm6559, %v6452
  %6603 = vst.msk [vmem:[%s13 + $0x158] sm:$0xff] %vm6559, %v6454
  %6604 = vst.msk [vmem:[%s13 + $0x160] sm:$0xff] %vm6559, %v6456
  %6605 = vst.msk [vmem:[%s13 + $0x168] sm:$0xff] %vm6559, %v6458
  %6606 = vst.msk [vmem:[%s13 + $0x170] sm:$0xff] %vm6559, %v6460
  %6607 = vst.msk [vmem:[%s13 + $0x178] sm:$0xff] %vm6559, %v6462
  %6608 = vst.msk [vmem:[%s13 + $0x180] sm:$0xff] %vm6559, %v6464
  %6609 = vst.msk [vmem:[%s13 + $0x188] sm:$0xff] %vm6559, %v6466
  %6610 = vst.msk [vmem:[%s13 + $0x190] sm:$0xff] %vm6559, %v6468
  %6611 = vst.msk [vmem:[%s13 + $0x198] sm:$0xff] %vm6559, %v6470
  %6612 = vst.msk [vmem:[%s13 + $0x1a0] sm:$0xff] %vm6559, %v6472
  %6613 = vst.msk [vmem:[%s13 + $0x1a8] sm:$0xff] %vm6559, %v6474
  %6614 = vst.msk [vmem:[%s13 + $0x1b0] sm:$0xff] %vm6559, %v6476
  %6615 = vst.msk [vmem:[%s13 + $0x1b8] sm:$0xff] %vm6559, %v6478
  %6616 = vst.msk [vmem:[%s13 + $0x1c0] sm:$0xff] %vm6559, %v6480
  %6617 = vst.msk [vmem:[%s13 + $0x1c8] sm:$0xff] %vm6559, %v6482
  %6618 = vst.msk [vmem:[%s13 + $0x1d0] sm:$0xff] %vm6559, %v6484
  %6619 = vst.msk [vmem:[%s13 + $0x1d8] sm:$0xff] %vm6559, %v6486
  %6620 = vst.msk [vmem:[%s13 + $0x1e0] sm:$0xff] %vm6559, %v6488
  %6621 = vst.msk [vmem:[%s13 + $0x1e8] sm:$0xff] %vm6559, %v6490
  %6622 = vst.msk [vmem:[%s13 + $0x1f0] sm:$0xff] %vm6559, %v6492
  %6623 = vst.msk [vmem:[%s13 + $0x1f8] sm:$0xff] %vm6559, %v6494
  %v6624 = vld [vmem:[%s13] sm:$0xff]
  %v6625 = vld [vmem:[%s13 + $0x8] sm:$0xff]
  %v6626 = vld [vmem:[%s13 + $0x10] sm:$0xff]
  %v6627 = vld [vmem:[%s13 + $0x18] sm:$0xff]
  %v6628 = vld [vmem:[%s13 + $0x20] sm:$0xff]
  %v6629 = vld [vmem:[%s13 + $0x28] sm:$0xff]
  %v6630 = vld [vmem:[%s13 + $0x30] sm:$0xff]
  %v6631 = vld [vmem:[%s13 + $0x38] sm:$0xff]
  %v6632 = vld [vmem:[%s13 + $0x40] sm:$0xff]
  %v6633 = vld [vmem:[%s13 + $0x48] sm:$0xff]
  %v6634 = vld [vmem:[%s13 + $0x50] sm:$0xff]
  %v6635 = vld [vmem:[%s13 + $0x58] sm:$0xff]
  %v6636 = vld [vmem:[%s13 + $0x60] sm:$0xff]
  %v6637 = vld [vmem:[%s13 + $0x68] sm:$0xff]
  %v6638 = vld [vmem:[%s13 + $0x70] sm:$0xff]
  %v6639 = vld [vmem:[%s13 + $0x78] sm:$0xff]
  %v6640 = vld [vmem:[%s13 + $0x80] sm:$0xff]
  %v6641 = vld [vmem:[%s13 + $0x88] sm:$0xff]
  %v6642 = vld [vmem:[%s13 + $0x90] sm:$0xff]
  %v6643 = vld [vmem:[%s13 + $0x98] sm:$0xff]
  %v6644 = vld [vmem:[%s13 + $0xa0] sm:$0xff]
  %v6645 = vld [vmem:[%s13 + $0xa8] sm:$0xff]
  %v6646 = vld [vmem:[%s13 + $0xb0] sm:$0xff]
  %v6647 = vld [vmem:[%s13 + $0xb8] sm:$0xff]
  %v6648 = vld [vmem:[%s13 + $0xc0] sm:$0xff]
  %v6649 = vld [vmem:[%s13 + $0xc8] sm:$0xff]
  %v6650 = vld [vmem:[%s13 + $0xd0] sm:$0xff]
  %v6651 = vld [vmem:[%s13 + $0xd8] sm:$0xff]
  %v6652 = vld [vmem:[%s13 + $0xe0] sm:$0xff]
  %v6653 = vld [vmem:[%s13 + $0xe8] sm:$0xff]
  %v6654 = vld [vmem:[%s13 + $0xf0] sm:$0xff]
  %v6655 = vld [vmem:[%s13 + $0xf8] sm:$0xff]
  %v6656 = vld [vmem:[%s13 + $0x100] sm:$0xff]
  %v6657 = vld [vmem:[%s13 + $0x108] sm:$0xff]
  %v6658 = vld [vmem:[%s13 + $0x110] sm:$0xff]
  %v6659 = vld [vmem:[%s13 + $0x118] sm:$0xff]
  %v6660 = vld [vmem:[%s13 + $0x120] sm:$0xff]
  %v6661 = vld [vmem:[%s13 + $0x128] sm:$0xff]
  %v6662 = vld [vmem:[%s13 + $0x130] sm:$0xff]
  %v6663 = vld [vmem:[%s13 + $0x138] sm:$0xff]
  %v6664 = vld [vmem:[%s13 + $0x140] sm:$0xff]
  %v6665 = vld [vmem:[%s13 + $0x148] sm:$0xff]
  %v6666 = vld [vmem:[%s13 + $0x150] sm:$0xff]
  %v6667 = vld [vmem:[%s13 + $0x158] sm:$0xff]
  %v6668 = vld [vmem:[%s13 + $0x160] sm:$0xff]
  %v6669 = vld [vmem:[%s13 + $0x168] sm:$0xff]
  %v6670 = vld [vmem:[%s13 + $0x170] sm:$0xff]
  %v6671 = vld [vmem:[%s13 + $0x178] sm:$0xff]
  %v6672 = vld [vmem:[%s13 + $0x180] sm:$0xff]
  %v6673 = vld [vmem:[%s13 + $0x188] sm:$0xff]
  %v6674 = vld [vmem:[%s13 + $0x190] sm:$0xff]
  %v6675 = vld [vmem:[%s13 + $0x198] sm:$0xff]
  %v6676 = vld [vmem:[%s13 + $0x1a0] sm:$0xff]
  %v6677 = vld [vmem:[%s13 + $0x1a8] sm:$0xff]
  %v6678 = vld [vmem:[%s13 + $0x1b0] sm:$0xff]
  %v6679 = vld [vmem:[%s13 + $0x1b8] sm:$0xff]
  %v6680 = vld [vmem:[%s13 + $0x1c0] sm:$0xff]
  %v6681 = vld [vmem:[%s13 + $0x1c8] sm:$0xff]
  %v6682 = vld [vmem:[%s13 + $0x1d0] sm:$0xff]
  %v6683 = vld [vmem:[%s13 + $0x1d8] sm:$0xff]
  %v6684 = vld [vmem:[%s13 + $0x1e0] sm:$0xff]
  %v6685 = vld [vmem:[%s13 + $0x1e8] sm:$0xff]
  %v6686 = vld [vmem:[%s13 + $0x1f0] sm:$0xff]
  %v6687 = vld [vmem:[%s13 + $0x1f8] sm:$0xff]
  %6752 = vrot.lane.b32.xlu0 %v6624, 124
  %v6753 = vpop.permute.xlu0 %6752
  %6754 = vrot.lane.b32.xlu0 %v6625, 124
  %v6755 = vpop.permute.xlu0 %6754
  %6756 = vrot.lane.b32.xlu0 %v6626, 124
  %v6757 = vpop.permute.xlu0 %6756
  %6758 = vrot.lane.b32.xlu0 %v6627, 124
  %v6759 = vpop.permute.xlu0 %6758
  %6760 = vrot.lane.b32.xlu0 %v6628, 124
  %v6761 = vpop.permute.xlu0 %6760
  %6762 = vrot.lane.b32.xlu0 %v6629, 124
  %v6763 = vpop.permute.xlu0 %6762
  %6764 = vrot.lane.b32.xlu0 %v6630, 124
  %v6765 = vpop.permute.xlu0 %6764
  %6766 = vrot.lane.b32.xlu0 %v6631, 124
  %v6767 = vpop.permute.xlu0 %6766
  %6768 = vrot.lane.b32.xlu0 %v6632, 124
  %v6769 = vpop.permute.xlu0 %6768
  %6770 = vrot.lane.b32.xlu0 %v6633, 124
  %v6771 = vpop.permute.xlu0 %6770
  %6772 = vrot.lane.b32.xlu0 %v6634, 124
  %v6773 = vpop.permute.xlu0 %6772
  %6774 = vrot.lane.b32.xlu0 %v6635, 124
  %v6775 = vpop.permute.xlu0 %6774
  %6776 = vrot.lane.b32.xlu0 %v6636, 124
  %v6777 = vpop.permute.xlu0 %6776
  %6778 = vrot.lane.b32.xlu0 %v6637, 124
  %v6779 = vpop.permute.xlu0 %6778
  %6780 = vrot.lane.b32.xlu0 %v6638, 124
  %v6781 = vpop.permute.xlu0 %6780
  %6782 = vrot.lane.b32.xlu0 %v6639, 124
  %v6783 = vpop.permute.xlu0 %6782
  %6784 = vrot.lane.b32.xlu0 %v6640, 124
  %v6785 = vpop.permute.xlu0 %6784
  %6786 = vrot.lane.b32.xlu0 %v6641, 124
  %v6787 = vpop.permute.xlu0 %6786
  %6788 = vrot.lane.b32.xlu0 %v6642, 124
  %v6789 = vpop.permute.xlu0 %6788
  %6790 = vrot.lane.b32.xlu0 %v6643, 124
  %v6791 = vpop.permute.xlu0 %6790
  %6792 = vrot.lane.b32.xlu0 %v6644, 124
  %v6793 = vpop.permute.xlu0 %6792
  %6794 = vrot.lane.b32.xlu0 %v6645, 124
  %v6795 = vpop.permute.xlu0 %6794
  %6796 = vrot.lane.b32.xlu0 %v6646, 124
  %v6797 = vpop.permute.xlu0 %6796
  %6798 = vrot.lane.b32.xlu0 %v6647, 124
  %v6799 = vpop.permute.xlu0 %6798
  %6800 = vrot.lane.b32.xlu0 %v6648, 124
  %v6801 = vpop.permute.xlu0 %6800
  %6802 = vrot.lane.b32.xlu0 %v6649, 124
  %v6803 = vpop.permute.xlu0 %6802
  %6804 = vrot.lane.b32.xlu0 %v6650, 124
  %v6805 = vpop.permute.xlu0 %6804
  %6806 = vrot.lane.b32.xlu0 %v6651, 124
  %v6807 = vpop.permute.xlu0 %6806
  %6808 = vrot.lane.b32.xlu0 %v6652, 124
  %v6809 = vpop.permute.xlu0 %6808
  %6810 = vrot.lane.b32.xlu0 %v6653, 124
  %v6811 = vpop.permute.xlu0 %6810
  %6812 = vrot.lane.b32.xlu0 %v6654, 124
  %v6813 = vpop.permute.xlu0 %6812
  %6814 = vrot.lane.b32.xlu0 %v6655, 124
  %v6815 = vpop.permute.xlu0 %6814
  %6816 = vrot.lane.b32.xlu0 %v6656, 124
  %v6817 = vpop.permute.xlu0 %6816
  %6818 = vrot.lane.b32.xlu0 %v6657, 124
  %v6819 = vpop.permute.xlu0 %6818
  %6820 = vrot.lane.b32.xlu0 %v6658, 124
  %v6821 = vpop.permute.xlu0 %6820
  %6822 = vrot.lane.b32.xlu0 %v6659, 124
  %v6823 = vpop.permute.xlu0 %6822
  %6824 = vrot.lane.b32.xlu0 %v6660, 124
  %v6825 = vpop.permute.xlu0 %6824
  %6826 = vrot.lane.b32.xlu0 %v6661, 124
  %v6827 = vpop.permute.xlu0 %6826
  %6828 = vrot.lane.b32.xlu0 %v6662, 124
  %v6829 = vpop.permute.xlu0 %6828
  %6830 = vrot.lane.b32.xlu0 %v6663, 124
  %v6831 = vpop.permute.xlu0 %6830
  %6832 = vrot.lane.b32.xlu0 %v6664, 124
  %v6833 = vpop.permute.xlu0 %6832
  %6834 = vrot.lane.b32.xlu0 %v6665, 124
  %v6835 = vpop.permute.xlu0 %6834
  %6836 = vrot.lane.b32.xlu0 %v6666, 124
  %v6837 = vpop.permute.xlu0 %6836
  %6838 = vrot.lane.b32.xlu0 %v6667, 124
  %v6839 = vpop.permute.xlu0 %6838
  %6840 = vrot.lane.b32.xlu0 %v6668, 124
  %v6841 = vpop.permute.xlu0 %6840
  %6842 = vrot.lane.b32.xlu0 %v6669, 124
  %v6843 = vpop.permute.xlu0 %6842
  %6844 = vrot.lane.b32.xlu0 %v6670, 124
  %v6845 = vpop.permute.xlu0 %6844
  %6846 = vrot.lane.b32.xlu0 %v6671, 124
  %v6847 = vpop.permute.xlu0 %6846
  %6848 = vrot.lane.b32.xlu0 %v6672, 124
  %v6849 = vpop.permute.xlu0 %6848
  %6850 = vrot.lane.b32.xlu0 %v6673, 124
  %v6851 = vpop.permute.xlu0 %6850
  %6852 = vrot.lane.b32.xlu0 %v6674, 124
  %v6853 = vpop.permute.xlu0 %6852
  %6854 = vrot.lane.b32.xlu0 %v6675, 124
  %v6855 = vpop.permute.xlu0 %6854
  %6856 = vrot.lane.b32.xlu0 %v6676, 124
  %v6857 = vpop.permute.xlu0 %6856
  %6858 = vrot.lane.b32.xlu0 %v6677, 124
  %v6859 = vpop.permute.xlu0 %6858
  %6860 = vrot.lane.b32.xlu0 %v6678, 124
  %v6861 = vpop.permute.xlu0 %6860
  %6862 = vrot.lane.b32.xlu0 %v6679, 124
  %v6863 = vpop.permute.xlu0 %6862
  %6864 = vrot.lane.b32.xlu0 %v6680, 124
  %v6865 = vpop.permute.xlu0 %6864
  %6866 = vrot.lane.b32.xlu0 %v6681, 124
  %v6867 = vpop.permute.xlu0 %6866
  %6868 = vrot.lane.b32.xlu0 %v6682, 124
  %v6869 = vpop.permute.xlu0 %6868
  %6870 = vrot.lane.b32.xlu0 %v6683, 124
  %v6871 = vpop.permute.xlu0 %6870
  %6872 = vrot.lane.b32.xlu0 %v6684, 124
  %v6873 = vpop.permute.xlu0 %6872
  %6874 = vrot.lane.b32.xlu0 %v6685, 124
  %v6875 = vpop.permute.xlu0 %6874
  %6876 = vrot.lane.b32.xlu0 %v6686, 124
  %v6877 = vpop.permute.xlu0 %6876
  %6878 = vrot.lane.b32.xlu0 %v6687, 124
  %v6879 = vpop.permute.xlu0 %6878
  %6944 = vmatprep.subr.mxu0 0.0
  %6945 = vmatpush1.msra.mxu0 %v6783
  %6946 = vmatprep.subr.mxu0 0.0
  %6947 = vmatpush1.msra.mxu0 %v6781
  %6948 = vmatprep.subr.mxu0 0.0
  %6949 = vmatpush1.msra.mxu0 %v6779
  %6950 = vmatprep.subr.mxu0 0.0
  %6951 = vmatpush1.msra.mxu0 %v6777
  %6952 = vmatprep.subr.mxu0 0.0
  %6953 = vmatpush1.msra.mxu0 %v6775
  %6954 = vmatprep.subr.mxu0 0.0
  %6955 = vmatpush1.msra.mxu0 %v6773
  %6956 = vmatprep.subr.mxu0 0.0
  %6957 = vmatpush1.msra.mxu0 %v6771
  %6958 = vmatprep.subr.mxu0 0.0
  %6959 = vmatpush1.msra.mxu0 %v6769
  %6960 = vmatprep.subr.mxu0 0.0
  %6961 = vmatpush1.msra.mxu0 %v6767
  %6962 = vmatprep.subr.mxu0 0.0
  %6963 = vmatpush1.msra.mxu0 %v6765
  %6964 = vmatprep.subr.mxu0 0.0
  %6965 = vmatpush1.msra.mxu0 %v6763
  %6966 = vmatprep.subr.mxu0 0.0
  %6967 = vmatpush1.msra.mxu0 %v6761
  %6968 = vmatprep.subr.mxu0 0.0
  %6969 = vmatpush1.msra.mxu0 %v6759
  %6970 = vmatprep.subr.mxu0 0.0
  %6971 = vmatpush1.msra.mxu0 %v6757
  %6972 = vmatprep.subr.mxu0 0.0
  %6973 = vmatpush1.msra.mxu0 %v6755
  %6974 = vmatprep.subr.mxu0 0.0
  %6975 = vmatpush1.msra.mxu0 %v6753
  %6976 = vmatprep.subr.mxu0 0.0
  %6977 = vmatpush2.msra.mxu0 %v6815
  %6978 = vmatprep.subr.mxu0 0.0
  %6979 = vmatpush2.msra.mxu0 %v6813
  %6980 = vmatprep.subr.mxu0 0.0
  %6981 = vmatpush2.msra.mxu0 %v6811
  %6982 = vmatprep.subr.mxu0 0.0
  %6983 = vmatpush2.msra.mxu0 %v6809
  %6984 = vmatprep.subr.mxu0 0.0
  %6985 = vmatpush2.msra.mxu0 %v6807
  %6986 = vmatprep.subr.mxu0 0.0
  %6987 = vmatpush2.msra.mxu0 %v6805
  %6988 = vmatprep.subr.mxu0 0.0
  %6989 = vmatpush2.msra.mxu0 %v6803
  %6990 = vmatprep.subr.mxu0 0.0
  %6991 = vmatpush2.msra.mxu0 %v6801
  %6992 = vmatprep.subr.mxu0 0.0
  %6993 = vmatpush2.msra.mxu0 %v6799
  %6994 = vmatprep.subr.mxu0 0.0
  %6995 = vmatpush2.msra.mxu0 %v6797
  %6996 = vmatprep.subr.mxu0 0.0
  %6997 = vmatpush2.msra.mxu0 %v6795
  %6998 = vmatprep.subr.mxu0 0.0
  %6999 = vmatpush2.msra.mxu0 %v6793
  %7000 = vmatprep.subr.mxu0 0.0
  %7001 = vmatpush2.msra.mxu0 %v6791
  %7002 = vmatprep.subr.mxu0 0.0
  %7003 = vmatpush2.msra.mxu0 %v6789
  %7004 = vmatprep.subr.mxu0 0.0
  %7005 = vmatpush2.msra.mxu0 %v6787
  %7006 = vmatprep.subr.mxu0 0.0
  %7007 = vmatpush2.msra.mxu0 %v6785
  %7008 = vmatprep.mubr.f32.mxu0 1.0
  %7009 = vmatmul.mubr.f32.gmra.mxu0 1.0
  %v7010 = vpop.f32.mrf.mxu0
  %v7011 = vadd.f32 0.0, %v7010
  %v7012 = vpop.f32.mrf.mxu0
  %7013 = vdwg.mxu0
  %7014 = vmatprep.subr.mxu0 0.0
  %7015 = vmatpush1.msra.mxu0 %v6847
  %7016 = vmatprep.subr.mxu0 0.0
  %7017 = vmatpush1.msra.mxu0 %v6845
  %7018 = vmatprep.subr.mxu0 0.0
  %7019 = vmatpush1.msra.mxu0 %v6843
  %7020 = vmatprep.subr.mxu0 0.0
  %7021 = vmatpush1.msra.mxu0 %v6841
  %7022 = vmatprep.subr.mxu0 0.0
  %7023 = vmatpush1.msra.mxu0 %v6839
  %7024 = vmatprep.subr.mxu0 0.0
  %7025 = vmatpush1.msra.mxu0 %v6837
  %7026 = vmatprep.subr.mxu0 0.0
  %7027 = vmatpush1.msra.mxu0 %v6835
  %7028 = vmatprep.subr.mxu0 0.0
  %7029 = vmatpush1.msra.mxu0 %v6833
  %7030 = vmatprep.subr.mxu0 0.0
  %7031 = vmatpush1.msra.mxu0 %v6831
  %7032 = vmatprep.subr.mxu0 0.0
  %7033 = vmatpush1.msra.mxu0 %v6829
  %7034 = vmatprep.subr.mxu0 0.0
  %7035 = vmatpush1.msra.mxu0 %v6827
  %7036 = vmatprep.subr.mxu0 0.0
  %7037 = vmatpush1.msra.mxu0 %v6825
  %7038 = vmatprep.subr.mxu0 0.0
  %7039 = vmatpush1.msra.mxu0 %v6823
  %7040 = vmatprep.subr.mxu0 0.0
  %7041 = vmatpush1.msra.mxu0 %v6821
  %7042 = vmatprep.subr.mxu0 0.0
  %7043 = vmatpush1.msra.mxu0 %v6819
  %7044 = vmatprep.subr.mxu0 0.0
  %7045 = vmatpush1.msra.mxu0 %v6817
  %7046 = vmatprep.subr.mxu0 0.0
  %7047 = vmatpush2.msra.mxu0 %v6879
  %7048 = vmatprep.subr.mxu0 0.0
  %7049 = vmatpush2.msra.mxu0 %v6877
  %7050 = vmatprep.subr.mxu0 0.0
  %7051 = vmatpush2.msra.mxu0 %v6875
  %7052 = vmatprep.subr.mxu0 0.0
  %7053 = vmatpush2.msra.mxu0 %v6873
  %7054 = vmatprep.subr.mxu0 0.0
  %7055 = vmatpush2.msra.mxu0 %v6871
  %7056 = vmatprep.subr.mxu0 0.0
  %7057 = vmatpush2.msra.mxu0 %v6869
  %7058 = vmatprep.subr.mxu0 0.0
  %7059 = vmatpush2.msra.mxu0 %v6867
  %7060 = vmatprep.subr.mxu0 0.0
  %7061 = vmatpush2.msra.mxu0 %v6865
  %7062 = vmatprep.subr.mxu0 0.0
  %7063 = vmatpush2.msra.mxu0 %v6863
  %7064 = vmatprep.subr.mxu0 0.0
  %7065 = vmatpush2.msra.mxu0 %v6861
  %7066 = vmatprep.subr.mxu0 0.0
  %7067 = vmatpush2.msra.mxu0 %v6859
  %7068 = vmatprep.subr.mxu0 0.0
  %7069 = vmatpush2.msra.mxu0 %v6857
  %7070 = vmatprep.subr.mxu0 0.0
  %7071 = vmatpush2.msra.mxu0 %v6855
  %7072 = vmatprep.subr.mxu0 0.0
  %7073 = vmatpush2.msra.mxu0 %v6853
  %7074 = vmatprep.subr.mxu0 0.0
  %7075 = vmatpush2.msra.mxu0 %v6851
  %7076 = vmatprep.subr.mxu0 0.0
  %7077 = vmatpush2.msra.mxu0 %v6849
  %7078 = vmatprep.mubr.f32.mxu0 1.0
  %7079 = vmatmul.mubr.f32.gmra.mxu0 1.0
  %v7080 = vpop.f32.mrf.mxu0
  %v7081 = vadd.f32 %v7011, %v7080
  %v7082 = vpop.f32.mrf.mxu0
  %7083 = vdwg.mxu0
  %v7084 = vmul.f32 %v6624, %v6624
  %v7085 = vmul.f32 %v6625, %v6625
  %v7086 = vmul.f32 %v6626, %v6626
  %v7087 = vmul.f32 %v6627, %v6627
  %v7088 = vmul.f32 %v6628, %v6628
  %v7089 = vmul.f32 %v6629, %v6629
  %v7090 = vmul.f32 %v6630, %v6630
  %v7091 = vmul.f32 %v6631, %v6631
  %v7092 = vmul.f32 %v6632, %v6632
  %v7093 = vmul.f32 %v6633, %v6633
  %v7094 = vmul.f32 %v6634, %v6634
  %v7095 = vmul.f32 %v6635, %v6635
  %v7096 = vmul.f32 %v6636, %v6636
  %v7097 = vmul.f32 %v6637, %v6637
  %v7098 = vmul.f32 %v6638, %v6638
  %v7099 = vmul.f32 %v6639, %v6639
  %v7100 = vmul.f32 %v6640, %v6640
  %v7101 = vmul.f32 %v6641, %v6641
  %v7102 = vmul.f32 %v6642, %v6642
  %v7103 = vmul.f32 %v6643, %v6643
  %v7104 = vmul.f32 %v6644, %v6644
  %v7105 = vmul.f32 %v6645, %v6645
  %v7106 = vmul.f32 %v6646, %v6646
  %v7107 = vmul.f32 %v6647, %v6647
  %v7108 = vmul.f32 %v6648, %v6648
  %v7109 = vmul.f32 %v6649, %v6649
  %v7110 = vmul.f32 %v6650, %v6650
  %v7111 = vmul.f32 %v6651, %v6651
  %v7112 = vmul.f32 %v6652, %v6652
  %v7113 = vmul.f32 %v6653, %v6653
  %v7114 = vmul.f32 %v6654, %v6654
  %v7115 = vmul.f32 %v6655, %v6655
  %v7116 = vmul.f32 %v6656, %v6656
  %v7117 = vmul.f32 %v6657, %v6657
  %v7118 = vmul.f32 %v6658, %v6658
  %v7119 = vmul.f32 %v6659, %v6659
  %v7120 = vmul.f32 %v6660, %v6660
  %v7121 = vmul.f32 %v6661, %v6661
  %v7122 = vmul.f32 %v6662, %v6662
  %v7123 = vmul.f32 %v6663, %v6663
  %v7124 = vmul.f32 %v6664, %v6664
  %v7125 = vmul.f32 %v6665, %v6665
  %v7126 = vmul.f32 %v6666, %v6666
  %v7127 = vmul.f32 %v6667, %v6667
  %v7128 = vmul.f32 %v6668, %v6668
  %v7129 = vmul.f32 %v6669, %v6669
  %v7130 = vmul.f32 %v6670, %v6670
  %v7131 = vmul.f32 %v6671, %v6671
  %v7132 = vmul.f32 %v6672, %v6672
  %v7133 = vmul.f32 %v6673, %v6673
  %v7134 = vmul.f32 %v6674, %v6674
  %v7135 = vmul.f32 %v6675, %v6675
  %v7136 = vmul.f32 %v6676, %v6676
  %v7137 = vmul.f32 %v6677, %v6677
  %v7138 = vmul.f32 %v6678, %v6678
  %v7139 = vmul.f32 %v6679, %v6679
  %v7140 = vmul.f32 %v6680, %v6680
  %v7141 = vmul.f32 %v6681, %v6681
  %v7142 = vmul.f32 %v6682, %v6682
  %v7143 = vmul.f32 %v6683, %v6683
  %v7144 = vmul.f32 %v6684, %v6684
  %v7145 = vmul.f32 %v6685, %v6685
  %v7146 = vmul.f32 %v6686, %v6686
  %v7147 = vmul.f32 %v6687, %v6687
  %7212 = vrot.lane.b32.xlu0 %v7084, 124
  %v7213 = vpop.permute.xlu0 %7212
  %7214 = vrot.lane.b32.xlu0 %v7085, 124
  %v7215 = vpop.permute.xlu0 %7214
  %7216 = vrot.lane.b32.xlu0 %v7086, 124
  %v7217 = vpop.permute.xlu0 %7216
  %7218 = vrot.lane.b32.xlu0 %v7087, 124
  %v7219 = vpop.permute.xlu0 %7218
  %7220 = vrot.lane.b32.xlu0 %v7088, 124
  %v7221 = vpop.permute.xlu0 %7220
  %7222 = vrot.lane.b32.xlu0 %v7089, 124
  %v7223 = vpop.permute.xlu0 %7222
  %7224 = vrot.lane.b32.xlu0 %v7090, 124
  %v7225 = vpop.permute.xlu0 %7224
  %7226 = vrot.lane.b32.xlu0 %v7091, 124
  %v7227 = vpop.permute.xlu0 %7226
  %7228 = vrot.lane.b32.xlu0 %v7092, 124
  %v7229 = vpop.permute.xlu0 %7228
  %7230 = vrot.lane.b32.xlu0 %v7093, 124
  %v7231 = vpop.permute.xlu0 %7230
  %7232 = vrot.lane.b32.xlu0 %v7094, 124
  %v7233 = vpop.permute.xlu0 %7232
  %7234 = vrot.lane.b32.xlu0 %v7095, 124
  %v7235 = vpop.permute.xlu0 %7234
  %7236 = vrot.lane.b32.xlu0 %v7096, 124
  %v7237 = vpop.permute.xlu0 %7236
  %7238 = vrot.lane.b32.xlu0 %v7097, 124
  %v7239 = vpop.permute.xlu0 %7238
  %7240 = vrot.lane.b32.xlu0 %v7098, 124
  %v7241 = vpop.permute.xlu0 %7240
  %7242 = vrot.lane.b32.xlu0 %v7099, 124
  %v7243 = vpop.permute.xlu0 %7242
  %7244 = vrot.lane.b32.xlu0 %v7100, 124
  %v7245 = vpop.permute.xlu0 %7244
  %7246 = vrot.lane.b32.xlu0 %v7101, 124
  %v7247 = vpop.permute.xlu0 %7246
  %7248 = vrot.lane.b32.xlu0 %v7102, 124
  %v7249 = vpop.permute.xlu0 %7248
  %7250 = vrot.lane.b32.xlu0 %v7103, 124
  %v7251 = vpop.permute.xlu0 %7250
  %7252 = vrot.lane.b32.xlu0 %v7104, 124
  %v7253 = vpop.permute.xlu0 %7252
  %7254 = vrot.lane.b32.xlu0 %v7105, 124
  %v7255 = vpop.permute.xlu0 %7254
  %7256 = vrot.lane.b32.xlu0 %v7106, 124
  %v7257 = vpop.permute.xlu0 %7256
  %7258 = vrot.lane.b32.xlu0 %v7107, 124
  %v7259 = vpop.permute.xlu0 %7258
  %7260 = vrot.lane.b32.xlu0 %v7108, 124
  %v7261 = vpop.permute.xlu0 %7260
  %7262 = vrot.lane.b32.xlu0 %v7109, 124
  %v7263 = vpop.permute.xlu0 %7262
  %7264 = vrot.lane.b32.xlu0 %v7110, 124
  %v7265 = vpop.permute.xlu0 %7264
  %7266 = vrot.lane.b32.xlu0 %v7111, 124
  %v7267 = vpop.permute.xlu0 %7266
  %7268 = vrot.lane.b32.xlu0 %v7112, 124
  %v7269 = vpop.permute.xlu0 %7268
  %7270 = vrot.lane.b32.xlu0 %v7113, 124
  %v7271 = vpop.permute.xlu0 %7270
  %7272 = vrot.lane.b32.xlu0 %v7114, 124
  %v7273 = vpop.permute.xlu0 %7272
  %7274 = vrot.lane.b32.xlu0 %v7115, 124
  %v7275 = vpop.permute.xlu0 %7274
  %7276 = vrot.lane.b32.xlu0 %v7116, 124
  %v7277 = vpop.permute.xlu0 %7276
  %7278 = vrot.lane.b32.xlu0 %v7117, 124
  %v7279 = vpop.permute.xlu0 %7278
  %7280 = vrot.lane.b32.xlu0 %v7118, 124
  %v7281 = vpop.permute.xlu0 %7280
  %7282 = vrot.lane.b32.xlu0 %v7119, 124
  %v7283 = vpop.permute.xlu0 %7282
  %7284 = vrot.lane.b32.xlu0 %v7120, 124
  %v7285 = vpop.permute.xlu0 %7284
  %7286 = vrot.lane.b32.xlu0 %v7121, 124
  %v7287 = vpop.permute.xlu0 %7286
  %7288 = vrot.lane.b32.xlu0 %v7122, 124
  %v7289 = vpop.permute.xlu0 %7288
  %7290 = vrot.lane.b32.xlu0 %v7123, 124
  %v7291 = vpop.permute.xlu0 %7290
  %7292 = vrot.lane.b32.xlu0 %v7124, 124
  %v7293 = vpop.permute.xlu0 %7292
  %7294 = vrot.lane.b32.xlu0 %v7125, 124
  %v7295 = vpop.permute.xlu0 %7294
  %7296 = vrot.lane.b32.xlu0 %v7126, 124
  %v7297 = vpop.permute.xlu0 %7296
  %7298 = vrot.lane.b32.xlu0 %v7127, 124
  %v7299 = vpop.permute.xlu0 %7298
  %7300 = vrot.lane.b32.xlu0 %v7128, 124
  %v7301 = vpop.permute.xlu0 %7300
  %7302 = vrot.lane.b32.xlu0 %v7129, 124
  %v7303 = vpop.permute.xlu0 %7302
  %7304 = vrot.lane.b32.xlu0 %v7130, 124
  %v7305 = vpop.permute.xlu0 %7304
  %7306 = vrot.lane.b32.xlu0 %v7131, 124
  %v7307 = vpop.permute.xlu0 %7306
  %7308 = vrot.lane.b32.xlu0 %v7132, 124
  %v7309 = vpop.permute.xlu0 %7308
  %7310 = vrot.lane.b32.xlu0 %v7133, 124
  %v7311 = vpop.permute.xlu0 %7310
  %7312 = vrot.lane.b32.xlu0 %v7134, 124
  %v7313 = vpop.permute.xlu0 %7312
  %7314 = vrot.lane.b32.xlu0 %v7135, 124
  %v7315 = vpop.permute.xlu0 %7314
  %7316 = vrot.lane.b32.xlu0 %v7136, 124
  %v7317 = vpop.permute.xlu0 %7316
  %7318 = vrot.lane.b32.xlu0 %v7137, 124
  %v7319 = vpop.permute.xlu0 %7318
  %7320 = vrot.lane.b32.xlu0 %v7138, 124
  %v7321 = vpop.permute.xlu0 %7320
  %7322 = vrot.lane.b32.xlu0 %v7139, 124
  %v7323 = vpop.permute.xlu0 %7322
  %7324 = vrot.lane.b32.xlu0 %v7140, 124
  %v7325 = vpop.permute.xlu0 %7324
  %7326 = vrot.lane.b32.xlu0 %v7141, 124
  %v7327 = vpop.permute.xlu0 %7326
  %7328 = vrot.lane.b32.xlu0 %v7142, 124
  %v7329 = vpop.permute.xlu0 %7328
  %7330 = vrot.lane.b32.xlu0 %v7143, 124
  %v7331 = vpop.permute.xlu0 %7330
  %7332 = vrot.lane.b32.xlu0 %v7144, 124
  %v7333 = vpop.permute.xlu0 %7332
  %7334 = vrot.lane.b32.xlu0 %v7145, 124
  %v7335 = vpop.permute.xlu0 %7334
  %7336 = vrot.lane.b32.xlu0 %v7146, 124
  %v7337 = vpop.permute.xlu0 %7336
  %7338 = vrot.lane.b32.xlu0 %v7147, 124
  %v7339 = vpop.permute.xlu0 %7338
  %7404 = vmatprep.subr.mxu0 0.0
  %7405 = vmatpush1.msra.mxu0 %v7243
  %7406 = vmatprep.subr.mxu0 0.0
  %7407 = vmatpush1.msra.mxu0 %v7241
  %7408 = vmatprep.subr.mxu0 0.0
  %7409 = vmatpush1.msra.mxu0 %v7239
  %7410 = vmatprep.subr.mxu0 0.0
  %7411 = vmatpush1.msra.mxu0 %v7237
  %7412 = vmatprep.subr.mxu0 0.0
  %7413 = vmatpush1.msra.mxu0 %v7235
  %7414 = vmatprep.subr.mxu0 0.0
  %7415 = vmatpush1.msra.mxu0 %v7233
  %7416 = vmatprep.subr.mxu0 0.0
  %7417 = vmatpush1.msra.mxu0 %v7231
  %7418 = vmatprep.subr.mxu0 0.0
  %7419 = vmatpush1.msra.mxu0 %v7229
  %7420 = vmatprep.subr.mxu0 0.0
  %7421 = vmatpush1.msra.mxu0 %v7227
  %7422 = vmatprep.subr.mxu0 0.0
  %7423 = vmatpush1.msra.mxu0 %v7225
  %7424 = vmatprep.subr.mxu0 0.0
  %7425 = vmatpush1.msra.mxu0 %v7223
  %7426 = vmatprep.subr.mxu0 0.0
  %7427 = vmatpush1.msra.mxu0 %v7221
  %7428 = vmatprep.subr.mxu0 0.0
  %7429 = vmatpush1.msra.mxu0 %v7219
  %7430 = vmatprep.subr.mxu0 0.0
  %7431 = vmatpush1.msra.mxu0 %v7217
  %7432 = vmatprep.subr.mxu0 0.0
  %7433 = vmatpush1.msra.mxu0 %v7215
  %7434 = vmatprep.subr.mxu0 0.0
  %7435 = vmatpush1.msra.mxu0 %v7213
  %7436 = vmatprep.subr.mxu0 0.0
  %7437 = vmatpush2.msra.mxu0 %v7275
  %7438 = vmatprep.subr.mxu0 0.0
  %7439 = vmatpush2.msra.mxu0 %v7273
  %7440 = vmatprep.subr.mxu0 0.0
  %7441 = vmatpush2.msra.mxu0 %v7271
  %7442 = vmatprep.subr.mxu0 0.0
  %7443 = vmatpush2.msra.mxu0 %v7269
  %7444 = vmatprep.subr.mxu0 0.0
  %7445 = vmatpush2.msra.mxu0 %v7267
  %7446 = vmatprep.subr.mxu0 0.0
  %7447 = vmatpush2.msra.mxu0 %v7265
  %7448 = vmatprep.subr.mxu0 0.0
  %7449 = vmatpush2.msra.mxu0 %v7263
  %7450 = vmatprep.subr.mxu0 0.0
  %7451 = vmatpush2.msra.mxu0 %v7261
  %7452 = vmatprep.subr.mxu0 0.0
  %7453 = vmatpush2.msra.mxu0 %v7259
  %7454 = vmatprep.subr.mxu0 0.0
  %7455 = vmatpush2.msra.mxu0 %v7257
  %7456 = vmatprep.subr.mxu0 0.0
  %7457 = vmatpush2.msra.mxu0 %v7255
  %7458 = vmatprep.subr.mxu0 0.0
  %7459 = vmatpush2.msra.mxu0 %v7253
  %7460 = vmatprep.subr.mxu0 0.0
  %7461 = vmatpush2.msra.mxu0 %v7251
  %7462 = vmatprep.subr.mxu0 0.0
  %7463 = vmatpush2.msra.mxu0 %v7249
  %7464 = vmatprep.subr.mxu0 0.0
  %7465 = vmatpush2.msra.mxu0 %v7247
  %7466 = vmatprep.subr.mxu0 0.0
  %7467 = vmatpush2.msra.mxu0 %v7245
  %7468 = vmatprep.mubr.f32.mxu0 1.0
  %7469 = vmatmul.mubr.f32.gmra.mxu0 1.0
  %v7470 = vpop.f32.mrf.mxu0
  %v7471 = vadd.f32 0.0, %v7470
  %v7472 = vpop.f32.mrf.mxu0
  %7473 = vdwg.mxu0
  %7474 = vmatprep.subr.mxu0 0.0
  %7475 = vmatpush1.msra.mxu0 %v7307
  %7476 = vmatprep.subr.mxu0 0.0
  %7477 = vmatpush1.msra.mxu0 %v7305
  %7478 = vmatprep.subr.mxu0 0.0
  %7479 = vmatpush1.msra.mxu0 %v7303
  %7480 = vmatprep.subr.mxu0 0.0
  %7481 = vmatpush1.msra.mxu0 %v7301
  %7482 = vmatprep.subr.mxu0 0.0
  %7483 = vmatpush1.msra.mxu0 %v7299
  %7484 = vmatprep.subr.mxu0 0.0
  %7485 = vmatpush1.msra.mxu0 %v7297
  %7486 = vmatprep.subr.mxu0 0.0
  %7487 = vmatpush1.msra.mxu0 %v7295
  %7488 = vmatprep.subr.mxu0 0.0
  %7489 = vmatpush1.msra.mxu0 %v7293
  %7490 = vmatprep.subr.mxu0 0.0
  %7491 = vmatpush1.msra.mxu0 %v7291
  %7492 = vmatprep.subr.mxu0 0.0
  %7493 = vmatpush1.msra.mxu0 %v7289
  %7494 = vmatprep.subr.mxu0 0.0
  %7495 = vmatpush1.msra.mxu0 %v7287
  %7496 = vmatprep.subr.mxu0 0.0
  %7497 = vmatpush1.msra.mxu0 %v7285
  %7498 = vmatprep.subr.mxu0 0.0
  %7499 = vmatpush1.msra.mxu0 %v7283
  %7500 = vmatprep.subr.mxu0 0.0
  %7501 = vmatpush1.msra.mxu0 %v7281
  %7502 = vmatprep.subr.mxu0 0.0
  %7503 = vmatpush1.msra.mxu0 %v7279
  %7504 = vmatprep.subr.mxu0 0.0
  %7505 = vmatpush1.msra.mxu0 %v7277
  %7506 = vmatprep.subr.mxu0 0.0
  %7507 = vmatpush2.msra.mxu0 %v7339
  %7508 = vmatprep.subr.mxu0 0.0
  %7509 = vmatpush2.msra.mxu0 %v7337
  %7510 = vmatprep.subr.mxu0 0.0
  %7511 = vmatpush2.msra.mxu0 %v7335
  %7512 = vmatprep.subr.mxu0 0.0
  %7513 = vmatpush2.msra.mxu0 %v7333
  %7514 = vmatprep.subr.mxu0 0.0
  %7515 = vmatpush2.msra.mxu0 %v7331
  %7516 = vmatprep.subr.mxu0 0.0
  %7517 = vmatpush2.msra.mxu0 %v7329
  %7518 = vmatprep.subr.mxu0 0.0
  %7519 = vmatpush2.msra.mxu0 %v7327
  %7520 = vmatprep.subr.mxu0 0.0
  %7521 = vmatpush2.msra.mxu0 %v7325
  %7522 = vmatprep.subr.mxu0 0.0
  %7523 = vmatpush2.msra.mxu0 %v7323
  %7524 = vmatprep.subr.mxu0 0.0
  %7525 = vmatpush2.msra.mxu0 %v7321
  %7526 = vmatprep.subr.mxu0 0.0
  %7527 = vmatpush2.msra.mxu0 %v7319
  %7528 = vmatprep.subr.mxu0 0.0
  %7529 = vmatpush2.msra.mxu0 %v7317
  %7530 = vmatprep.subr.mxu0 0.0
  %7531 = vmatpush2.msra.mxu0 %v7315
  %7532 = vmatprep.subr.mxu0 0.0
  %7533 = vmatpush2.msra.mxu0 %v7313
  %7534 = vmatprep.subr.mxu0 0.0
  %7535 = vmatpush2.msra.mxu0 %v7311
  %7536 = vmatprep.subr.mxu0 0.0
  %7537 = vmatpush2.msra.mxu0 %v7309
  %7538 = vmatprep.mubr.f32.mxu0 1.0
  %7539 = vmatmul.mubr.f32.gmra.mxu0 1.0
  %v7540 = vpop.f32.mrf.mxu0
  %v7541 = vadd.f32 %v7471, %v7540
  %v7542 = vpop.f32.mrf.mxu0
  %7543 = vdwg.mxu0
  %v7544 = vmul.f32 %v7081, 0.001953125
  %v7545 = vmul.f32 %v7541, 0.001953125
  %v7546 = vmul.f32 %v7544, %v7544
  %v7547 = vsub.f32 %v7545, %v7546
  %v7548 = vmax.f32 %v7547, 0.0
  %v7549 = vld [vmem:[%s7] sm:$0x1]
  %v7550 = vadd.f32 %v7548, 1e-05
  %v7551 = vrsqrt.pop %v7550
  %v7552 = vmul.f32 %v7549, %v7551
  %v7553 = vld [vmem:[%s8] sm:$0x1]
  %v7554 = vmul.f32 %v7544, %v7552
  %v7555 = vsub.f32 %v7553, %v7554
  %v7557 = vlaneseq
  %v7558 = vshrl.u32 %v7557, 7
  %v7559 = vsub.s32 0, %v7558
  %v7560 = vrot.slane %v7552, %v7559
  %7561 = vrot.lane.b32.xlu0 %v7560, 4
  %v7562 = vpop.permute.xlu0 %7561
  %v7564 = vmul.f32 %v6624, %v7562
  %v7565 = vmul.f32 %v6625, %v7562
  %v7566 = vmul.f32 %v6626, %v7562
  %v7567 = vmul.f32 %v6627, %v7562
  %v7568 = vmul.f32 %v6628, %v7562
  %v7569 = vmul.f32 %v6629, %v7562
  %v7570 = vmul.f32 %v6630, %v7562
  %v7571 = vmul.f32 %v6631, %v7562
  %v7572 = vmul.f32 %v6632, %v7562
  %v7573 = vmul.f32 %v6633, %v7562
  %v7574 = vmul.f32 %v6634, %v7562
  %v7575 = vmul.f32 %v6635, %v7562
  %v7576 = vmul.f32 %v6636, %v7562
  %v7577 = vmul.f32 %v6637, %v7562
  %v7578 = vmul.f32 %v6638, %v7562
  %v7579 = vmul.f32 %v6639, %v7562
  %v7580 = vmul.f32 %v6640, %v7562
  %v7581 = vmul.f32 %v6641, %v7562
  %v7582 = vmul.f32 %v6642, %v7562
  %v7583 = vmul.f32 %v6643, %v7562
  %v7584 = vmul.f32 %v6644, %v7562
  %v7585 = vmul.f32 %v6645, %v7562
  %v7586 = vmul.f32 %v6646, %v7562
  %v7587 = vmul.f32 %v6647, %v7562
  %v7588 = vmul.f32 %v6648, %v7562
  %v7589 = vmul.f32 %v6649, %v7562
  %v7590 = vmul.f32 %v6650, %v7562
  %v7591 = vmul.f32 %v6651, %v7562
  %v7592 = vmul.f32 %v6652, %v7562
  %v7593 = vmul.f32 %v6653, %v7562
  %v7594 = vmul.f32 %v6654, %v7562
  %v7595 = vmul.f32 %v6655, %v7562
  %v7596 = vmul.f32 %v6656, %v7562
  %v7597 = vmul.f32 %v6657, %v7562
  %v7598 = vmul.f32 %v6658, %v7562
  %v7599 = vmul.f32 %v6659, %v7562
  %v7600 = vmul.f32 %v6660, %v7562
  %v7601 = vmul.f32 %v6661, %v7562
  %v7602 = vmul.f32 %v6662, %v7562
  %v7603 = vmul.f32 %v6663, %v7562
  %v7604 = vmul.f32 %v6664, %v7562
  %v7605 = vmul.f32 %v6665, %v7562
  %v7606 = vmul.f32 %v6666, %v7562
  %v7607 = vmul.f32 %v6667, %v7562
  %v7608 = vmul.f32 %v6668, %v7562
  %v7609 = vmul.f32 %v6669, %v7562
  %v7610 = vmul.f32 %v6670, %v7562
  %v7611 = vmul.f32 %v6671, %v7562
  %v7612 = vmul.f32 %v6672, %v7562
  %v7613 = vmul.f32 %v6673, %v7562
  %v7614 = vmul.f32 %v6674, %v7562
  %v7615 = vmul.f32 %v6675, %v7562
  %v7616 = vmul.f32 %v6676, %v7562
  %v7617 = vmul.f32 %v6677, %v7562
  %v7618 = vmul.f32 %v6678, %v7562
  %v7619 = vmul.f32 %v6679, %v7562
  %v7620 = vmul.f32 %v6680, %v7562
  %v7621 = vmul.f32 %v6681, %v7562
  %v7622 = vmul.f32 %v6682, %v7562
  %v7623 = vmul.f32 %v6683, %v7562
  %v7624 = vmul.f32 %v6684, %v7562
  %v7625 = vmul.f32 %v6685, %v7562
  %v7626 = vmul.f32 %v6686, %v7562
  %v7627 = vmul.f32 %v6687, %v7562
  %v7629 = vlaneseq
  %v7630 = vshrl.u32 %v7629, 7
  %v7631 = vsub.s32 0, %v7630
  %v7632 = vrot.slane %v7555, %v7631
  %7633 = vrot.lane.b32.xlu0 %v7632, 4
  %v7634 = vpop.permute.xlu0 %7633
  %v7636 = vadd.f32 %v7564, %v7634
  %v7637 = vadd.f32 %v7565, %v7634
  %v7638 = vadd.f32 %v7566, %v7634
  %v7639 = vadd.f32 %v7567, %v7634
  %v7640 = vadd.f32 %v7568, %v7634
  %v7641 = vadd.f32 %v7569, %v7634
  %v7642 = vadd.f32 %v7570, %v7634
  %v7643 = vadd.f32 %v7571, %v7634
  %v7644 = vadd.f32 %v7572, %v7634
  %v7645 = vadd.f32 %v7573, %v7634
  %v7646 = vadd.f32 %v7574, %v7634
  %v7647 = vadd.f32 %v7575, %v7634
  %v7648 = vadd.f32 %v7576, %v7634
  %v7649 = vadd.f32 %v7577, %v7634
  %v7650 = vadd.f32 %v7578, %v7634
  %v7651 = vadd.f32 %v7579, %v7634
  %v7652 = vadd.f32 %v7580, %v7634
  %v7653 = vadd.f32 %v7581, %v7634
  %v7654 = vadd.f32 %v7582, %v7634
  %v7655 = vadd.f32 %v7583, %v7634
  %v7656 = vadd.f32 %v7584, %v7634
  %v7657 = vadd.f32 %v7585, %v7634
  %v7658 = vadd.f32 %v7586, %v7634
  %v7659 = vadd.f32 %v7587, %v7634
  %v7660 = vadd.f32 %v7588, %v7634
  %v7661 = vadd.f32 %v7589, %v7634
  %v7662 = vadd.f32 %v7590, %v7634
  %v7663 = vadd.f32 %v7591, %v7634
  %v7664 = vadd.f32 %v7592, %v7634
  %v7665 = vadd.f32 %v7593, %v7634
  %v7666 = vadd.f32 %v7594, %v7634
  %v7667 = vadd.f32 %v7595, %v7634
  %v7668 = vadd.f32 %v7596, %v7634
  %v7669 = vadd.f32 %v7597, %v7634
  %v7670 = vadd.f32 %v7598, %v7634
  %v7671 = vadd.f32 %v7599, %v7634
  %v7672 = vadd.f32 %v7600, %v7634
  %v7673 = vadd.f32 %v7601, %v7634
  %v7674 = vadd.f32 %v7602, %v7634
  %v7675 = vadd.f32 %v7603, %v7634
  %v7676 = vadd.f32 %v7604, %v7634
  %v7677 = vadd.f32 %v7605, %v7634
  %v7678 = vadd.f32 %v7606, %v7634
  %v7679 = vadd.f32 %v7607, %v7634
  %v7680 = vadd.f32 %v7608, %v7634
  %v7681 = vadd.f32 %v7609, %v7634
  %v7682 = vadd.f32 %v7610, %v7634
  %v7683 = vadd.f32 %v7611, %v7634
  %v7684 = vadd.f32 %v7612, %v7634
  %v7685 = vadd.f32 %v7613, %v7634
  %v7686 = vadd.f32 %v7614, %v7634
  %v7687 = vadd.f32 %v7615, %v7634
  %v7688 = vadd.f32 %v7616, %v7634
  %v7689 = vadd.f32 %v7617, %v7634
  %v7690 = vadd.f32 %v7618, %v7634
  %v7691 = vadd.f32 %v7619, %v7634
  %v7692 = vadd.f32 %v7620, %v7634
  %v7693 = vadd.f32 %v7621, %v7634
  %v7694 = vadd.f32 %v7622, %v7634
  %v7695 = vadd.f32 %v7623, %v7634
  %v7696 = vadd.f32 %v7624, %v7634
  %v7697 = vadd.f32 %v7625, %v7634
  %v7698 = vadd.f32 %v7626, %v7634
  %v7699 = vadd.f32 %v7627, %v7634
  %v7700 = vmax.f32 %v7636, 0.0
  %v7701 = vmax.f32 %v7637, 0.0
  %v7702 = vmax.f32 %v7638, 0.0
  %v7703 = vmax.f32 %v7639, 0.0
  %v7704 = vmax.f32 %v7640, 0.0
  %v7705 = vmax.f32 %v7641, 0.0
  %v7706 = vmax.f32 %v7642, 0.0
  %v7707 = vmax.f32 %v7643, 0.0
  %v7708 = vmax.f32 %v7644, 0.0
  %v7709 = vmax.f32 %v7645, 0.0
  %v7710 = vmax.f32 %v7646, 0.0
  %v7711 = vmax.f32 %v7647, 0.0
  %v7712 = vmax.f32 %v7648, 0.0
  %v7713 = vmax.f32 %v7649, 0.0
  %v7714 = vmax.f32 %v7650, 0.0
  %v7715 = vmax.f32 %v7651, 0.0
  %v7716 = vmax.f32 %v7652, 0.0
  %v7717 = vmax.f32 %v7653, 0.0
  %v7718 = vmax.f32 %v7654, 0.0
  %v7719 = vmax.f32 %v7655, 0.0
  %v7720 = vmax.f32 %v7656, 0.0
  %v7721 = vmax.f32 %v7657, 0.0
  %v7722 = vmax.f32 %v7658, 0.0
  %v7723 = vmax.f32 %v7659, 0.0
  %v7724 = vmax.f32 %v7660, 0.0
  %v7725 = vmax.f32 %v7661, 0.0
  %v7726 = vmax.f32 %v7662, 0.0
  %v7727 = vmax.f32 %v7663, 0.0
  %v7728 = vmax.f32 %v7664, 0.0
  %v7729 = vmax.f32 %v7665, 0.0
  %v7730 = vmax.f32 %v7666, 0.0
  %v7731 = vmax.f32 %v7667, 0.0
  %v7732 = vmax.f32 %v7668, 0.0
  %v7733 = vmax.f32 %v7669, 0.0
  %v7734 = vmax.f32 %v7670, 0.0
  %v7735 = vmax.f32 %v7671, 0.0
  %v7736 = vmax.f32 %v7672, 0.0
  %v7737 = vmax.f32 %v7673, 0.0
  %v7738 = vmax.f32 %v7674, 0.0
  %v7739 = vmax.f32 %v7675, 0.0
  %v7740 = vmax.f32 %v7676, 0.0
  %v7741 = vmax.f32 %v7677, 0.0
  %v7742 = vmax.f32 %v7678, 0.0
  %v7743 = vmax.f32 %v7679, 0.0
  %v7744 = vmax.f32 %v7680, 0.0
  %v7745 = vmax.f32 %v7681, 0.0
  %v7746 = vmax.f32 %v7682, 0.0
  %v7747 = vmax.f32 %v7683, 0.0
  %v7748 = vmax.f32 %v7684, 0.0
  %v7749 = vmax.f32 %v7685, 0.0
  %v7750 = vmax.f32 %v7686, 0.0
  %v7751 = vmax.f32 %v7687, 0.0
  %v7752 = vmax.f32 %v7688, 0.0
  %v7753 = vmax.f32 %v7689, 0.0
  %v7754 = vmax.f32 %v7690, 0.0
  %v7755 = vmax.f32 %v7691, 0.0
  %v7756 = vmax.f32 %v7692, 0.0
  %v7757 = vmax.f32 %v7693, 0.0
  %v7758 = vmax.f32 %v7694, 0.0
  %v7759 = vmax.f32 %v7695, 0.0
  %v7760 = vmax.f32 %v7696, 0.0
  %v7761 = vmax.f32 %v7697, 0.0
  %v7762 = vmax.f32 %v7698, 0.0
  %v7763 = vmax.f32 %v7699, 0.0
  %v7764 = vpack.c.bf16 %v7701, %v7700
  %v7765 = vpack.c.bf16 %v7703, %v7702
  %v7766 = vpack.c.bf16 %v7705, %v7704
  %v7767 = vpack.c.bf16 %v7707, %v7706
  %v7768 = vpack.c.bf16 %v7709, %v7708
  %v7769 = vpack.c.bf16 %v7711, %v7710
  %v7770 = vpack.c.bf16 %v7713, %v7712
  %v7771 = vpack.c.bf16 %v7715, %v7714
  %v7772 = vpack.c.bf16 %v7717, %v7716
  %v7773 = vpack.c.bf16 %v7719, %v7718
  %v7774 = vpack.c.bf16 %v7721, %v7720
  %v7775 = vpack.c.bf16 %v7723, %v7722
  %v7776 = vpack.c.bf16 %v7725, %v7724
  %v7777 = vpack.c.bf16 %v7727, %v7726
  %v7778 = vpack.c.bf16 %v7729, %v7728
  %v7779 = vpack.c.bf16 %v7731, %v7730
  %v7780 = vpack.c.bf16 %v7733, %v7732
  %v7781 = vpack.c.bf16 %v7735, %v7734
  %v7782 = vpack.c.bf16 %v7737, %v7736
  %v7783 = vpack.c.bf16 %v7739, %v7738
  %v7784 = vpack.c.bf16 %v7741, %v7740
  %v7785 = vpack.c.bf16 %v7743, %v7742
  %v7786 = vpack.c.bf16 %v7745, %v7744
  %v7787 = vpack.c.bf16 %v7747, %v7746
  %v7788 = vpack.c.bf16 %v7749, %v7748
  %v7789 = vpack.c.bf16 %v7751, %v7750
  %v7790 = vpack.c.bf16 %v7753, %v7752
  %v7791 = vpack.c.bf16 %v7755, %v7754
  %v7792 = vpack.c.bf16 %v7757, %v7756
  %v7793 = vpack.c.bf16 %v7759, %v7758
  %v7794 = vpack.c.bf16 %v7761, %v7760
  %v7795 = vpack.c.bf16 %v7763, %v7762
  %v7796 = vld [vmem:[%s9] sm:$0xf]
  %7829 = vrot.lane.b32.xlu0 %v7764, 124
  %v7830 = vpop.permute.xlu0 %7829
  %7831 = vrot.lane.b32.xlu0 %v7765, 124
  %v7832 = vpop.permute.xlu0 %7831
  %7833 = vrot.lane.b32.xlu0 %v7766, 124
  %v7834 = vpop.permute.xlu0 %7833
  %7835 = vrot.lane.b32.xlu0 %v7767, 124
  %v7836 = vpop.permute.xlu0 %7835
  %7837 = vrot.lane.b32.xlu0 %v7768, 124
  %v7838 = vpop.permute.xlu0 %7837
  %7839 = vrot.lane.b32.xlu0 %v7769, 124
  %v7840 = vpop.permute.xlu0 %7839
  %7841 = vrot.lane.b32.xlu0 %v7770, 124
  %v7842 = vpop.permute.xlu0 %7841
  %7843 = vrot.lane.b32.xlu0 %v7771, 124
  %v7844 = vpop.permute.xlu0 %7843
  %7845 = vrot.lane.b32.xlu0 %v7772, 124
  %v7846 = vpop.permute.xlu0 %7845
  %7847 = vrot.lane.b32.xlu0 %v7773, 124
  %v7848 = vpop.permute.xlu0 %7847
  %7849 = vrot.lane.b32.xlu0 %v7774, 124
  %v7850 = vpop.permute.xlu0 %7849
  %7851 = vrot.lane.b32.xlu0 %v7775, 124
  %v7852 = vpop.permute.xlu0 %7851
  %7853 = vrot.lane.b32.xlu0 %v7776, 124
  %v7854 = vpop.permute.xlu0 %7853
  %7855 = vrot.lane.b32.xlu0 %v7777, 124
  %v7856 = vpop.permute.xlu0 %7855
  %7857 = vrot.lane.b32.xlu0 %v7778, 124
  %v7858 = vpop.permute.xlu0 %7857
  %7859 = vrot.lane.b32.xlu0 %v7779, 124
  %v7860 = vpop.permute.xlu0 %7859
  %7861 = vrot.lane.b32.xlu0 %v7780, 124
  %v7862 = vpop.permute.xlu0 %7861
  %7863 = vrot.lane.b32.xlu0 %v7781, 124
  %v7864 = vpop.permute.xlu0 %7863
  %7865 = vrot.lane.b32.xlu0 %v7782, 124
  %v7866 = vpop.permute.xlu0 %7865
  %7867 = vrot.lane.b32.xlu0 %v7783, 124
  %v7868 = vpop.permute.xlu0 %7867
  %7869 = vrot.lane.b32.xlu0 %v7784, 124
  %v7870 = vpop.permute.xlu0 %7869
  %7871 = vrot.lane.b32.xlu0 %v7785, 124
  %v7872 = vpop.permute.xlu0 %7871
  %7873 = vrot.lane.b32.xlu0 %v7786, 124
  %v7874 = vpop.permute.xlu0 %7873
  %7875 = vrot.lane.b32.xlu0 %v7787, 124
  %v7876 = vpop.permute.xlu0 %7875
  %7877 = vrot.lane.b32.xlu0 %v7788, 124
  %v7878 = vpop.permute.xlu0 %7877
  %7879 = vrot.lane.b32.xlu0 %v7789, 124
  %v7880 = vpop.permute.xlu0 %7879
  %7881 = vrot.lane.b32.xlu0 %v7790, 124
  %v7882 = vpop.permute.xlu0 %7881
  %7883 = vrot.lane.b32.xlu0 %v7791, 124
  %v7884 = vpop.permute.xlu0 %7883
  %7885 = vrot.lane.b32.xlu0 %v7792, 124
  %v7886 = vpop.permute.xlu0 %7885
  %7887 = vrot.lane.b32.xlu0 %v7793, 124
  %v7888 = vpop.permute.xlu0 %7887
  %7889 = vrot.lane.b32.xlu0 %v7794, 124
  %v7890 = vpop.permute.xlu0 %7889
  %7891 = vrot.lane.b32.xlu0 %v7795, 124
  %v7892 = vpop.permute.xlu0 %7891
  %v7894 = vsel %vm2682, %v7830, 0
  %v7897 = vsel %vm2682, %v7832, 0
  %v7900 = vsel %vm2682, %v7834, 0
  %v7903 = vsel %vm2682, %v7836, 0
  %v7906 = vsel %vm2682, %v7838, 0
  %v7909 = vsel %vm2682, %v7840, 0
  %v7912 = vsel %vm2682, %v7842, 0
  %v7915 = vsel %vm2682, %v7844, 0
  %v7918 = vsel %vm2682, %v7846, 0
  %v7921 = vsel %vm2682, %v7848, 0
  %v7924 = vsel %vm2682, %v7850, 0
  %v7927 = vsel %vm2682, %v7852, 0
  %v7930 = vsel %vm2682, %v7854, 0
  %v7933 = vsel %vm2682, %v7856, 0
  %v7936 = vsel %vm2682, %v7858, 0
  %v7939 = vsel %vm2682, %v7860, 0
  %v7942 = vsel %vm2682, %v7862, 0
  %v7945 = vsel %vm2682, %v7864, 0
  %v7948 = vsel %vm2682, %v7866, 0
  %v7951 = vsel %vm2682, %v7868, 0
  %v7954 = vsel %vm2682, %v7870, 0
  %v7957 = vsel %vm2682, %v7872, 0
  %v7960 = vsel %vm2682, %v7874, 0
  %v7963 = vsel %vm2682, %v7876, 0
  %v7966 = vsel %vm2682, %v7878, 0
  %v7969 = vsel %vm2682, %v7880, 0
  %v7972 = vsel %vm2682, %v7882, 0
  %v7975 = vsel %vm2682, %v7884, 0
  %v7978 = vsel %vm2682, %v7886, 0
  %v7981 = vsel %vm2682, %v7888, 0
  %v7984 = vsel %vm2682, %v7890, 0
  %v7987 = vsel %vm2682, %v7892, 0
  %v7990 = vsel %vm2779, %v7796, 0
  %7992 = vmatprep.subr.bf16.mxu0 0
  %7993 = vmatpush1.bf16.msra.mxu0 0
  %7994 = vmatprep.subr.bf16.mxu0 0
  %7995 = vmatpush1.bf16.msra.mxu0 0
  %7996 = vmatprep.subr.bf16.mxu0 0
  %7997 = vmatpush1.bf16.msra.mxu0 0
  %7998 = vmatprep.subr.bf16.mxu0 0
  %7999 = vmatpush1.bf16.msra.mxu0 0
  %8000 = vmatprep.subr.bf16.mxu0 0
  %8001 = vmatpush1.bf16.msra.mxu0 0
  %8002 = vmatprep.subr.bf16.mxu0 0
  %8003 = vmatpush1.bf16.msra.mxu0 0
  %8004 = vmatprep.subr.bf16.mxu0 0
  %8005 = vmatpush1.bf16.msra.mxu0 0
  %8006 = vmatprep.subr.bf16.mxu0 0
  %8007 = vmatpush1.bf16.msra.mxu0 %v7990
  %8008 = vmatprep.subr.bf16.mxu0 0
  %8009 = vmatpush2.bf16.msra.mxu0 0
  %8010 = vmatprep.subr.bf16.mxu0 0
  %8011 = vmatpush2.bf16.msra.mxu0 0
  %8012 = vmatprep.subr.bf16.mxu0 0
  %8013 = vmatpush2.bf16.msra.mxu0 0
  %8014 = vmatprep.subr.bf16.mxu0 0
  %8015 = vmatpush2.bf16.msra.mxu0 0
  %8016 = vmatprep.subr.bf16.mxu0 0
  %8017 = vmatpush2.bf16.msra.mxu0 0
  %8018 = vmatprep.subr.bf16.mxu0 0
  %8019 = vmatpush2.bf16.msra.mxu0 0
  %8020 = vmatprep.subr.bf16.mxu0 0
  %8021 = vmatpush2.bf16.msra.mxu0 0
  %8022 = vmatprep.subr.bf16.mxu0 0
  %8023 = vmatpush2.bf16.msra.mxu0 0
  %8024 = vmatprep.mubr.bf16.mxu0 0
  %8025 = vmatmul.mubr.bf16.gmra.mxu0 %v7894
  %v8026 = vpop.f32.mrf.mxu0
  %v8027 = vadd.f32 0.0, %v8026
  %v8028 = vpop.f32.mrf.mxu0
  %v8029 = vpop.f32.mrf.mxu0
  %v8030 = vadd.f32 0.0, %v8029
  %v8031 = vpop.f32.mrf.mxu0
  %8032 = vmatprep.mubr.bf16.mxu0 0
  %8033 = vmatmul.mubr.bf16.gmra.mxu0 %v7897
  %v8034 = vpop.f32.mrf.mxu0
  %v8035 = vadd.f32 0.0, %v8034
  %v8036 = vpop.f32.mrf.mxu0
  %v8037 = vpop.f32.mrf.mxu0
  %v8038 = vadd.f32 0.0, %v8037
  %v8039 = vpop.f32.mrf.mxu0
  %8040 = vmatprep.mubr.bf16.mxu0 0
  %8041 = vmatmul.mubr.bf16.gmra.mxu0 %v7900
  %v8042 = vpop.f32.mrf.mxu0
  %v8043 = vadd.f32 0.0, %v8042
  %v8044 = vpop.f32.mrf.mxu0
  %v8045 = vpop.f32.mrf.mxu0
  %v8046 = vadd.f32 0.0, %v8045
  %v8047 = vpop.f32.mrf.mxu0
  %8048 = vmatprep.mubr.bf16.mxu0 0
  %8049 = vmatmul.mubr.bf16.gmra.mxu0 %v7903
  %v8050 = vpop.f32.mrf.mxu0
  %v8051 = vadd.f32 0.0, %v8050
  %v8052 = vpop.f32.mrf.mxu0
  %v8053 = vpop.f32.mrf.mxu0
  %v8054 = vadd.f32 0.0, %v8053
  %v8055 = vpop.f32.mrf.mxu0
  %8056 = vmatprep.mubr.bf16.mxu0 0
  %8057 = vmatmul.mubr.bf16.gmra.mxu0 %v7906
  %v8058 = vpop.f32.mrf.mxu0
  %v8059 = vadd.f32 0.0, %v8058
  %v8060 = vpop.f32.mrf.mxu0
  %v8061 = vpop.f32.mrf.mxu0
  %v8062 = vadd.f32 0.0, %v8061
  %v8063 = vpop.f32.mrf.mxu0
  %8064 = vmatprep.mubr.bf16.mxu0 0
  %8065 = vmatmul.mubr.bf16.gmra.mxu0 %v7909
  %v8066 = vpop.f32.mrf.mxu0
  %v8067 = vadd.f32 0.0, %v8066
  %v8068 = vpop.f32.mrf.mxu0
  %v8069 = vpop.f32.mrf.mxu0
  %v8070 = vadd.f32 0.0, %v8069
  %v8071 = vpop.f32.mrf.mxu0
  %8072 = vmatprep.mubr.bf16.mxu0 0
  %8073 = vmatmul.mubr.bf16.gmra.mxu0 %v7912
  %v8074 = vpop.f32.mrf.mxu0
  %v8075 = vadd.f32 0.0, %v8074
  %v8076 = vpop.f32.mrf.mxu0
  %v8077 = vpop.f32.mrf.mxu0
  %v8078 = vadd.f32 0.0, %v8077
  %v8079 = vpop.f32.mrf.mxu0
  %8080 = vmatprep.mubr.bf16.mxu0 0
  %8081 = vmatmul.mubr.bf16.gmra.mxu0 %v7915
  %v8082 = vpop.f32.mrf.mxu0
  %v8083 = vadd.f32 0.0, %v8082
  %v8084 = vpop.f32.mrf.mxu0
  %v8085 = vpop.f32.mrf.mxu0
  %v8086 = vadd.f32 0.0, %v8085
  %v8087 = vpop.f32.mrf.mxu0
  %8088 = vmatprep.mubr.bf16.mxu0 0
  %8089 = vmatmul.mubr.bf16.gmra.mxu0 %v7918
  %v8090 = vpop.f32.mrf.mxu0
  %v8091 = vadd.f32 0.0, %v8090
  %v8092 = vpop.f32.mrf.mxu0
  %v8093 = vpop.f32.mrf.mxu0
  %v8094 = vadd.f32 0.0, %v8093
  %v8095 = vpop.f32.mrf.mxu0
  %8096 = vmatprep.mubr.bf16.mxu0 0
  %8097 = vmatmul.mubr.bf16.gmra.mxu0 %v7921
  %v8098 = vpop.f32.mrf.mxu0
  %v8099 = vadd.f32 0.0, %v8098
  %v8100 = vpop.f32.mrf.mxu0
  %v8101 = vpop.f32.mrf.mxu0
  %v8102 = vadd.f32 0.0, %v8101
  %v8103 = vpop.f32.mrf.mxu0
  %8104 = vmatprep.mubr.bf16.mxu0 0
  %8105 = vmatmul.mubr.bf16.gmra.mxu0 %v7924
  %v8106 = vpop.f32.mrf.mxu0
  %v8107 = vadd.f32 0.0, %v8106
  %v8108 = vpop.f32.mrf.mxu0
  %v8109 = vpop.f32.mrf.mxu0
  %v8110 = vadd.f32 0.0, %v8109
  %v8111 = vpop.f32.mrf.mxu0
  %8112 = vmatprep.mubr.bf16.mxu0 0
  %8113 = vmatmul.mubr.bf16.gmra.mxu0 %v7927
  %v8114 = vpop.f32.mrf.mxu0
  %v8115 = vadd.f32 0.0, %v8114
  %v8116 = vpop.f32.mrf.mxu0
  %v8117 = vpop.f32.mrf.mxu0
  %v8118 = vadd.f32 0.0, %v8117
  %v8119 = vpop.f32.mrf.mxu0
  %8120 = vmatprep.mubr.bf16.mxu0 0
  %8121 = vmatmul.mubr.bf16.gmra.mxu0 %v7930
  %v8122 = vpop.f32.mrf.mxu0
  %v8123 = vadd.f32 0.0, %v8122
  %v8124 = vpop.f32.mrf.mxu0
  %v8125 = vpop.f32.mrf.mxu0
  %v8126 = vadd.f32 0.0, %v8125
  %v8127 = vpop.f32.mrf.mxu0
  %8128 = vmatprep.mubr.bf16.mxu0 0
  %8129 = vmatmul.mubr.bf16.gmra.mxu0 %v7933
  %v8130 = vpop.f32.mrf.mxu0
  %v8131 = vadd.f32 0.0, %v8130
  %v8132 = vpop.f32.mrf.mxu0
  %v8133 = vpop.f32.mrf.mxu0
  %v8134 = vadd.f32 0.0, %v8133
  %v8135 = vpop.f32.mrf.mxu0
  %8136 = vmatprep.mubr.bf16.mxu0 0
  %8137 = vmatmul.mubr.bf16.gmra.mxu0 %v7936
  %v8138 = vpop.f32.mrf.mxu0
  %v8139 = vadd.f32 0.0, %v8138
  %v8140 = vpop.f32.mrf.mxu0
  %v8141 = vpop.f32.mrf.mxu0
  %v8142 = vadd.f32 0.0, %v8141
  %v8143 = vpop.f32.mrf.mxu0
  %8144 = vmatprep.mubr.bf16.mxu0 0
  %8145 = vmatmul.mubr.bf16.gmra.mxu0 %v7939
  %v8146 = vpop.f32.mrf.mxu0
  %v8147 = vadd.f32 0.0, %v8146
  %v8148 = vpop.f32.mrf.mxu0
  %v8149 = vpop.f32.mrf.mxu0
  %v8150 = vadd.f32 0.0, %v8149
  %v8151 = vpop.f32.mrf.mxu0
  %8152 = vmatprep.mubr.bf16.mxu0 0
  %8153 = vmatmul.mubr.bf16.gmra.mxu0 %v7942
  %v8154 = vpop.f32.mrf.mxu0
  %v8155 = vadd.f32 0.0, %v8154
  %v8156 = vpop.f32.mrf.mxu0
  %v8157 = vpop.f32.mrf.mxu0
  %v8158 = vadd.f32 0.0, %v8157
  %v8159 = vpop.f32.mrf.mxu0
  %8160 = vmatprep.mubr.bf16.mxu0 0
  %8161 = vmatmul.mubr.bf16.gmra.mxu0 %v7945
  %v8162 = vpop.f32.mrf.mxu0
  %v8163 = vadd.f32 0.0, %v8162
  %v8164 = vpop.f32.mrf.mxu0
  %v8165 = vpop.f32.mrf.mxu0
  %v8166 = vadd.f32 0.0, %v8165
  %v8167 = vpop.f32.mrf.mxu0
  %8168 = vmatprep.mubr.bf16.mxu0 0
  %8169 = vmatmul.mubr.bf16.gmra.mxu0 %v7948
  %v8170 = vpop.f32.mrf.mxu0
  %v8171 = vadd.f32 0.0, %v8170
  %v8172 = vpop.f32.mrf.mxu0
  %v8173 = vpop.f32.mrf.mxu0
  %v8174 = vadd.f32 0.0, %v8173
  %v8175 = vpop.f32.mrf.mxu0
  %8176 = vmatprep.mubr.bf16.mxu0 0
  %8177 = vmatmul.mubr.bf16.gmra.mxu0 %v7951
  %v8178 = vpop.f32.mrf.mxu0
  %v8179 = vadd.f32 0.0, %v8178
  %v8180 = vpop.f32.mrf.mxu0
  %v8181 = vpop.f32.mrf.mxu0
  %v8182 = vadd.f32 0.0, %v8181
  %v8183 = vpop.f32.mrf.mxu0
  %8184 = vmatprep.mubr.bf16.mxu0 0
  %8185 = vmatmul.mubr.bf16.gmra.mxu0 %v7954
  %v8186 = vpop.f32.mrf.mxu0
  %v8187 = vadd.f32 0.0, %v8186
  %v8188 = vpop.f32.mrf.mxu0
  %v8189 = vpop.f32.mrf.mxu0
  %v8190 = vadd.f32 0.0, %v8189
  %v8191 = vpop.f32.mrf.mxu0
  %8192 = vmatprep.mubr.bf16.mxu0 0
  %8193 = vmatmul.mubr.bf16.gmra.mxu0 %v7957
  %v8194 = vpop.f32.mrf.mxu0
  %v8195 = vadd.f32 0.0, %v8194
  %v8196 = vpop.f32.mrf.mxu0
  %v8197 = vpop.f32.mrf.mxu0
  %v8198 = vadd.f32 0.0, %v8197
  %v8199 = vpop.f32.mrf.mxu0
  %8200 = vmatprep.mubr.bf16.mxu0 0
  %8201 = vmatmul.mubr.bf16.gmra.mxu0 %v7960
  %v8202 = vpop.f32.mrf.mxu0
  %v8203 = vadd.f32 0.0, %v8202
  %v8204 = vpop.f32.mrf.mxu0
  %v8205 = vpop.f32.mrf.mxu0
  %v8206 = vadd.f32 0.0, %v8205
  %v8207 = vpop.f32.mrf.mxu0
  %8208 = vmatprep.mubr.bf16.mxu0 0
  %8209 = vmatmul.mubr.bf16.gmra.mxu0 %v7963
  %v8210 = vpop.f32.mrf.mxu0
  %v8211 = vadd.f32 0.0, %v8210
  %v8212 = vpop.f32.mrf.mxu0
  %v8213 = vpop.f32.mrf.mxu0
  %v8214 = vadd.f32 0.0, %v8213
  %v8215 = vpop.f32.mrf.mxu0
  %8216 = vmatprep.mubr.bf16.mxu0 0
  %8217 = vmatmul.mubr.bf16.gmra.mxu0 %v7966
  %v8218 = vpop.f32.mrf.mxu0
  %v8219 = vadd.f32 0.0, %v8218
  %v8220 = vpop.f32.mrf.mxu0
  %v8221 = vpop.f32.mrf.mxu0
  %v8222 = vadd.f32 0.0, %v8221
  %v8223 = vpop.f32.mrf.mxu0
  %8224 = vmatprep.mubr.bf16.mxu0 0
  %8225 = vmatmul.mubr.bf16.gmra.mxu0 %v7969
  %v8226 = vpop.f32.mrf.mxu0
  %v8227 = vadd.f32 0.0, %v8226
  %v8228 = vpop.f32.mrf.mxu0
  %v8229 = vpop.f32.mrf.mxu0
  %v8230 = vadd.f32 0.0, %v8229
  %v8231 = vpop.f32.mrf.mxu0
  %8232 = vmatprep.mubr.bf16.mxu0 0
  %8233 = vmatmul.mubr.bf16.gmra.mxu0 %v7972
  %v8234 = vpop.f32.mrf.mxu0
  %v8235 = vadd.f32 0.0, %v8234
  %v8236 = vpop.f32.mrf.mxu0
  %v8237 = vpop.f32.mrf.mxu0
  %v8238 = vadd.f32 0.0, %v8237
  %v8239 = vpop.f32.mrf.mxu0
  %8240 = vmatprep.mubr.bf16.mxu0 0
  %8241 = vmatmul.mubr.bf16.gmra.mxu0 %v7975
  %v8242 = vpop.f32.mrf.mxu0
  %v8243 = vadd.f32 0.0, %v8242
  %v8244 = vpop.f32.mrf.mxu0
  %v8245 = vpop.f32.mrf.mxu0
  %v8246 = vadd.f32 0.0, %v8245
  %v8247 = vpop.f32.mrf.mxu0
  %8248 = vmatprep.mubr.bf16.mxu0 0
  %8249 = vmatmul.mubr.bf16.gmra.mxu0 %v7978
  %v8250 = vpop.f32.mrf.mxu0
  %v8251 = vadd.f32 0.0, %v8250
  %v8252 = vpop.f32.mrf.mxu0
  %v8253 = vpop.f32.mrf.mxu0
  %v8254 = vadd.f32 0.0, %v8253
  %v8255 = vpop.f32.mrf.mxu0
  %8256 = vmatprep.mubr.bf16.mxu0 0
  %8257 = vmatmul.mubr.bf16.gmra.mxu0 %v7981
  %v8258 = vpop.f32.mrf.mxu0
  %v8259 = vadd.f32 0.0, %v8258
  %v8260 = vpop.f32.mrf.mxu0
  %v8261 = vpop.f32.mrf.mxu0
  %v8262 = vadd.f32 0.0, %v8261
  %v8263 = vpop.f32.mrf.mxu0
  %8264 = vmatprep.mubr.bf16.mxu0 0
  %8265 = vmatmul.mubr.bf16.gmra.mxu0 %v7984
  %v8266 = vpop.f32.mrf.mxu0
  %v8267 = vadd.f32 0.0, %v8266
  %v8268 = vpop.f32.mrf.mxu0
  %v8269 = vpop.f32.mrf.mxu0
  %v8270 = vadd.f32 0.0, %v8269
  %v8271 = vpop.f32.mrf.mxu0
  %8272 = vmatprep.mubr.bf16.mxu0 0
  %8273 = vmatmul.mubr.bf16.gmra.mxu0 %v7987
  %v8274 = vpop.f32.mrf.mxu0
  %v8275 = vadd.f32 0.0, %v8274
  %v8276 = vpop.f32.mrf.mxu0
  %v8277 = vpop.f32.mrf.mxu0
  %v8278 = vadd.f32 0.0, %v8277
  %v8279 = vpop.f32.mrf.mxu0
  %8280 = vdwg.mxu0
  %8281 = vmatprep.subr.mxu0 0.0
  %8282 = vmatpush1.msra.mxu0 %v8086
  %8283 = vmatprep.subr.mxu0 0.0
  %8284 = vmatpush1.msra.mxu0 %v8083
  %8285 = vmatprep.subr.mxu0 0.0
  %8286 = vmatpush1.msra.mxu0 %v8078
  %8287 = vmatprep.subr.mxu0 0.0
  %8288 = vmatpush1.msra.mxu0 %v8075
  %8289 = vmatprep.subr.mxu0 0.0
  %8290 = vmatpush1.msra.mxu0 %v8070
  %8291 = vmatprep.subr.mxu0 0.0
  %8292 = vmatpush1.msra.mxu0 %v8067
  %8293 = vmatprep.subr.mxu0 0.0
  %8294 = vmatpush1.msra.mxu0 %v8062
  %8295 = vmatprep.subr.mxu0 0.0
  %8296 = vmatpush1.msra.mxu0 %v8059
  %8297 = vmatprep.subr.mxu0 0.0
  %8298 = vmatpush1.msra.mxu0 %v8054
  %8299 = vmatprep.subr.mxu0 0.0
  %8300 = vmatpush1.msra.mxu0 %v8051
  %8301 = vmatprep.subr.mxu0 0.0
  %8302 = vmatpush1.msra.mxu0 %v8046
  %8303 = vmatprep.subr.mxu0 0.0
  %8304 = vmatpush1.msra.mxu0 %v8043
  %8305 = vmatprep.subr.mxu0 0.0
  %8306 = vmatpush1.msra.mxu0 %v8038
  %8307 = vmatprep.subr.mxu0 0.0
  %8308 = vmatpush1.msra.mxu0 %v8035
  %8309 = vmatprep.subr.mxu0 0.0
  %8310 = vmatpush1.msra.mxu0 %v8030
  %8311 = vmatprep.subr.mxu0 0.0
  %8312 = vmatpush1.msra.mxu0 %v8027
  %8313 = vmatprep.subr.mxu0 0.0
  %8314 = vmatpush2.msra.mxu0 %v8150
  %8315 = vmatprep.subr.mxu0 0.0
  %8316 = vmatpush2.msra.mxu0 %v8147
  %8317 = vmatprep.subr.mxu0 0.0
  %8318 = vmatpush2.msra.mxu0 %v8142
  %8319 = vmatprep.subr.mxu0 0.0
  %8320 = vmatpush2.msra.mxu0 %v8139
  %8321 = vmatprep.subr.mxu0 0.0
  %8322 = vmatpush2.msra.mxu0 %v8134
  %8323 = vmatprep.subr.mxu0 0.0
  %8324 = vmatpush2.msra.mxu0 %v8131
  %8325 = vmatprep.subr.mxu0 0.0
  %8326 = vmatpush2.msra.mxu0 %v8126
  %8327 = vmatprep.subr.mxu0 0.0
  %8328 = vmatpush2.msra.mxu0 %v8123
  %8329 = vmatprep.subr.mxu0 0.0
  %8330 = vmatpush2.msra.mxu0 %v8118
  %8331 = vmatprep.subr.mxu0 0.0
  %8332 = vmatpush2.msra.mxu0 %v8115
  %8333 = vmatprep.subr.mxu0 0.0
  %8334 = vmatpush2.msra.mxu0 %v8110
  %8335 = vmatprep.subr.mxu0 0.0
  %8336 = vmatpush2.msra.mxu0 %v8107
  %8337 = vmatprep.subr.mxu0 0.0
  %8338 = vmatpush2.msra.mxu0 %v8102
  %8339 = vmatprep.subr.mxu0 0.0
  %8340 = vmatpush2.msra.mxu0 %v8099
  %8341 = vmatprep.subr.mxu0 0.0
  %8342 = vmatpush2.msra.mxu0 %v8094
  %8343 = vmatprep.subr.mxu0 0.0
  %8344 = vmatpush2.msra.mxu0 %v8091
  %8345 = vmatprep.mubr.f32.mxu0 1.0
  %8346 = vmatmul.mubr.f32.gmra.mxu0 1.0
  %v8347 = vpop.f32.mrf.mxu0
  %v8348 = vadd.f32 0.0, %v8347
  %v8349 = vpop.f32.mrf.mxu0
  %8350 = vdwg.mxu0
  %8351 = vmatprep.subr.mxu0 0.0
  %8352 = vmatpush1.msra.mxu0 %v8214
  %8353 = vmatprep.subr.mxu0 0.0
  %8354 = vmatpush1.msra.mxu0 %v8211
  %8355 = vmatprep.subr.mxu0 0.0
  %8356 = vmatpush1.msra.mxu0 %v8206
  %8357 = vmatprep.subr.mxu0 0.0
  %8358 = vmatpush1.msra.mxu0 %v8203
  %8359 = vmatprep.subr.mxu0 0.0
  %8360 = vmatpush1.msra.mxu0 %v8198
  %8361 = vmatprep.subr.mxu0 0.0
  %8362 = vmatpush1.msra.mxu0 %v8195
  %8363 = vmatprep.subr.mxu0 0.0
  %8364 = vmatpush1.msra.mxu0 %v8190
  %8365 = vmatprep.subr.mxu0 0.0
  %8366 = vmatpush1.msra.mxu0 %v8187
  %8367 = vmatprep.subr.mxu0 0.0
  %8368 = vmatpush1.msra.mxu0 %v8182
  %8369 = vmatprep.subr.mxu0 0.0
  %8370 = vmatpush1.msra.mxu0 %v8179
  %8371 = vmatprep.subr.mxu0 0.0
  %8372 = vmatpush1.msra.mxu0 %v8174
  %8373 = vmatprep.subr.mxu0 0.0
  %8374 = vmatpush1.msra.mxu0 %v8171
  %8375 = vmatprep.subr.mxu0 0.0
  %8376 = vmatpush1.msra.mxu0 %v8166
  %8377 = vmatprep.subr.mxu0 0.0
  %8378 = vmatpush1.msra.mxu0 %v8163
  %8379 = vmatprep.subr.mxu0 0.0
  %8380 = vmatpush1.msra.mxu0 %v8158
  %8381 = vmatprep.subr.mxu0 0.0
  %8382 = vmatpush1.msra.mxu0 %v8155
  %8383 = vmatprep.subr.mxu0 0.0
  %8384 = vmatpush2.msra.mxu0 %v8278
  %8385 = vmatprep.subr.mxu0 0.0
  %8386 = vmatpush2.msra.mxu0 %v8275
  %8387 = vmatprep.subr.mxu0 0.0
  %8388 = vmatpush2.msra.mxu0 %v8270
  %8389 = vmatprep.subr.mxu0 0.0
  %8390 = vmatpush2.msra.mxu0 %v8267
  %8391 = vmatprep.subr.mxu0 0.0
  %8392 = vmatpush2.msra.mxu0 %v8262
  %8393 = vmatprep.subr.mxu0 0.0
  %8394 = vmatpush2.msra.mxu0 %v8259
  %8395 = vmatprep.subr.mxu0 0.0
  %8396 = vmatpush2.msra.mxu0 %v8254
  %8397 = vmatprep.subr.mxu0 0.0
  %8398 = vmatpush2.msra.mxu0 %v8251
  %8399 = vmatprep.subr.mxu0 0.0
  %8400 = vmatpush2.msra.mxu0 %v8246
  %8401 = vmatprep.subr.mxu0 0.0
  %8402 = vmatpush2.msra.mxu0 %v8243
  %8403 = vmatprep.subr.mxu0 0.0
  %8404 = vmatpush2.msra.mxu0 %v8238
  %8405 = vmatprep.subr.mxu0 0.0
  %8406 = vmatpush2.msra.mxu0 %v8235
  %8407 = vmatprep.subr.mxu0 0.0
  %8408 = vmatpush2.msra.mxu0 %v8230
  %8409 = vmatprep.subr.mxu0 0.0
  %8410 = vmatpush2.msra.mxu0 %v8227
  %8411 = vmatprep.subr.mxu0 0.0
  %8412 = vmatpush2.msra.mxu0 %v8222
  %8413 = vmatprep.subr.mxu0 0.0
  %8414 = vmatpush2.msra.mxu0 %v8219
  %8415 = vmatprep.mubr.f32.mxu0 1.0
  %8416 = vmatmul.mubr.f32.gmra.mxu0 1.0
  %v8417 = vpop.f32.mrf.mxu0
  %v8418 = vadd.f32 %v8348, %v8417
  %v8419 = vpop.f32.mrf.mxu0
  %8420 = vdwg.mxu0
  %v8421 = vmul.f32 %v8027, %v8027
  %v8422 = vmul.f32 %v8030, %v8030
  %v8423 = vmul.f32 %v8035, %v8035
  %v8424 = vmul.f32 %v8038, %v8038
  %v8425 = vmul.f32 %v8043, %v8043
  %v8426 = vmul.f32 %v8046, %v8046
  %v8427 = vmul.f32 %v8051, %v8051
  %v8428 = vmul.f32 %v8054, %v8054
  %v8429 = vmul.f32 %v8059, %v8059
  %v8430 = vmul.f32 %v8062, %v8062
  %v8431 = vmul.f32 %v8067, %v8067
  %v8432 = vmul.f32 %v8070, %v8070
  %v8433 = vmul.f32 %v8075, %v8075
  %v8434 = vmul.f32 %v8078, %v8078
  %v8435 = vmul.f32 %v8083, %v8083
  %v8436 = vmul.f32 %v8086, %v8086
  %v8437 = vmul.f32 %v8091, %v8091
  %v8438 = vmul.f32 %v8094, %v8094
  %v8439 = vmul.f32 %v8099, %v8099
  %v8440 = vmul.f32 %v8102, %v8102
  %v8441 = vmul.f32 %v8107, %v8107
  %v8442 = vmul.f32 %v8110, %v8110
  %v8443 = vmul.f32 %v8115, %v8115
  %v8444 = vmul.f32 %v8118, %v8118
  %v8445 = vmul.f32 %v8123, %v8123
  %v8446 = vmul.f32 %v8126, %v8126
  %v8447 = vmul.f32 %v8131, %v8131
  %v8448 = vmul.f32 %v8134, %v8134
  %v8449 = vmul.f32 %v8139, %v8139
  %v8450 = vmul.f32 %v8142, %v8142
  %v8451 = vmul.f32 %v8147, %v8147
  %v8452 = vmul.f32 %v8150, %v8150
  %v8453 = vmul.f32 %v8155, %v8155
  %v8454 = vmul.f32 %v8158, %v8158
  %v8455 = vmul.f32 %v8163, %v8163
  %v8456 = vmul.f32 %v8166, %v8166
  %v8457 = vmul.f32 %v8171, %v8171
  %v8458 = vmul.f32 %v8174, %v8174
  %v8459 = vmul.f32 %v8179, %v8179
  %v8460 = vmul.f32 %v8182, %v8182
  %v8461 = vmul.f32 %v8187, %v8187
  %v8462 = vmul.f32 %v8190, %v8190
  %v8463 = vmul.f32 %v8195, %v8195
  %v8464 = vmul.f32 %v8198, %v8198
  %v8465 = vmul.f32 %v8203, %v8203
  %v8466 = vmul.f32 %v8206, %v8206
  %v8467 = vmul.f32 %v8211, %v8211
  %v8468 = vmul.f32 %v8214, %v8214
  %v8469 = vmul.f32 %v8219, %v8219
  %v8470 = vmul.f32 %v8222, %v8222
  %v8471 = vmul.f32 %v8227, %v8227
  %v8472 = vmul.f32 %v8230, %v8230
  %v8473 = vmul.f32 %v8235, %v8235
  %v8474 = vmul.f32 %v8238, %v8238
  %v8475 = vmul.f32 %v8243, %v8243
  %v8476 = vmul.f32 %v8246, %v8246
  %v8477 = vmul.f32 %v8251, %v8251
  %v8478 = vmul.f32 %v8254, %v8254
  %v8479 = vmul.f32 %v8259, %v8259
  %v8480 = vmul.f32 %v8262, %v8262
  %v8481 = vmul.f32 %v8267, %v8267
  %v8482 = vmul.f32 %v8270, %v8270
  %v8483 = vmul.f32 %v8275, %v8275
  %v8484 = vmul.f32 %v8278, %v8278
  %8485 = vmatprep.subr.mxu0 0.0
  %8486 = vmatpush1.msra.mxu0 %v8436
  %8487 = vmatprep.subr.mxu0 0.0
  %8488 = vmatpush1.msra.mxu0 %v8435
  %8489 = vmatprep.subr.mxu0 0.0
  %8490 = vmatpush1.msra.mxu0 %v8434
  %8491 = vmatprep.subr.mxu0 0.0
  %8492 = vmatpush1.msra.mxu0 %v8433
  %8493 = vmatprep.subr.mxu0 0.0
  %8494 = vmatpush1.msra.mxu0 %v8432
  %8495 = vmatprep.subr.mxu0 0.0
  %8496 = vmatpush1.msra.mxu0 %v8431
  %8497 = vmatprep.subr.mxu0 0.0
  %8498 = vmatpush1.msra.mxu0 %v8430
  %8499 = vmatprep.subr.mxu0 0.0
  %8500 = vmatpush1.msra.mxu0 %v8429
  %8501 = vmatprep.subr.mxu0 0.0
  %8502 = vmatpush1.msra.mxu0 %v8428
  %8503 = vmatprep.subr.mxu0 0.0
  %8504 = vmatpush1.msra.mxu0 %v8427
  %8505 = vmatprep.subr.mxu0 0.0
  %8506 = vmatpush1.msra.mxu0 %v8426
  %8507 = vmatprep.subr.mxu0 0.0
  %8508 = vmatpush1.msra.mxu0 %v8425
  %8509 = vmatprep.subr.mxu0 0.0
  %8510 = vmatpush1.msra.mxu0 %v8424
  %8511 = vmatprep.subr.mxu0 0.0
  %8512 = vmatpush1.msra.mxu0 %v8423
  %8513 = vmatprep.subr.mxu0 0.0
  %8514 = vmatpush1.msra.mxu0 %v8422
  %8515 = vmatprep.subr.mxu0 0.0
  %8516 = vmatpush1.msra.mxu0 %v8421
  %8517 = vmatprep.subr.mxu0 0.0
  %8518 = vmatpush2.msra.mxu0 %v8452
  %8519 = vmatprep.subr.mxu0 0.0
  %8520 = vmatpush2.msra.mxu0 %v8451
  %8521 = vmatprep.subr.mxu0 0.0
  %8522 = vmatpush2.msra.mxu0 %v8450
  %8523 = vmatprep.subr.mxu0 0.0
  %8524 = vmatpush2.msra.mxu0 %v8449
  %8525 = vmatprep.subr.mxu0 0.0
  %8526 = vmatpush2.msra.mxu0 %v8448
  %8527 = vmatprep.subr.mxu0 0.0
  %8528 = vmatpush2.msra.mxu0 %v8447
  %8529 = vmatprep.subr.mxu0 0.0
  %8530 = vmatpush2.msra.mxu0 %v8446
  %8531 = vmatprep.subr.mxu0 0.0
  %8532 = vmatpush2.msra.mxu0 %v8445
  %8533 = vmatprep.subr.mxu0 0.0
  %8534 = vmatpush2.msra.mxu0 %v8444
  %8535 = vmatprep.subr.mxu0 0.0
  %8536 = vmatpush2.msra.mxu0 %v8443
  %8537 = vmatprep.subr.mxu0 0.0
  %8538 = vmatpush2.msra.mxu0 %v8442
  %8539 = vmatprep.subr.mxu0 0.0
  %8540 = vmatpush2.msra.mxu0 %v8441
  %8541 = vmatprep.subr.mxu0 0.0
  %8542 = vmatpush2.msra.mxu0 %v8440
  %8543 = vmatprep.subr.mxu0 0.0
  %8544 = vmatpush2.msra.mxu0 %v8439
  %8545 = vmatprep.subr.mxu0 0.0
  %8546 = vmatpush2.msra.mxu0 %v8438
  %8547 = vmatprep.subr.mxu0 0.0
  %8548 = vmatpush2.msra.mxu0 %v8437
  %8549 = vmatprep.mubr.f32.mxu0 1.0
  %8550 = vmatmul.mubr.f32.gmra.mxu0 1.0
  %v8551 = vpop.f32.mrf.mxu0
  %v8552 = vadd.f32 0.0, %v8551
  %v8553 = vpop.f32.mrf.mxu0
  %8554 = vdwg.mxu0
  %8555 = vmatprep.subr.mxu0 0.0
  %8556 = vmatpush1.msra.mxu0 %v8468
  %8557 = vmatprep.subr.mxu0 0.0
  %8558 = vmatpush1.msra.mxu0 %v8467
  %8559 = vmatprep.subr.mxu0 0.0
  %8560 = vmatpush1.msra.mxu0 %v8466
  %8561 = vmatprep.subr.mxu0 0.0
  %8562 = vmatpush1.msra.mxu0 %v8465
  %8563 = vmatprep.subr.mxu0 0.0
  %8564 = vmatpush1.msra.mxu0 %v8464
  %8565 = vmatprep.subr.mxu0 0.0
  %8566 = vmatpush1.msra.mxu0 %v8463
  %8567 = vmatprep.subr.mxu0 0.0
  %8568 = vmatpush1.msra.mxu0 %v8462
  %8569 = vmatprep.subr.mxu0 0.0
  %8570 = vmatpush1.msra.mxu0 %v8461
  %8571 = vmatprep.subr.mxu0 0.0
  %8572 = vmatpush1.msra.mxu0 %v8460
  %8573 = vmatprep.subr.mxu0 0.0
  %8574 = vmatpush1.msra.mxu0 %v8459
  %8575 = vmatprep.subr.mxu0 0.0
  %8576 = vmatpush1.msra.mxu0 %v8458
  %8577 = vmatprep.subr.mxu0 0.0
  %8578 = vmatpush1.msra.mxu0 %v8457
  %8579 = vmatprep.subr.mxu0 0.0
  %8580 = vmatpush1.msra.mxu0 %v8456
  %8581 = vmatprep.subr.mxu0 0.0
  %8582 = vmatpush1.msra.mxu0 %v8455
  %8583 = vmatprep.subr.mxu0 0.0
  %8584 = vmatpush1.msra.mxu0 %v8454
  %8585 = vmatprep.subr.mxu0 0.0
  %8586 = vmatpush1.msra.mxu0 %v8453
  %8587 = vmatprep.subr.mxu0 0.0
  %8588 = vmatpush2.msra.mxu0 %v8484
  %8589 = vmatprep.subr.mxu0 0.0
  %8590 = vmatpush2.msra.mxu0 %v8483
  %8591 = vmatprep.subr.mxu0 0.0
  %8592 = vmatpush2.msra.mxu0 %v8482
  %8593 = vmatprep.subr.mxu0 0.0
  %8594 = vmatpush2.msra.mxu0 %v8481
  %8595 = vmatprep.subr.mxu0 0.0
  %8596 = vmatpush2.msra.mxu0 %v8480
  %8597 = vmatprep.subr.mxu0 0.0
  %8598 = vmatpush2.msra.mxu0 %v8479
  %8599 = vmatprep.subr.mxu0 0.0
  %8600 = vmatpush2.msra.mxu0 %v8478
  %8601 = vmatprep.subr.mxu0 0.0
  %8602 = vmatpush2.msra.mxu0 %v8477
  %8603 = vmatprep.subr.mxu0 0.0
  %8604 = vmatpush2.msra.mxu0 %v8476
  %8605 = vmatprep.subr.mxu0 0.0
  %8606 = vmatpush2.msra.mxu0 %v8475
  %8607 = vmatprep.subr.mxu0 0.0
  %8608 = vmatpush2.msra.mxu0 %v8474
  %8609 = vmatprep.subr.mxu0 0.0
  %8610 = vmatpush2.msra.mxu0 %v8473
  %8611 = vmatprep.subr.mxu0 0.0
  %8612 = vmatpush2.msra.mxu0 %v8472
  %8613 = vmatprep.subr.mxu0 0.0
  %8614 = vmatpush2.msra.mxu0 %v8471
  %8615 = vmatprep.subr.mxu0 0.0
  %8616 = vmatpush2.msra.mxu0 %v8470
  %8617 = vmatprep.subr.mxu0 0.0
  %8618 = vmatpush2.msra.mxu0 %v8469
  %8619 = vmatprep.mubr.f32.mxu0 1.0
  %8620 = vmatmul.mubr.f32.gmra.mxu0 1.0
  %v8621 = vpop.f32.mrf.mxu0
  %v8622 = vadd.f32 %v8552, %v8621
  %v8623 = vpop.f32.mrf.mxu0
  %8624 = vdwg.mxu0
  %v8625 = vmul.f32 %v8418, 0.001953125
  %v8626 = vmul.f32 %v8622, 0.001953125
  %v8627 = vmul.f32 %v8625, %v8625
  %v8628 = vsub.f32 %v8626, %v8627
  %v8629 = vmax.f32 %v8628, 0.0
  %v8630 = vld [vmem:[%s10] sm:$0x1]
  %v8631 = vadd.f32 %v8629, 1e-05
  %v8632 = vrsqrt.pop %v8631
  %v8633 = vmul.f32 %v8630, %v8632
  %v8634 = vld [vmem:[%s11] sm:$0x1]
  %v8635 = vmul.f32 %v8625, %v8633
  %v8636 = vsub.f32 %v8634, %v8635
  %v8638 = vlaneseq
  %v8639 = vshrl.u32 %v8638, 7
  %v8640 = vsub.s32 0, %v8639
  %v8641 = vrot.slane %v8633, %v8640
  %v8643 = vmul.f32 %v8027, %v8641
  %v8644 = vmul.f32 %v8030, %v8641
  %v8645 = vmul.f32 %v8035, %v8641
  %v8646 = vmul.f32 %v8038, %v8641
  %v8647 = vmul.f32 %v8043, %v8641
  %v8648 = vmul.f32 %v8046, %v8641
  %v8649 = vmul.f32 %v8051, %v8641
  %v8650 = vmul.f32 %v8054, %v8641
  %v8651 = vmul.f32 %v8059, %v8641
  %v8652 = vmul.f32 %v8062, %v8641
  %v8653 = vmul.f32 %v8067, %v8641
  %v8654 = vmul.f32 %v8070, %v8641
  %v8655 = vmul.f32 %v8075, %v8641
  %v8656 = vmul.f32 %v8078, %v8641
  %v8657 = vmul.f32 %v8083, %v8641
  %v8658 = vmul.f32 %v8086, %v8641
  %v8659 = vmul.f32 %v8091, %v8641
  %v8660 = vmul.f32 %v8094, %v8641
  %v8661 = vmul.f32 %v8099, %v8641
  %v8662 = vmul.f32 %v8102, %v8641
  %v8663 = vmul.f32 %v8107, %v8641
  %v8664 = vmul.f32 %v8110, %v8641
  %v8665 = vmul.f32 %v8115, %v8641
  %v8666 = vmul.f32 %v8118, %v8641
  %v8667 = vmul.f32 %v8123, %v8641
  %v8668 = vmul.f32 %v8126, %v8641
  %v8669 = vmul.f32 %v8131, %v8641
  %v8670 = vmul.f32 %v8134, %v8641
  %v8671 = vmul.f32 %v8139, %v8641
  %v8672 = vmul.f32 %v8142, %v8641
  %v8673 = vmul.f32 %v8147, %v8641
  %v8674 = vmul.f32 %v8150, %v8641
  %v8675 = vmul.f32 %v8155, %v8641
  %v8676 = vmul.f32 %v8158, %v8641
  %v8677 = vmul.f32 %v8163, %v8641
  %v8678 = vmul.f32 %v8166, %v8641
  %v8679 = vmul.f32 %v8171, %v8641
  %v8680 = vmul.f32 %v8174, %v8641
  %v8681 = vmul.f32 %v8179, %v8641
  %v8682 = vmul.f32 %v8182, %v8641
  %v8683 = vmul.f32 %v8187, %v8641
  %v8684 = vmul.f32 %v8190, %v8641
  %v8685 = vmul.f32 %v8195, %v8641
  %v8686 = vmul.f32 %v8198, %v8641
  %v8687 = vmul.f32 %v8203, %v8641
  %v8688 = vmul.f32 %v8206, %v8641
  %v8689 = vmul.f32 %v8211, %v8641
  %v8690 = vmul.f32 %v8214, %v8641
  %v8691 = vmul.f32 %v8219, %v8641
  %v8692 = vmul.f32 %v8222, %v8641
  %v8693 = vmul.f32 %v8227, %v8641
  %v8694 = vmul.f32 %v8230, %v8641
  %v8695 = vmul.f32 %v8235, %v8641
  %v8696 = vmul.f32 %v8238, %v8641
  %v8697 = vmul.f32 %v8243, %v8641
  %v8698 = vmul.f32 %v8246, %v8641
  %v8699 = vmul.f32 %v8251, %v8641
  %v8700 = vmul.f32 %v8254, %v8641
  %v8701 = vmul.f32 %v8259, %v8641
  %v8702 = vmul.f32 %v8262, %v8641
  %v8703 = vmul.f32 %v8267, %v8641
  %v8704 = vmul.f32 %v8270, %v8641
  %v8705 = vmul.f32 %v8275, %v8641
  %v8706 = vmul.f32 %v8278, %v8641
  %v8708 = vlaneseq
  %v8709 = vshrl.u32 %v8708, 7
  %v8710 = vsub.s32 0, %v8709
  %v8711 = vrot.slane %v8636, %v8710
  %v8713 = vadd.f32 %v8643, %v8711
  %v8714 = vadd.f32 %v8644, %v8711
  %v8715 = vadd.f32 %v8645, %v8711
  %v8716 = vadd.f32 %v8646, %v8711
  %v8717 = vadd.f32 %v8647, %v8711
  %v8718 = vadd.f32 %v8648, %v8711
  %v8719 = vadd.f32 %v8649, %v8711
  %v8720 = vadd.f32 %v8650, %v8711
  %v8721 = vadd.f32 %v8651, %v8711
  %v8722 = vadd.f32 %v8652, %v8711
  %v8723 = vadd.f32 %v8653, %v8711
  %v8724 = vadd.f32 %v8654, %v8711
  %v8725 = vadd.f32 %v8655, %v8711
  %v8726 = vadd.f32 %v8656, %v8711
  %v8727 = vadd.f32 %v8657, %v8711
  %v8728 = vadd.f32 %v8658, %v8711
  %v8729 = vadd.f32 %v8659, %v8711
  %v8730 = vadd.f32 %v8660, %v8711
  %v8731 = vadd.f32 %v8661, %v8711
  %v8732 = vadd.f32 %v8662, %v8711
  %v8733 = vadd.f32 %v8663, %v8711
  %v8734 = vadd.f32 %v8664, %v8711
  %v8735 = vadd.f32 %v8665, %v8711
  %v8736 = vadd.f32 %v8666, %v8711
  %v8737 = vadd.f32 %v8667, %v8711
  %v8738 = vadd.f32 %v8668, %v8711
  %v8739 = vadd.f32 %v8669, %v8711
  %v8740 = vadd.f32 %v8670, %v8711
  %v8741 = vadd.f32 %v8671, %v8711
  %v8742 = vadd.f32 %v8672, %v8711
  %v8743 = vadd.f32 %v8673, %v8711
  %v8744 = vadd.f32 %v8674, %v8711
  %v8745 = vadd.f32 %v8675, %v8711
  %v8746 = vadd.f32 %v8676, %v8711
  %v8747 = vadd.f32 %v8677, %v8711
  %v8748 = vadd.f32 %v8678, %v8711
  %v8749 = vadd.f32 %v8679, %v8711
  %v8750 = vadd.f32 %v8680, %v8711
  %v8751 = vadd.f32 %v8681, %v8711
  %v8752 = vadd.f32 %v8682, %v8711
  %v8753 = vadd.f32 %v8683, %v8711
  %v8754 = vadd.f32 %v8684, %v8711
  %v8755 = vadd.f32 %v8685, %v8711
  %v8756 = vadd.f32 %v8686, %v8711
  %v8757 = vadd.f32 %v8687, %v8711
  %v8758 = vadd.f32 %v8688, %v8711
  %v8759 = vadd.f32 %v8689, %v8711
  %v8760 = vadd.f32 %v8690, %v8711
  %v8761 = vadd.f32 %v8691, %v8711
  %v8762 = vadd.f32 %v8692, %v8711
  %v8763 = vadd.f32 %v8693, %v8711
  %v8764 = vadd.f32 %v8694, %v8711
  %v8765 = vadd.f32 %v8695, %v8711
  %v8766 = vadd.f32 %v8696, %v8711
  %v8767 = vadd.f32 %v8697, %v8711
  %v8768 = vadd.f32 %v8698, %v8711
  %v8769 = vadd.f32 %v8699, %v8711
  %v8770 = vadd.f32 %v8700, %v8711
  %v8771 = vadd.f32 %v8701, %v8711
  %v8772 = vadd.f32 %v8702, %v8711
  %v8773 = vadd.f32 %v8703, %v8711
  %v8774 = vadd.f32 %v8704, %v8711
  %v8775 = vadd.f32 %v8705, %v8711
  %v8776 = vadd.f32 %v8706, %v8711
  %v8777 = vmax.f32 %v8713, 0.0
  %v8778 = vmax.f32 %v8714, 0.0
  %v8779 = vmax.f32 %v8715, 0.0
  %v8780 = vmax.f32 %v8716, 0.0
  %v8781 = vmax.f32 %v8717, 0.0
  %v8782 = vmax.f32 %v8718, 0.0
  %v8783 = vmax.f32 %v8719, 0.0
  %v8784 = vmax.f32 %v8720, 0.0
  %v8785 = vmax.f32 %v8721, 0.0
  %v8786 = vmax.f32 %v8722, 0.0
  %v8787 = vmax.f32 %v8723, 0.0
  %v8788 = vmax.f32 %v8724, 0.0
  %v8789 = vmax.f32 %v8725, 0.0
  %v8790 = vmax.f32 %v8726, 0.0
  %v8791 = vmax.f32 %v8727, 0.0
  %v8792 = vmax.f32 %v8728, 0.0
  %v8793 = vmax.f32 %v8729, 0.0
  %v8794 = vmax.f32 %v8730, 0.0
  %v8795 = vmax.f32 %v8731, 0.0
  %v8796 = vmax.f32 %v8732, 0.0
  %v8797 = vmax.f32 %v8733, 0.0
  %v8798 = vmax.f32 %v8734, 0.0
  %v8799 = vmax.f32 %v8735, 0.0
  %v8800 = vmax.f32 %v8736, 0.0
  %v8801 = vmax.f32 %v8737, 0.0
  %v8802 = vmax.f32 %v8738, 0.0
  %v8803 = vmax.f32 %v8739, 0.0
  %v8804 = vmax.f32 %v8740, 0.0
  %v8805 = vmax.f32 %v8741, 0.0
  %v8806 = vmax.f32 %v8742, 0.0
  %v8807 = vmax.f32 %v8743, 0.0
  %v8808 = vmax.f32 %v8744, 0.0
  %v8809 = vmax.f32 %v8745, 0.0
  %v8810 = vmax.f32 %v8746, 0.0
  %v8811 = vmax.f32 %v8747, 0.0
  %v8812 = vmax.f32 %v8748, 0.0
  %v8813 = vmax.f32 %v8749, 0.0
  %v8814 = vmax.f32 %v8750, 0.0
  %v8815 = vmax.f32 %v8751, 0.0
  %v8816 = vmax.f32 %v8752, 0.0
  %v8817 = vmax.f32 %v8753, 0.0
  %v8818 = vmax.f32 %v8754, 0.0
  %v8819 = vmax.f32 %v8755, 0.0
  %v8820 = vmax.f32 %v8756, 0.0
  %v8821 = vmax.f32 %v8757, 0.0
  %v8822 = vmax.f32 %v8758, 0.0
  %v8823 = vmax.f32 %v8759, 0.0
  %v8824 = vmax.f32 %v8760, 0.0
  %v8825 = vmax.f32 %v8761, 0.0
  %v8826 = vmax.f32 %v8762, 0.0
  %v8827 = vmax.f32 %v8763, 0.0
  %v8828 = vmax.f32 %v8764, 0.0
  %v8829 = vmax.f32 %v8765, 0.0
  %v8830 = vmax.f32 %v8766, 0.0
  %v8831 = vmax.f32 %v8767, 0.0
  %v8832 = vmax.f32 %v8768, 0.0
  %v8833 = vmax.f32 %v8769, 0.0
  %v8834 = vmax.f32 %v8770, 0.0
  %v8835 = vmax.f32 %v8771, 0.0
  %v8836 = vmax.f32 %v8772, 0.0
  %v8837 = vmax.f32 %v8773, 0.0
  %v8838 = vmax.f32 %v8774, 0.0
  %v8839 = vmax.f32 %v8775, 0.0
  %v8840 = vmax.f32 %v8776, 0.0
  %v8841 = vpack.c.bf16 %v8778, %v8777
  %v8842 = vpack.c.bf16 %v8780, %v8779
  %v8843 = vpack.c.bf16 %v8782, %v8781
  %v8844 = vpack.c.bf16 %v8784, %v8783
  %v8845 = vpack.c.bf16 %v8786, %v8785
  %v8846 = vpack.c.bf16 %v8788, %v8787
  %v8847 = vpack.c.bf16 %v8790, %v8789
  %v8848 = vpack.c.bf16 %v8792, %v8791
  %v8849 = vpack.c.bf16 %v8794, %v8793
  %v8850 = vpack.c.bf16 %v8796, %v8795
  %v8851 = vpack.c.bf16 %v8798, %v8797
  %v8852 = vpack.c.bf16 %v8800, %v8799
  %v8853 = vpack.c.bf16 %v8802, %v8801
  %v8854 = vpack.c.bf16 %v8804, %v8803
  %v8855 = vpack.c.bf16 %v8806, %v8805
  %v8856 = vpack.c.bf16 %v8808, %v8807
  %v8857 = vpack.c.bf16 %v8810, %v8809
  %v8858 = vpack.c.bf16 %v8812, %v8811
  %v8859 = vpack.c.bf16 %v8814, %v8813
  %v8860 = vpack.c.bf16 %v8816, %v8815
  %v8861 = vpack.c.bf16 %v8818, %v8817
  %v8862 = vpack.c.bf16 %v8820, %v8819
  %v8863 = vpack.c.bf16 %v8822, %v8821
  %v8864 = vpack.c.bf16 %v8824, %v8823
  %v8865 = vpack.c.bf16 %v8826, %v8825
  %v8866 = vpack.c.bf16 %v8828, %v8827
  %v8867 = vpack.c.bf16 %v8830, %v8829
  %v8868 = vpack.c.bf16 %v8832, %v8831
  %v8869 = vpack.c.bf16 %v8834, %v8833
  %v8870 = vpack.c.bf16 %v8836, %v8835
  %v8871 = vpack.c.bf16 %v8838, %v8837
  %v8872 = vpack.c.bf16 %v8840, %v8839
  %v8873 = vld [vmem:[%s12] sm:$0xf]
  %v8875 = vsel %vm2682, %v8841, 0
  %v8878 = vsel %vm2682, %v8842, 0
  %v8881 = vsel %vm2682, %v8843, 0
  %v8884 = vsel %vm2682, %v8844, 0
  %v8887 = vsel %vm2682, %v8845, 0
  %v8890 = vsel %vm2682, %v8846, 0
  %v8893 = vsel %vm2682, %v8847, 0
  %v8896 = vsel %vm2682, %v8848, 0
  %v8899 = vsel %vm2682, %v8849, 0
  %v8902 = vsel %vm2682, %v8850, 0
  %v8905 = vsel %vm2682, %v8851, 0
  %v8908 = vsel %vm2682, %v8852, 0
  %v8911 = vsel %vm2682, %v8853, 0
  %v8914 = vsel %vm2682, %v8854, 0
  %v8917 = vsel %vm2682, %v8855, 0
  %v8920 = vsel %vm2682, %v8856, 0
  %v8923 = vsel %vm2682, %v8857, 0
  %v8926 = vsel %vm2682, %v8858, 0
  %v8929 = vsel %vm2682, %v8859, 0
  %v8932 = vsel %vm2682, %v8860, 0
  %v8935 = vsel %vm2682, %v8861, 0
  %v8938 = vsel %vm2682, %v8862, 0
  %v8941 = vsel %vm2682, %v8863, 0
  %v8944 = vsel %vm2682, %v8864, 0
  %v8947 = vsel %vm2682, %v8865, 0
  %v8950 = vsel %vm2682, %v8866, 0
  %v8953 = vsel %vm2682, %v8867, 0
  %v8956 = vsel %vm2682, %v8868, 0
  %v8959 = vsel %vm2682, %v8869, 0
  %v8962 = vsel %vm2682, %v8870, 0
  %v8965 = vsel %vm2682, %v8871, 0
  %v8968 = vsel %vm2682, %v8872, 0
  %v8971 = vsel %vm2779, %v8873, 0
  %8973 = vmatprep.subr.bf16.mxu0 0
  %8974 = vmatpush1.bf16.msra.mxu0 0
  %8975 = vmatprep.subr.bf16.mxu0 0
  %8976 = vmatpush1.bf16.msra.mxu0 0
  %8977 = vmatprep.subr.bf16.mxu0 0
  %8978 = vmatpush1.bf16.msra.mxu0 0
  %8979 = vmatprep.subr.bf16.mxu0 0
  %8980 = vmatpush1.bf16.msra.mxu0 0
  %8981 = vmatprep.subr.bf16.mxu0 0
  %8982 = vmatpush1.bf16.msra.mxu0 0
  %8983 = vmatprep.subr.bf16.mxu0 0
  %8984 = vmatpush1.bf16.msra.mxu0 0
  %8985 = vmatprep.subr.bf16.mxu0 0
  %8986 = vmatpush1.bf16.msra.mxu0 0
  %8987 = vmatprep.subr.bf16.mxu0 0
  %8988 = vmatpush1.bf16.msra.mxu0 %v8971
  %8989 = vmatprep.subr.bf16.mxu0 0
  %8990 = vmatpush2.bf16.msra.mxu0 0
  %8991 = vmatprep.subr.bf16.mxu0 0
  %8992 = vmatpush2.bf16.msra.mxu0 0
  %8993 = vmatprep.subr.bf16.mxu0 0
  %8994 = vmatpush2.bf16.msra.mxu0 0
  %8995 = vmatprep.subr.bf16.mxu0 0
  %8996 = vmatpush2.bf16.msra.mxu0 0
  %8997 = vmatprep.subr.bf16.mxu0 0
  %8998 = vmatpush2.bf16.msra.mxu0 0
  %8999 = vmatprep.subr.bf16.mxu0 0
  %9000 = vmatpush2.bf16.msra.mxu0 0
  %9001 = vmatprep.subr.bf16.mxu0 0
  %9002 = vmatpush2.bf16.msra.mxu0 0
  %9003 = vmatprep.subr.bf16.mxu0 0
  %9004 = vmatpush2.bf16.msra.mxu0 0
  %9005 = vmatprep.mubr.bf16.mxu0 0
  %9006 = vmatmul.mubr.bf16.gmra.mxu0 %v8875
  %v9007 = vpop.f32.mrf.mxu0
  %v9008 = vadd.f32 0.0, %v9007
  %v9009 = vpop.f32.mrf.mxu0
  %v9010 = vpop.f32.mrf.mxu0
  %v9011 = vadd.f32 0.0, %v9010
  %v9012 = vpop.f32.mrf.mxu0
  %9013 = vmatprep.mubr.bf16.mxu0 0
  %9014 = vmatmul.mubr.bf16.gmra.mxu0 %v8878
  %v9015 = vpop.f32.mrf.mxu0
  %v9016 = vadd.f32 0.0, %v9015
  %v9017 = vpop.f32.mrf.mxu0
  %v9018 = vpop.f32.mrf.mxu0
  %v9019 = vadd.f32 0.0, %v9018
  %v9020 = vpop.f32.mrf.mxu0
  %9021 = vmatprep.mubr.bf16.mxu0 0
  %9022 = vmatmul.mubr.bf16.gmra.mxu0 %v8881
  %v9023 = vpop.f32.mrf.mxu0
  %v9024 = vadd.f32 0.0, %v9023
  %v9025 = vpop.f32.mrf.mxu0
  %v9026 = vpop.f32.mrf.mxu0
  %v9027 = vadd.f32 0.0, %v9026
  %v9028 = vpop.f32.mrf.mxu0
  %9029 = vmatprep.mubr.bf16.mxu0 0
  %9030 = vmatmul.mubr.bf16.gmra.mxu0 %v8884
  %v9031 = vpop.f32.mrf.mxu0
  %v9032 = vadd.f32 0.0, %v9031
  %v9033 = vpop.f32.mrf.mxu0
  %v9034 = vpop.f32.mrf.mxu0
  %v9035 = vadd.f32 0.0, %v9034
  %v9036 = vpop.f32.mrf.mxu0
  %9037 = vmatprep.mubr.bf16.mxu0 0
  %9038 = vmatmul.mubr.bf16.gmra.mxu0 %v8887
  %v9039 = vpop.f32.mrf.mxu0
  %v9040 = vadd.f32 0.0, %v9039
  %v9041 = vpop.f32.mrf.mxu0
  %v9042 = vpop.f32.mrf.mxu0
  %v9043 = vadd.f32 0.0, %v9042
  %v9044 = vpop.f32.mrf.mxu0
  %9045 = vmatprep.mubr.bf16.mxu0 0
  %9046 = vmatmul.mubr.bf16.gmra.mxu0 %v8890
  %v9047 = vpop.f32.mrf.mxu0
  %v9048 = vadd.f32 0.0, %v9047
  %v9049 = vpop.f32.mrf.mxu0
  %v9050 = vpop.f32.mrf.mxu0
  %v9051 = vadd.f32 0.0, %v9050
  %v9052 = vpop.f32.mrf.mxu0
  %9053 = vmatprep.mubr.bf16.mxu0 0
  %9054 = vmatmul.mubr.bf16.gmra.mxu0 %v8893
  %v9055 = vpop.f32.mrf.mxu0
  %v9056 = vadd.f32 0.0, %v9055
  %v9057 = vpop.f32.mrf.mxu0
  %v9058 = vpop.f32.mrf.mxu0
  %v9059 = vadd.f32 0.0, %v9058
  %v9060 = vpop.f32.mrf.mxu0
  %9061 = vmatprep.mubr.bf16.mxu0 0
  %9062 = vmatmul.mubr.bf16.gmra.mxu0 %v8896
  %v9063 = vpop.f32.mrf.mxu0
  %v9064 = vadd.f32 0.0, %v9063
  %v9065 = vpop.f32.mrf.mxu0
  %v9066 = vpop.f32.mrf.mxu0
  %v9067 = vadd.f32 0.0, %v9066
  %v9068 = vpop.f32.mrf.mxu0
  %9069 = vmatprep.mubr.bf16.mxu0 0
  %9070 = vmatmul.mubr.bf16.gmra.mxu0 %v8899
  %v9071 = vpop.f32.mrf.mxu0
  %v9072 = vadd.f32 0.0, %v9071
  %v9073 = vpop.f32.mrf.mxu0
  %v9074 = vpop.f32.mrf.mxu0
  %v9075 = vadd.f32 0.0, %v9074
  %v9076 = vpop.f32.mrf.mxu0
  %9077 = vmatprep.mubr.bf16.mxu0 0
  %9078 = vmatmul.mubr.bf16.gmra.mxu0 %v8902
  %v9079 = vpop.f32.mrf.mxu0
  %v9080 = vadd.f32 0.0, %v9079
  %v9081 = vpop.f32.mrf.mxu0
  %v9082 = vpop.f32.mrf.mxu0
  %v9083 = vadd.f32 0.0, %v9082
  %v9084 = vpop.f32.mrf.mxu0
  %9085 = vmatprep.mubr.bf16.mxu0 0
  %9086 = vmatmul.mubr.bf16.gmra.mxu0 %v8905
  %v9087 = vpop.f32.mrf.mxu0
  %v9088 = vadd.f32 0.0, %v9087
  %v9089 = vpop.f32.mrf.mxu0
  %v9090 = vpop.f32.mrf.mxu0
  %v9091 = vadd.f32 0.0, %v9090
  %v9092 = vpop.f32.mrf.mxu0
  %9093 = vmatprep.mubr.bf16.mxu0 0
  %9094 = vmatmul.mubr.bf16.gmra.mxu0 %v8908
  %v9095 = vpop.f32.mrf.mxu0
  %v9096 = vadd.f32 0.0, %v9095
  %v9097 = vpop.f32.mrf.mxu0
  %v9098 = vpop.f32.mrf.mxu0
  %v9099 = vadd.f32 0.0, %v9098
  %v9100 = vpop.f32.mrf.mxu0
  %9101 = vmatprep.mubr.bf16.mxu0 0
  %9102 = vmatmul.mubr.bf16.gmra.mxu0 %v8911
  %v9103 = vpop.f32.mrf.mxu0
  %v9104 = vadd.f32 0.0, %v9103
  %v9105 = vpop.f32.mrf.mxu0
  %v9106 = vpop.f32.mrf.mxu0
  %v9107 = vadd.f32 0.0, %v9106
  %v9108 = vpop.f32.mrf.mxu0
  %9109 = vmatprep.mubr.bf16.mxu0 0
  %9110 = vmatmul.mubr.bf16.gmra.mxu0 %v8914
  %v9111 = vpop.f32.mrf.mxu0
  %v9112 = vadd.f32 0.0, %v9111
  %v9113 = vpop.f32.mrf.mxu0
  %v9114 = vpop.f32.mrf.mxu0
  %v9115 = vadd.f32 0.0, %v9114
  %v9116 = vpop.f32.mrf.mxu0
  %9117 = vmatprep.mubr.bf16.mxu0 0
  %9118 = vmatmul.mubr.bf16.gmra.mxu0 %v8917
  %v9119 = vpop.f32.mrf.mxu0
  %v9120 = vadd.f32 0.0, %v9119
  %v9121 = vpop.f32.mrf.mxu0
  %v9122 = vpop.f32.mrf.mxu0
  %v9123 = vadd.f32 0.0, %v9122
  %v9124 = vpop.f32.mrf.mxu0
  %9125 = vmatprep.mubr.bf16.mxu0 0
  %9126 = vmatmul.mubr.bf16.gmra.mxu0 %v8920
  %v9127 = vpop.f32.mrf.mxu0
  %v9128 = vadd.f32 0.0, %v9127
  %v9129 = vpop.f32.mrf.mxu0
  %v9130 = vpop.f32.mrf.mxu0
  %v9131 = vadd.f32 0.0, %v9130
  %v9132 = vpop.f32.mrf.mxu0
  %9133 = vmatprep.mubr.bf16.mxu0 0
  %9134 = vmatmul.mubr.bf16.gmra.mxu0 %v8923
  %v9135 = vpop.f32.mrf.mxu0
  %v9136 = vadd.f32 0.0, %v9135
  %v9137 = vpop.f32.mrf.mxu0
  %v9138 = vpop.f32.mrf.mxu0
  %v9139 = vadd.f32 0.0, %v9138
  %v9140 = vpop.f32.mrf.mxu0
  %9141 = vmatprep.mubr.bf16.mxu0 0
  %9142 = vmatmul.mubr.bf16.gmra.mxu0 %v8926
  %v9143 = vpop.f32.mrf.mxu0
  %v9144 = vadd.f32 0.0, %v9143
  %v9145 = vpop.f32.mrf.mxu0
  %v9146 = vpop.f32.mrf.mxu0
  %v9147 = vadd.f32 0.0, %v9146
  %v9148 = vpop.f32.mrf.mxu0
  %9149 = vmatprep.mubr.bf16.mxu0 0
  %9150 = vmatmul.mubr.bf16.gmra.mxu0 %v8929
  %v9151 = vpop.f32.mrf.mxu0
  %v9152 = vadd.f32 0.0, %v9151
  %v9153 = vpop.f32.mrf.mxu0
  %v9154 = vpop.f32.mrf.mxu0
  %v9155 = vadd.f32 0.0, %v9154
  %v9156 = vpop.f32.mrf.mxu0
  %9157 = vmatprep.mubr.bf16.mxu0 0
  %9158 = vmatmul.mubr.bf16.gmra.mxu0 %v8932
  %v9159 = vpop.f32.mrf.mxu0
  %v9160 = vadd.f32 0.0, %v9159
  %v9161 = vpop.f32.mrf.mxu0
  %v9162 = vpop.f32.mrf.mxu0
  %v9163 = vadd.f32 0.0, %v9162
  %v9164 = vpop.f32.mrf.mxu0
  %9165 = vmatprep.mubr.bf16.mxu0 0
  %9166 = vmatmul.mubr.bf16.gmra.mxu0 %v8935
  %v9167 = vpop.f32.mrf.mxu0
  %v9168 = vadd.f32 0.0, %v9167
  %v9169 = vpop.f32.mrf.mxu0
  %v9170 = vpop.f32.mrf.mxu0
  %v9171 = vadd.f32 0.0, %v9170
  %v9172 = vpop.f32.mrf.mxu0
  %9173 = vmatprep.mubr.bf16.mxu0 0
  %9174 = vmatmul.mubr.bf16.gmra.mxu0 %v8938
  %v9175 = vpop.f32.mrf.mxu0
  %v9176 = vadd.f32 0.0, %v9175
  %v9177 = vpop.f32.mrf.mxu0
  %v9178 = vpop.f32.mrf.mxu0
  %v9179 = vadd.f32 0.0, %v9178
  %v9180 = vpop.f32.mrf.mxu0
  %9181 = vmatprep.mubr.bf16.mxu0 0
  %9182 = vmatmul.mubr.bf16.gmra.mxu0 %v8941
  %v9183 = vpop.f32.mrf.mxu0
  %v9184 = vadd.f32 0.0, %v9183
  %v9185 = vpop.f32.mrf.mxu0
  %v9186 = vpop.f32.mrf.mxu0
  %v9187 = vadd.f32 0.0, %v9186
  %v9188 = vpop.f32.mrf.mxu0
  %9189 = vmatprep.mubr.bf16.mxu0 0
  %9190 = vmatmul.mubr.bf16.gmra.mxu0 %v8944
  %v9191 = vpop.f32.mrf.mxu0
  %v9192 = vadd.f32 0.0, %v9191
  %v9193 = vpop.f32.mrf.mxu0
  %v9194 = vpop.f32.mrf.mxu0
  %v9195 = vadd.f32 0.0, %v9194
  %v9196 = vpop.f32.mrf.mxu0
  %9197 = vmatprep.mubr.bf16.mxu0 0
  %9198 = vmatmul.mubr.bf16.gmra.mxu0 %v8947
  %v9199 = vpop.f32.mrf.mxu0
  %v9200 = vadd.f32 0.0, %v9199
  %v9201 = vpop.f32.mrf.mxu0
  %v9202 = vpop.f32.mrf.mxu0
  %v9203 = vadd.f32 0.0, %v9202
  %v9204 = vpop.f32.mrf.mxu0
  %9205 = vmatprep.mubr.bf16.mxu0 0
  %9206 = vmatmul.mubr.bf16.gmra.mxu0 %v8950
  %v9207 = vpop.f32.mrf.mxu0
  %v9208 = vadd.f32 0.0, %v9207
  %v9209 = vpop.f32.mrf.mxu0
  %v9210 = vpop.f32.mrf.mxu0
  %v9211 = vadd.f32 0.0, %v9210
  %v9212 = vpop.f32.mrf.mxu0
  %9213 = vmatprep.mubr.bf16.mxu0 0
  %9214 = vmatmul.mubr.bf16.gmra.mxu0 %v8953
  %v9215 = vpop.f32.mrf.mxu0
  %v9216 = vadd.f32 0.0, %v9215
  %v9217 = vpop.f32.mrf.mxu0
  %v9218 = vpop.f32.mrf.mxu0
  %v9219 = vadd.f32 0.0, %v9218
  %v9220 = vpop.f32.mrf.mxu0
  %9221 = vmatprep.mubr.bf16.mxu0 0
  %9222 = vmatmul.mubr.bf16.gmra.mxu0 %v8956
  %v9223 = vpop.f32.mrf.mxu0
  %v9224 = vadd.f32 0.0, %v9223
  %v9225 = vpop.f32.mrf.mxu0
  %v9226 = vpop.f32.mrf.mxu0
  %v9227 = vadd.f32 0.0, %v9226
  %v9228 = vpop.f32.mrf.mxu0
  %9229 = vmatprep.mubr.bf16.mxu0 0
  %9230 = vmatmul.mubr.bf16.gmra.mxu0 %v8959
  %v9231 = vpop.f32.mrf.mxu0
  %v9232 = vadd.f32 0.0, %v9231
  %v9233 = vpop.f32.mrf.mxu0
  %v9234 = vpop.f32.mrf.mxu0
  %v9235 = vadd.f32 0.0, %v9234
  %v9236 = vpop.f32.mrf.mxu0
  %9237 = vmatprep.mubr.bf16.mxu0 0
  %9238 = vmatmul.mubr.bf16.gmra.mxu0 %v8962
  %v9239 = vpop.f32.mrf.mxu0
  %v9240 = vadd.f32 0.0, %v9239
  %v9241 = vpop.f32.mrf.mxu0
  %v9242 = vpop.f32.mrf.mxu0
  %v9243 = vadd.f32 0.0, %v9242
  %v9244 = vpop.f32.mrf.mxu0
  %9245 = vmatprep.mubr.bf16.mxu0 0
  %9246 = vmatmul.mubr.bf16.gmra.mxu0 %v8965
  %v9247 = vpop.f32.mrf.mxu0
  %v9248 = vadd.f32 0.0, %v9247
  %v9249 = vpop.f32.mrf.mxu0
  %v9250 = vpop.f32.mrf.mxu0
  %v9251 = vadd.f32 0.0, %v9250
  %v9252 = vpop.f32.mrf.mxu0
  %9253 = vmatprep.mubr.bf16.mxu0 0
  %9254 = vmatmul.mubr.bf16.gmra.mxu0 %v8968
  %v9255 = vpop.f32.mrf.mxu0
  %v9256 = vadd.f32 0.0, %v9255
  %v9257 = vpop.f32.mrf.mxu0
  %v9258 = vpop.f32.mrf.mxu0
  %v9259 = vadd.f32 0.0, %v9258
  %v9260 = vpop.f32.mrf.mxu0
  %9261 = vdwg.mxu0
  %9326 = vrot.lane.b32.xlu0 %v9008, 112
  %v9327 = vpop.permute.xlu0 %9326
  %9328 = vrot.lane.b32.xlu0 %v9011, 112
  %v9329 = vpop.permute.xlu0 %9328
  %9330 = vrot.lane.b32.xlu0 %v9016, 112
  %v9331 = vpop.permute.xlu0 %9330
  %9332 = vrot.lane.b32.xlu0 %v9019, 112
  %v9333 = vpop.permute.xlu0 %9332
  %9334 = vrot.lane.b32.xlu0 %v9024, 112
  %v9335 = vpop.permute.xlu0 %9334
  %9336 = vrot.lane.b32.xlu0 %v9027, 112
  %v9337 = vpop.permute.xlu0 %9336
  %9338 = vrot.lane.b32.xlu0 %v9032, 112
  %v9339 = vpop.permute.xlu0 %9338
  %9340 = vrot.lane.b32.xlu0 %v9035, 112
  %v9341 = vpop.permute.xlu0 %9340
  %9342 = vrot.lane.b32.xlu0 %v9040, 112
  %v9343 = vpop.permute.xlu0 %9342
  %9344 = vrot.lane.b32.xlu0 %v9043, 112
  %v9345 = vpop.permute.xlu0 %9344
  %9346 = vrot.lane.b32.xlu0 %v9048, 112
  %v9347 = vpop.permute.xlu0 %9346
  %9348 = vrot.lane.b32.xlu0 %v9051, 112
  %v9349 = vpop.permute.xlu0 %9348
  %9350 = vrot.lane.b32.xlu0 %v9056, 112
  %v9351 = vpop.permute.xlu0 %9350
  %9352 = vrot.lane.b32.xlu0 %v9059, 112
  %v9353 = vpop.permute.xlu0 %9352
  %9354 = vrot.lane.b32.xlu0 %v9064, 112
  %v9355 = vpop.permute.xlu0 %9354
  %9356 = vrot.lane.b32.xlu0 %v9067, 112
  %v9357 = vpop.permute.xlu0 %9356
  %9358 = vrot.lane.b32.xlu0 %v9072, 112
  %v9359 = vpop.permute.xlu0 %9358
  %9360 = vrot.lane.b32.xlu0 %v9075, 112
  %v9361 = vpop.permute.xlu0 %9360
  %9362 = vrot.lane.b32.xlu0 %v9080, 112
  %v9363 = vpop.permute.xlu0 %9362
  %9364 = vrot.lane.b32.xlu0 %v9083, 112
  %v9365 = vpop.permute.xlu0 %9364
  %9366 = vrot.lane.b32.xlu0 %v9088, 112
  %v9367 = vpop.permute.xlu0 %9366
  %9368 = vrot.lane.b32.xlu0 %v9091, 112
  %v9369 = vpop.permute.xlu0 %9368
  %9370 = vrot.lane.b32.xlu0 %v9096, 112
  %v9371 = vpop.permute.xlu0 %9370
  %9372 = vrot.lane.b32.xlu0 %v9099, 112
  %v9373 = vpop.permute.xlu0 %9372
  %9374 = vrot.lane.b32.xlu0 %v9104, 112
  %v9375 = vpop.permute.xlu0 %9374
  %9376 = vrot.lane.b32.xlu0 %v9107, 112
  %v9377 = vpop.permute.xlu0 %9376
  %9378 = vrot.lane.b32.xlu0 %v9112, 112
  %v9379 = vpop.permute.xlu0 %9378
  %9380 = vrot.lane.b32.xlu0 %v9115, 112
  %v9381 = vpop.permute.xlu0 %9380
  %9382 = vrot.lane.b32.xlu0 %v9120, 112
  %v9383 = vpop.permute.xlu0 %9382
  %9384 = vrot.lane.b32.xlu0 %v9123, 112
  %v9385 = vpop.permute.xlu0 %9384
  %9386 = vrot.lane.b32.xlu0 %v9128, 112
  %v9387 = vpop.permute.xlu0 %9386
  %9388 = vrot.lane.b32.xlu0 %v9131, 112
  %v9389 = vpop.permute.xlu0 %9388
  %9390 = vrot.lane.b32.xlu0 %v9136, 112
  %v9391 = vpop.permute.xlu0 %9390
  %9392 = vrot.lane.b32.xlu0 %v9139, 112
  %v9393 = vpop.permute.xlu0 %9392
  %9394 = vrot.lane.b32.xlu0 %v9144, 112
  %v9395 = vpop.permute.xlu0 %9394
  %9396 = vrot.lane.b32.xlu0 %v9147, 112
  %v9397 = vpop.permute.xlu0 %9396
  %9398 = vrot.lane.b32.xlu0 %v9152, 112
  %v9399 = vpop.permute.xlu0 %9398
  %9400 = vrot.lane.b32.xlu0 %v9155, 112
  %v9401 = vpop.permute.xlu0 %9400
  %9402 = vrot.lane.b32.xlu0 %v9160, 112
  %v9403 = vpop.permute.xlu0 %9402
  %9404 = vrot.lane.b32.xlu0 %v9163, 112
  %v9405 = vpop.permute.xlu0 %9404
  %9406 = vrot.lane.b32.xlu0 %v9168, 112
  %v9407 = vpop.permute.xlu0 %9406
  %9408 = vrot.lane.b32.xlu0 %v9171, 112
  %v9409 = vpop.permute.xlu0 %9408
  %9410 = vrot.lane.b32.xlu0 %v9176, 112
  %v9411 = vpop.permute.xlu0 %9410
  %9412 = vrot.lane.b32.xlu0 %v9179, 112
  %v9413 = vpop.permute.xlu0 %9412
  %9414 = vrot.lane.b32.xlu0 %v9184, 112
  %v9415 = vpop.permute.xlu0 %9414
  %9416 = vrot.lane.b32.xlu0 %v9187, 112
  %v9417 = vpop.permute.xlu0 %9416
  %9418 = vrot.lane.b32.xlu0 %v9192, 112
  %v9419 = vpop.permute.xlu0 %9418
  %9420 = vrot.lane.b32.xlu0 %v9195, 112
  %v9421 = vpop.permute.xlu0 %9420
  %9422 = vrot.lane.b32.xlu0 %v9200, 112
  %v9423 = vpop.permute.xlu0 %9422
  %9424 = vrot.lane.b32.xlu0 %v9203, 112
  %v9425 = vpop.permute.xlu0 %9424
  %9426 = vrot.lane.b32.xlu0 %v9208, 112
  %v9427 = vpop.permute.xlu0 %9426
  %9428 = vrot.lane.b32.xlu0 %v9211, 112
  %v9429 = vpop.permute.xlu0 %9428
  %9430 = vrot.lane.b32.xlu0 %v9216, 112
  %v9431 = vpop.permute.xlu0 %9430
  %9432 = vrot.lane.b32.xlu0 %v9219, 112
  %v9433 = vpop.permute.xlu0 %9432
  %9434 = vrot.lane.b32.xlu0 %v9224, 112
  %v9435 = vpop.permute.xlu0 %9434
  %9436 = vrot.lane.b32.xlu0 %v9227, 112
  %v9437 = vpop.permute.xlu0 %9436
  %9438 = vrot.lane.b32.xlu0 %v9232, 112
  %v9439 = vpop.permute.xlu0 %9438
  %9440 = vrot.lane.b32.xlu0 %v9235, 112
  %v9441 = vpop.permute.xlu0 %9440
  %9442 = vrot.lane.b32.xlu0 %v9240, 112
  %v9443 = vpop.permute.xlu0 %9442
  %9444 = vrot.lane.b32.xlu0 %v9243, 112
  %v9445 = vpop.permute.xlu0 %9444
  %9446 = vrot.lane.b32.xlu0 %v9248, 112
  %v9447 = vpop.permute.xlu0 %9446
  %9448 = vrot.lane.b32.xlu0 %v9251, 112
  %v9449 = vpop.permute.xlu0 %9448
  %9450 = vrot.lane.b32.xlu0 %v9256, 112
  %v9451 = vpop.permute.xlu0 %9450
  %9452 = vrot.lane.b32.xlu0 %v9259, 112
  %v9453 = vpop.permute.xlu0 %9452
  %9518 = vst.msk [vmem:[#allocation2] sm:$0xff] %vm1699, %v9327
  %9519 = vst.msk [vmem:[#allocation2 + $0x8] sm:$0xff] %vm1699, %v9329
  %9520 = vst.msk [vmem:[#allocation2 + $0x10] sm:$0xff] %vm1699, %v9331
  %9521 = vst.msk [vmem:[#allocation2 + $0x18] sm:$0xff] %vm1699, %v9333
  %9522 = vst.msk [vmem:[#allocation2 + $0x20] sm:$0xff] %vm1699, %v9335
  %9523 = vst.msk [vmem:[#allocation2 + $0x28] sm:$0xff] %vm1699, %v9337
  %9524 = vst.msk [vmem:[#allocation2 + $0x30] sm:$0xff] %vm1699, %v9339
  %9525 = vst.msk [vmem:[#allocation2 + $0x38] sm:$0xff] %vm1699, %v9341
  %9526 = vst.msk [vmem:[#allocation2 + $0x40] sm:$0xff] %vm1699, %v9343
  %9527 = vst.msk [vmem:[#allocation2 + $0x48] sm:$0xff] %vm1699, %v9345
  %9528 = vst.msk [vmem:[#allocation2 + $0x50] sm:$0xff] %vm1699, %v9347
  %9529 = vst.msk [vmem:[#allocation2 + $0x58] sm:$0xff] %vm1699, %v9349
  %9530 = vst.msk [vmem:[#allocation2 + $0x60] sm:$0xff] %vm1699, %v9351
  %9531 = vst.msk [vmem:[#allocation2 + $0x68] sm:$0xff] %vm1699, %v9353
  %9532 = vst.msk [vmem:[#allocation2 + $0x70] sm:$0xff] %vm1699, %v9355
  %9533 = vst.msk [vmem:[#allocation2 + $0x78] sm:$0xff] %vm1699, %v9357
  %9534 = vst.msk [vmem:[#allocation2 + $0x80] sm:$0xff] %vm1699, %v9359
  %9535 = vst.msk [vmem:[#allocation2 + $0x88] sm:$0xff] %vm1699, %v9361
  %9536 = vst.msk [vmem:[#allocation2 + $0x90] sm:$0xff] %vm1699, %v9363
  %9537 = vst.msk [vmem:[#allocation2 + $0x98] sm:$0xff] %vm1699, %v9365
  %9538 = vst.msk [vmem:[#allocation2 + $0xa0] sm:$0xff] %vm1699, %v9367
  %9539 = vst.msk [vmem:[#allocation2 + $0xa8] sm:$0xff] %vm1699, %v9369
  %9540 = vst.msk [vmem:[#allocation2 + $0xb0] sm:$0xff] %vm1699, %v9371
  %9541 = vst.msk [vmem:[#allocation2 + $0xb8] sm:$0xff] %vm1699, %v9373
  %9542 = vst.msk [vmem:[#allocation2 + $0xc0] sm:$0xff] %vm1699, %v9375
  %9543 = vst.msk [vmem:[#allocation2 + $0xc8] sm:$0xff] %vm1699, %v9377
  %9544 = vst.msk [vmem:[#allocation2 + $0xd0] sm:$0xff] %vm1699, %v9379
  %9545 = vst.msk [vmem:[#allocation2 + $0xd8] sm:$0xff] %vm1699, %v9381
  %9546 = vst.msk [vmem:[#allocation2 + $0xe0] sm:$0xff] %vm1699, %v9383
  %9547 = vst.msk [vmem:[#allocation2 + $0xe8] sm:$0xff] %vm1699, %v9385
  %9548 = vst.msk [vmem:[#allocation2 + $0xf0] sm:$0xff] %vm1699, %v9387
  %9549 = vst.msk [vmem:[#allocation2 + $0xf8] sm:$0xff] %vm1699, %v9389
  %9550 = vst.msk [vmem:[#allocation2 + $0x100] sm:$0xff] %vm1699, %v9391
  %9551 = vst.msk [vmem:[#allocation2 + $0x108] sm:$0xff] %vm1699, %v9393
  %9552 = vst.msk [vmem:[#allocation2 + $0x110] sm:$0xff] %vm1699, %v9395
  %9553 = vst.msk [vmem:[#allocation2 + $0x118] sm:$0xff] %vm1699, %v9397
  %9554 = vst.msk [vmem:[#allocation2 + $0x120] sm:$0xff] %vm1699, %v9399
  %9555 = vst.msk [vmem:[#allocation2 + $0x128] sm:$0xff] %vm1699, %v9401
  %9556 = vst.msk [vmem:[#allocation2 + $0x130] sm:$0xff] %vm1699, %v9403
  %9557 = vst.msk [vmem:[#allocation2 + $0x138] sm:$0xff] %vm1699, %v9405
  %9558 = vst.msk [vmem:[#allocation2 + $0x140] sm:$0xff] %vm1699, %v9407
  %9559 = vst.msk [vmem:[#allocation2 + $0x148] sm:$0xff] %vm1699, %v9409
  %9560 = vst.msk [vmem:[#allocation2 + $0x150] sm:$0xff] %vm1699, %v9411
  %9561 = vst.msk [vmem:[#allocation2 + $0x158] sm:$0xff] %vm1699, %v9413
  %9562 = vst.msk [vmem:[#allocation2 + $0x160] sm:$0xff] %vm1699, %v9415
  %9563 = vst.msk [vmem:[#allocation2 + $0x168] sm:$0xff] %vm1699, %v9417
  %9564 = vst.msk [vmem:[#allocation2 + $0x170] sm:$0xff] %vm1699, %v9419
  %9565 = vst.msk [vmem:[#allocation2 + $0x178] sm:$0xff] %vm1699, %v9421
  %9566 = vst.msk [vmem:[#allocation2 + $0x180] sm:$0xff] %vm1699, %v9423
  %9567 = vst.msk [vmem:[#allocation2 + $0x188] sm:$0xff] %vm1699, %v9425
  %9568 = vst.msk [vmem:[#allocation2 + $0x190] sm:$0xff] %vm1699, %v9427
  %9569 = vst.msk [vmem:[#allocation2 + $0x198] sm:$0xff] %vm1699, %v9429
  %9570 = vst.msk [vmem:[#allocation2 + $0x1a0] sm:$0xff] %vm1699, %v9431
  %9571 = vst.msk [vmem:[#allocation2 + $0x1a8] sm:$0xff] %vm1699, %v9433
  %9572 = vst.msk [vmem:[#allocation2 + $0x1b0] sm:$0xff] %vm1699, %v9435
  %9573 = vst.msk [vmem:[#allocation2 + $0x1b8] sm:$0xff] %vm1699, %v9437
  %9574 = vst.msk [vmem:[#allocation2 + $0x1c0] sm:$0xff] %vm1699, %v9439
  %9575 = vst.msk [vmem:[#allocation2 + $0x1c8] sm:$0xff] %vm1699, %v9441
  %9576 = vst.msk [vmem:[#allocation2 + $0x1d0] sm:$0xff] %vm1699, %v9443
  %9577 = vst.msk [vmem:[#allocation2 + $0x1d8] sm:$0xff] %vm1699, %v9445
  %9578 = vst.msk [vmem:[#allocation2 + $0x1e0] sm:$0xff] %vm1699, %v9447
  %9579 = vst.msk [vmem:[#allocation2 + $0x1e8] sm:$0xff] %vm1699, %v9449
  %9580 = vst.msk [vmem:[#allocation2 + $0x1f0] sm:$0xff] %vm1699, %v9451
  %9581 = vst.msk [vmem:[#allocation2 + $0x1f8] sm:$0xff] %vm1699, %v9453
  %v9582 = vld [vmem:[%s3392 + $0x1] sm:$0xff]
  %v9583 = vld [vmem:[%s3392 + $0x9] sm:$0x7f]
  %v9584 = vld [vmem:[%s3392 + $0x11] sm:$0xff]
  %v9585 = vld [vmem:[%s3392 + $0x19] sm:$0x7f]
  %v9586 = vld [vmem:[%s3392 + $0x21] sm:$0xff]
  %v9587 = vld [vmem:[%s3392 + $0x29] sm:$0x7f]
  %v9588 = vld [vmem:[%s3392 + $0x31] sm:$0xff]
  %v9589 = vld [vmem:[%s3392 + $0x39] sm:$0x7f]
  %v9590 = vld [vmem:[%s3392 + $0x41] sm:$0xff]
  %v9591 = vld [vmem:[%s3392 + $0x49] sm:$0x7f]
  %v9592 = vld [vmem:[%s3392 + $0x51] sm:$0xff]
  %v9593 = vld [vmem:[%s3392 + $0x59] sm:$0x7f]
  %v9594 = vld [vmem:[%s3392 + $0x61] sm:$0xff]
  %v9595 = vld [vmem:[%s3392 + $0x69] sm:$0x7f]
  %v9596 = vld [vmem:[%s3392 + $0x71] sm:$0xff]
  %v9597 = vld [vmem:[%s3392 + $0x79] sm:$0x7f]
  %v9598 = vld [vmem:[%s3392 + $0x81] sm:$0xff]
  %v9599 = vld [vmem:[%s3392 + $0x89] sm:$0x7f]
  %v9600 = vld [vmem:[%s3392 + $0x91] sm:$0xff]
  %v9601 = vld [vmem:[%s3392 + $0x99] sm:$0x7f]
  %v9602 = vld [vmem:[%s3392 + $0xa1] sm:$0xff]
  %v9603 = vld [vmem:[%s3392 + $0xa9] sm:$0x7f]
  %v9604 = vld [vmem:[%s3392 + $0xb1] sm:$0xff]
  %v9605 = vld [vmem:[%s3392 + $0xb9] sm:$0x7f]
  %v9606 = vld [vmem:[%s3392 + $0xc1] sm:$0xff]
  %v9607 = vld [vmem:[%s3392 + $0xc9] sm:$0x7f]
  %v9608 = vld [vmem:[%s3392 + $0xd1] sm:$0xff]
  %v9609 = vld [vmem:[%s3392 + $0xd9] sm:$0x7f]
  %v9610 = vld [vmem:[%s3392 + $0xe1] sm:$0xff]
  %v9611 = vld [vmem:[%s3392 + $0xe9] sm:$0x7f]
  %v9612 = vld [vmem:[%s3392 + $0x101] sm:$0xff]
  %v9613 = vld [vmem:[%s3392 + $0x109] sm:$0x7f]
  %v9614 = vld [vmem:[%s3392 + $0x111] sm:$0xff]
  %v9615 = vld [vmem:[%s3392 + $0x119] sm:$0x7f]
  %v9616 = vld [vmem:[%s3392 + $0x121] sm:$0xff]
  %v9617 = vld [vmem:[%s3392 + $0x129] sm:$0x7f]
  %v9618 = vld [vmem:[%s3392 + $0x131] sm:$0xff]
  %v9619 = vld [vmem:[%s3392 + $0x139] sm:$0x7f]
  %v9620 = vld [vmem:[%s3392 + $0x141] sm:$0xff]
  %v9621 = vld [vmem:[%s3392 + $0x149] sm:$0x7f]
  %v9622 = vld [vmem:[%s3392 + $0x151] sm:$0xff]
  %v9623 = vld [vmem:[%s3392 + $0x159] sm:$0x7f]
  %v9624 = vld [vmem:[%s3392 + $0x161] sm:$0xff]
  %v9625 = vld [vmem:[%s3392 + $0x169] sm:$0x7f]
  %v9626 = vld [vmem:[%s3392 + $0x171] sm:$0xff]
  %v9627 = vld [vmem:[%s3392 + $0x179] sm:$0x7f]
  %v9628 = vld [vmem:[%s3392 + $0x181] sm:$0xff]
  %v9629 = vld [vmem:[%s3392 + $0x189] sm:$0x7f]
  %v9630 = vld [vmem:[%s3392 + $0x191] sm:$0xff]
  %v9631 = vld [vmem:[%s3392 + $0x199] sm:$0x7f]
  %v9632 = vld [vmem:[%s3392 + $0x1a1] sm:$0xff]
  %v9633 = vld [vmem:[%s3392 + $0x1a9] sm:$0x7f]
  %v9634 = vld [vmem:[%s3392 + $0x1b1] sm:$0xff]
  %v9635 = vld [vmem:[%s3392 + $0x1b9] sm:$0x7f]
  %v9636 = vld [vmem:[%s3392 + $0x1c1] sm:$0xff]
  %v9637 = vld [vmem:[%s3392 + $0x1c9] sm:$0x7f]
  %v9638 = vld [vmem:[%s3392 + $0x1d1] sm:$0xff]
  %v9639 = vld [vmem:[%s3392 + $0x1d9] sm:$0x7f]
  %v9640 = vld [vmem:[%s3392 + $0x1e1] sm:$0xff]
  %v9641 = vld [vmem:[%s3392 + $0x1e9] sm:$0x7f]
  %v9642 = vadd.f32 %v9582, %v9008
  %v9643 = vadd.f32 %v9583, %v9011
  %v9644 = vadd.f32 %v9584, %v9016
  %v9645 = vadd.f32 %v9585, %v9019
  %v9646 = vadd.f32 %v9586, %v9024
  %v9647 = vadd.f32 %v9587, %v9027
  %v9648 = vadd.f32 %v9588, %v9032
  %v9649 = vadd.f32 %v9589, %v9035
  %v9650 = vadd.f32 %v9590, %v9040
  %v9651 = vadd.f32 %v9591, %v9043
  %v9652 = vadd.f32 %v9592, %v9048
  %v9653 = vadd.f32 %v9593, %v9051
  %v9654 = vadd.f32 %v9594, %v9056
  %v9655 = vadd.f32 %v9595, %v9059
  %v9656 = vadd.f32 %v9596, %v9064
  %v9657 = vadd.f32 %v9597, %v9067
  %v9658 = vadd.f32 %v9598, %v9072
  %v9659 = vadd.f32 %v9599, %v9075
  %v9660 = vadd.f32 %v9600, %v9080
  %v9661 = vadd.f32 %v9601, %v9083
  %v9662 = vadd.f32 %v9602, %v9088
  %v9663 = vadd.f32 %v9603, %v9091
  %v9664 = vadd.f32 %v9604, %v9096
  %v9665 = vadd.f32 %v9605, %v9099
  %v9666 = vadd.f32 %v9606, %v9104
  %v9667 = vadd.f32 %v9607, %v9107
  %v9668 = vadd.f32 %v9608, %v9112
  %v9669 = vadd.f32 %v9609, %v9115
  %v9670 = vadd.f32 %v9610, %v9120
  %v9671 = vadd.f32 %v9611, %v9123
  %v9672 = vadd.f32 %v9612, %v9136
  %v9673 = vadd.f32 %v9613, %v9139
  %v9674 = vadd.f32 %v9614, %v9144
  %v9675 = vadd.f32 %v9615, %v9147
  %v9676 = vadd.f32 %v9616, %v9152
  %v9677 = vadd.f32 %v9617, %v9155
  %v9678 = vadd.f32 %v9618, %v9160
  %v9679 = vadd.f32 %v9619, %v9163
  %v9680 = vadd.f32 %v9620, %v9168
  %v9681 = vadd.f32 %v9621, %v9171
  %v9682 = vadd.f32 %v9622, %v9176
  %v9683 = vadd.f32 %v9623, %v9179
  %v9684 = vadd.f32 %v9624, %v9184
  %v9685 = vadd.f32 %v9625, %v9187
  %v9686 = vadd.f32 %v9626, %v9192
  %v9687 = vadd.f32 %v9627, %v9195
  %v9688 = vadd.f32 %v9628, %v9200
  %v9689 = vadd.f32 %v9629, %v9203
  %v9690 = vadd.f32 %v9630, %v9208
  %v9691 = vadd.f32 %v9631, %v9211
  %v9692 = vadd.f32 %v9632, %v9216
  %v9693 = vadd.f32 %v9633, %v9219
  %v9694 = vadd.f32 %v9634, %v9224
  %v9695 = vadd.f32 %v9635, %v9227
  %v9696 = vadd.f32 %v9636, %v9232
  %v9697 = vadd.f32 %v9637, %v9235
  %v9698 = vadd.f32 %v9638, %v9240
  %v9699 = vadd.f32 %v9639, %v9243
  %v9700 = vadd.f32 %v9640, %v9248
  %v9701 = vadd.f32 %v9641, %v9251
  %9702 = vst.msk [vmem:[%s3392 + $0x1] sm:$0xff] %vm1699, %v9642
  %9703 = vst.msk [vmem:[%s3392 + $0x9] sm:$0x7f] %vm3514, %v9643
  %9704 = vst.msk [vmem:[%s3392 + $0x11] sm:$0xff] %vm1699, %v9644
  %9705 = vst.msk [vmem:[%s3392 + $0x19] sm:$0x7f] %vm3514, %v9645
  %9706 = vst.msk [vmem:[%s3392 + $0x21] sm:$0xff] %vm1699, %v9646
  %9707 = vst.msk [vmem:[%s3392 + $0x29] sm:$0x7f] %vm3514, %v9647
  %9708 = vst.msk [vmem:[%s3392 + $0x31] sm:$0xff] %vm1699, %v9648
  %9709 = vst.msk [vmem:[%s3392 + $0x39] sm:$0x7f] %vm3514, %v9649
  %9710 = vst.msk [vmem:[%s3392 + $0x41] sm:$0xff] %vm1699, %v9650
  %9711 = vst.msk [vmem:[%s3392 + $0x49] sm:$0x7f] %vm3514, %v9651
  %9712 = vst.msk [vmem:[%s3392 + $0x51] sm:$0xff] %vm1699, %v9652
  %9713 = vst.msk [vmem:[%s3392 + $0x59] sm:$0x7f] %vm3514, %v9653
  %9714 = vst.msk [vmem:[%s3392 + $0x61] sm:$0xff] %vm1699, %v9654
  %9715 = vst.msk [vmem:[%s3392 + $0x69] sm:$0x7f] %vm3514, %v9655
  %9716 = vst.msk [vmem:[%s3392 + $0x71] sm:$0xff] %vm1699, %v9656
  %9717 = vst.msk [vmem:[%s3392 + $0x79] sm:$0x7f] %vm3514, %v9657
  %9718 = vst.msk [vmem:[%s3392 + $0x81] sm:$0xff] %vm1699, %v9658
  %9719 = vst.msk [vmem:[%s3392 + $0x89] sm:$0x7f] %vm3514, %v9659
  %9720 = vst.msk [vmem:[%s3392 + $0x91] sm:$0xff] %vm1699, %v9660
  %9721 = vst.msk [vmem:[%s3392 + $0x99] sm:$0x7f] %vm3514, %v9661
  %9722 = vst.msk [vmem:[%s3392 + $0xa1] sm:$0xff] %vm1699, %v9662
  %9723 = vst.msk [vmem:[%s3392 + $0xa9] sm:$0x7f] %vm3514, %v9663
  %9724 = vst.msk [vmem:[%s3392 + $0xb1] sm:$0xff] %vm1699, %v9664
  %9725 = vst.msk [vmem:[%s3392 + $0xb9] sm:$0x7f] %vm3514, %v9665
  %9726 = vst.msk [vmem:[%s3392 + $0xc1] sm:$0xff] %vm1699, %v9666
  %9727 = vst.msk [vmem:[%s3392 + $0xc9] sm:$0x7f] %vm3514, %v9667
  %9728 = vst.msk [vmem:[%s3392 + $0xd1] sm:$0xff] %vm1699, %v9668
  %9729 = vst.msk [vmem:[%s3392 + $0xd9] sm:$0x7f] %vm3514, %v9669
  %9730 = vst.msk [vmem:[%s3392 + $0xe1] sm:$0xff] %vm1699, %v9670
  %9731 = vst.msk [vmem:[%s3392 + $0xe9] sm:$0x7f] %vm3514, %v9671
  %9732 = vst.msk [vmem:[%s3392 + $0x101] sm:$0xff] %vm1699, %v9672
  %9733 = vst.msk [vmem:[%s3392 + $0x109] sm:$0x7f] %vm3514, %v9673
  %9734 = vst.msk [vmem:[%s3392 + $0x111] sm:$0xff] %vm1699, %v9674
  %9735 = vst.msk [vmem:[%s3392 + $0x119] sm:$0x7f] %vm3514, %v9675
  %9736 = vst.msk [vmem:[%s3392 + $0x121] sm:$0xff] %vm1699, %v9676
  %9737 = vst.msk [vmem:[%s3392 + $0x129] sm:$0x7f] %vm3514, %v9677
  %9738 = vst.msk [vmem:[%s3392 + $0x131] sm:$0xff] %vm1699, %v9678
  %9739 = vst.msk [vmem:[%s3392 + $0x139] sm:$0x7f] %vm3514, %v9679
  %9740 = vst.msk [vmem:[%s3392 + $0x141] sm:$0xff] %vm1699, %v9680
  %9741 = vst.msk [vmem:[%s3392 + $0x149] sm:$0x7f] %vm3514, %v9681
  %9742 = vst.msk [vmem:[%s3392 + $0x151] sm:$0xff] %vm1699, %v9682
  %9743 = vst.msk [vmem:[%s3392 + $0x159] sm:$0x7f] %vm3514, %v9683
  %9744 = vst.msk [vmem:[%s3392 + $0x161] sm:$0xff] %vm1699, %v9684
  %9745 = vst.msk [vmem:[%s3392 + $0x169] sm:$0x7f] %vm3514, %v9685
  %9746 = vst.msk [vmem:[%s3392 + $0x171] sm:$0xff] %vm1699, %v9686
  %9747 = vst.msk [vmem:[%s3392 + $0x179] sm:$0x7f] %vm3514, %v9687
  %9748 = vst.msk [vmem:[%s3392 + $0x181] sm:$0xff] %vm1699, %v9688
  %9749 = vst.msk [vmem:[%s3392 + $0x189] sm:$0x7f] %vm3514, %v9689
  %9750 = vst.msk [vmem:[%s3392 + $0x191] sm:$0xff] %vm1699, %v9690
  %9751 = vst.msk [vmem:[%s3392 + $0x199] sm:$0x7f] %vm3514, %v9691
  %9752 = vst.msk [vmem:[%s3392 + $0x1a1] sm:$0xff] %vm1699, %v9692
  %9753 = vst.msk [vmem:[%s3392 + $0x1a9] sm:$0x7f] %vm3514, %v9693
  %9754 = vst.msk [vmem:[%s3392 + $0x1b1] sm:$0xff] %vm1699, %v9694
  %9755 = vst.msk [vmem:[%s3392 + $0x1b9] sm:$0x7f] %vm3514, %v9695
  %9756 = vst.msk [vmem:[%s3392 + $0x1c1] sm:$0xff] %vm1699, %v9696
  %9757 = vst.msk [vmem:[%s3392 + $0x1c9] sm:$0x7f] %vm3514, %v9697
  %9758 = vst.msk [vmem:[%s3392 + $0x1d1] sm:$0xff] %vm1699, %v9698
  %9759 = vst.msk [vmem:[%s3392 + $0x1d9] sm:$0x7f] %vm3514, %v9699
  %9760 = vst.msk [vmem:[%s3392 + $0x1e1] sm:$0xff] %vm1699, %v9700
  %9761 = vst.msk [vmem:[%s3392 + $0x1e9] sm:$0x7f] %vm3514, %v9701
  %v9762 = vld [vmem:[%s3392] sm:$0xff]
  %v9763 = vld [vmem:[%s3392 + $0x8] sm:$0xff]
  %v9764 = vld [vmem:[%s3392 + $0x10] sm:$0xff]
  %v9765 = vld [vmem:[%s3392 + $0x18] sm:$0xff]
  %v9766 = vld [vmem:[%s3392 + $0x20] sm:$0xff]
  %v9767 = vld [vmem:[%s3392 + $0x28] sm:$0xff]
  %v9768 = vld [vmem:[%s3392 + $0x30] sm:$0xff]
  %v9769 = vld [vmem:[%s3392 + $0x38] sm:$0xff]
  %v9770 = vld [vmem:[%s3392 + $0x40] sm:$0xff]
  %v9771 = vld [vmem:[%s3392 + $0x48] sm:$0xff]
  %v9772 = vld [vmem:[%s3392 + $0x50] sm:$0xff]
  %v9773 = vld [vmem:[%s3392 + $0x58] sm:$0xff]
  %v9774 = vld [vmem:[%s3392 + $0x60] sm:$0xff]
  %v9775 = vld [vmem:[%s3392 + $0x68] sm:$0xff]
  %v9776 = vld [vmem:[%s3392 + $0x70] sm:$0xff]
  %v9777 = vld [vmem:[%s3392 + $0x78] sm:$0xff]
  %v9778 = vld [vmem:[%s3392 + $0x80] sm:$0xff]
  %v9779 = vld [vmem:[%s3392 + $0x88] sm:$0xff]
  %v9780 = vld [vmem:[%s3392 + $0x90] sm:$0xff]
  %v9781 = vld [vmem:[%s3392 + $0x98] sm:$0xff]
  %v9782 = vld [vmem:[%s3392 + $0xa0] sm:$0xff]
  %v9783 = vld [vmem:[%s3392 + $0xa8] sm:$0xff]
  %v9784 = vld [vmem:[%s3392 + $0xb0] sm:$0xff]
  %v9785 = vld [vmem:[%s3392 + $0xb8] sm:$0xff]
  %v9786 = vld [vmem:[%s3392 + $0xc0] sm:$0xff]
  %v9787 = vld [vmem:[%s3392 + $0xc8] sm:$0xff]
  %v9788 = vld [vmem:[%s3392 + $0xd0] sm:$0xff]
  %v9789 = vld [vmem:[%s3392 + $0xd8] sm:$0xff]
  %v9790 = vld [vmem:[%s3392 + $0xe0] sm:$0xff]
  %v9791 = vld [vmem:[%s3392 + $0xe8] sm:$0xff]
  %v9792 = vld [vmem:[%s3392 + $0x100] sm:$0xff]
  %v9793 = vld [vmem:[%s3392 + $0x108] sm:$0xff]
  %v9794 = vld [vmem:[%s3392 + $0x110] sm:$0xff]
  %v9795 = vld [vmem:[%s3392 + $0x118] sm:$0xff]
  %v9796 = vld [vmem:[%s3392 + $0x120] sm:$0xff]
  %v9797 = vld [vmem:[%s3392 + $0x128] sm:$0xff]
  %v9798 = vld [vmem:[%s3392 + $0x130] sm:$0xff]
  %v9799 = vld [vmem:[%s3392 + $0x138] sm:$0xff]
  %v9800 = vld [vmem:[%s3392 + $0x140] sm:$0xff]
  %v9801 = vld [vmem:[%s3392 + $0x148] sm:$0xff]
  %v9802 = vld [vmem:[%s3392 + $0x150] sm:$0xff]
  %v9803 = vld [vmem:[%s3392 + $0x158] sm:$0xff]
  %v9804 = vld [vmem:[%s3392 + $0x160] sm:$0xff]
  %v9805 = vld [vmem:[%s3392 + $0x168] sm:$0xff]
  %v9806 = vld [vmem:[%s3392 + $0x170] sm:$0xff]
  %v9807 = vld [vmem:[%s3392 + $0x178] sm:$0xff]
  %v9808 = vld [vmem:[%s3392 + $0x180] sm:$0xff]
  %v9809 = vld [vmem:[%s3392 + $0x188] sm:$0xff]
  %v9810 = vld [vmem:[%s3392 + $0x190] sm:$0xff]
  %v9811 = vld [vmem:[%s3392 + $0x198] sm:$0xff]
  %v9812 = vld [vmem:[%s3392 + $0x1a0] sm:$0xff]
  %v9813 = vld [vmem:[%s3392 + $0x1a8] sm:$0xff]
  %v9814 = vld [vmem:[%s3392 + $0x1b0] sm:$0xff]
  %v9815 = vld [vmem:[%s3392 + $0x1b8] sm:$0xff]
  %v9816 = vld [vmem:[%s3392 + $0x1c0] sm:$0xff]
  %v9817 = vld [vmem:[%s3392 + $0x1c8] sm:$0xff]
  %v9818 = vld [vmem:[%s3392 + $0x1d0] sm:$0xff]
  %v9819 = vld [vmem:[%s3392 + $0x1d8] sm:$0xff]
  %v9820 = vld [vmem:[%s3392 + $0x1e0] sm:$0xff]
  %v9821 = vld [vmem:[%s3392 + $0x1e8] sm:$0xff]
  %9822 = vrot.lane.b32.xlu0 %v9008, 124
  %v9823 = vpop.permute.xlu0 %9822
  %9824 = vrot.lane.b32.xlu0 %v9011, 124
  %v9825 = vpop.permute.xlu0 %9824
  %9826 = vrot.lane.b32.xlu0 %v9016, 124
  %v9827 = vpop.permute.xlu0 %9826
  %9828 = vrot.lane.b32.xlu0 %v9019, 124
  %v9829 = vpop.permute.xlu0 %9828
  %9830 = vrot.lane.b32.xlu0 %v9024, 124
  %v9831 = vpop.permute.xlu0 %9830
  %9832 = vrot.lane.b32.xlu0 %v9027, 124
  %v9833 = vpop.permute.xlu0 %9832
  %9834 = vrot.lane.b32.xlu0 %v9032, 124
  %v9835 = vpop.permute.xlu0 %9834
  %9836 = vrot.lane.b32.xlu0 %v9035, 124
  %v9837 = vpop.permute.xlu0 %9836
  %9838 = vrot.lane.b32.xlu0 %v9040, 124
  %v9839 = vpop.permute.xlu0 %9838
  %9840 = vrot.lane.b32.xlu0 %v9043, 124
  %v9841 = vpop.permute.xlu0 %9840
  %9842 = vrot.lane.b32.xlu0 %v9048, 124
  %v9843 = vpop.permute.xlu0 %9842
  %9844 = vrot.lane.b32.xlu0 %v9051, 124
  %v9845 = vpop.permute.xlu0 %9844
  %9846 = vrot.lane.b32.xlu0 %v9056, 124
  %v9847 = vpop.permute.xlu0 %9846
  %9848 = vrot.lane.b32.xlu0 %v9059, 124
  %v9849 = vpop.permute.xlu0 %9848
  %9850 = vrot.lane.b32.xlu0 %v9064, 124
  %v9851 = vpop.permute.xlu0 %9850
  %9852 = vrot.lane.b32.xlu0 %v9067, 124
  %v9853 = vpop.permute.xlu0 %9852
  %9854 = vrot.lane.b32.xlu0 %v9072, 124
  %v9855 = vpop.permute.xlu0 %9854
  %9856 = vrot.lane.b32.xlu0 %v9075, 124
  %v9857 = vpop.permute.xlu0 %9856
  %9858 = vrot.lane.b32.xlu0 %v9080, 124
  %v9859 = vpop.permute.xlu0 %9858
  %9860 = vrot.lane.b32.xlu0 %v9083, 124
  %v9861 = vpop.permute.xlu0 %9860
  %9862 = vrot.lane.b32.xlu0 %v9088, 124
  %v9863 = vpop.permute.xlu0 %9862
  %9864 = vrot.lane.b32.xlu0 %v9091, 124
  %v9865 = vpop.permute.xlu0 %9864
  %9866 = vrot.lane.b32.xlu0 %v9096, 124
  %v9867 = vpop.permute.xlu0 %9866
  %9868 = vrot.lane.b32.xlu0 %v9099, 124
  %v9869 = vpop.permute.xlu0 %9868
  %9870 = vrot.lane.b32.xlu0 %v9104, 124
  %v9871 = vpop.permute.xlu0 %9870
  %9872 = vrot.lane.b32.xlu0 %v9107, 124
  %v9873 = vpop.permute.xlu0 %9872
  %9874 = vrot.lane.b32.xlu0 %v9112, 124
  %v9875 = vpop.permute.xlu0 %9874
  %9876 = vrot.lane.b32.xlu0 %v9115, 124
  %v9877 = vpop.permute.xlu0 %9876
  %9878 = vrot.lane.b32.xlu0 %v9120, 124
  %v9879 = vpop.permute.xlu0 %9878
  %9880 = vrot.lane.b32.xlu0 %v9123, 124
  %v9881 = vpop.permute.xlu0 %9880
  %9882 = vrot.lane.b32.xlu0 %v9136, 124
  %v9883 = vpop.permute.xlu0 %9882
  %9884 = vrot.lane.b32.xlu0 %v9139, 124
  %v9885 = vpop.permute.xlu0 %9884
  %9886 = vrot.lane.b32.xlu0 %v9144, 124
  %v9887 = vpop.permute.xlu0 %9886
  %9888 = vrot.lane.b32.xlu0 %v9147, 124
  %v9889 = vpop.permute.xlu0 %9888
  %9890 = vrot.lane.b32.xlu0 %v9152, 124
  %v9891 = vpop.permute.xlu0 %9890
  %9892 = vrot.lane.b32.xlu0 %v9155, 124
  %v9893 = vpop.permute.xlu0 %9892
  %9894 = vrot.lane.b32.xlu0 %v9160, 124
  %v9895 = vpop.permute.xlu0 %9894
  %9896 = vrot.lane.b32.xlu0 %v9163, 124
  %v9897 = vpop.permute.xlu0 %9896
  %9898 = vrot.lane.b32.xlu0 %v9168, 124
  %v9899 = vpop.permute.xlu0 %9898
  %9900 = vrot.lane.b32.xlu0 %v9171, 124
  %v9901 = vpop.permute.xlu0 %9900
  %9902 = vrot.lane.b32.xlu0 %v9176, 124
  %v9903 = vpop.permute.xlu0 %9902
  %9904 = vrot.lane.b32.xlu0 %v9179, 124
  %v9905 = vpop.permute.xlu0 %9904
  %9906 = vrot.lane.b32.xlu0 %v9184, 124
  %v9907 = vpop.permute.xlu0 %9906
  %9908 = vrot.lane.b32.xlu0 %v9187, 124
  %v9909 = vpop.permute.xlu0 %9908
  %9910 = vrot.lane.b32.xlu0 %v9192, 124
  %v9911 = vpop.permute.xlu0 %9910
  %9912 = vrot.lane.b32.xlu0 %v9195, 124
  %v9913 = vpop.permute.xlu0 %9912
  %9914 = vrot.lane.b32.xlu0 %v9200, 124
  %v9915 = vpop.permute.xlu0 %9914
  %9916 = vrot.lane.b32.xlu0 %v9203, 124
  %v9917 = vpop.permute.xlu0 %9916
  %9918 = vrot.lane.b32.xlu0 %v9208, 124
  %v9919 = vpop.permute.xlu0 %9918
  %9920 = vrot.lane.b32.xlu0 %v9211, 124
  %v9921 = vpop.permute.xlu0 %9920
  %9922 = vrot.lane.b32.xlu0 %v9216, 124
  %v9923 = vpop.permute.xlu0 %9922
  %9924 = vrot.lane.b32.xlu0 %v9219, 124
  %v9925 = vpop.permute.xlu0 %9924
  %9926 = vrot.lane.b32.xlu0 %v9224, 124
  %v9927 = vpop.permute.xlu0 %9926
  %9928 = vrot.lane.b32.xlu0 %v9227, 124
  %v9929 = vpop.permute.xlu0 %9928
  %9930 = vrot.lane.b32.xlu0 %v9232, 124
  %v9931 = vpop.permute.xlu0 %9930
  %9932 = vrot.lane.b32.xlu0 %v9235, 124
  %v9933 = vpop.permute.xlu0 %9932
  %9934 = vrot.lane.b32.xlu0 %v9240, 124
  %v9935 = vpop.permute.xlu0 %9934
  %9936 = vrot.lane.b32.xlu0 %v9243, 124
  %v9937 = vpop.permute.xlu0 %9936
  %9938 = vrot.lane.b32.xlu0 %v9248, 124
  %v9939 = vpop.permute.xlu0 %9938
  %9940 = vrot.lane.b32.xlu0 %v9251, 124
  %v9941 = vpop.permute.xlu0 %9940
  %v10002 = vadd.f32 %v9762, %v9823
  %v10003 = vadd.f32 %v9763, %v9825
  %v10004 = vadd.f32 %v9764, %v9827
  %v10005 = vadd.f32 %v9765, %v9829
  %v10006 = vadd.f32 %v9766, %v9831
  %v10007 = vadd.f32 %v9767, %v9833
  %v10008 = vadd.f32 %v9768, %v9835
  %v10009 = vadd.f32 %v9769, %v9837
  %v10010 = vadd.f32 %v9770, %v9839
  %v10011 = vadd.f32 %v9771, %v9841
  %v10012 = vadd.f32 %v9772, %v9843
  %v10013 = vadd.f32 %v9773, %v9845
  %v10014 = vadd.f32 %v9774, %v9847
  %v10015 = vadd.f32 %v9775, %v9849
  %v10016 = vadd.f32 %v9776, %v9851
  %v10017 = vadd.f32 %v9777, %v9853
  %v10018 = vadd.f32 %v9778, %v9855
  %v10019 = vadd.f32 %v9779, %v9857
  %v10020 = vadd.f32 %v9780, %v9859
  %v10021 = vadd.f32 %v9781, %v9861
  %v10022 = vadd.f32 %v9782, %v9863
  %v10023 = vadd.f32 %v9783, %v9865
  %v10024 = vadd.f32 %v9784, %v9867
  %v10025 = vadd.f32 %v9785, %v9869
  %v10026 = vadd.f32 %v9786, %v9871
  %v10027 = vadd.f32 %v9787, %v9873
  %v10028 = vadd.f32 %v9788, %v9875
  %v10029 = vadd.f32 %v9789, %v9877
  %v10030 = vadd.f32 %v9790, %v9879
  %v10031 = vadd.f32 %v9791, %v9881
  %v10032 = vadd.f32 %v9792, %v9883
  %v10033 = vadd.f32 %v9793, %v9885
  %v10034 = vadd.f32 %v9794, %v9887
  %v10035 = vadd.f32 %v9795, %v9889
  %v10036 = vadd.f32 %v9796, %v9891
  %v10037 = vadd.f32 %v9797, %v9893
  %v10038 = vadd.f32 %v9798, %v9895
  %v10039 = vadd.f32 %v9799, %v9897
  %v10040 = vadd.f32 %v9800, %v9899
  %v10041 = vadd.f32 %v9801, %v9901
  %v10042 = vadd.f32 %v9802, %v9903
  %v10043 = vadd.f32 %v9803, %v9905
  %v10044 = vadd.f32 %v9804, %v9907
  %v10045 = vadd.f32 %v9805, %v9909
  %v10046 = vadd.f32 %v9806, %v9911
  %v10047 = vadd.f32 %v9807, %v9913
  %v10048 = vadd.f32 %v9808, %v9915
  %v10049 = vadd.f32 %v9809, %v9917
  %v10050 = vadd.f32 %v9810, %v9919
  %v10051 = vadd.f32 %v9811, %v9921
  %v10052 = vadd.f32 %v9812, %v9923
  %v10053 = vadd.f32 %v9813, %v9925
  %v10054 = vadd.f32 %v9814, %v9927
  %v10055 = vadd.f32 %v9815, %v9929
  %v10056 = vadd.f32 %v9816, %v9931
  %v10057 = vadd.f32 %v9817, %v9933
  %v10058 = vadd.f32 %v9818, %v9935
  %v10059 = vadd.f32 %v9819, %v9937
  %v10060 = vadd.f32 %v9820, %v9939
  %v10061 = vadd.f32 %v9821, %v9941
  %10062 = vst.msk [vmem:[%s3392] sm:$0xff] %vm1699, %v10002
  %10063 = vst.msk [vmem:[%s3392 + $0x8] sm:$0xff] %vm1699, %v10003
  %10064 = vst.msk [vmem:[%s3392 + $0x10] sm:$0xff] %vm1699, %v10004
  %10065 = vst.msk [vmem:[%s3392 + $0x18] sm:$0xff] %vm1699, %v10005
  %10066 = vst.msk [vmem:[%s3392 + $0x20] sm:$0xff] %vm1699, %v10006
  %10067 = vst.msk [vmem:[%s3392 + $0x28] sm:$0xff] %vm1699, %v10007
  %10068 = vst.msk [vmem:[%s3392 + $0x30] sm:$0xff] %vm1699, %v10008
  %10069 = vst.msk [vmem:[%s3392 + $0x38] sm:$0xff] %vm1699, %v10009
  %10070 = vst.msk [vmem:[%s3392 + $0x40] sm:$0xff] %vm1699, %v10010
  %10071 = vst.msk [vmem:[%s3392 + $0x48] sm:$0xff] %vm1699, %v10011
  %10072 = vst.msk [vmem:[%s3392 + $0x50] sm:$0xff] %vm1699, %v10012
  %10073 = vst.msk [vmem:[%s3392 + $0x58] sm:$0xff] %vm1699, %v10013
  %10074 = vst.msk [vmem:[%s3392 + $0x60] sm:$0xff] %vm1699, %v10014
  %10075 = vst.msk [vmem:[%s3392 + $0x68] sm:$0xff] %vm1699, %v10015
  %10076 = vst.msk [vmem:[%s3392 + $0x70] sm:$0xff] %vm1699, %v10016
  %10077 = vst.msk [vmem:[%s3392 + $0x78] sm:$0xff] %vm1699, %v10017
  %10078 = vst.msk [vmem:[%s3392 + $0x80] sm:$0xff] %vm1699, %v10018
  %10079 = vst.msk [vmem:[%s3392 + $0x88] sm:$0xff] %vm1699, %v10019
  %10080 = vst.msk [vmem:[%s3392 + $0x90] sm:$0xff] %vm1699, %v10020
  %10081 = vst.msk [vmem:[%s3392 + $0x98] sm:$0xff] %vm1699, %v10021
  %10082 = vst.msk [vmem:[%s3392 + $0xa0] sm:$0xff] %vm1699, %v10022
  %10083 = vst.msk [vmem:[%s3392 + $0xa8] sm:$0xff] %vm1699, %v10023
  %10084 = vst.msk [vmem:[%s3392 + $0xb0] sm:$0xff] %vm1699, %v10024
  %10085 = vst.msk [vmem:[%s3392 + $0xb8] sm:$0xff] %vm1699, %v10025
  %10086 = vst.msk [vmem:[%s3392 + $0xc0] sm:$0xff] %vm1699, %v10026
  %10087 = vst.msk [vmem:[%s3392 + $0xc8] sm:$0xff] %vm1699, %v10027
  %10088 = vst.msk [vmem:[%s3392 + $0xd0] sm:$0xff] %vm1699, %v10028
  %10089 = vst.msk [vmem:[%s3392 + $0xd8] sm:$0xff] %vm1699, %v10029
  %10090 = vst.msk [vmem:[%s3392 + $0xe0] sm:$0xff] %vm1699, %v10030
  %10091 = vst.msk [vmem:[%s3392 + $0xe8] sm:$0xff] %vm1699, %v10031
  %10092 = vst.msk [vmem:[%s3392 + $0x100] sm:$0xff] %vm1699, %v10032
  %10093 = vst.msk [vmem:[%s3392 + $0x108] sm:$0xff] %vm1699, %v10033
  %10094 = vst.msk [vmem:[%s3392 + $0x110] sm:$0xff] %vm1699, %v10034
  %10095 = vst.msk [vmem:[%s3392 + $0x118] sm:$0xff] %vm1699, %v10035
  %10096 = vst.msk [vmem:[%s3392 + $0x120] sm:$0xff] %vm1699, %v10036
  %10097 = vst.msk [vmem:[%s3392 + $0x128] sm:$0xff] %vm1699, %v10037
  %10098 = vst.msk [vmem:[%s3392 + $0x130] sm:$0xff] %vm1699, %v10038
  %10099 = vst.msk [vmem:[%s3392 + $0x138] sm:$0xff] %vm1699, %v10039
  %10100 = vst.msk [vmem:[%s3392 + $0x140] sm:$0xff] %vm1699, %v10040
  %10101 = vst.msk [vmem:[%s3392 + $0x148] sm:$0xff] %vm1699, %v10041
  %10102 = vst.msk [vmem:[%s3392 + $0x150] sm:$0xff] %vm1699, %v10042
  %10103 = vst.msk [vmem:[%s3392 + $0x158] sm:$0xff] %vm1699, %v10043
  %10104 = vst.msk [vmem:[%s3392 + $0x160] sm:$0xff] %vm1699, %v10044
  %10105 = vst.msk [vmem:[%s3392 + $0x168] sm:$0xff] %vm1699, %v10045
  %10106 = vst.msk [vmem:[%s3392 + $0x170] sm:$0xff] %vm1699, %v10046
  %10107 = vst.msk [vmem:[%s3392 + $0x178] sm:$0xff] %vm1699, %v10047
  %10108 = vst.msk [vmem:[%s3392 + $0x180] sm:$0xff] %vm1699, %v10048
  %10109 = vst.msk [vmem:[%s3392 + $0x188] sm:$0xff] %vm1699, %v10049
  %10110 = vst.msk [vmem:[%s3392 + $0x190] sm:$0xff] %vm1699, %v10050
  %10111 = vst.msk [vmem:[%s3392 + $0x198] sm:$0xff] %vm1699, %v10051
  %10112 = vst.msk [vmem:[%s3392 + $0x1a0] sm:$0xff] %vm1699, %v10052
  %10113 = vst.msk [vmem:[%s3392 + $0x1a8] sm:$0xff] %vm1699, %v10053
  %10114 = vst.msk [vmem:[%s3392 + $0x1b0] sm:$0xff] %vm1699, %v10054
  %10115 = vst.msk [vmem:[%s3392 + $0x1b8] sm:$0xff] %vm1699, %v10055
  %10116 = vst.msk [vmem:[%s3392 + $0x1c0] sm:$0xff] %vm1699, %v10056
  %10117 = vst.msk [vmem:[%s3392 + $0x1c8] sm:$0xff] %vm1699, %v10057
  %10118 = vst.msk [vmem:[%s3392 + $0x1d0] sm:$0xff] %vm1699, %v10058
  %10119 = vst.msk [vmem:[%s3392 + $0x1d8] sm:$0xff] %vm1699, %v10059
  %10120 = vst.msk [vmem:[%s3392 + $0x1e0] sm:$0xff] %vm1699, %v10060
  %10121 = vst.msk [vmem:[%s3392 + $0x1e8] sm:$0xff] %vm1699, %v10061
  %v10122 = vld [vmem:[%s3392] sm:$0xff]
  %v10123 = vld [vmem:[%s3392 + $0x8] sm:$0x7f]
  %v10124 = vld [vmem:[%s3392 + $0x10] sm:$0xff]
  %v10125 = vld [vmem:[%s3392 + $0x18] sm:$0x7f]
  %v10126 = vld [vmem:[%s3392 + $0x20] sm:$0xff]
  %v10127 = vld [vmem:[%s3392 + $0x28] sm:$0x7f]
  %v10128 = vld [vmem:[%s3392 + $0x30] sm:$0xff]
  %v10129 = vld [vmem:[%s3392 + $0x38] sm:$0x7f]
  %v10130 = vld [vmem:[%s3392 + $0x40] sm:$0xff]
  %v10131 = vld [vmem:[%s3392 + $0x48] sm:$0x7f]
  %v10132 = vld [vmem:[%s3392 + $0x50] sm:$0xff]
  %v10133 = vld [vmem:[%s3392 + $0x58] sm:$0x7f]
  %v10134 = vld [vmem:[%s3392 + $0x60] sm:$0xff]
  %v10135 = vld [vmem:[%s3392 + $0x68] sm:$0x7f]
  %v10136 = vld [vmem:[%s3392 + $0x70] sm:$0xff]
  %v10137 = vld [vmem:[%s3392 + $0x78] sm:$0x7f]
  %v10138 = vld [vmem:[%s3392 + $0x80] sm:$0xff]
  %v10139 = vld [vmem:[%s3392 + $0x88] sm:$0x7f]
  %v10140 = vld [vmem:[%s3392 + $0x90] sm:$0xff]
  %v10141 = vld [vmem:[%s3392 + $0x98] sm:$0x7f]
  %v10142 = vld [vmem:[%s3392 + $0xa0] sm:$0xff]
  %v10143 = vld [vmem:[%s3392 + $0xa8] sm:$0x7f]
  %v10144 = vld [vmem:[%s3392 + $0xb0] sm:$0xff]
  %v10145 = vld [vmem:[%s3392 + $0xb8] sm:$0x7f]
  %v10146 = vld [vmem:[%s3392 + $0xc0] sm:$0xff]
  %v10147 = vld [vmem:[%s3392 + $0xc8] sm:$0x7f]
  %v10148 = vld [vmem:[%s3392 + $0xd0] sm:$0xff]
  %v10149 = vld [vmem:[%s3392 + $0xd8] sm:$0x7f]
  %v10150 = vld [vmem:[%s3392 + $0xe0] sm:$0xff]
  %v10151 = vld [vmem:[%s3392 + $0xe8] sm:$0x7f]
  %v10152 = vld [vmem:[%s3392 + $0x100] sm:$0xff]
  %v10153 = vld [vmem:[%s3392 + $0x108] sm:$0x7f]
  %v10154 = vld [vmem:[%s3392 + $0x110] sm:$0xff]
  %v10155 = vld [vmem:[%s3392 + $0x118] sm:$0x7f]
  %v10156 = vld [vmem:[%s3392 + $0x120] sm:$0xff]
  %v10157 = vld [vmem:[%s3392 + $0x128] sm:$0x7f]
  %v10158 = vld [vmem:[%s3392 + $0x130] sm:$0xff]
  %v10159 = vld [vmem:[%s3392 + $0x138] sm:$0x7f]
  %v10160 = vld [vmem:[%s3392 + $0x140] sm:$0xff]
  %v10161 = vld [vmem:[%s3392 + $0x148] sm:$0x7f]
  %v10162 = vld [vmem:[%s3392 + $0x150] sm:$0xff]
  %v10163 = vld [vmem:[%s3392 + $0x158] sm:$0x7f]
  %v10164 = vld [vmem:[%s3392 + $0x160] sm:$0xff]
  %v10165 = vld [vmem:[%s3392 + $0x168] sm:$0x7f]
  %v10166 = vld [vmem:[%s3392 + $0x170] sm:$0xff]
  %v10167 = vld [vmem:[%s3392 + $0x178] sm:$0x7f]
  %v10168 = vld [vmem:[%s3392 + $0x180] sm:$0xff]
  %v10169 = vld [vmem:[%s3392 + $0x188] sm:$0x7f]
  %v10170 = vld [vmem:[%s3392 + $0x190] sm:$0xff]
  %v10171 = vld [vmem:[%s3392 + $0x198] sm:$0x7f]
  %v10172 = vld [vmem:[%s3392 + $0x1a0] sm:$0xff]
  %v10173 = vld [vmem:[%s3392 + $0x1a8] sm:$0x7f]
  %v10174 = vld [vmem:[%s3392 + $0x1b0] sm:$0xff]
  %v10175 = vld [vmem:[%s3392 + $0x1b8] sm:$0x7f]
  %v10176 = vld [vmem:[%s3392 + $0x1c0] sm:$0xff]
  %v10177 = vld [vmem:[%s3392 + $0x1c8] sm:$0x7f]
  %v10178 = vld [vmem:[%s3392 + $0x1d0] sm:$0xff]
  %v10179 = vld [vmem:[%s3392 + $0x1d8] sm:$0x7f]
  %v10180 = vld [vmem:[%s3392 + $0x1e0] sm:$0xff]
  %v10181 = vld [vmem:[%s3392 + $0x1e8] sm:$0x7f]
  %v10182 = vrot.slane %v9008, 1
  %v10183 = vrot.slane %v9011, 1
  %v10184 = vsel %vm3994, %v10182, %v10183
  %v10185 = vrot.slane %v9016, 1
  %v10186 = vrot.slane %v9019, 1
  %v10187 = vsel %vm3994, %v10185, %v10186
  %v10188 = vrot.slane %v9024, 1
  %v10189 = vrot.slane %v9027, 1
  %v10190 = vsel %vm3994, %v10188, %v10189
  %v10191 = vrot.slane %v9032, 1
  %v10192 = vrot.slane %v9035, 1
  %v10193 = vsel %vm3994, %v10191, %v10192
  %v10194 = vrot.slane %v9040, 1
  %v10195 = vrot.slane %v9043, 1
  %v10196 = vsel %vm3994, %v10194, %v10195
  %v10197 = vrot.slane %v9048, 1
  %v10198 = vrot.slane %v9051, 1
  %v10199 = vsel %vm3994, %v10197, %v10198
  %v10200 = vrot.slane %v9056, 1
  %v10201 = vrot.slane %v9059, 1
  %v10202 = vsel %vm3994, %v10200, %v10201
  %v10203 = vrot.slane %v9064, 1
  %v10204 = vrot.slane %v9067, 1
  %v10205 = vsel %vm3994, %v10203, %v10204
  %v10206 = vrot.slane %v9072, 1
  %v10207 = vrot.slane %v9075, 1
  %v10208 = vsel %vm3994, %v10206, %v10207
  %v10209 = vrot.slane %v9080, 1
  %v10210 = vrot.slane %v9083, 1
  %v10211 = vsel %vm3994, %v10209, %v10210
  %v10212 = vrot.slane %v9088, 1
  %v10213 = vrot.slane %v9091, 1
  %v10214 = vsel %vm3994, %v10212, %v10213
  %v10215 = vrot.slane %v9096, 1
  %v10216 = vrot.slane %v9099, 1
  %v10217 = vsel %vm3994, %v10215, %v10216
  %v10218 = vrot.slane %v9104, 1
  %v10219 = vrot.slane %v9107, 1
  %v10220 = vsel %vm3994, %v10218, %v10219
  %v10221 = vrot.slane %v9112, 1
  %v10222 = vrot.slane %v9115, 1
  %v10223 = vsel %vm3994, %v10221, %v10222
  %v10224 = vrot.slane %v9120, 1
  %v10225 = vrot.slane %v9123, 1
  %v10226 = vsel %vm3994, %v10224, %v10225
  %v10227 = vrot.slane %v9136, 1
  %v10228 = vrot.slane %v9139, 1
  %v10229 = vsel %vm3994, %v10227, %v10228
  %v10230 = vrot.slane %v9144, 1
  %v10231 = vrot.slane %v9147, 1
  %v10232 = vsel %vm3994, %v10230, %v10231
  %v10233 = vrot.slane %v9152, 1
  %v10234 = vrot.slane %v9155, 1
  %v10235 = vsel %vm3994, %v10233, %v10234
  %v10236 = vrot.slane %v9160, 1
  %v10237 = vrot.slane %v9163, 1
  %v10238 = vsel %vm3994, %v10236, %v10237
  %v10239 = vrot.slane %v9168, 1
  %v10240 = vrot.slane %v9171, 1
  %v10241 = vsel %vm3994, %v10239, %v10240
  %v10242 = vrot.slane %v9176, 1
  %v10243 = vrot.slane %v9179, 1
  %v10244 = vsel %vm3994, %v10242, %v10243
  %v10245 = vrot.slane %v9184, 1
  %v10246 = vrot.slane %v9187, 1
  %v10247 = vsel %vm3994, %v10245, %v10246
  %v10248 = vrot.slane %v9192, 1
  %v10249 = vrot.slane %v9195, 1
  %v10250 = vsel %vm3994, %v10248, %v10249
  %v10251 = vrot.slane %v9200, 1
  %v10252 = vrot.slane %v9203, 1
  %v10253 = vsel %vm3994, %v10251, %v10252
  %v10254 = vrot.slane %v9208, 1
  %v10255 = vrot.slane %v9211, 1
  %v10256 = vsel %vm3994, %v10254, %v10255
  %v10257 = vrot.slane %v9216, 1
  %v10258 = vrot.slane %v9219, 1
  %v10259 = vsel %vm3994, %v10257, %v10258
  %v10260 = vrot.slane %v9224, 1
  %v10261 = vrot.slane %v9227, 1
  %v10262 = vsel %vm3994, %v10260, %v10261
  %v10263 = vrot.slane %v9232, 1
  %v10264 = vrot.slane %v9235, 1
  %v10265 = vsel %vm3994, %v10263, %v10264
  %v10266 = vrot.slane %v9240, 1
  %v10267 = vrot.slane %v9243, 1
  %v10268 = vsel %vm3994, %v10266, %v10267
  %v10269 = vrot.slane %v9248, 1
  %v10270 = vrot.slane %v9251, 1
  %v10271 = vsel %vm3994, %v10269, %v10270
  %10272 = vrot.lane.b32.xlu0 %v10184, 120
  %v10273 = vpop.permute.xlu0 %10272
  %10274 = vrot.lane.b32.xlu0 %v10183, 120
  %v10275 = vpop.permute.xlu0 %10274
  %10276 = vrot.lane.b32.xlu0 %v10187, 120
  %v10277 = vpop.permute.xlu0 %10276
  %10278 = vrot.lane.b32.xlu0 %v10186, 120
  %v10279 = vpop.permute.xlu0 %10278
  %10280 = vrot.lane.b32.xlu0 %v10190, 120
  %v10281 = vpop.permute.xlu0 %10280
  %10282 = vrot.lane.b32.xlu0 %v10189, 120
  %v10283 = vpop.permute.xlu0 %10282
  %10284 = vrot.lane.b32.xlu0 %v10193, 120
  %v10285 = vpop.permute.xlu0 %10284
  %10286 = vrot.lane.b32.xlu0 %v10192, 120
  %v10287 = vpop.permute.xlu0 %10286
  %10288 = vrot.lane.b32.xlu0 %v10196, 120
  %v10289 = vpop.permute.xlu0 %10288
  %10290 = vrot.lane.b32.xlu0 %v10195, 120
  %v10291 = vpop.permute.xlu0 %10290
  %10292 = vrot.lane.b32.xlu0 %v10199, 120
  %v10293 = vpop.permute.xlu0 %10292
  %10294 = vrot.lane.b32.xlu0 %v10198, 120
  %v10295 = vpop.permute.xlu0 %10294
  %10296 = vrot.lane.b32.xlu0 %v10202, 120
  %v10297 = vpop.permute.xlu0 %10296
  %10298 = vrot.lane.b32.xlu0 %v10201, 120
  %v10299 = vpop.permute.xlu0 %10298
  %10300 = vrot.lane.b32.xlu0 %v10205, 120
  %v10301 = vpop.permute.xlu0 %10300
  %10302 = vrot.lane.b32.xlu0 %v10204, 120
  %v10303 = vpop.permute.xlu0 %10302
  %10304 = vrot.lane.b32.xlu0 %v10208, 120
  %v10305 = vpop.permute.xlu0 %10304
  %10306 = vrot.lane.b32.xlu0 %v10207, 120
  %v10307 = vpop.permute.xlu0 %10306
  %10308 = vrot.lane.b32.xlu0 %v10211, 120
  %v10309 = vpop.permute.xlu0 %10308
  %10310 = vrot.lane.b32.xlu0 %v10210, 120
  %v10311 = vpop.permute.xlu0 %10310
  %10312 = vrot.lane.b32.xlu0 %v10214, 120
  %v10313 = vpop.permute.xlu0 %10312
  %10314 = vrot.lane.b32.xlu0 %v10213, 120
  %v10315 = vpop.permute.xlu0 %10314
  %10316 = vrot.lane.b32.xlu0 %v10217, 120
  %v10317 = vpop.permute.xlu0 %10316
  %10318 = vrot.lane.b32.xlu0 %v10216, 120
  %v10319 = vpop.permute.xlu0 %10318
  %10320 = vrot.lane.b32.xlu0 %v10220, 120
  %v10321 = vpop.permute.xlu0 %10320
  %10322 = vrot.lane.b32.xlu0 %v10219, 120
  %v10323 = vpop.permute.xlu0 %10322
  %10324 = vrot.lane.b32.xlu0 %v10223, 120
  %v10325 = vpop.permute.xlu0 %10324
  %10326 = vrot.lane.b32.xlu0 %v10222, 120
  %v10327 = vpop.permute.xlu0 %10326
  %10328 = vrot.lane.b32.xlu0 %v10226, 120
  %v10329 = vpop.permute.xlu0 %10328
  %10330 = vrot.lane.b32.xlu0 %v10225, 120
  %v10331 = vpop.permute.xlu0 %10330
  %10332 = vrot.lane.b32.xlu0 %v10229, 120
  %v10333 = vpop.permute.xlu0 %10332
  %10334 = vrot.lane.b32.xlu0 %v10228, 120
  %v10335 = vpop.permute.xlu0 %10334
  %10336 = vrot.lane.b32.xlu0 %v10232, 120
  %v10337 = vpop.permute.xlu0 %10336
  %10338 = vrot.lane.b32.xlu0 %v10231, 120
  %v10339 = vpop.permute.xlu0 %10338
  %10340 = vrot.lane.b32.xlu0 %v10235, 120
  %v10341 = vpop.permute.xlu0 %10340
  %10342 = vrot.lane.b32.xlu0 %v10234, 120
  %v10343 = vpop.permute.xlu0 %10342
  %10344 = vrot.lane.b32.xlu0 %v10238, 120
  %v10345 = vpop.permute.xlu0 %10344
  %10346 = vrot.lane.b32.xlu0 %v10237, 120
  %v10347 = vpop.permute.xlu0 %10346
  %10348 = vrot.lane.b32.xlu0 %v10241, 120
  %v10349 = vpop.permute.xlu0 %10348
  %10350 = vrot.lane.b32.xlu0 %v10240, 120
  %v10351 = vpop.permute.xlu0 %10350
  %10352 = vrot.lane.b32.xlu0 %v10244, 120
  %v10353 = vpop.permute.xlu0 %10352
  %10354 = vrot.lane.b32.xlu0 %v10243, 120
  %v10355 = vpop.permute.xlu0 %10354
  %10356 = vrot.lane.b32.xlu0 %v10247, 120
  %v10357 = vpop.permute.xlu0 %10356
  %10358 = vrot.lane.b32.xlu0 %v10246, 120
  %v10359 = vpop.permute.xlu0 %10358
  %10360 = vrot.lane.b32.xlu0 %v10250, 120
  %v10361 = vpop.permute.xlu0 %10360
  %10362 = vrot.lane.b32.xlu0 %v10249, 120
  %v10363 = vpop.permute.xlu0 %10362
  %10364 = vrot.lane.b32.xlu0 %v10253, 120
  %v10365 = vpop.permute.xlu0 %10364
  %10366 = vrot.lane.b32.xlu0 %v10252, 120
  %v10367 = vpop.permute.xlu0 %10366
  %10368 = vrot.lane.b32.xlu0 %v10256, 120
  %v10369 = vpop.permute.xlu0 %10368
  %10370 = vrot.lane.b32.xlu0 %v10255, 120
  %v10371 = vpop.permute.xlu0 %10370
  %10372 = vrot.lane.b32.xlu0 %v10259, 120
  %v10373 = vpop.permute.xlu0 %10372
  %10374 = vrot.lane.b32.xlu0 %v10258, 120
  %v10375 = vpop.permute.xlu0 %10374
  %10376 = vrot.lane.b32.xlu0 %v10262, 120
  %v10377 = vpop.permute.xlu0 %10376
  %10378 = vrot.lane.b32.xlu0 %v10261, 120
  %v10379 = vpop.permute.xlu0 %10378
  %10380 = vrot.lane.b32.xlu0 %v10265, 120
  %v10381 = vpop.permute.xlu0 %10380
  %10382 = vrot.lane.b32.xlu0 %v10264, 120
  %v10383 = vpop.permute.xlu0 %10382
  %10384 = vrot.lane.b32.xlu0 %v10268, 120
  %v10385 = vpop.permute.xlu0 %10384
  %10386 = vrot.lane.b32.xlu0 %v10267, 120
  %v10387 = vpop.permute.xlu0 %10386
  %10388 = vrot.lane.b32.xlu0 %v10271, 120
  %v10389 = vpop.permute.xlu0 %10388
  %10390 = vrot.lane.b32.xlu0 %v10270, 120
  %v10391 = vpop.permute.xlu0 %10390
  %v10452 = vadd.f32 %v10122, %v10273
  %v10453 = vadd.f32 %v10123, %v10275
  %v10454 = vadd.f32 %v10124, %v10277
  %v10455 = vadd.f32 %v10125, %v10279
  %v10456 = vadd.f32 %v10126, %v10281
  %v10457 = vadd.f32 %v10127, %v10283
  %v10458 = vadd.f32 %v10128, %v10285
  %v10459 = vadd.f32 %v10129, %v10287
  %v10460 = vadd.f32 %v10130, %v10289
  %v10461 = vadd.f32 %v10131, %v10291
  %v10462 = vadd.f32 %v10132, %v10293
  %v10463 = vadd.f32 %v10133, %v10295
  %v10464 = vadd.f32 %v10134, %v10297
  %v10465 = vadd.f32 %v10135, %v10299
  %v10466 = vadd.f32 %v10136, %v10301
  %v10467 = vadd.f32 %v10137, %v10303
  %v10468 = vadd.f32 %v10138, %v10305
  %v10469 = vadd.f32 %v10139, %v10307
  %v10470 = vadd.f32 %v10140, %v10309
  %v10471 = vadd.f32 %v10141, %v10311
  %v10472 = vadd.f32 %v10142, %v10313
  %v10473 = vadd.f32 %v10143, %v10315
  %v10474 = vadd.f32 %v10144, %v10317
  %v10475 = vadd.f32 %v10145, %v10319
  %v10476 = vadd.f32 %v10146, %v10321
  %v10477 = vadd.f32 %v10147, %v10323
  %v10478 = vadd.f32 %v10148, %v10325
  %v10479 = vadd.f32 %v10149, %v10327
  %v10480 = vadd.f32 %v10150, %v10329
  %v10481 = vadd.f32 %v10151, %v10331
  %v10482 = vadd.f32 %v10152, %v10333
  %v10483 = vadd.f32 %v10153, %v10335
  %v10484 = vadd.f32 %v10154, %v10337
  %v10485 = vadd.f32 %v10155, %v10339
  %v10486 = vadd.f32 %v10156, %v10341
  %v10487 = vadd.f32 %v10157, %v10343
  %v10488 = vadd.f32 %v10158, %v10345
  %v10489 = vadd.f32 %v10159, %v10347
  %v10490 = vadd.f32 %v10160, %v10349
  %v10491 = vadd.f32 %v10161, %v10351
  %v10492 = vadd.f32 %v10162, %v10353
  %v10493 = vadd.f32 %v10163, %v10355
  %v10494 = vadd.f32 %v10164, %v10357
  %v10495 = vadd.f32 %v10165, %v10359
  %v10496 = vadd.f32 %v10166, %v10361
  %v10497 = vadd.f32 %v10167, %v10363
  %v10498 = vadd.f32 %v10168, %v10365
  %v10499 = vadd.f32 %v10169, %v10367
  %v10500 = vadd.f32 %v10170, %v10369
  %v10501 = vadd.f32 %v10171, %v10371
  %v10502 = vadd.f32 %v10172, %v10373
  %v10503 = vadd.f32 %v10173, %v10375
  %v10504 = vadd.f32 %v10174, %v10377
  %v10505 = vadd.f32 %v10175, %v10379
  %v10506 = vadd.f32 %v10176, %v10381
  %v10507 = vadd.f32 %v10177, %v10383
  %v10508 = vadd.f32 %v10178, %v10385
  %v10509 = vadd.f32 %v10179, %v10387
  %v10510 = vadd.f32 %v10180, %v10389
  %v10511 = vadd.f32 %v10181, %v10391
  %10512 = vst.msk [vmem:[%s3392] sm:$0xff] %vm1699, %v10452
  %10513 = vst.msk [vmem:[%s3392 + $0x8] sm:$0x7f] %vm3514, %v10453
  %10514 = vst.msk [vmem:[%s3392 + $0x10] sm:$0xff] %vm1699, %v10454
  %10515 = vst.msk [vmem:[%s3392 + $0x18] sm:$0x7f] %vm3514, %v10455
  %10516 = vst.msk [vmem:[%s3392 + $0x20] sm:$0xff] %vm1699, %v10456
  %10517 = vst.msk [vmem:[%s3392 + $0x28] sm:$0x7f] %vm3514, %v10457
  %10518 = vst.msk [vmem:[%s3392 + $0x30] sm:$0xff] %vm1699, %v10458
  %10519 = vst.msk [vmem:[%s3392 + $0x38] sm:$0x7f] %vm3514, %v10459
  %10520 = vst.msk [vmem:[%s3392 + $0x40] sm:$0xff] %vm1699, %v10460
  %10521 = vst.msk [vmem:[%s3392 + $0x48] sm:$0x7f] %vm3514, %v10461
  %10522 = vst.msk [vmem:[%s3392 + $0x50] sm:$0xff] %vm1699, %v10462
  %10523 = vst.msk [vmem:[%s3392 + $0x58] sm:$0x7f] %vm3514, %v10463
  %10524 = vst.msk [vmem:[%s3392 + $0x60] sm:$0xff] %vm1699, %v10464
  %10525 = vst.msk [vmem:[%s3392 + $0x68] sm:$0x7f] %vm3514, %v10465
  %10526 = vst.msk [vmem:[%s3392 + $0x70] sm:$0xff] %vm1699, %v10466
  %10527 = vst.msk [vmem:[%s3392 + $0x78] sm:$0x7f] %vm3514, %v10467
  %10528 = vst.msk [vmem:[%s3392 + $0x80] sm:$0xff] %vm1699, %v10468
  %10529 = vst.msk [vmem:[%s3392 + $0x88] sm:$0x7f] %vm3514, %v10469
  %10530 = vst.msk [vmem:[%s3392 + $0x90] sm:$0xff] %vm1699, %v10470
  %10531 = vst.msk [vmem:[%s3392 + $0x98] sm:$0x7f] %vm3514, %v10471
  %10532 = vst.msk [vmem:[%s3392 + $0xa0] sm:$0xff] %vm1699, %v10472
  %10533 = vst.msk [vmem:[%s3392 + $0xa8] sm:$0x7f] %vm3514, %v10473
  %10534 = vst.msk [vmem:[%s3392 + $0xb0] sm:$0xff] %vm1699, %v10474
  %10535 = vst.msk [vmem:[%s3392 + $0xb8] sm:$0x7f] %vm3514, %v10475
  %10536 = vst.msk [vmem:[%s3392 + $0xc0] sm:$0xff] %vm1699, %v10476
  %10537 = vst.msk [vmem:[%s3392 + $0xc8] sm:$0x7f] %vm3514, %v10477
  %10538 = vst.msk [vmem:[%s3392 + $0xd0] sm:$0xff] %vm1699, %v10478
  %10539 = vst.msk [vmem:[%s3392 + $0xd8] sm:$0x7f] %vm3514, %v10479
  %10540 = vst.msk [vmem:[%s3392 + $0xe0] sm:$0xff] %vm1699, %v10480
  %10541 = vst.msk [vmem:[%s3392 + $0xe8] sm:$0x7f] %vm3514, %v10481
  %10542 = vst.msk [vmem:[%s3392 + $0x100] sm:$0xff] %vm1699, %v10482
  %10543 = vst.msk [vmem:[%s3392 + $0x108] sm:$0x7f] %vm3514, %v10483
  %10544 = vst.msk [vmem:[%s3392 + $0x110] sm:$0xff] %vm1699, %v10484
  %10545 = vst.msk [vmem:[%s3392 + $0x118] sm:$0x7f] %vm3514, %v10485
  %10546 = vst.msk [vmem:[%s3392 + $0x120] sm:$0xff] %vm1699, %v10486
  %10547 = vst.msk [vmem:[%s3392 + $0x128] sm:$0x7f] %vm3514, %v10487
  %10548 = vst.msk [vmem:[%s3392 + $0x130] sm:$0xff] %vm1699, %v10488
  %10549 = vst.msk [vmem:[%s3392 + $0x138] sm:$0x7f] %vm3514, %v10489
  %10550 = vst.msk [vmem:[%s3392 + $0x140] sm:$0xff] %vm1699, %v10490
  %10551 = vst.msk [vmem:[%s3392 + $0x148] sm:$0x7f] %vm3514, %v10491
  %10552 = vst.msk [vmem:[%s3392 + $0x150] sm:$0xff] %vm1699, %v10492
  %10553 = vst.msk [vmem:[%s3392 + $0x158] sm:$0x7f] %vm3514, %v10493
  %10554 = vst.msk [vmem:[%s3392 + $0x160] sm:$0xff] %vm1699, %v10494
  %10555 = vst.msk [vmem:[%s3392 + $0x168] sm:$0x7f] %vm3514, %v10495
  %10556 = vst.msk [vmem:[%s3392 + $0x170] sm:$0xff] %vm1699, %v10496
  %10557 = vst.msk [vmem:[%s3392 + $0x178] sm:$0x7f] %vm3514, %v10497
  %10558 = vst.msk [vmem:[%s3392 + $0x180] sm:$0xff] %vm1699, %v10498
  %10559 = vst.msk [vmem:[%s3392 + $0x188] sm:$0x7f] %vm3514, %v10499
  %10560 = vst.msk [vmem:[%s3392 + $0x190] sm:$0xff] %vm1699, %v10500
  %10561 = vst.msk [vmem:[%s3392 + $0x198] sm:$0x7f] %vm3514, %v10501
  %10562 = vst.msk [vmem:[%s3392 + $0x1a0] sm:$0xff] %vm1699, %v10502
  %10563 = vst.msk [vmem:[%s3392 + $0x1a8] sm:$0x7f] %vm3514, %v10503
  %10564 = vst.msk [vmem:[%s3392 + $0x1b0] sm:$0xff] %vm1699, %v10504
  %10565 = vst.msk [vmem:[%s3392 + $0x1b8] sm:$0x7f] %vm3514, %v10505
  %10566 = vst.msk [vmem:[%s3392 + $0x1c0] sm:$0xff] %vm1699, %v10506
  %10567 = vst.msk [vmem:[%s3392 + $0x1c8] sm:$0x7f] %vm3514, %v10507
  %10568 = vst.msk [vmem:[%s3392 + $0x1d0] sm:$0xff] %vm1699, %v10508
  %10569 = vst.msk [vmem:[%s3392 + $0x1d8] sm:$0x7f] %vm3514, %v10509
  %10570 = vst.msk [vmem:[%s3392 + $0x1e0] sm:$0xff] %vm1699, %v10510
  %10571 = vst.msk [vmem:[%s3392 + $0x1e8] sm:$0x7f] %vm3514, %v10511
  %v10572 = vld [vmem:[#allocation2 + $0x1] sm:$0xff]
  %v10573 = vld [vmem:[#allocation2 + $0x9] sm:$0x7f]
  %v10574 = vld [vmem:[#allocation2 + $0x11] sm:$0xff]
  %v10575 = vld [vmem:[#allocation2 + $0x19] sm:$0x7f]
  %v10576 = vld [vmem:[#allocation2 + $0x21] sm:$0xff]
  %v10577 = vld [vmem:[#allocation2 + $0x29] sm:$0x7f]
  %v10578 = vld [vmem:[#allocation2 + $0x31] sm:$0xff]
  %v10579 = vld [vmem:[#allocation2 + $0x39] sm:$0x7f]
  %v10580 = vld [vmem:[#allocation2 + $0x41] sm:$0xff]
  %v10581 = vld [vmem:[#allocation2 + $0x49] sm:$0x7f]
  %v10582 = vld [vmem:[#allocation2 + $0x51] sm:$0xff]
  %v10583 = vld [vmem:[#allocation2 + $0x59] sm:$0x7f]
  %v10584 = vld [vmem:[#allocation2 + $0x61] sm:$0xff]
  %v10585 = vld [vmem:[#allocation2 + $0x69] sm:$0x7f]
  %v10586 = vld [vmem:[#allocation2 + $0x71] sm:$0xff]
  %v10587 = vld [vmem:[#allocation2 + $0x79] sm:$0x7f]
  %v10588 = vld [vmem:[#allocation2 + $0x81] sm:$0xff]
  %v10589 = vld [vmem:[#allocation2 + $0x89] sm:$0x7f]
  %v10590 = vld [vmem:[#allocation2 + $0x91] sm:$0xff]
  %v10591 = vld [vmem:[#allocation2 + $0x99] sm:$0x7f]
  %v10592 = vld [vmem:[#allocation2 + $0xa1] sm:$0xff]
  %v10593 = vld [vmem:[#allocation2 + $0xa9] sm:$0x7f]
  %v10594 = vld [vmem:[#allocation2 + $0xb1] sm:$0xff]
  %v10595 = vld [vmem:[#allocation2 + $0xb9] sm:$0x7f]
  %v10596 = vld [vmem:[#allocation2 + $0xc1] sm:$0xff]
  %v10597 = vld [vmem:[#allocation2 + $0xc9] sm:$0x7f]
  %v10598 = vld [vmem:[#allocation2 + $0xd1] sm:$0xff]
  %v10599 = vld [vmem:[#allocation2 + $0xd9] sm:$0x7f]
  %v10600 = vld [vmem:[#allocation2 + $0xe1] sm:$0xff]
  %v10601 = vld [vmem:[#allocation2 + $0xe9] sm:$0x7f]
  %v10602 = vld [vmem:[#allocation2 + $0xf1] sm:$0xff]
  %v10603 = vld [vmem:[#allocation2 + $0xf9] sm:$0x7f]
  %v10604 = vld [vmem:[#allocation2 + $0x101] sm:$0xff]
  %v10605 = vld [vmem:[#allocation2 + $0x109] sm:$0x7f]
  %v10606 = vld [vmem:[#allocation2 + $0x111] sm:$0xff]
  %v10607 = vld [vmem:[#allocation2 + $0x119] sm:$0x7f]
  %v10608 = vld [vmem:[#allocation2 + $0x121] sm:$0xff]
  %v10609 = vld [vmem:[#allocation2 + $0x129] sm:$0x7f]
  %v10610 = vld [vmem:[#allocation2 + $0x131] sm:$0xff]
  %v10611 = vld [vmem:[#allocation2 + $0x139] sm:$0x7f]
  %v10612 = vld [vmem:[#allocation2 + $0x141] sm:$0xff]
  %v10613 = vld [vmem:[#allocation2 + $0x149] sm:$0x7f]
  %v10614 = vld [vmem:[#allocation2 + $0x151] sm:$0xff]
  %v10615 = vld [vmem:[#allocation2 + $0x159] sm:$0x7f]
  %v10616 = vld [vmem:[#allocation2 + $0x161] sm:$0xff]
  %v10617 = vld [vmem:[#allocation2 + $0x169] sm:$0x7f]
  %v10618 = vld [vmem:[#allocation2 + $0x171] sm:$0xff]
  %v10619 = vld [vmem:[#allocation2 + $0x179] sm:$0x7f]
  %v10620 = vld [vmem:[#allocation2 + $0x181] sm:$0xff]
  %v10621 = vld [vmem:[#allocation2 + $0x189] sm:$0x7f]
  %v10622 = vld [vmem:[#allocation2 + $0x191] sm:$0xff]
  %v10623 = vld [vmem:[#allocation2 + $0x199] sm:$0x7f]
  %v10624 = vld [vmem:[#allocation2 + $0x1a1] sm:$0xff]
  %v10625 = vld [vmem:[#allocation2 + $0x1a9] sm:$0x7f]
  %v10626 = vld [vmem:[#allocation2 + $0x1b1] sm:$0xff]
  %v10627 = vld [vmem:[#allocation2 + $0x1b9] sm:$0x7f]
  %v10628 = vld [vmem:[#allocation2 + $0x1c1] sm:$0xff]
  %v10629 = vld [vmem:[#allocation2 + $0x1c9] sm:$0x7f]
  %v10630 = vld [vmem:[#allocation2 + $0x1d1] sm:$0xff]
  %v10631 = vld [vmem:[#allocation2 + $0x1d9] sm:$0x7f]
  %v10632 = vld [vmem:[#allocation2 + $0x1e1] sm:$0xff]
  %v10633 = vld [vmem:[#allocation2 + $0x1e9] sm:$0x7f]
  %v10634 = vld [vmem:[#allocation2 + $0x1f1] sm:$0xff]
  %v10635 = vld [vmem:[#allocation2 + $0x1f9] sm:$0x7f]
  %10636 = vrot.lane.b32.xlu0 %v9008, 116
  %v10637 = vpop.permute.xlu0 %10636
  %10638 = vrot.lane.b32.xlu0 %v9011, 116
  %v10639 = vpop.permute.xlu0 %10638
  %10640 = vrot.lane.b32.xlu0 %v9016, 116
  %v10641 = vpop.permute.xlu0 %10640
  %10642 = vrot.lane.b32.xlu0 %v9019, 116
  %v10643 = vpop.permute.xlu0 %10642
  %10644 = vrot.lane.b32.xlu0 %v9024, 116
  %v10645 = vpop.permute.xlu0 %10644
  %10646 = vrot.lane.b32.xlu0 %v9027, 116
  %v10647 = vpop.permute.xlu0 %10646
  %10648 = vrot.lane.b32.xlu0 %v9032, 116
  %v10649 = vpop.permute.xlu0 %10648
  %10650 = vrot.lane.b32.xlu0 %v9035, 116
  %v10651 = vpop.permute.xlu0 %10650
  %10652 = vrot.lane.b32.xlu0 %v9040, 116
  %v10653 = vpop.permute.xlu0 %10652
  %10654 = vrot.lane.b32.xlu0 %v9043, 116
  %v10655 = vpop.permute.xlu0 %10654
  %10656 = vrot.lane.b32.xlu0 %v9048, 116
  %v10657 = vpop.permute.xlu0 %10656
  %10658 = vrot.lane.b32.xlu0 %v9051, 116
  %v10659 = vpop.permute.xlu0 %10658
  %10660 = vrot.lane.b32.xlu0 %v9056, 116
  %v10661 = vpop.permute.xlu0 %10660
  %10662 = vrot.lane.b32.xlu0 %v9059, 116
  %v10663 = vpop.permute.xlu0 %10662
  %10664 = vrot.lane.b32.xlu0 %v9064, 116
  %v10665 = vpop.permute.xlu0 %10664
  %10666 = vrot.lane.b32.xlu0 %v9067, 116
  %v10667 = vpop.permute.xlu0 %10666
  %10668 = vrot.lane.b32.xlu0 %v9072, 116
  %v10669 = vpop.permute.xlu0 %10668
  %10670 = vrot.lane.b32.xlu0 %v9075, 116
  %v10671 = vpop.permute.xlu0 %10670
  %10672 = vrot.lane.b32.xlu0 %v9080, 116
  %v10673 = vpop.permute.xlu0 %10672
  %10674 = vrot.lane.b32.xlu0 %v9083, 116
  %v10675 = vpop.permute.xlu0 %10674
  %10676 = vrot.lane.b32.xlu0 %v9088, 116
  %v10677 = vpop.permute.xlu0 %10676
  %10678 = vrot.lane.b32.xlu0 %v9091, 116
  %v10679 = vpop.permute.xlu0 %10678
  %10680 = vrot.lane.b32.xlu0 %v9096, 116
  %v10681 = vpop.permute.xlu0 %10680
  %10682 = vrot.lane.b32.xlu0 %v9099, 116
  %v10683 = vpop.permute.xlu0 %10682
  %10684 = vrot.lane.b32.xlu0 %v9104, 116
  %v10685 = vpop.permute.xlu0 %10684
  %10686 = vrot.lane.b32.xlu0 %v9107, 116
  %v10687 = vpop.permute.xlu0 %10686
  %10688 = vrot.lane.b32.xlu0 %v9112, 116
  %v10689 = vpop.permute.xlu0 %10688
  %10690 = vrot.lane.b32.xlu0 %v9115, 116
  %v10691 = vpop.permute.xlu0 %10690
  %10692 = vrot.lane.b32.xlu0 %v9120, 116
  %v10693 = vpop.permute.xlu0 %10692
  %10694 = vrot.lane.b32.xlu0 %v9123, 116
  %v10695 = vpop.permute.xlu0 %10694
  %10696 = vrot.lane.b32.xlu0 %v9128, 116
  %v10697 = vpop.permute.xlu0 %10696
  %10698 = vrot.lane.b32.xlu0 %v9131, 116
  %v10699 = vpop.permute.xlu0 %10698
  %10700 = vrot.lane.b32.xlu0 %v9136, 116
  %v10701 = vpop.permute.xlu0 %10700
  %10702 = vrot.lane.b32.xlu0 %v9139, 116
  %v10703 = vpop.permute.xlu0 %10702
  %10704 = vrot.lane.b32.xlu0 %v9144, 116
  %v10705 = vpop.permute.xlu0 %10704
  %10706 = vrot.lane.b32.xlu0 %v9147, 116
  %v10707 = vpop.permute.xlu0 %10706
  %10708 = vrot.lane.b32.xlu0 %v9152, 116
  %v10709 = vpop.permute.xlu0 %10708
  %10710 = vrot.lane.b32.xlu0 %v9155, 116
  %v10711 = vpop.permute.xlu0 %10710
  %10712 = vrot.lane.b32.xlu0 %v9160, 116
  %v10713 = vpop.permute.xlu0 %10712
  %10714 = vrot.lane.b32.xlu0 %v9163, 116
  %v10715 = vpop.permute.xlu0 %10714
  %10716 = vrot.lane.b32.xlu0 %v9168, 116
  %v10717 = vpop.permute.xlu0 %10716
  %10718 = vrot.lane.b32.xlu0 %v9171, 116
  %v10719 = vpop.permute.xlu0 %10718
  %10720 = vrot.lane.b32.xlu0 %v9176, 116
  %v10721 = vpop.permute.xlu0 %10720
  %10722 = vrot.lane.b32.xlu0 %v9179, 116
  %v10723 = vpop.permute.xlu0 %10722
  %10724 = vrot.lane.b32.xlu0 %v9184, 116
  %v10725 = vpop.permute.xlu0 %10724
  %10726 = vrot.lane.b32.xlu0 %v9187, 116
  %v10727 = vpop.permute.xlu0 %10726
  %10728 = vrot.lane.b32.xlu0 %v9192, 116
  %v10729 = vpop.permute.xlu0 %10728
  %10730 = vrot.lane.b32.xlu0 %v9195, 116
  %v10731 = vpop.permute.xlu0 %10730
  %10732 = vrot.lane.b32.xlu0 %v9200, 116
  %v10733 = vpop.permute.xlu0 %10732
  %10734 = vrot.lane.b32.xlu0 %v9203, 116
  %v10735 = vpop.permute.xlu0 %10734
  %10736 = vrot.lane.b32.xlu0 %v9208, 116
  %v10737 = vpop.permute.xlu0 %10736
  %10738 = vrot.lane.b32.xlu0 %v9211, 116
  %v10739 = vpop.permute.xlu0 %10738
  %10740 = vrot.lane.b32.xlu0 %v9216, 116
  %v10741 = vpop.permute.xlu0 %10740
  %10742 = vrot.lane.b32.xlu0 %v9219, 116
  %v10743 = vpop.permute.xlu0 %10742
  %10744 = vrot.lane.b32.xlu0 %v9224, 116
  %v10745 = vpop.permute.xlu0 %10744
  %10746 = vrot.lane.b32.xlu0 %v9227, 116
  %v10747 = vpop.permute.xlu0 %10746
  %10748 = vrot.lane.b32.xlu0 %v9232, 116
  %v10749 = vpop.permute.xlu0 %10748
  %10750 = vrot.lane.b32.xlu0 %v9235, 116
  %v10751 = vpop.permute.xlu0 %10750
  %10752 = vrot.lane.b32.xlu0 %v9240, 116
  %v10753 = vpop.permute.xlu0 %10752
  %10754 = vrot.lane.b32.xlu0 %v9243, 116
  %v10755 = vpop.permute.xlu0 %10754
  %10756 = vrot.lane.b32.xlu0 %v9248, 116
  %v10757 = vpop.permute.xlu0 %10756
  %10758 = vrot.lane.b32.xlu0 %v9251, 116
  %v10759 = vpop.permute.xlu0 %10758
  %10760 = vrot.lane.b32.xlu0 %v9256, 116
  %v10761 = vpop.permute.xlu0 %10760
  %10762 = vrot.lane.b32.xlu0 %v9259, 116
  %v10763 = vpop.permute.xlu0 %10762
  %v10828 = vadd.f32 %v10572, %v10637
  %v10829 = vadd.f32 %v10573, %v10639
  %v10830 = vadd.f32 %v10574, %v10641
  %v10831 = vadd.f32 %v10575, %v10643
  %v10832 = vadd.f32 %v10576, %v10645
  %v10833 = vadd.f32 %v10577, %v10647
  %v10834 = vadd.f32 %v10578, %v10649
  %v10835 = vadd.f32 %v10579, %v10651
  %v10836 = vadd.f32 %v10580, %v10653
  %v10837 = vadd.f32 %v10581, %v10655
  %v10838 = vadd.f32 %v10582, %v10657
  %v10839 = vadd.f32 %v10583, %v10659
  %v10840 = vadd.f32 %v10584, %v10661
  %v10841 = vadd.f32 %v10585, %v10663
  %v10842 = vadd.f32 %v10586, %v10665
  %v10843 = vadd.f32 %v10587, %v10667
  %v10844 = vadd.f32 %v10588, %v10669
  %v10845 = vadd.f32 %v10589, %v10671
  %v10846 = vadd.f32 %v10590, %v10673
  %v10847 = vadd.f32 %v10591, %v10675
  %v10848 = vadd.f32 %v10592, %v10677
  %v10849 = vadd.f32 %v10593, %v10679
  %v10850 = vadd.f32 %v10594, %v10681
  %v10851 = vadd.f32 %v10595, %v10683
  %v10852 = vadd.f32 %v10596, %v10685
  %v10853 = vadd.f32 %v10597, %v10687
  %v10854 = vadd.f32 %v10598, %v10689
  %v10855 = vadd.f32 %v10599, %v10691
  %v10856 = vadd.f32 %v10600, %v10693
  %v10857 = vadd.f32 %v10601, %v10695
  %v10858 = vadd.f32 %v10602, %v10697
  %v10859 = vadd.f32 %v10603, %v10699
  %v10860 = vadd.f32 %v10604, %v10701
  %v10861 = vadd.f32 %v10605, %v10703
  %v10862 = vadd.f32 %v10606, %v10705
  %v10863 = vadd.f32 %v10607, %v10707
  %v10864 = vadd.f32 %v10608, %v10709
  %v10865 = vadd.f32 %v10609, %v10711
  %v10866 = vadd.f32 %v10610, %v10713
  %v10867 = vadd.f32 %v10611, %v10715
  %v10868 = vadd.f32 %v10612, %v10717
  %v10869 = vadd.f32 %v10613, %v10719
  %v10870 = vadd.f32 %v10614, %v10721
  %v10871 = vadd.f32 %v10615, %v10723
  %v10872 = vadd.f32 %v10616, %v10725
  %v10873 = vadd.f32 %v10617, %v10727
  %v10874 = vadd.f32 %v10618, %v10729
  %v10875 = vadd.f32 %v10619, %v10731
  %v10876 = vadd.f32 %v10620, %v10733
  %v10877 = vadd.f32 %v10621, %v10735
  %v10878 = vadd.f32 %v10622, %v10737
  %v10879 = vadd.f32 %v10623, %v10739
  %v10880 = vadd.f32 %v10624, %v10741
  %v10881 = vadd.f32 %v10625, %v10743
  %v10882 = vadd.f32 %v10626, %v10745
  %v10883 = vadd.f32 %v10627, %v10747
  %v10884 = vadd.f32 %v10628, %v10749
  %v10885 = vadd.f32 %v10629, %v10751
  %v10886 = vadd.f32 %v10630, %v10753
  %v10887 = vadd.f32 %v10631, %v10755
  %v10888 = vadd.f32 %v10632, %v10757
  %v10889 = vadd.f32 %v10633, %v10759
  %v10890 = vadd.f32 %v10634, %v10761
  %v10891 = vadd.f32 %v10635, %v10763
  %10892 = vst.msk [vmem:[#allocation2 + $0x1] sm:$0xff] %vm1699, %v10828
  %10893 = vst.msk [vmem:[#allocation2 + $0x9] sm:$0x7f] %vm3514, %v10829
  %10894 = vst.msk [vmem:[#allocation2 + $0x11] sm:$0xff] %vm1699, %v10830
  %10895 = vst.msk [vmem:[#allocation2 + $0x19] sm:$0x7f] %vm3514, %v10831
  %10896 = vst.msk [vmem:[#allocation2 + $0x21] sm:$0xff] %vm1699, %v10832
  %10897 = vst.msk [vmem:[#allocation2 + $0x29] sm:$0x7f] %vm3514, %v10833
  %10898 = vst.msk [vmem:[#allocation2 + $0x31] sm:$0xff] %vm1699, %v10834
  %10899 = vst.msk [vmem:[#allocation2 + $0x39] sm:$0x7f] %vm3514, %v10835
  %10900 = vst.msk [vmem:[#allocation2 + $0x41] sm:$0xff] %vm1699, %v10836
  %10901 = vst.msk [vmem:[#allocation2 + $0x49] sm:$0x7f] %vm3514, %v10837
  %10902 = vst.msk [vmem:[#allocation2 + $0x51] sm:$0xff] %vm1699, %v10838
  %10903 = vst.msk [vmem:[#allocation2 + $0x59] sm:$0x7f] %vm3514, %v10839
  %10904 = vst.msk [vmem:[#allocation2 + $0x61] sm:$0xff] %vm1699, %v10840
  %10905 = vst.msk [vmem:[#allocation2 + $0x69] sm:$0x7f] %vm3514, %v10841
  %10906 = vst.msk [vmem:[#allocation2 + $0x71] sm:$0xff] %vm1699, %v10842
  %10907 = vst.msk [vmem:[#allocation2 + $0x79] sm:$0x7f] %vm3514, %v10843
  %10908 = vst.msk [vmem:[#allocation2 + $0x81] sm:$0xff] %vm1699, %v10844
  %10909 = vst.msk [vmem:[#allocation2 + $0x89] sm:$0x7f] %vm3514, %v10845
  %10910 = vst.msk [vmem:[#allocation2 + $0x91] sm:$0xff] %vm1699, %v10846
  %10911 = vst.msk [vmem:[#allocation2 + $0x99] sm:$0x7f] %vm3514, %v10847
  %10912 = vst.msk [vmem:[#allocation2 + $0xa1] sm:$0xff] %vm1699, %v10848
  %10913 = vst.msk [vmem:[#allocation2 + $0xa9] sm:$0x7f] %vm3514, %v10849
  %10914 = vst.msk [vmem:[#allocation2 + $0xb1] sm:$0xff] %vm1699, %v10850
  %10915 = vst.msk [vmem:[#allocation2 + $0xb9] sm:$0x7f] %vm3514, %v10851
  %10916 = vst.msk [vmem:[#allocation2 + $0xc1] sm:$0xff] %vm1699, %v10852
  %10917 = vst.msk [vmem:[#allocation2 + $0xc9] sm:$0x7f] %vm3514, %v10853
  %10918 = vst.msk [vmem:[#allocation2 + $0xd1] sm:$0xff] %vm1699, %v10854
  %10919 = vst.msk [vmem:[#allocation2 + $0xd9] sm:$0x7f] %vm3514, %v10855
  %10920 = vst.msk [vmem:[#allocation2 + $0xe1] sm:$0xff] %vm1699, %v10856
  %10921 = vst.msk [vmem:[#allocation2 + $0xe9] sm:$0x7f] %vm3514, %v10857
  %10922 = vst.msk [vmem:[#allocation2 + $0xf1] sm:$0xff] %vm1699, %v10858
  %10923 = vst.msk [vmem:[#allocation2 + $0xf9] sm:$0x7f] %vm3514, %v10859
  %10924 = vst.msk [vmem:[#allocation2 + $0x101] sm:$0xff] %vm1699, %v10860
  %10925 = vst.msk [vmem:[#allocation2 + $0x109] sm:$0x7f] %vm3514, %v10861
  %10926 = vst.msk [vmem:[#allocation2 + $0x111] sm:$0xff] %vm1699, %v10862
  %10927 = vst.msk [vmem:[#allocation2 + $0x119] sm:$0x7f] %vm3514, %v10863
  %10928 = vst.msk [vmem:[#allocation2 + $0x121] sm:$0xff] %vm1699, %v10864
  %10929 = vst.msk [vmem:[#allocation2 + $0x129] sm:$0x7f] %vm3514, %v10865
  %10930 = vst.msk [vmem:[#allocation2 + $0x131] sm:$0xff] %vm1699, %v10866
  %10931 = vst.msk [vmem:[#allocation2 + $0x139] sm:$0x7f] %vm3514, %v10867
  %10932 = vst.msk [vmem:[#allocation2 + $0x141] sm:$0xff] %vm1699, %v10868
  %10933 = vst.msk [vmem:[#allocation2 + $0x149] sm:$0x7f] %vm3514, %v10869
  %10934 = vst.msk [vmem:[#allocation2 + $0x151] sm:$0xff] %vm1699, %v10870
  %10935 = vst.msk [vmem:[#allocation2 + $0x159] sm:$0x7f] %vm3514, %v10871
  %10936 = vst.msk [vmem:[#allocation2 + $0x161] sm:$0xff] %vm1699, %v10872
  %10937 = vst.msk [vmem:[#allocation2 + $0x169] sm:$0x7f] %vm3514, %v10873
  %10938 = vst.msk [vmem:[#allocation2 + $0x171] sm:$0xff] %vm1699, %v10874
  %10939 = vst.msk [vmem:[#allocation2 + $0x179] sm:$0x7f] %vm3514, %v10875
  %10940 = vst.msk [vmem:[#allocation2 + $0x181] sm:$0xff] %vm1699, %v10876
  %10941 = vst.msk [vmem:[#allocation2 + $0x189] sm:$0x7f] %vm3514, %v10877
  %10942 = vst.msk [vmem:[#allocation2 + $0x191] sm:$0xff] %vm1699, %v10878
  %10943 = vst.msk [vmem:[#allocation2 + $0x199] sm:$0x7f] %vm3514, %v10879
  %10944 = vst.msk [vmem:[#allocation2 + $0x1a1] sm:$0xff] %vm1699, %v10880
  %10945 = vst.msk [vmem:[#allocation2 + $0x1a9] sm:$0x7f] %vm3514, %v10881
  %10946 = vst.msk [vmem:[#allocation2 + $0x1b1] sm:$0xff] %vm1699, %v10882
  %10947 = vst.msk [vmem:[#allocation2 + $0x1b9] sm:$0x7f] %vm3514, %v10883
  %10948 = vst.msk [vmem:[#allocation2 + $0x1c1] sm:$0xff] %vm1699, %v10884
  %10949 = vst.msk [vmem:[#allocation2 + $0x1c9] sm:$0x7f] %vm3514, %v10885
  %10950 = vst.msk [vmem:[#allocation2 + $0x1d1] sm:$0xff] %vm1699, %v10886
  %10951 = vst.msk [vmem:[#allocation2 + $0x1d9] sm:$0x7f] %vm3514, %v10887
  %10952 = vst.msk [vmem:[#allocation2 + $0x1e1] sm:$0xff] %vm1699, %v10888
  %10953 = vst.msk [vmem:[#allocation2 + $0x1e9] sm:$0x7f] %vm3514, %v10889
  %10954 = vst.msk [vmem:[#allocation2 + $0x1f1] sm:$0xff] %vm1699, %v10890
  %10955 = vst.msk [vmem:[#allocation2 + $0x1f9] sm:$0x7f] %vm3514, %v10891
  %v10956 = vld [vmem:[#allocation2] sm:$0xff]
  %v10957 = vld [vmem:[#allocation2 + $0x8] sm:$0x7f]
  %v10958 = vld [vmem:[#allocation2 + $0x10] sm:$0xff]
  %v10959 = vld [vmem:[#allocation2 + $0x18] sm:$0x7f]
  %v10960 = vld [vmem:[#allocation2 + $0x20] sm:$0xff]
  %v10961 = vld [vmem:[#allocation2 + $0x28] sm:$0x7f]
  %v10962 = vld [vmem:[#allocation2 + $0x30] sm:$0xff]
  %v10963 = vld [vmem:[#allocation2 + $0x38] sm:$0x7f]
  %v10964 = vld [vmem:[#allocation2 + $0x40] sm:$0xff]
  %v10965 = vld [vmem:[#allocation2 + $0x48] sm:$0x7f]
  %v10966 = vld [vmem:[#allocation2 + $0x50] sm:$0xff]
  %v10967 = vld [vmem:[#allocation2 + $0x58] sm:$0x7f]
  %v10968 = vld [vmem:[#allocation2 + $0x60] sm:$0xff]
  %v10969 = vld [vmem:[#allocation2 + $0x68] sm:$0x7f]
  %v10970 = vld [vmem:[#allocation2 + $0x70] sm:$0xff]
  %v10971 = vld [vmem:[#allocation2 + $0x78] sm:$0x7f]
  %v10972 = vld [vmem:[#allocation2 + $0x80] sm:$0xff]
  %v10973 = vld [vmem:[#allocation2 + $0x88] sm:$0x7f]
  %v10974 = vld [vmem:[#allocation2 + $0x90] sm:$0xff]
  %v10975 = vld [vmem:[#allocation2 + $0x98] sm:$0x7f]
  %v10976 = vld [vmem:[#allocation2 + $0xa0] sm:$0xff]
  %v10977 = vld [vmem:[#allocation2 + $0xa8] sm:$0x7f]
  %v10978 = vld [vmem:[#allocation2 + $0xb0] sm:$0xff]
  %v10979 = vld [vmem:[#allocation2 + $0xb8] sm:$0x7f]
  %v10980 = vld [vmem:[#allocation2 + $0xc0] sm:$0xff]
  %v10981 = vld [vmem:[#allocation2 + $0xc8] sm:$0x7f]
  %v10982 = vld [vmem:[#allocation2 + $0xd0] sm:$0xff]
  %v10983 = vld [vmem:[#allocation2 + $0xd8] sm:$0x7f]
  %v10984 = vld [vmem:[#allocation2 + $0xe0] sm:$0xff]
  %v10985 = vld [vmem:[#allocation2 + $0xe8] sm:$0x7f]
  %v10986 = vld [vmem:[#allocation2 + $0xf0] sm:$0xff]
  %v10987 = vld [vmem:[#allocation2 + $0xf8] sm:$0x7f]
  %v10988 = vld [vmem:[#allocation2 + $0x100] sm:$0xff]
  %v10989 = vld [vmem:[#allocation2 + $0x108] sm:$0x7f]
  %v10990 = vld [vmem:[#allocation2 + $0x110] sm:$0xff]
  %v10991 = vld [vmem:[#allocation2 + $0x118] sm:$0x7f]
  %v10992 = vld [vmem:[#allocation2 + $0x120] sm:$0xff]
  %v10993 = vld [vmem:[#allocation2 + $0x128] sm:$0x7f]
  %v10994 = vld [vmem:[#allocation2 + $0x130] sm:$0xff]
  %v10995 = vld [vmem:[#allocation2 + $0x138] sm:$0x7f]
  %v10996 = vld [vmem:[#allocation2 + $0x140] sm:$0xff]
  %v10997 = vld [vmem:[#allocation2 + $0x148] sm:$0x7f]
  %v10998 = vld [vmem:[#allocation2 + $0x150] sm:$0xff]
  %v10999 = vld [vmem:[#allocation2 + $0x158] sm:$0x7f]
  %v11000 = vld [vmem:[#allocation2 + $0x160] sm:$0xff]
  %v11001 = vld [vmem:[#allocation2 + $0x168] sm:$0x7f]
  %v11002 = vld [vmem:[#allocation2 + $0x170] sm:$0xff]
  %v11003 = vld [vmem:[#allocation2 + $0x178] sm:$0x7f]
  %v11004 = vld [vmem:[#allocation2 + $0x180] sm:$0xff]
  %v11005 = vld [vmem:[#allocation2 + $0x188] sm:$0x7f]
  %v11006 = vld [vmem:[#allocation2 + $0x190] sm:$0xff]
  %v11007 = vld [vmem:[#allocation2 + $0x198] sm:$0x7f]
  %v11008 = vld [vmem:[#allocation2 + $0x1a0] sm:$0xff]
  %v11009 = vld [vmem:[#allocation2 + $0x1a8] sm:$0x7f]
  %v11010 = vld [vmem:[#allocation2 + $0x1b0] sm:$0xff]
  %v11011 = vld [vmem:[#allocation2 + $0x1b8] sm:$0x7f]
  %v11012 = vld [vmem:[#allocation2 + $0x1c0] sm:$0xff]
  %v11013 = vld [vmem:[#allocation2 + $0x1c8] sm:$0x7f]
  %v11014 = vld [vmem:[#allocation2 + $0x1d0] sm:$0xff]
  %v11015 = vld [vmem:[#allocation2 + $0x1d8] sm:$0x7f]
  %v11016 = vld [vmem:[#allocation2 + $0x1e0] sm:$0xff]
  %v11017 = vld [vmem:[#allocation2 + $0x1e8] sm:$0x7f]
  %v11018 = vld [vmem:[#allocation2 + $0x1f0] sm:$0xff]
  %v11019 = vld [vmem:[#allocation2 + $0x1f8] sm:$0x7f]
  %v11020 = vrot.slane %v9128, 1
  %v11021 = vrot.slane %v9131, 1
  %v11022 = vsel %vm3994, %v11020, %v11021
  %v11023 = vrot.slane %v9256, 1
  %v11024 = vrot.slane %v9259, 1
  %v11025 = vsel %vm3994, %v11023, %v11024
  %11026 = vrot.lane.b32.xlu0 %v10184, 108
  %v11027 = vpop.permute.xlu0 %11026
  %11028 = vrot.lane.b32.xlu0 %v10183, 108
  %v11029 = vpop.permute.xlu0 %11028
  %11030 = vrot.lane.b32.xlu0 %v10187, 108
  %v11031 = vpop.permute.xlu0 %11030
  %11032 = vrot.lane.b32.xlu0 %v10186, 108
  %v11033 = vpop.permute.xlu0 %11032
  %11034 = vrot.lane.b32.xlu0 %v10190, 108
  %v11035 = vpop.permute.xlu0 %11034
  %11036 = vrot.lane.b32.xlu0 %v10189, 108
  %v11037 = vpop.permute.xlu0 %11036
  %11038 = vrot.lane.b32.xlu0 %v10193, 108
  %v11039 = vpop.permute.xlu0 %11038
  %11040 = vrot.lane.b32.xlu0 %v10192, 108
  %v11041 = vpop.permute.xlu0 %11040
  %11042 = vrot.lane.b32.xlu0 %v10196, 108
  %v11043 = vpop.permute.xlu0 %11042
  %11044 = vrot.lane.b32.xlu0 %v10195, 108
  %v11045 = vpop.permute.xlu0 %11044
  %11046 = vrot.lane.b32.xlu0 %v10199, 108
  %v11047 = vpop.permute.xlu0 %11046
  %11048 = vrot.lane.b32.xlu0 %v10198, 108
  %v11049 = vpop.permute.xlu0 %11048
  %11050 = vrot.lane.b32.xlu0 %v10202, 108
  %v11051 = vpop.permute.xlu0 %11050
  %11052 = vrot.lane.b32.xlu0 %v10201, 108
  %v11053 = vpop.permute.xlu0 %11052
  %11054 = vrot.lane.b32.xlu0 %v10205, 108
  %v11055 = vpop.permute.xlu0 %11054
  %11056 = vrot.lane.b32.xlu0 %v10204, 108
  %v11057 = vpop.permute.xlu0 %11056
  %11058 = vrot.lane.b32.xlu0 %v10208, 108
  %v11059 = vpop.permute.xlu0 %11058
  %11060 = vrot.lane.b32.xlu0 %v10207, 108
  %v11061 = vpop.permute.xlu0 %11060
  %11062 = vrot.lane.b32.xlu0 %v10211, 108
  %v11063 = vpop.permute.xlu0 %11062
  %11064 = vrot.lane.b32.xlu0 %v10210, 108
  %v11065 = vpop.permute.xlu0 %11064
  %11066 = vrot.lane.b32.xlu0 %v10214, 108
  %v11067 = vpop.permute.xlu0 %11066
  %11068 = vrot.lane.b32.xlu0 %v10213, 108
  %v11069 = vpop.permute.xlu0 %11068
  %11070 = vrot.lane.b32.xlu0 %v10217, 108
  %v11071 = vpop.permute.xlu0 %11070
  %11072 = vrot.lane.b32.xlu0 %v10216, 108
  %v11073 = vpop.permute.xlu0 %11072
  %11074 = vrot.lane.b32.xlu0 %v10220, 108
  %v11075 = vpop.permute.xlu0 %11074
  %11076 = vrot.lane.b32.xlu0 %v10219, 108
  %v11077 = vpop.permute.xlu0 %11076
  %11078 = vrot.lane.b32.xlu0 %v10223, 108
  %v11079 = vpop.permute.xlu0 %11078
  %11080 = vrot.lane.b32.xlu0 %v10222, 108
  %v11081 = vpop.permute.xlu0 %11080
  %11082 = vrot.lane.b32.xlu0 %v10226, 108
  %v11083 = vpop.permute.xlu0 %11082
  %11084 = vrot.lane.b32.xlu0 %v10225, 108
  %v11085 = vpop.permute.xlu0 %11084
  %11086 = vrot.lane.b32.xlu0 %v11022, 108
  %v11087 = vpop.permute.xlu0 %11086
  %11088 = vrot.lane.b32.xlu0 %v11021, 108
  %v11089 = vpop.permute.xlu0 %11088
  %11090 = vrot.lane.b32.xlu0 %v10229, 108
  %v11091 = vpop.permute.xlu0 %11090
  %11092 = vrot.lane.b32.xlu0 %v10228, 108
  %v11093 = vpop.permute.xlu0 %11092
  %11094 = vrot.lane.b32.xlu0 %v10232, 108
  %v11095 = vpop.permute.xlu0 %11094
  %11096 = vrot.lane.b32.xlu0 %v10231, 108
  %v11097 = vpop.permute.xlu0 %11096
  %11098 = vrot.lane.b32.xlu0 %v10235, 108
  %v11099 = vpop.permute.xlu0 %11098
  %11100 = vrot.lane.b32.xlu0 %v10234, 108
  %v11101 = vpop.permute.xlu0 %11100
  %11102 = vrot.lane.b32.xlu0 %v10238, 108
  %v11103 = vpop.permute.xlu0 %11102
  %11104 = vrot.lane.b32.xlu0 %v10237, 108
  %v11105 = vpop.permute.xlu0 %11104
  %11106 = vrot.lane.b32.xlu0 %v10241, 108
  %v11107 = vpop.permute.xlu0 %11106
  %11108 = vrot.lane.b32.xlu0 %v10240, 108
  %v11109 = vpop.permute.xlu0 %11108
  %11110 = vrot.lane.b32.xlu0 %v10244, 108
  %v11111 = vpop.permute.xlu0 %11110
  %11112 = vrot.lane.b32.xlu0 %v10243, 108
  %v11113 = vpop.permute.xlu0 %11112
  %11114 = vrot.lane.b32.xlu0 %v10247, 108
  %v11115 = vpop.permute.xlu0 %11114
  %11116 = vrot.lane.b32.xlu0 %v10246, 108
  %v11117 = vpop.permute.xlu0 %11116
  %11118 = vrot.lane.b32.xlu0 %v10250, 108
  %v11119 = vpop.permute.xlu0 %11118
  %11120 = vrot.lane.b32.xlu0 %v10249, 108
  %v11121 = vpop.permute.xlu0 %11120
  %11122 = vrot.lane.b32.xlu0 %v10253, 108
  %v11123 = vpop.permute.xlu0 %11122
  %11124 = vrot.lane.b32.xlu0 %v10252, 108
  %v11125 = vpop.permute.xlu0 %11124
  %11126 = vrot.lane.b32.xlu0 %v10256, 108
  %v11127 = vpop.permute.xlu0 %11126
  %11128 = vrot.lane.b32.xlu0 %v10255, 108
  %v11129 = vpop.permute.xlu0 %11128
  %11130 = vrot.lane.b32.xlu0 %v10259, 108
  %v11131 = vpop.permute.xlu0 %11130
  %11132 = vrot.lane.b32.xlu0 %v10258, 108
  %v11133 = vpop.permute.xlu0 %11132
  %11134 = vrot.lane.b32.xlu0 %v10262, 108
  %v11135 = vpop.permute.xlu0 %11134
  %11136 = vrot.lane.b32.xlu0 %v10261, 108
  %v11137 = vpop.permute.xlu0 %11136
  %11138 = vrot.lane.b32.xlu0 %v10265, 108
  %v11139 = vpop.permute.xlu0 %11138
  %11140 = vrot.lane.b32.xlu0 %v10264, 108
  %v11141 = vpop.permute.xlu0 %11140
  %11142 = vrot.lane.b32.xlu0 %v10268, 108
  %v11143 = vpop.permute.xlu0 %11142
  %11144 = vrot.lane.b32.xlu0 %v10267, 108
  %v11145 = vpop.permute.xlu0 %11144
  %11146 = vrot.lane.b32.xlu0 %v10271, 108
  %v11147 = vpop.permute.xlu0 %11146
  %11148 = vrot.lane.b32.xlu0 %v10270, 108
  %v11149 = vpop.permute.xlu0 %11148
  %11150 = vrot.lane.b32.xlu0 %v11025, 108
  %v11151 = vpop.permute.xlu0 %11150
  %11152 = vrot.lane.b32.xlu0 %v11024, 108
  %v11153 = vpop.permute.xlu0 %11152
  %v11218 = vadd.f32 %v10956, %v11027
  %v11219 = vadd.f32 %v10957, %v11029
  %v11220 = vadd.f32 %v10958, %v11031
  %v11221 = vadd.f32 %v10959, %v11033
  %v11222 = vadd.f32 %v10960, %v11035
  %v11223 = vadd.f32 %v10961, %v11037
  %v11224 = vadd.f32 %v10962, %v11039
  %v11225 = vadd.f32 %v10963, %v11041
  %v11226 = vadd.f32 %v10964, %v11043
  %v11227 = vadd.f32 %v10965, %v11045
  %v11228 = vadd.f32 %v10966, %v11047
  %v11229 = vadd.f32 %v10967, %v11049
  %v11230 = vadd.f32 %v10968, %v11051
  %v11231 = vadd.f32 %v10969, %v11053
  %v11232 = vadd.f32 %v10970, %v11055
  %v11233 = vadd.f32 %v10971, %v11057
  %v11234 = vadd.f32 %v10972, %v11059
  %v11235 = vadd.f32 %v10973, %v11061
  %v11236 = vadd.f32 %v10974, %v11063
  %v11237 = vadd.f32 %v10975, %v11065
  %v11238 = vadd.f32 %v10976, %v11067
  %v11239 = vadd.f32 %v10977, %v11069
  %v11240 = vadd.f32 %v10978, %v11071
  %v11241 = vadd.f32 %v10979, %v11073
  %v11242 = vadd.f32 %v10980, %v11075
  %v11243 = vadd.f32 %v10981, %v11077
  %v11244 = vadd.f32 %v10982, %v11079
  %v11245 = vadd.f32 %v10983, %v11081
  %v11246 = vadd.f32 %v10984, %v11083
  %v11247 = vadd.f32 %v10985, %v11085
  %v11248 = vadd.f32 %v10986, %v11087
  %v11249 = vadd.f32 %v10987, %v11089
  %v11250 = vadd.f32 %v10988, %v11091
  %v11251 = vadd.f32 %v10989, %v11093
  %v11252 = vadd.f32 %v10990, %v11095
  %v11253 = vadd.f32 %v10991, %v11097
  %v11254 = vadd.f32 %v10992, %v11099
  %v11255 = vadd.f32 %v10993, %v11101
  %v11256 = vadd.f32 %v10994, %v11103
  %v11257 = vadd.f32 %v10995, %v11105
  %v11258 = vadd.f32 %v10996, %v11107
  %v11259 = vadd.f32 %v10997, %v11109
  %v11260 = vadd.f32 %v10998, %v11111
  %v11261 = vadd.f32 %v10999, %v11113
  %v11262 = vadd.f32 %v11000, %v11115
  %v11263 = vadd.f32 %v11001, %v11117
  %v11264 = vadd.f32 %v11002, %v11119
  %v11265 = vadd.f32 %v11003, %v11121
  %v11266 = vadd.f32 %v11004, %v11123
  %v11267 = vadd.f32 %v11005, %v11125
  %v11268 = vadd.f32 %v11006, %v11127
  %v11269 = vadd.f32 %v11007, %v11129
  %v11270 = vadd.f32 %v11008, %v11131
  %v11271 = vadd.f32 %v11009, %v11133
  %v11272 = vadd.f32 %v11010, %v11135
  %v11273 = vadd.f32 %v11011, %v11137
  %v11274 = vadd.f32 %v11012, %v11139
  %v11275 = vadd.f32 %v11013, %v11141
  %v11276 = vadd.f32 %v11014, %v11143
  %v11277 = vadd.f32 %v11015, %v11145
  %v11278 = vadd.f32 %v11016, %v11147
  %v11279 = vadd.f32 %v11017, %v11149
  %v11280 = vadd.f32 %v11018, %v11151
  %v11281 = vadd.f32 %v11019, %v11153
  %11282 = vst.msk [vmem:[#allocation2] sm:$0xff] %vm1699, %v11218
  %11283 = vst.msk [vmem:[#allocation2 + $0x8] sm:$0x7f] %vm3514, %v11219
  %11284 = vst.msk [vmem:[#allocation2 + $0x10] sm:$0xff] %vm1699, %v11220
  %11285 = vst.msk [vmem:[#allocation2 + $0x18] sm:$0x7f] %vm3514, %v11221
  %11286 = vst.msk [vmem:[#allocation2 + $0x20] sm:$0xff] %vm1699, %v11222
  %11287 = vst.msk [vmem:[#allocation2 + $0x28] sm:$0x7f] %vm3514, %v11223
  %11288 = vst.msk [vmem:[#allocation2 + $0x30] sm:$0xff] %vm1699, %v11224
  %11289 = vst.msk [vmem:[#allocation2 + $0x38] sm:$0x7f] %vm3514, %v11225
  %11290 = vst.msk [vmem:[#allocation2 + $0x40] sm:$0xff] %vm1699, %v11226
  %11291 = vst.msk [vmem:[#allocation2 + $0x48] sm:$0x7f] %vm3514, %v11227
  %11292 = vst.msk [vmem:[#allocation2 + $0x50] sm:$0xff] %vm1699, %v11228
  %11293 = vst.msk [vmem:[#allocation2 + $0x58] sm:$0x7f] %vm3514, %v11229
  %11294 = vst.msk [vmem:[#allocation2 + $0x60] sm:$0xff] %vm1699, %v11230
  %11295 = vst.msk [vmem:[#allocation2 + $0x68] sm:$0x7f] %vm3514, %v11231
  %11296 = vst.msk [vmem:[#allocation2 + $0x70] sm:$0xff] %vm1699, %v11232
  %11297 = vst.msk [vmem:[#allocation2 + $0x78] sm:$0x7f] %vm3514, %v11233
  %11298 = vst.msk [vmem:[#allocation2 + $0x80] sm:$0xff] %vm1699, %v11234
  %11299 = vst.msk [vmem:[#allocation2 + $0x88] sm:$0x7f] %vm3514, %v11235
  %11300 = vst.msk [vmem:[#allocation2 + $0x90] sm:$0xff] %vm1699, %v11236
  %11301 = vst.msk [vmem:[#allocation2 + $0x98] sm:$0x7f] %vm3514, %v11237
  %11302 = vst.msk [vmem:[#allocation2 + $0xa0] sm:$0xff] %vm1699, %v11238
  %11303 = vst.msk [vmem:[#allocation2 + $0xa8] sm:$0x7f] %vm3514, %v11239
  %11304 = vst.msk [vmem:[#allocation2 + $0xb0] sm:$0xff] %vm1699, %v11240
  %11305 = vst.msk [vmem:[#allocation2 + $0xb8] sm:$0x7f] %vm3514, %v11241
  %11306 = vst.msk [vmem:[#allocation2 + $0xc0] sm:$0xff] %vm1699, %v11242
  %11307 = vst.msk [vmem:[#allocation2 + $0xc8] sm:$0x7f] %vm3514, %v11243
  %11308 = vst.msk [vmem:[#allocation2 + $0xd0] sm:$0xff] %vm1699, %v11244
  %11309 = vst.msk [vmem:[#allocation2 + $0xd8] sm:$0x7f] %vm3514, %v11245
  %11310 = vst.msk [vmem:[#allocation2 + $0xe0] sm:$0xff] %vm1699, %v11246
  %11311 = vst.msk [vmem:[#allocation2 + $0xe8] sm:$0x7f] %vm3514, %v11247
  %11312 = vst.msk [vmem:[#allocation2 + $0xf0] sm:$0xff] %vm1699, %v11248
  %11313 = vst.msk [vmem:[#allocation2 + $0xf8] sm:$0x7f] %vm3514, %v11249
  %11314 = vst.msk [vmem:[#allocation2 + $0x100] sm:$0xff] %vm1699, %v11250
  %11315 = vst.msk [vmem:[#allocation2 + $0x108] sm:$0x7f] %vm3514, %v11251
  %11316 = vst.msk [vmem:[#allocation2 + $0x110] sm:$0xff] %vm1699, %v11252
  %11317 = vst.msk [vmem:[#allocation2 + $0x118] sm:$0x7f] %vm3514, %v11253
  %11318 = vst.msk [vmem:[#allocation2 + $0x120] sm:$0xff] %vm1699, %v11254
  %11319 = vst.msk [vmem:[#allocation2 + $0x128] sm:$0x7f] %vm3514, %v11255
  %11320 = vst.msk [vmem:[#allocation2 + $0x130] sm:$0xff] %vm1699, %v11256
  %11321 = vst.msk [vmem:[#allocation2 + $0x138] sm:$0x7f] %vm3514, %v11257
  %11322 = vst.msk [vmem:[#allocation2 + $0x140] sm:$0xff] %vm1699, %v11258
  %11323 = vst.msk [vmem:[#allocation2 + $0x148] sm:$0x7f] %vm3514, %v11259
  %11324 = vst.msk [vmem:[#allocation2 + $0x150] sm:$0xff] %vm1699, %v11260
  %11325 = vst.msk [vmem:[#allocation2 + $0x158] sm:$0x7f] %vm3514, %v11261
  %11326 = vst.msk [vmem:[#allocation2 + $0x160] sm:$0xff] %vm1699, %v11262
  %11327 = vst.msk [vmem:[#allocation2 + $0x168] sm:$0x7f] %vm3514, %v11263
  %11328 = vst.msk [vmem:[#allocation2 + $0x170] sm:$0xff] %vm1699, %v11264
  %11329 = vst.msk [vmem:[#allocation2 + $0x178] sm:$0x7f] %vm3514, %v11265
  %11330 = vst.msk [vmem:[#allocation2 + $0x180] sm:$0xff] %vm1699, %v11266
  %11331 = vst.msk [vmem:[#allocation2 + $0x188] sm:$0x7f] %vm3514, %v11267
  %11332 = vst.msk [vmem:[#allocation2 + $0x190] sm:$0xff] %vm1699, %v11268
  %11333 = vst.msk [vmem:[#allocation2 + $0x198] sm:$0x7f] %vm3514, %v11269
  %11334 = vst.msk [vmem:[#allocation2 + $0x1a0] sm:$0xff] %vm1699, %v11270
  %11335 = vst.msk [vmem:[#allocation2 + $0x1a8] sm:$0x7f] %vm3514, %v11271
  %11336 = vst.msk [vmem:[#allocation2 + $0x1b0] sm:$0xff] %vm1699, %v11272
  %11337 = vst.msk [vmem:[#allocation2 + $0x1b8] sm:$0x7f] %vm3514, %v11273
  %11338 = vst.msk [vmem:[#allocation2 + $0x1c0] sm:$0xff] %vm1699, %v11274
  %11339 = vst.msk [vmem:[#allocation2 + $0x1c8] sm:$0x7f] %vm3514, %v11275
  %11340 = vst.msk [vmem:[#allocation2 + $0x1d0] sm:$0xff] %vm1699, %v11276
  %11341 = vst.msk [vmem:[#allocation2 + $0x1d8] sm:$0x7f] %vm3514, %v11277
  %11342 = vst.msk [vmem:[#allocation2 + $0x1e0] sm:$0xff] %vm1699, %v11278
  %11343 = vst.msk [vmem:[#allocation2 + $0x1e8] sm:$0x7f] %vm3514, %v11279
  %11344 = vst.msk [vmem:[#allocation2 + $0x1f0] sm:$0xff] %vm1699, %v11280
  %11345 = vst.msk [vmem:[#allocation2 + $0x1f8] sm:$0x7f] %vm3514, %v11281
  %v11346 = vld [vmem:[#allocation2 + $0x1] sm:$0xff]
  %v11347 = vld [vmem:[#allocation2 + $0x9] sm:$0x7f]
  %v11348 = vld [vmem:[#allocation2 + $0x11] sm:$0xff]
  %v11349 = vld [vmem:[#allocation2 + $0x19] sm:$0x7f]
  %v11350 = vld [vmem:[#allocation2 + $0x21] sm:$0xff]
  %v11351 = vld [vmem:[#allocation2 + $0x29] sm:$0x7f]
  %v11352 = vld [vmem:[#allocation2 + $0x31] sm:$0xff]
  %v11353 = vld [vmem:[#allocation2 + $0x39] sm:$0x7f]
  %v11354 = vld [vmem:[#allocation2 + $0x41] sm:$0xff]
  %v11355 = vld [vmem:[#allocation2 + $0x49] sm:$0x7f]
  %v11356 = vld [vmem:[#allocation2 + $0x51] sm:$0xff]
  %v11357 = vld [vmem:[#allocation2 + $0x59] sm:$0x7f]
  %v11358 = vld [vmem:[#allocation2 + $0x61] sm:$0xff]
  %v11359 = vld [vmem:[#allocation2 + $0x69] sm:$0x7f]
  %v11360 = vld [vmem:[#allocation2 + $0x71] sm:$0xff]
  %v11361 = vld [vmem:[#allocation2 + $0x79] sm:$0x7f]
  %v11362 = vld [vmem:[#allocation2 + $0x81] sm:$0xff]
  %v11363 = vld [vmem:[#allocation2 + $0x89] sm:$0x7f]
  %v11364 = vld [vmem:[#allocation2 + $0x91] sm:$0xff]
  %v11365 = vld [vmem:[#allocation2 + $0x99] sm:$0x7f]
  %v11366 = vld [vmem:[#allocation2 + $0xa1] sm:$0xff]
  %v11367 = vld [vmem:[#allocation2 + $0xa9] sm:$0x7f]
  %v11368 = vld [vmem:[#allocation2 + $0xb1] sm:$0xff]
  %v11369 = vld [vmem:[#allocation2 + $0xb9] sm:$0x7f]
  %v11370 = vld [vmem:[#allocation2 + $0xc1] sm:$0xff]
  %v11371 = vld [vmem:[#allocation2 + $0xc9] sm:$0x7f]
  %v11372 = vld [vmem:[#allocation2 + $0xd1] sm:$0xff]
  %v11373 = vld [vmem:[#allocation2 + $0xd9] sm:$0x7f]
  %v11374 = vld [vmem:[#allocation2 + $0xe1] sm:$0xff]
  %v11375 = vld [vmem:[#allocation2 + $0xe9] sm:$0x7f]
  %v11376 = vld [vmem:[#allocation2 + $0x101] sm:$0xff]
  %v11377 = vld [vmem:[#allocation2 + $0x109] sm:$0x7f]
  %v11378 = vld [vmem:[#allocation2 + $0x111] sm:$0xff]
  %v11379 = vld [vmem:[#allocation2 + $0x119] sm:$0x7f]
  %v11380 = vld [vmem:[#allocation2 + $0x121] sm:$0xff]
  %v11381 = vld [vmem:[#allocation2 + $0x129] sm:$0x7f]
  %v11382 = vld [vmem:[#allocation2 + $0x131] sm:$0xff]
  %v11383 = vld [vmem:[#allocation2 + $0x139] sm:$0x7f]
  %v11384 = vld [vmem:[#allocation2 + $0x141] sm:$0xff]
  %v11385 = vld [vmem:[#allocation2 + $0x149] sm:$0x7f]
  %v11386 = vld [vmem:[#allocation2 + $0x151] sm:$0xff]
  %v11387 = vld [vmem:[#allocation2 + $0x159] sm:$0x7f]
  %v11388 = vld [vmem:[#allocation2 + $0x161] sm:$0xff]
  %v11389 = vld [vmem:[#allocation2 + $0x169] sm:$0x7f]
  %v11390 = vld [vmem:[#allocation2 + $0x171] sm:$0xff]
  %v11391 = vld [vmem:[#allocation2 + $0x179] sm:$0x7f]
  %v11392 = vld [vmem:[#allocation2 + $0x181] sm:$0xff]
  %v11393 = vld [vmem:[#allocation2 + $0x189] sm:$0x7f]
  %v11394 = vld [vmem:[#allocation2 + $0x191] sm:$0xff]
  %v11395 = vld [vmem:[#allocation2 + $0x199] sm:$0x7f]
  %v11396 = vld [vmem:[#allocation2 + $0x1a1] sm:$0xff]
  %v11397 = vld [vmem:[#allocation2 + $0x1a9] sm:$0x7f]
  %v11398 = vld [vmem:[#allocation2 + $0x1b1] sm:$0xff]
  %v11399 = vld [vmem:[#allocation2 + $0x1b9] sm:$0x7f]
  %v11400 = vld [vmem:[#allocation2 + $0x1c1] sm:$0xff]
  %v11401 = vld [vmem:[#allocation2 + $0x1c9] sm:$0x7f]
  %v11402 = vld [vmem:[#allocation2 + $0x1d1] sm:$0xff]
  %v11403 = vld [vmem:[#allocation2 + $0x1d9] sm:$0x7f]
  %v11404 = vld [vmem:[#allocation2 + $0x1e1] sm:$0xff]
  %v11405 = vld [vmem:[#allocation2 + $0x1e9] sm:$0x7f]
  %11406 = vrot.lane.b32.xlu0 %v9016, 104
  %v11407 = vpop.permute.xlu0 %11406
  %11408 = vrot.lane.b32.xlu0 %v9019, 104
  %v11409 = vpop.permute.xlu0 %11408
  %11410 = vrot.lane.b32.xlu0 %v9024, 104
  %v11411 = vpop.permute.xlu0 %11410
  %11412 = vrot.lane.b32.xlu0 %v9027, 104
  %v11413 = vpop.permute.xlu0 %11412
  %11414 = vrot.lane.b32.xlu0 %v9032, 104
  %v11415 = vpop.permute.xlu0 %11414
  %11416 = vrot.lane.b32.xlu0 %v9035, 104
  %v11417 = vpop.permute.xlu0 %11416
  %11418 = vrot.lane.b32.xlu0 %v9040, 104
  %v11419 = vpop.permute.xlu0 %11418
  %11420 = vrot.lane.b32.xlu0 %v9043, 104
  %v11421 = vpop.permute.xlu0 %11420
  %11422 = vrot.lane.b32.xlu0 %v9048, 104
  %v11423 = vpop.permute.xlu0 %11422
  %11424 = vrot.lane.b32.xlu0 %v9051, 104
  %v11425 = vpop.permute.xlu0 %11424
  %11426 = vrot.lane.b32.xlu0 %v9056, 104
  %v11427 = vpop.permute.xlu0 %11426
  %11428 = vrot.lane.b32.xlu0 %v9059, 104
  %v11429 = vpop.permute.xlu0 %11428
  %11430 = vrot.lane.b32.xlu0 %v9064, 104
  %v11431 = vpop.permute.xlu0 %11430
  %11432 = vrot.lane.b32.xlu0 %v9067, 104
  %v11433 = vpop.permute.xlu0 %11432
  %11434 = vrot.lane.b32.xlu0 %v9072, 104
  %v11435 = vpop.permute.xlu0 %11434
  %11436 = vrot.lane.b32.xlu0 %v9075, 104
  %v11437 = vpop.permute.xlu0 %11436
  %11438 = vrot.lane.b32.xlu0 %v9080, 104
  %v11439 = vpop.permute.xlu0 %11438
  %11440 = vrot.lane.b32.xlu0 %v9083, 104
  %v11441 = vpop.permute.xlu0 %11440
  %11442 = vrot.lane.b32.xlu0 %v9088, 104
  %v11443 = vpop.permute.xlu0 %11442
  %11444 = vrot.lane.b32.xlu0 %v9091, 104
  %v11445 = vpop.permute.xlu0 %11444
  %11446 = vrot.lane.b32.xlu0 %v9096, 104
  %v11447 = vpop.permute.xlu0 %11446
  %11448 = vrot.lane.b32.xlu0 %v9099, 104
  %v11449 = vpop.permute.xlu0 %11448
  %11450 = vrot.lane.b32.xlu0 %v9104, 104
  %v11451 = vpop.permute.xlu0 %11450
  %11452 = vrot.lane.b32.xlu0 %v9107, 104
  %v11453 = vpop.permute.xlu0 %11452
  %11454 = vrot.lane.b32.xlu0 %v9112, 104
  %v11455 = vpop.permute.xlu0 %11454
  %11456 = vrot.lane.b32.xlu0 %v9115, 104
  %v11457 = vpop.permute.xlu0 %11456
  %11458 = vrot.lane.b32.xlu0 %v9120, 104
  %v11459 = vpop.permute.xlu0 %11458
  %11460 = vrot.lane.b32.xlu0 %v9123, 104
  %v11461 = vpop.permute.xlu0 %11460
  %11462 = vrot.lane.b32.xlu0 %v9128, 104
  %v11463 = vpop.permute.xlu0 %11462
  %11464 = vrot.lane.b32.xlu0 %v9131, 104
  %v11465 = vpop.permute.xlu0 %11464
  %11466 = vrot.lane.b32.xlu0 %v9144, 104
  %v11467 = vpop.permute.xlu0 %11466
  %11468 = vrot.lane.b32.xlu0 %v9147, 104
  %v11469 = vpop.permute.xlu0 %11468
  %11470 = vrot.lane.b32.xlu0 %v9152, 104
  %v11471 = vpop.permute.xlu0 %11470
  %11472 = vrot.lane.b32.xlu0 %v9155, 104
  %v11473 = vpop.permute.xlu0 %11472
  %11474 = vrot.lane.b32.xlu0 %v9160, 104
  %v11475 = vpop.permute.xlu0 %11474
  %11476 = vrot.lane.b32.xlu0 %v9163, 104
  %v11477 = vpop.permute.xlu0 %11476
  %11478 = vrot.lane.b32.xlu0 %v9168, 104
  %v11479 = vpop.permute.xlu0 %11478
  %11480 = vrot.lane.b32.xlu0 %v9171, 104
  %v11481 = vpop.permute.xlu0 %11480
  %11482 = vrot.lane.b32.xlu0 %v9176, 104
  %v11483 = vpop.permute.xlu0 %11482
  %11484 = vrot.lane.b32.xlu0 %v9179, 104
  %v11485 = vpop.permute.xlu0 %11484
  %11486 = vrot.lane.b32.xlu0 %v9184, 104
  %v11487 = vpop.permute.xlu0 %11486
  %11488 = vrot.lane.b32.xlu0 %v9187, 104
  %v11489 = vpop.permute.xlu0 %11488
  %11490 = vrot.lane.b32.xlu0 %v9192, 104
  %v11491 = vpop.permute.xlu0 %11490
  %11492 = vrot.lane.b32.xlu0 %v9195, 104
  %v11493 = vpop.permute.xlu0 %11492
  %11494 = vrot.lane.b32.xlu0 %v9200, 104
  %v11495 = vpop.permute.xlu0 %11494
  %11496 = vrot.lane.b32.xlu0 %v9203, 104
  %v11497 = vpop.permute.xlu0 %11496
  %11498 = vrot.lane.b32.xlu0 %v9208, 104
  %v11499 = vpop.permute.xlu0 %11498
  %11500 = vrot.lane.b32.xlu0 %v9211, 104
  %v11501 = vpop.permute.xlu0 %11500
  %11502 = vrot.lane.b32.xlu0 %v9216, 104
  %v11503 = vpop.permute.xlu0 %11502
  %11504 = vrot.lane.b32.xlu0 %v9219, 104
  %v11505 = vpop.permute.xlu0 %11504
  %11506 = vrot.lane.b32.xlu0 %v9224, 104
  %v11507 = vpop.permute.xlu0 %11506
  %11508 = vrot.lane.b32.xlu0 %v9227, 104
  %v11509 = vpop.permute.xlu0 %11508
  %11510 = vrot.lane.b32.xlu0 %v9232, 104
  %v11511 = vpop.permute.xlu0 %11510
  %11512 = vrot.lane.b32.xlu0 %v9235, 104
  %v11513 = vpop.permute.xlu0 %11512
  %11514 = vrot.lane.b32.xlu0 %v9240, 104
  %v11515 = vpop.permute.xlu0 %11514
  %11516 = vrot.lane.b32.xlu0 %v9243, 104
  %v11517 = vpop.permute.xlu0 %11516
  %11518 = vrot.lane.b32.xlu0 %v9248, 104
  %v11519 = vpop.permute.xlu0 %11518
  %11520 = vrot.lane.b32.xlu0 %v9251, 104
  %v11521 = vpop.permute.xlu0 %11520
  %11522 = vrot.lane.b32.xlu0 %v9256, 104
  %v11523 = vpop.permute.xlu0 %11522
  %11524 = vrot.lane.b32.xlu0 %v9259, 104
  %v11525 = vpop.permute.xlu0 %11524
  %v11586 = vadd.f32 %v11346, %v11407
  %v11587 = vadd.f32 %v11347, %v11409
  %v11588 = vadd.f32 %v11348, %v11411
  %v11589 = vadd.f32 %v11349, %v11413
  %v11590 = vadd.f32 %v11350, %v11415
  %v11591 = vadd.f32 %v11351, %v11417
  %v11592 = vadd.f32 %v11352, %v11419
  %v11593 = vadd.f32 %v11353, %v11421
  %v11594 = vadd.f32 %v11354, %v11423
  %v11595 = vadd.f32 %v11355, %v11425
  %v11596 = vadd.f32 %v11356, %v11427
  %v11597 = vadd.f32 %v11357, %v11429
  %v11598 = vadd.f32 %v11358, %v11431
  %v11599 = vadd.f32 %v11359, %v11433
  %v11600 = vadd.f32 %v11360, %v11435
  %v11601 = vadd.f32 %v11361, %v11437
  %v11602 = vadd.f32 %v11362, %v11439
  %v11603 = vadd.f32 %v11363, %v11441
  %v11604 = vadd.f32 %v11364, %v11443
  %v11605 = vadd.f32 %v11365, %v11445
  %v11606 = vadd.f32 %v11366, %v11447
  %v11607 = vadd.f32 %v11367, %v11449
  %v11608 = vadd.f32 %v11368, %v11451
  %v11609 = vadd.f32 %v11369, %v11453
  %v11610 = vadd.f32 %v11370, %v11455
  %v11611 = vadd.f32 %v11371, %v11457
  %v11612 = vadd.f32 %v11372, %v11459
  %v11613 = vadd.f32 %v11373, %v11461
  %v11614 = vadd.f32 %v11374, %v11463
  %v11615 = vadd.f32 %v11375, %v11465
  %v11616 = vadd.f32 %v11376, %v11467
  %v11617 = vadd.f32 %v11377, %v11469
  %v11618 = vadd.f32 %v11378, %v11471
  %v11619 = vadd.f32 %v11379, %v11473
  %v11620 = vadd.f32 %v11380, %v11475
  %v11621 = vadd.f32 %v11381, %v11477
  %v11622 = vadd.f32 %v11382, %v11479
  %v11623 = vadd.f32 %v11383, %v11481
  %v11624 = vadd.f32 %v11384, %v11483
  %v11625 = vadd.f32 %v11385, %v11485
  %v11626 = vadd.f32 %v11386, %v11487
  %v11627 = vadd.f32 %v11387, %v11489
  %v11628 = vadd.f32 %v11388, %v11491
  %v11629 = vadd.f32 %v11389, %v11493
  %v11630 = vadd.f32 %v11390, %v11495
  %v11631 = vadd.f32 %v11391, %v11497
  %v11632 = vadd.f32 %v11392, %v11499
  %v11633 = vadd.f32 %v11393, %v11501
  %v11634 = vadd.f32 %v11394, %v11503
  %v11635 = vadd.f32 %v11395, %v11505
  %v11636 = vadd.f32 %v11396, %v11507
  %v11637 = vadd.f32 %v11397, %v11509
  %v11638 = vadd.f32 %v11398, %v11511
  %v11639 = vadd.f32 %v11399, %v11513
  %v11640 = vadd.f32 %v11400, %v11515
  %v11641 = vadd.f32 %v11401, %v11517
  %v11642 = vadd.f32 %v11402, %v11519
  %v11643 = vadd.f32 %v11403, %v11521
  %v11644 = vadd.f32 %v11404, %v11523
  %v11645 = vadd.f32 %v11405, %v11525
  %11646 = vst.msk [vmem:[#allocation2 + $0x1] sm:$0xff] %vm1699, %v11586
  %11647 = vst.msk [vmem:[#allocation2 + $0x9] sm:$0x7f] %vm3514, %v11587
  %11648 = vst.msk [vmem:[#allocation2 + $0x11] sm:$0xff] %vm1699, %v11588
  %11649 = vst.msk [vmem:[#allocation2 + $0x19] sm:$0x7f] %vm3514, %v11589
  %11650 = vst.msk [vmem:[#allocation2 + $0x21] sm:$0xff] %vm1699, %v11590
  %11651 = vst.msk [vmem:[#allocation2 + $0x29] sm:$0x7f] %vm3514, %v11591
  %11652 = vst.msk [vmem:[#allocation2 + $0x31] sm:$0xff] %vm1699, %v11592
  %11653 = vst.msk [vmem:[#allocation2 + $0x39] sm:$0x7f] %vm3514, %v11593
  %11654 = vst.msk [vmem:[#allocation2 + $0x41] sm:$0xff] %vm1699, %v11594
  %11655 = vst.msk [vmem:[#allocation2 + $0x49] sm:$0x7f] %vm3514, %v11595
  %11656 = vst.msk [vmem:[#allocation2 + $0x51] sm:$0xff] %vm1699, %v11596
  %11657 = vst.msk [vmem:[#allocation2 + $0x59] sm:$0x7f] %vm3514, %v11597
  %11658 = vst.msk [vmem:[#allocation2 + $0x61] sm:$0xff] %vm1699, %v11598
  %11659 = vst.msk [vmem:[#allocation2 + $0x69] sm:$0x7f] %vm3514, %v11599
  %11660 = vst.msk [vmem:[#allocation2 + $0x71] sm:$0xff] %vm1699, %v11600
  %11661 = vst.msk [vmem:[#allocation2 + $0x79] sm:$0x7f] %vm3514, %v11601
  %11662 = vst.msk [vmem:[#allocation2 + $0x81] sm:$0xff] %vm1699, %v11602
  %11663 = vst.msk [vmem:[#allocation2 + $0x89] sm:$0x7f] %vm3514, %v11603
  %11664 = vst.msk [vmem:[#allocation2 + $0x91] sm:$0xff] %vm1699, %v11604
  %11665 = vst.msk [vmem:[#allocation2 + $0x99] sm:$0x7f] %vm3514, %v11605
  %11666 = vst.msk [vmem:[#allocation2 + $0xa1] sm:$0xff] %vm1699, %v11606
  %11667 = vst.msk [vmem:[#allocation2 + $0xa9] sm:$0x7f] %vm3514, %v11607
  %11668 = vst.msk [vmem:[#allocation2 + $0xb1] sm:$0xff] %vm1699, %v11608
  %11669 = vst.msk [vmem:[#allocation2 + $0xb9] sm:$0x7f] %vm3514, %v11609
  %11670 = vst.msk [vmem:[#allocation2 + $0xc1] sm:$0xff] %vm1699, %v11610
  %11671 = vst.msk [vmem:[#allocation2 + $0xc9] sm:$0x7f] %vm3514, %v11611
  %11672 = vst.msk [vmem:[#allocation2 + $0xd1] sm:$0xff] %vm1699, %v11612
  %11673 = vst.msk [vmem:[#allocation2 + $0xd9] sm:$0x7f] %vm3514, %v11613
  %11674 = vst.msk [vmem:[#allocation2 + $0xe1] sm:$0xff] %vm1699, %v11614
  %11675 = vst.msk [vmem:[#allocation2 + $0xe9] sm:$0x7f] %vm3514, %v11615
  %11676 = vst.msk [vmem:[#allocation2 + $0x101] sm:$0xff] %vm1699, %v11616
  %11677 = vst.msk [vmem:[#allocation2 + $0x109] sm:$0x7f] %vm3514, %v11617
  %11678 = vst.msk [vmem:[#allocation2 + $0x111] sm:$0xff] %vm1699, %v11618
  %11679 = vst.msk [vmem:[#allocation2 + $0x119] sm:$0x7f] %vm3514, %v11619
  %11680 = vst.msk [vmem:[#allocation2 + $0x121] sm:$0xff] %vm1699, %v11620
  %11681 = vst.msk [vmem:[#allocation2 + $0x129] sm:$0x7f] %vm3514, %v11621
  %11682 = vst.msk [vmem:[#allocation2 + $0x131] sm:$0xff] %vm1699, %v11622
  %11683 = vst.msk [vmem:[#allocation2 + $0x139] sm:$0x7f] %vm3514, %v11623
  %11684 = vst.msk [vmem:[#allocation2 + $0x141] sm:$0xff] %vm1699, %v11624
  %11685 = vst.msk [vmem:[#allocation2 + $0x149] sm:$0x7f] %vm3514, %v11625
  %11686 = vst.msk [vmem:[#allocation2 + $0x151] sm:$0xff] %vm1699, %v11626
  %11687 = vst.msk [vmem:[#allocation2 + $0x159] sm:$0x7f] %vm3514, %v11627
  %11688 = vst.msk [vmem:[#allocation2 + $0x161] sm:$0xff] %vm1699, %v11628
  %11689 = vst.msk [vmem:[#allocation2 + $0x169] sm:$0x7f] %vm3514, %v11629
  %11690 = vst.msk [vmem:[#allocation2 + $0x171] sm:$0xff] %vm1699, %v11630
  %11691 = vst.msk [vmem:[#allocation2 + $0x179] sm:$0x7f] %vm3514, %v11631
  %11692 = vst.msk [vmem:[#allocation2 + $0x181] sm:$0xff] %vm1699, %v11632
  %11693 = vst.msk [vmem:[#allocation2 + $0x189] sm:$0x7f] %vm3514, %v11633
  %11694 = vst.msk [vmem:[#allocation2 + $0x191] sm:$0xff] %vm1699, %v11634
  %11695 = vst.msk [vmem:[#allocation2 + $0x199] sm:$0x7f] %vm3514, %v11635
  %11696 = vst.msk [vmem:[#allocation2 + $0x1a1] sm:$0xff] %vm1699, %v11636
  %11697 = vst.msk [vmem:[#allocation2 + $0x1a9] sm:$0x7f] %vm3514, %v11637
  %11698 = vst.msk [vmem:[#allocation2 + $0x1b1] sm:$0xff] %vm1699, %v11638
  %11699 = vst.msk [vmem:[#allocation2 + $0x1b9] sm:$0x7f] %vm3514, %v11639
  %11700 = vst.msk [vmem:[#allocation2 + $0x1c1] sm:$0xff] %vm1699, %v11640
  %11701 = vst.msk [vmem:[#allocation2 + $0x1c9] sm:$0x7f] %vm3514, %v11641
  %11702 = vst.msk [vmem:[#allocation2 + $0x1d1] sm:$0xff] %vm1699, %v11642
  %11703 = vst.msk [vmem:[#allocation2 + $0x1d9] sm:$0x7f] %vm3514, %v11643
  %11704 = vst.msk [vmem:[#allocation2 + $0x1e1] sm:$0xff] %vm1699, %v11644
  %11705 = vst.msk [vmem:[#allocation2 + $0x1e9] sm:$0x7f] %vm3514, %v11645
  %v11706 = vld [vmem:[#allocation2] sm:$0xff]
  %v11707 = vld [vmem:[#allocation2 + $0x8] sm:$0xff]
  %v11708 = vld [vmem:[#allocation2 + $0x10] sm:$0xff]
  %v11709 = vld [vmem:[#allocation2 + $0x18] sm:$0xff]
  %v11710 = vld [vmem:[#allocation2 + $0x20] sm:$0xff]
  %v11711 = vld [vmem:[#allocation2 + $0x28] sm:$0xff]
  %v11712 = vld [vmem:[#allocation2 + $0x30] sm:$0xff]
  %v11713 = vld [vmem:[#allocation2 + $0x38] sm:$0xff]
  %v11714 = vld [vmem:[#allocation2 + $0x40] sm:$0xff]
  %v11715 = vld [vmem:[#allocation2 + $0x48] sm:$0xff]
  %v11716 = vld [vmem:[#allocation2 + $0x50] sm:$0xff]
  %v11717 = vld [vmem:[#allocation2 + $0x58] sm:$0xff]
  %v11718 = vld [vmem:[#allocation2 + $0x60] sm:$0xff]
  %v11719 = vld [vmem:[#allocation2 + $0x68] sm:$0xff]
  %v11720 = vld [vmem:[#allocation2 + $0x70] sm:$0xff]
  %v11721 = vld [vmem:[#allocation2 + $0x78] sm:$0xff]
  %v11722 = vld [vmem:[#allocation2 + $0x80] sm:$0xff]
  %v11723 = vld [vmem:[#allocation2 + $0x88] sm:$0xff]
  %v11724 = vld [vmem:[#allocation2 + $0x90] sm:$0xff]
  %v11725 = vld [vmem:[#allocation2 + $0x98] sm:$0xff]
  %v11726 = vld [vmem:[#allocation2 + $0xa0] sm:$0xff]
  %v11727 = vld [vmem:[#allocation2 + $0xa8] sm:$0xff]
  %v11728 = vld [vmem:[#allocation2 + $0xb0] sm:$0xff]
  %v11729 = vld [vmem:[#allocation2 + $0xb8] sm:$0xff]
  %v11730 = vld [vmem:[#allocation2 + $0xc0] sm:$0xff]
  %v11731 = vld [vmem:[#allocation2 + $0xc8] sm:$0xff]
  %v11732 = vld [vmem:[#allocation2 + $0xd0] sm:$0xff]
  %v11733 = vld [vmem:[#allocation2 + $0xd8] sm:$0xff]
  %v11734 = vld [vmem:[#allocation2 + $0xe0] sm:$0xff]
  %v11735 = vld [vmem:[#allocation2 + $0xe8] sm:$0xff]
  %v11736 = vld [vmem:[#allocation2 + $0x100] sm:$0xff]
  %v11737 = vld [vmem:[#allocation2 + $0x108] sm:$0xff]
  %v11738 = vld [vmem:[#allocation2 + $0x110] sm:$0xff]
  %v11739 = vld [vmem:[#allocation2 + $0x118] sm:$0xff]
  %v11740 = vld [vmem:[#allocation2 + $0x120] sm:$0xff]
  %v11741 = vld [vmem:[#allocation2 + $0x128] sm:$0xff]
  %v11742 = vld [vmem:[#allocation2 + $0x130] sm:$0xff]
  %v11743 = vld [vmem:[#allocation2 + $0x138] sm:$0xff]
  %v11744 = vld [vmem:[#allocation2 + $0x140] sm:$0xff]
  %v11745 = vld [vmem:[#allocation2 + $0x148] sm:$0xff]
  %v11746 = vld [vmem:[#allocation2 + $0x150] sm:$0xff]
  %v11747 = vld [vmem:[#allocation2 + $0x158] sm:$0xff]
  %v11748 = vld [vmem:[#allocation2 + $0x160] sm:$0xff]
  %v11749 = vld [vmem:[#allocation2 + $0x168] sm:$0xff]
  %v11750 = vld [vmem:[#allocation2 + $0x170] sm:$0xff]
  %v11751 = vld [vmem:[#allocation2 + $0x178] sm:$0xff]
  %v11752 = vld [vmem:[#allocation2 + $0x180] sm:$0xff]
  %v11753 = vld [vmem:[#allocation2 + $0x188] sm:$0xff]
  %v11754 = vld [vmem:[#allocation2 + $0x190] sm:$0xff]
  %v11755 = vld [vmem:[#allocation2 + $0x198] sm:$0xff]
  %v11756 = vld [vmem:[#allocation2 + $0x1a0] sm:$0xff]
  %v11757 = vld [vmem:[#allocation2 + $0x1a8] sm:$0xff]
  %v11758 = vld [vmem:[#allocation2 + $0x1b0] sm:$0xff]
  %v11759 = vld [vmem:[#allocation2 + $0x1b8] sm:$0xff]
  %v11760 = vld [vmem:[#allocation2 + $0x1c0] sm:$0xff]
  %v11761 = vld [vmem:[#allocation2 + $0x1c8] sm:$0xff]
  %v11762 = vld [vmem:[#allocation2 + $0x1d0] sm:$0xff]
  %v11763 = vld [vmem:[#allocation2 + $0x1d8] sm:$0xff]
  %v11764 = vld [vmem:[#allocation2 + $0x1e0] sm:$0xff]
  %v11765 = vld [vmem:[#allocation2 + $0x1e8] sm:$0xff]
  %11766 = vrot.lane.b32.xlu0 %v9016, 100
  %v11767 = vpop.permute.xlu0 %11766
  %11768 = vrot.lane.b32.xlu0 %v9019, 100
  %v11769 = vpop.permute.xlu0 %11768
  %11770 = vrot.lane.b32.xlu0 %v9024, 100
  %v11771 = vpop.permute.xlu0 %11770
  %11772 = vrot.lane.b32.xlu0 %v9027, 100
  %v11773 = vpop.permute.xlu0 %11772
  %11774 = vrot.lane.b32.xlu0 %v9032, 100
  %v11775 = vpop.permute.xlu0 %11774
  %11776 = vrot.lane.b32.xlu0 %v9035, 100
  %v11777 = vpop.permute.xlu0 %11776
  %11778 = vrot.lane.b32.xlu0 %v9040, 100
  %v11779 = vpop.permute.xlu0 %11778
  %11780 = vrot.lane.b32.xlu0 %v9043, 100
  %v11781 = vpop.permute.xlu0 %11780
  %11782 = vrot.lane.b32.xlu0 %v9048, 100
  %v11783 = vpop.permute.xlu0 %11782
  %11784 = vrot.lane.b32.xlu0 %v9051, 100
  %v11785 = vpop.permute.xlu0 %11784
  %11786 = vrot.lane.b32.xlu0 %v9056, 100
  %v11787 = vpop.permute.xlu0 %11786
  %11788 = vrot.lane.b32.xlu0 %v9059, 100
  %v11789 = vpop.permute.xlu0 %11788
  %11790 = vrot.lane.b32.xlu0 %v9064, 100
  %v11791 = vpop.permute.xlu0 %11790
  %11792 = vrot.lane.b32.xlu0 %v9067, 100
  %v11793 = vpop.permute.xlu0 %11792
  %11794 = vrot.lane.b32.xlu0 %v9072, 100
  %v11795 = vpop.permute.xlu0 %11794
  %11796 = vrot.lane.b32.xlu0 %v9075, 100
  %v11797 = vpop.permute.xlu0 %11796
  %11798 = vrot.lane.b32.xlu0 %v9080, 100
  %v11799 = vpop.permute.xlu0 %11798
  %11800 = vrot.lane.b32.xlu0 %v9083, 100
  %v11801 = vpop.permute.xlu0 %11800
  %11802 = vrot.lane.b32.xlu0 %v9088, 100
  %v11803 = vpop.permute.xlu0 %11802
  %11804 = vrot.lane.b32.xlu0 %v9091, 100
  %v11805 = vpop.permute.xlu0 %11804
  %11806 = vrot.lane.b32.xlu0 %v9096, 100
  %v11807 = vpop.permute.xlu0 %11806
  %11808 = vrot.lane.b32.xlu0 %v9099, 100
  %v11809 = vpop.permute.xlu0 %11808
  %11810 = vrot.lane.b32.xlu0 %v9104, 100
  %v11811 = vpop.permute.xlu0 %11810
  %11812 = vrot.lane.b32.xlu0 %v9107, 100
  %v11813 = vpop.permute.xlu0 %11812
  %11814 = vrot.lane.b32.xlu0 %v9112, 100
  %v11815 = vpop.permute.xlu0 %11814
  %11816 = vrot.lane.b32.xlu0 %v9115, 100
  %v11817 = vpop.permute.xlu0 %11816
  %11818 = vrot.lane.b32.xlu0 %v9120, 100
  %v11819 = vpop.permute.xlu0 %11818
  %11820 = vrot.lane.b32.xlu0 %v9123, 100
  %v11821 = vpop.permute.xlu0 %11820
  %11822 = vrot.lane.b32.xlu0 %v9128, 100
  %v11823 = vpop.permute.xlu0 %11822
  %11824 = vrot.lane.b32.xlu0 %v9131, 100
  %v11825 = vpop.permute.xlu0 %11824
  %11826 = vrot.lane.b32.xlu0 %v9144, 100
  %v11827 = vpop.permute.xlu0 %11826
  %11828 = vrot.lane.b32.xlu0 %v9147, 100
  %v11829 = vpop.permute.xlu0 %11828
  %11830 = vrot.lane.b32.xlu0 %v9152, 100
  %v11831 = vpop.permute.xlu0 %11830
  %11832 = vrot.lane.b32.xlu0 %v9155, 100
  %v11833 = vpop.permute.xlu0 %11832
  %11834 = vrot.lane.b32.xlu0 %v9160, 100
  %v11835 = vpop.permute.xlu0 %11834
  %11836 = vrot.lane.b32.xlu0 %v9163, 100
  %v11837 = vpop.permute.xlu0 %11836
  %11838 = vrot.lane.b32.xlu0 %v9168, 100
  %v11839 = vpop.permute.xlu0 %11838
  %11840 = vrot.lane.b32.xlu0 %v9171, 100
  %v11841 = vpop.permute.xlu0 %11840
  %11842 = vrot.lane.b32.xlu0 %v9176, 100
  %v11843 = vpop.permute.xlu0 %11842
  %11844 = vrot.lane.b32.xlu0 %v9179, 100
  %v11845 = vpop.permute.xlu0 %11844
  %11846 = vrot.lane.b32.xlu0 %v9184, 100
  %v11847 = vpop.permute.xlu0 %11846
  %11848 = vrot.lane.b32.xlu0 %v9187, 100
  %v11849 = vpop.permute.xlu0 %11848
  %11850 = vrot.lane.b32.xlu0 %v9192, 100
  %v11851 = vpop.permute.xlu0 %11850
  %11852 = vrot.lane.b32.xlu0 %v9195, 100
  %v11853 = vpop.permute.xlu0 %11852
  %11854 = vrot.lane.b32.xlu0 %v9200, 100
  %v11855 = vpop.permute.xlu0 %11854
  %11856 = vrot.lane.b32.xlu0 %v9203, 100
  %v11857 = vpop.permute.xlu0 %11856
  %11858 = vrot.lane.b32.xlu0 %v9208, 100
  %v11859 = vpop.permute.xlu0 %11858
  %11860 = vrot.lane.b32.xlu0 %v9211, 100
  %v11861 = vpop.permute.xlu0 %11860
  %11862 = vrot.lane.b32.xlu0 %v9216, 100
  %v11863 = vpop.permute.xlu0 %11862
  %11864 = vrot.lane.b32.xlu0 %v9219, 100
  %v11865 = vpop.permute.xlu0 %11864
  %11866 = vrot.lane.b32.xlu0 %v9224, 100
  %v11867 = vpop.permute.xlu0 %11866
  %11868 = vrot.lane.b32.xlu0 %v9227, 100
  %v11869 = vpop.permute.xlu0 %11868
  %11870 = vrot.lane.b32.xlu0 %v9232, 100
  %v11871 = vpop.permute.xlu0 %11870
  %11872 = vrot.lane.b32.xlu0 %v9235, 100
  %v11873 = vpop.permute.xlu0 %11872
  %11874 = vrot.lane.b32.xlu0 %v9240, 100
  %v11875 = vpop.permute.xlu0 %11874
  %11876 = vrot.lane.b32.xlu0 %v9243, 100
  %v11877 = vpop.permute.xlu0 %11876
  %11878 = vrot.lane.b32.xlu0 %v9248, 100
  %v11879 = vpop.permute.xlu0 %11878
  %11880 = vrot.lane.b32.xlu0 %v9251, 100
  %v11881 = vpop.permute.xlu0 %11880
  %11882 = vrot.lane.b32.xlu0 %v9256, 100
  %v11883 = vpop.permute.xlu0 %11882
  %11884 = vrot.lane.b32.xlu0 %v9259, 100
  %v11885 = vpop.permute.xlu0 %11884
  %v11946 = vadd.f32 %v11706, %v11767
  %v11947 = vadd.f32 %v11707, %v11769
  %v11948 = vadd.f32 %v11708, %v11771
  %v11949 = vadd.f32 %v11709, %v11773
  %v11950 = vadd.f32 %v11710, %v11775
  %v11951 = vadd.f32 %v11711, %v11777
  %v11952 = vadd.f32 %v11712, %v11779
  %v11953 = vadd.f32 %v11713, %v11781
  %v11954 = vadd.f32 %v11714, %v11783
  %v11955 = vadd.f32 %v11715, %v11785
  %v11956 = vadd.f32 %v11716, %v11787
  %v11957 = vadd.f32 %v11717, %v11789
  %v11958 = vadd.f32 %v11718, %v11791
  %v11959 = vadd.f32 %v11719, %v11793
  %v11960 = vadd.f32 %v11720, %v11795
  %v11961 = vadd.f32 %v11721, %v11797
  %v11962 = vadd.f32 %v11722, %v11799
  %v11963 = vadd.f32 %v11723, %v11801
  %v11964 = vadd.f32 %v11724, %v11803
  %v11965 = vadd.f32 %v11725, %v11805
  %v11966 = vadd.f32 %v11726, %v11807
  %v11967 = vadd.f32 %v11727, %v11809
  %v11968 = vadd.f32 %v11728, %v11811
  %v11969 = vadd.f32 %v11729, %v11813
  %v11970 = vadd.f32 %v11730, %v11815
  %v11971 = vadd.f32 %v11731, %v11817
  %v11972 = vadd.f32 %v11732, %v11819
  %v11973 = vadd.f32 %v11733, %v11821
  %v11974 = vadd.f32 %v11734, %v11823
  %v11975 = vadd.f32 %v11735, %v11825
  %v11976 = vadd.f32 %v11736, %v11827
  %v11977 = vadd.f32 %v11737, %v11829
  %v11978 = vadd.f32 %v11738, %v11831
  %v11979 = vadd.f32 %v11739, %v11833
  %v11980 = vadd.f32 %v11740, %v11835
  %v11981 = vadd.f32 %v11741, %v11837
  %v11982 = vadd.f32 %v11742, %v11839
  %v11983 = vadd.f32 %v11743, %v11841
  %v11984 = vadd.f32 %v11744, %v11843
  %v11985 = vadd.f32 %v11745, %v11845
  %v11986 = vadd.f32 %v11746, %v11847
  %v11987 = vadd.f32 %v11747, %v11849
  %v11988 = vadd.f32 %v11748, %v11851
  %v11989 = vadd.f32 %v11749, %v11853
  %v11990 = vadd.f32 %v11750, %v11855
  %v11991 = vadd.f32 %v11751, %v11857
  %v11992 = vadd.f32 %v11752, %v11859
  %v11993 = vadd.f32 %v11753, %v11861
  %v11994 = vadd.f32 %v11754, %v11863
  %v11995 = vadd.f32 %v11755, %v11865
  %v11996 = vadd.f32 %v11756, %v11867
  %v11997 = vadd.f32 %v11757, %v11869
  %v11998 = vadd.f32 %v11758, %v11871
  %v11999 = vadd.f32 %v11759, %v11873
  %v12000 = vadd.f32 %v11760, %v11875
  %v12001 = vadd.f32 %v11761, %v11877
  %v12002 = vadd.f32 %v11762, %v11879
  %v12003 = vadd.f32 %v11763, %v11881
  %v12004 = vadd.f32 %v11764, %v11883
  %v12005 = vadd.f32 %v11765, %v11885
  %12006 = vst.msk [vmem:[#allocation2] sm:$0xff] %vm1699, %v11946
  %12007 = vst.msk [vmem:[#allocation2 + $0x8] sm:$0xff] %vm1699, %v11947
  %12008 = vst.msk [vmem:[#allocation2 + $0x10] sm:$0xff] %vm1699, %v11948
  %12009 = vst.msk [vmem:[#allocation2 + $0x18] sm:$0xff] %vm1699, %v11949
  %12010 = vst.msk [vmem:[#allocation2 + $0x20] sm:$0xff] %vm1699, %v11950
  %12011 = vst.msk [vmem:[#allocation2 + $0x28] sm:$0xff] %vm1699, %v11951
  %12012 = vst.msk [vmem:[#allocation2 + $0x30] sm:$0xff] %vm1699, %v11952
  %12013 = vst.msk [vmem:[#allocation2 + $0x38] sm:$0xff] %vm1699, %v11953
  %12014 = vst.msk [vmem:[#allocation2 + $0x40] sm:$0xff] %vm1699, %v11954
  %12015 = vst.msk [vmem:[#allocation2 + $0x48] sm:$0xff] %vm1699, %v11955
  %12016 = vst.msk [vmem:[#allocation2 + $0x50] sm:$0xff] %vm1699, %v11956
  %12017 = vst.msk [vmem:[#allocation2 + $0x58] sm:$0xff] %vm1699, %v11957
  %12018 = vst.msk [vmem:[#allocation2 + $0x60] sm:$0xff] %vm1699, %v11958
  %12019 = vst.msk [vmem:[#allocation2 + $0x68] sm:$0xff] %vm1699, %v11959
  %12020 = vst.msk [vmem:[#allocation2 + $0x70] sm:$0xff] %vm1699, %v11960
  %12021 = vst.msk [vmem:[#allocation2 + $0x78] sm:$0xff] %vm1699, %v11961
  %12022 = vst.msk [vmem:[#allocation2 + $0x80] sm:$0xff] %vm1699, %v11962
  %12023 = vst.msk [vmem:[#allocation2 + $0x88] sm:$0xff] %vm1699, %v11963
  %12024 = vst.msk [vmem:[#allocation2 + $0x90] sm:$0xff] %vm1699, %v11964
  %12025 = vst.msk [vmem:[#allocation2 + $0x98] sm:$0xff] %vm1699, %v11965
  %12026 = vst.msk [vmem:[#allocation2 + $0xa0] sm:$0xff] %vm1699, %v11966
  %12027 = vst.msk [vmem:[#allocation2 + $0xa8] sm:$0xff] %vm1699, %v11967
  %12028 = vst.msk [vmem:[#allocation2 + $0xb0] sm:$0xff] %vm1699, %v11968
  %12029 = vst.msk [vmem:[#allocation2 + $0xb8] sm:$0xff] %vm1699, %v11969
  %12030 = vst.msk [vmem:[#allocation2 + $0xc0] sm:$0xff] %vm1699, %v11970
  %12031 = vst.msk [vmem:[#allocation2 + $0xc8] sm:$0xff] %vm1699, %v11971
  %12032 = vst.msk [vmem:[#allocation2 + $0xd0] sm:$0xff] %vm1699, %v11972
  %12033 = vst.msk [vmem:[#allocation2 + $0xd8] sm:$0xff] %vm1699, %v11973
  %12034 = vst.msk [vmem:[#allocation2 + $0xe0] sm:$0xff] %vm1699, %v11974
  %12035 = vst.msk [vmem:[#allocation2 + $0xe8] sm:$0xff] %vm1699, %v11975
  %12036 = vst.msk [vmem:[#allocation2 + $0x100] sm:$0xff] %vm1699, %v11976
  %12037 = vst.msk [vmem:[#allocation2 + $0x108] sm:$0xff] %vm1699, %v11977
  %12038 = vst.msk [vmem:[#allocation2 + $0x110] sm:$0xff] %vm1699, %v11978
  %12039 = vst.msk [vmem:[#allocation2 + $0x118] sm:$0xff] %vm1699, %v11979
  %12040 = vst.msk [vmem:[#allocation2 + $0x120] sm:$0xff] %vm1699, %v11980
  %12041 = vst.msk [vmem:[#allocation2 + $0x128] sm:$0xff] %vm1699, %v11981
  %12042 = vst.msk [vmem:[#allocation2 + $0x130] sm:$0xff] %vm1699, %v11982
  %12043 = vst.msk [vmem:[#allocation2 + $0x138] sm:$0xff] %vm1699, %v11983
  %12044 = vst.msk [vmem:[#allocation2 + $0x140] sm:$0xff] %vm1699, %v11984
  %12045 = vst.msk [vmem:[#allocation2 + $0x148] sm:$0xff] %vm1699, %v11985
  %12046 = vst.msk [vmem:[#allocation2 + $0x150] sm:$0xff] %vm1699, %v11986
  %12047 = vst.msk [vmem:[#allocation2 + $0x158] sm:$0xff] %vm1699, %v11987
  %12048 = vst.msk [vmem:[#allocation2 + $0x160] sm:$0xff] %vm1699, %v11988
  %12049 = vst.msk [vmem:[#allocation2 + $0x168] sm:$0xff] %vm1699, %v11989
  %12050 = vst.msk [vmem:[#allocation2 + $0x170] sm:$0xff] %vm1699, %v11990
  %12051 = vst.msk [vmem:[#allocation2 + $0x178] sm:$0xff] %vm1699, %v11991
  %12052 = vst.msk [vmem:[#allocation2 + $0x180] sm:$0xff] %vm1699, %v11992
  %12053 = vst.msk [vmem:[#allocation2 + $0x188] sm:$0xff] %vm1699, %v11993
  %12054 = vst.msk [vmem:[#allocation2 + $0x190] sm:$0xff] %vm1699, %v11994
  %12055 = vst.msk [vmem:[#allocation2 + $0x198] sm:$0xff] %vm1699, %v11995
  %12056 = vst.msk [vmem:[#allocation2 + $0x1a0] sm:$0xff] %vm1699, %v11996
  %12057 = vst.msk [vmem:[#allocation2 + $0x1a8] sm:$0xff] %vm1699, %v11997
  %12058 = vst.msk [vmem:[#allocation2 + $0x1b0] sm:$0xff] %vm1699, %v11998
  %12059 = vst.msk [vmem:[#allocation2 + $0x1b8] sm:$0xff] %vm1699, %v11999
  %12060 = vst.msk [vmem:[#allocation2 + $0x1c0] sm:$0xff] %vm1699, %v12000
  %12061 = vst.msk [vmem:[#allocation2 + $0x1c8] sm:$0xff] %vm1699, %v12001
  %12062 = vst.msk [vmem:[#allocation2 + $0x1d0] sm:$0xff] %vm1699, %v12002
  %12063 = vst.msk [vmem:[#allocation2 + $0x1d8] sm:$0xff] %vm1699, %v12003
  %12064 = vst.msk [vmem:[#allocation2 + $0x1e0] sm:$0xff] %vm1699, %v12004
  %12065 = vst.msk [vmem:[#allocation2 + $0x1e8] sm:$0xff] %vm1699, %v12005
  %v12066 = vld [vmem:[#allocation2] sm:$0xff]
  %v12067 = vld [vmem:[#allocation2 + $0x8] sm:$0x7f]
  %v12068 = vld [vmem:[#allocation2 + $0x10] sm:$0xff]
  %v12069 = vld [vmem:[#allocation2 + $0x18] sm:$0x7f]
  %v12070 = vld [vmem:[#allocation2 + $0x20] sm:$0xff]
  %v12071 = vld [vmem:[#allocation2 + $0x28] sm:$0x7f]
  %v12072 = vld [vmem:[#allocation2 + $0x30] sm:$0xff]
  %v12073 = vld [vmem:[#allocation2 + $0x38] sm:$0x7f]
  %v12074 = vld [vmem:[#allocation2 + $0x40] sm:$0xff]
  %v12075 = vld [vmem:[#allocation2 + $0x48] sm:$0x7f]
  %v12076 = vld [vmem:[#allocation2 + $0x50] sm:$0xff]
  %v12077 = vld [vmem:[#allocation2 + $0x58] sm:$0x7f]
  %v12078 = vld [vmem:[#allocation2 + $0x60] sm:$0xff]
  %v12079 = vld [vmem:[#allocation2 + $0x68] sm:$0x7f]
  %v12080 = vld [vmem:[#allocation2 + $0x70] sm:$0xff]
  %v12081 = vld [vmem:[#allocation2 + $0x78] sm:$0x7f]
  %v12082 = vld [vmem:[#allocation2 + $0x80] sm:$0xff]
  %v12083 = vld [vmem:[#allocation2 + $0x88] sm:$0x7f]
  %v12084 = vld [vmem:[#allocation2 + $0x90] sm:$0xff]
  %v12085 = vld [vmem:[#allocation2 + $0x98] sm:$0x7f]
  %v12086 = vld [vmem:[#allocation2 + $0xa0] sm:$0xff]
  %v12087 = vld [vmem:[#allocation2 + $0xa8] sm:$0x7f]
  %v12088 = vld [vmem:[#allocation2 + $0xb0] sm:$0xff]
  %v12089 = vld [vmem:[#allocation2 + $0xb8] sm:$0x7f]
  %v12090 = vld [vmem:[#allocation2 + $0xc0] sm:$0xff]
  %v12091 = vld [vmem:[#allocation2 + $0xc8] sm:$0x7f]
  %v12092 = vld [vmem:[#allocation2 + $0xd0] sm:$0xff]
  %v12093 = vld [vmem:[#allocation2 + $0xd8] sm:$0x7f]
  %v12094 = vld [vmem:[#allocation2 + $0xe0] sm:$0xff]
  %v12095 = vld [vmem:[#allocation2 + $0xe8] sm:$0x7f]
  %v12096 = vld [vmem:[#allocation2 + $0x100] sm:$0xff]
  %v12097 = vld [vmem:[#allocation2 + $0x108] sm:$0x7f]
  %v12098 = vld [vmem:[#allocation2 + $0x110] sm:$0xff]
  %v12099 = vld [vmem:[#allocation2 + $0x118] sm:$0x7f]
  %v12100 = vld [vmem:[#allocation2 + $0x120] sm:$0xff]
  %v12101 = vld [vmem:[#allocation2 + $0x128] sm:$0x7f]
  %v12102 = vld [vmem:[#allocation2 + $0x130] sm:$0xff]
  %v12103 = vld [vmem:[#allocation2 + $0x138] sm:$0x7f]
  %v12104 = vld [vmem:[#allocation2 + $0x140] sm:$0xff]
  %v12105 = vld [vmem:[#allocation2 + $0x148] sm:$0x7f]
  %v12106 = vld [vmem:[#allocation2 + $0x150] sm:$0xff]
  %v12107 = vld [vmem:[#allocation2 + $0x158] sm:$0x7f]
  %v12108 = vld [vmem:[#allocation2 + $0x160] sm:$0xff]
  %v12109 = vld [vmem:[#allocation2 + $0x168] sm:$0x7f]
  %v12110 = vld [vmem:[#allocation2 + $0x170] sm:$0xff]
  %v12111 = vld [vmem:[#allocation2 + $0x178] sm:$0x7f]
  %v12112 = vld [vmem:[#allocation2 + $0x180] sm:$0xff]
  %v12113 = vld [vmem:[#allocation2 + $0x188] sm:$0x7f]
  %v12114 = vld [vmem:[#allocation2 + $0x190] sm:$0xff]
  %v12115 = vld [vmem:[#allocation2 + $0x198] sm:$0x7f]
  %v12116 = vld [vmem:[#allocation2 + $0x1a0] sm:$0xff]
  %v12117 = vld [vmem:[#allocation2 + $0x1a8] sm:$0x7f]
  %v12118 = vld [vmem:[#allocation2 + $0x1b0] sm:$0xff]
  %v12119 = vld [vmem:[#allocation2 + $0x1b8] sm:$0x7f]
  %v12120 = vld [vmem:[#allocation2 + $0x1c0] sm:$0xff]
  %v12121 = vld [vmem:[#allocation2 + $0x1c8] sm:$0x7f]
  %v12122 = vld [vmem:[#allocation2 + $0x1d0] sm:$0xff]
  %v12123 = vld [vmem:[#allocation2 + $0x1d8] sm:$0x7f]
  %v12124 = vld [vmem:[#allocation2 + $0x1e0] sm:$0xff]
  %v12125 = vld [vmem:[#allocation2 + $0x1e8] sm:$0x7f]
  %12126 = vrot.lane.b32.xlu0 %v10187, 96
  %v12127 = vpop.permute.xlu0 %12126
  %12128 = vrot.lane.b32.xlu0 %v10186, 96
  %v12129 = vpop.permute.xlu0 %12128
  %12130 = vrot.lane.b32.xlu0 %v10190, 96
  %v12131 = vpop.permute.xlu0 %12130
  %12132 = vrot.lane.b32.xlu0 %v10189, 96
  %v12133 = vpop.permute.xlu0 %12132
  %12134 = vrot.lane.b32.xlu0 %v10193, 96
  %v12135 = vpop.permute.xlu0 %12134
  %12136 = vrot.lane.b32.xlu0 %v10192, 96
  %v12137 = vpop.permute.xlu0 %12136
  %12138 = vrot.lane.b32.xlu0 %v10196, 96
  %v12139 = vpop.permute.xlu0 %12138
  %12140 = vrot.lane.b32.xlu0 %v10195, 96
  %v12141 = vpop.permute.xlu0 %12140
  %12142 = vrot.lane.b32.xlu0 %v10199, 96
  %v12143 = vpop.permute.xlu0 %12142
  %12144 = vrot.lane.b32.xlu0 %v10198, 96
  %v12145 = vpop.permute.xlu0 %12144
  %12146 = vrot.lane.b32.xlu0 %v10202, 96
  %v12147 = vpop.permute.xlu0 %12146
  %12148 = vrot.lane.b32.xlu0 %v10201, 96
  %v12149 = vpop.permute.xlu0 %12148
  %12150 = vrot.lane.b32.xlu0 %v10205, 96
  %v12151 = vpop.permute.xlu0 %12150
  %12152 = vrot.lane.b32.xlu0 %v10204, 96
  %v12153 = vpop.permute.xlu0 %12152
  %12154 = vrot.lane.b32.xlu0 %v10208, 96
  %v12155 = vpop.permute.xlu0 %12154
  %12156 = vrot.lane.b32.xlu0 %v10207, 96
  %v12157 = vpop.permute.xlu0 %12156
  %12158 = vrot.lane.b32.xlu0 %v10211, 96
  %v12159 = vpop.permute.xlu0 %12158
  %12160 = vrot.lane.b32.xlu0 %v10210, 96
  %v12161 = vpop.permute.xlu0 %12160
  %12162 = vrot.lane.b32.xlu0 %v10214, 96
  %v12163 = vpop.permute.xlu0 %12162
  %12164 = vrot.lane.b32.xlu0 %v10213, 96
  %v12165 = vpop.permute.xlu0 %12164
  %12166 = vrot.lane.b32.xlu0 %v10217, 96
  %v12167 = vpop.permute.xlu0 %12166
  %12168 = vrot.lane.b32.xlu0 %v10216, 96
  %v12169 = vpop.permute.xlu0 %12168
  %12170 = vrot.lane.b32.xlu0 %v10220, 96
  %v12171 = vpop.permute.xlu0 %12170
  %12172 = vrot.lane.b32.xlu0 %v10219, 96
  %v12173 = vpop.permute.xlu0 %12172
  %12174 = vrot.lane.b32.xlu0 %v10223, 96
  %v12175 = vpop.permute.xlu0 %12174
  %12176 = vrot.lane.b32.xlu0 %v10222, 96
  %v12177 = vpop.permute.xlu0 %12176
  %12178 = vrot.lane.b32.xlu0 %v10226, 96
  %v12179 = vpop.permute.xlu0 %12178
  %12180 = vrot.lane.b32.xlu0 %v10225, 96
  %v12181 = vpop.permute.xlu0 %12180
  %12182 = vrot.lane.b32.xlu0 %v11022, 96
  %v12183 = vpop.permute.xlu0 %12182
  %12184 = vrot.lane.b32.xlu0 %v11021, 96
  %v12185 = vpop.permute.xlu0 %12184
  %12186 = vrot.lane.b32.xlu0 %v10232, 96
  %v12187 = vpop.permute.xlu0 %12186
  %12188 = vrot.lane.b32.xlu0 %v10231, 96
  %v12189 = vpop.permute.xlu0 %12188
  %12190 = vrot.lane.b32.xlu0 %v10235, 96
  %v12191 = vpop.permute.xlu0 %12190
  %12192 = vrot.lane.b32.xlu0 %v10234, 96
  %v12193 = vpop.permute.xlu0 %12192
  %12194 = vrot.lane.b32.xlu0 %v10238, 96
  %v12195 = vpop.permute.xlu0 %12194
  %12196 = vrot.lane.b32.xlu0 %v10237, 96
  %v12197 = vpop.permute.xlu0 %12196
  %12198 = vrot.lane.b32.xlu0 %v10241, 96
  %v12199 = vpop.permute.xlu0 %12198
  %12200 = vrot.lane.b32.xlu0 %v10240, 96
  %v12201 = vpop.permute.xlu0 %12200
  %12202 = vrot.lane.b32.xlu0 %v10244, 96
  %v12203 = vpop.permute.xlu0 %12202
  %12204 = vrot.lane.b32.xlu0 %v10243, 96
  %v12205 = vpop.permute.xlu0 %12204
  %12206 = vrot.lane.b32.xlu0 %v10247, 96
  %v12207 = vpop.permute.xlu0 %12206
  %12208 = vrot.lane.b32.xlu0 %v10246, 96
  %v12209 = vpop.permute.xlu0 %12208
  %12210 = vrot.lane.b32.xlu0 %v10250, 96
  %v12211 = vpop.permute.xlu0 %12210
  %12212 = vrot.lane.b32.xlu0 %v10249, 96
  %v12213 = vpop.permute.xlu0 %12212
  %12214 = vrot.lane.b32.xlu0 %v10253, 96
  %v12215 = vpop.permute.xlu0 %12214
  %12216 = vrot.lane.b32.xlu0 %v10252, 96
  %v12217 = vpop.permute.xlu0 %12216
  %12218 = vrot.lane.b32.xlu0 %v10256, 96
  %v12219 = vpop.permute.xlu0 %12218
  %12220 = vrot.lane.b32.xlu0 %v10255, 96
  %v12221 = vpop.permute.xlu0 %12220
  %12222 = vrot.lane.b32.xlu0 %v10259, 96
  %v12223 = vpop.permute.xlu0 %12222
  %12224 = vrot.lane.b32.xlu0 %v10258, 96
  %v12225 = vpop.permute.xlu0 %12224
  %12226 = vrot.lane.b32.xlu0 %v10262, 96
  %v12227 = vpop.permute.xlu0 %12226
  %12228 = vrot.lane.b32.xlu0 %v10261, 96
  %v12229 = vpop.permute.xlu0 %12228
  %12230 = vrot.lane.b32.xlu0 %v10265, 96
  %v12231 = vpop.permute.xlu0 %12230
  %12232 = vrot.lane.b32.xlu0 %v10264, 96
  %v12233 = vpop.permute.xlu0 %12232
  %12234 = vrot.lane.b32.xlu0 %v10268, 96
  %v12235 = vpop.permute.xlu0 %12234
  %12236 = vrot.lane.b32.xlu0 %v10267, 96
  %v12237 = vpop.permute.xlu0 %12236
  %12238 = vrot.lane.b32.xlu0 %v10271, 96
  %v12239 = vpop.permute.xlu0 %12238
  %12240 = vrot.lane.b32.xlu0 %v10270, 96
  %v12241 = vpop.permute.xlu0 %12240
  %12242 = vrot.lane.b32.xlu0 %v11025, 96
  %v12243 = vpop.permute.xlu0 %12242
  %12244 = vrot.lane.b32.xlu0 %v11024, 96
  %v12245 = vpop.permute.xlu0 %12244
  %v12306 = vadd.f32 %v12066, %v12127
  %v12307 = vadd.f32 %v12067, %v12129
  %v12308 = vadd.f32 %v12068, %v12131
  %v12309 = vadd.f32 %v12069, %v12133
  %v12310 = vadd.f32 %v12070, %v12135
  %v12311 = vadd.f32 %v12071, %v12137
  %v12312 = vadd.f32 %v12072, %v12139
  %v12313 = vadd.f32 %v12073, %v12141
  %v12314 = vadd.f32 %v12074, %v12143
  %v12315 = vadd.f32 %v12075, %v12145
  %v12316 = vadd.f32 %v12076, %v12147
  %v12317 = vadd.f32 %v12077, %v12149
  %v12318 = vadd.f32 %v12078, %v12151
  %v12319 = vadd.f32 %v12079, %v12153
  %v12320 = vadd.f32 %v12080, %v12155
  %v12321 = vadd.f32 %v12081, %v12157
  %v12322 = vadd.f32 %v12082, %v12159
  %v12323 = vadd.f32 %v12083, %v12161
  %v12324 = vadd.f32 %v12084, %v12163
  %v12325 = vadd.f32 %v12085, %v12165
  %v12326 = vadd.f32 %v12086, %v12167
  %v12327 = vadd.f32 %v12087, %v12169
  %v12328 = vadd.f32 %v12088, %v12171
  %v12329 = vadd.f32 %v12089, %v12173
  %v12330 = vadd.f32 %v12090, %v12175
  %v12331 = vadd.f32 %v12091, %v12177
  %v12332 = vadd.f32 %v12092, %v12179
  %v12333 = vadd.f32 %v12093, %v12181
  %v12334 = vadd.f32 %v12094, %v12183
  %v12335 = vadd.f32 %v12095, %v12185
  %v12336 = vadd.f32 %v12096, %v12187
  %v12337 = vadd.f32 %v12097, %v12189
  %v12338 = vadd.f32 %v12098, %v12191
  %v12339 = vadd.f32 %v12099, %v12193
  %v12340 = vadd.f32 %v12100, %v12195
  %v12341 = vadd.f32 %v12101, %v12197
  %v12342 = vadd.f32 %v12102, %v12199
  %v12343 = vadd.f32 %v12103, %v12201
  %v12344 = vadd.f32 %v12104, %v12203
  %v12345 = vadd.f32 %v12105, %v12205
  %v12346 = vadd.f32 %v12106, %v12207
  %v12347 = vadd.f32 %v12107, %v12209
  %v12348 = vadd.f32 %v12108, %v12211
  %v12349 = vadd.f32 %v12109, %v12213
  %v12350 = vadd.f32 %v12110, %v12215
  %v12351 = vadd.f32 %v12111, %v12217
  %v12352 = vadd.f32 %v12112, %v12219
  %v12353 = vadd.f32 %v12113, %v12221
  %v12354 = vadd.f32 %v12114, %v12223
  %v12355 = vadd.f32 %v12115, %v12225
  %v12356 = vadd.f32 %v12116, %v12227
  %v12357 = vadd.f32 %v12117, %v12229
  %v12358 = vadd.f32 %v12118, %v12231
  %v12359 = vadd.f32 %v12119, %v12233
  %v12360 = vadd.f32 %v12120, %v12235
  %v12361 = vadd.f32 %v12121, %v12237
  %v12362 = vadd.f32 %v12122, %v12239
  %v12363 = vadd.f32 %v12123, %v12241
  %v12364 = vadd.f32 %v12124, %v12243
  %v12365 = vadd.f32 %v12125, %v12245
  %12366 = vst.msk [vmem:[#allocation2] sm:$0xff] %vm1699, %v12306
  %12367 = vst.msk [vmem:[#allocation2 + $0x8] sm:$0x7f] %vm3514, %v12307
  %12368 = vst.msk [vmem:[#allocation2 + $0x10] sm:$0xff] %vm1699, %v12308
  %12369 = vst.msk [vmem:[#allocation2 + $0x18] sm:$0x7f] %vm3514, %v12309
  %12370 = vst.msk [vmem:[#allocation2 + $0x20] sm:$0xff] %vm1699, %v12310
  %12371 = vst.msk [vmem:[#allocation2 + $0x28] sm:$0x7f] %vm3514, %v12311
  %12372 = vst.msk [vmem:[#allocation2 + $0x30] sm:$0xff] %vm1699, %v12312
  %12373 = vst.msk [vmem:[#allocation2 + $0x38] sm:$0x7f] %vm3514, %v12313
  %12374 = vst.msk [vmem:[#allocation2 + $0x40] sm:$0xff] %vm1699, %v12314
  %12375 = vst.msk [vmem:[#allocation2 + $0x48] sm:$0x7f] %vm3514, %v12315
  %12376 = vst.msk [vmem:[#allocation2 + $0x50] sm:$0xff] %vm1699, %v12316
  %12377 = vst.msk [vmem:[#allocation2 + $0x58] sm:$0x7f] %vm3514, %v12317
  %12378 = vst.msk [vmem:[#allocation2 + $0x60] sm:$0xff] %vm1699, %v12318
  %12379 = vst.msk [vmem:[#allocation2 + $0x68] sm:$0x7f] %vm3514, %v12319
  %12380 = vst.msk [vmem:[#allocation2 + $0x70] sm:$0xff] %vm1699, %v12320
  %12381 = vst.msk [vmem:[#allocation2 + $0x78] sm:$0x7f] %vm3514, %v12321
  %12382 = vst.msk [vmem:[#allocation2 + $0x80] sm:$0xff] %vm1699, %v12322
  %12383 = vst.msk [vmem:[#allocation2 + $0x88] sm:$0x7f] %vm3514, %v12323
  %12384 = vst.msk [vmem:[#allocation2 + $0x90] sm:$0xff] %vm1699, %v12324
  %12385 = vst.msk [vmem:[#allocation2 + $0x98] sm:$0x7f] %vm3514, %v12325
  %12386 = vst.msk [vmem:[#allocation2 + $0xa0] sm:$0xff] %vm1699, %v12326
  %12387 = vst.msk [vmem:[#allocation2 + $0xa8] sm:$0x7f] %vm3514, %v12327
  %12388 = vst.msk [vmem:[#allocation2 + $0xb0] sm:$0xff] %vm1699, %v12328
  %12389 = vst.msk [vmem:[#allocation2 + $0xb8] sm:$0x7f] %vm3514, %v12329
  %12390 = vst.msk [vmem:[#allocation2 + $0xc0] sm:$0xff] %vm1699, %v12330
  %12391 = vst.msk [vmem:[#allocation2 + $0xc8] sm:$0x7f] %vm3514, %v12331
  %12392 = vst.msk [vmem:[#allocation2 + $0xd0] sm:$0xff] %vm1699, %v12332
  %12393 = vst.msk [vmem:[#allocation2 + $0xd8] sm:$0x7f] %vm3514, %v12333
  %12394 = vst.msk [vmem:[#allocation2 + $0xe0] sm:$0xff] %vm1699, %v12334
  %12395 = vst.msk [vmem:[#allocation2 + $0xe8] sm:$0x7f] %vm3514, %v12335
  %12396 = vst.msk [vmem:[#allocation2 + $0x100] sm:$0xff] %vm1699, %v12336
  %12397 = vst.msk [vmem:[#allocation2 + $0x108] sm:$0x7f] %vm3514, %v12337
  %12398 = vst.msk [vmem:[#allocation2 + $0x110] sm:$0xff] %vm1699, %v12338
  %12399 = vst.msk [vmem:[#allocation2 + $0x118] sm:$0x7f] %vm3514, %v12339
  %12400 = vst.msk [vmem:[#allocation2 + $0x120] sm:$0xff] %vm1699, %v12340
  %12401 = vst.msk [vmem:[#allocation2 + $0x128] sm:$0x7f] %vm3514, %v12341
  %12402 = vst.msk [vmem:[#allocation2 + $0x130] sm:$0xff] %vm1699, %v12342
  %12403 = vst.msk [vmem:[#allocation2 + $0x138] sm:$0x7f] %vm3514, %v12343
  %12404 = vst.msk [vmem:[#allocation2 + $0x140] sm:$0xff] %vm1699, %v12344
  %12405 = vst.msk [vmem:[#allocation2 + $0x148] sm:$0x7f] %vm3514, %v12345
  %12406 = vst.msk [vmem:[#allocation2 + $0x150] sm:$0xff] %vm1699, %v12346
  %12407 = vst.msk [vmem:[#allocation2 + $0x158] sm:$0x7f] %vm3514, %v12347
  %12408 = vst.msk [vmem:[#allocation2 + $0x160] sm:$0xff] %vm1699, %v12348
  %12409 = vst.msk [vmem:[#allocation2 + $0x168] sm:$0x7f] %vm3514, %v12349
  %12410 = vst.msk [vmem:[#allocation2 + $0x170] sm:$0xff] %vm1699, %v12350
  %12411 = vst.msk [vmem:[#allocation2 + $0x178] sm:$0x7f] %vm3514, %v12351
  %12412 = vst.msk [vmem:[#allocation2 + $0x180] sm:$0xff] %vm1699, %v12352
  %12413 = vst.msk [vmem:[#allocation2 + $0x188] sm:$0x7f] %vm3514, %v12353
  %12414 = vst.msk [vmem:[#allocation2 + $0x190] sm:$0xff] %vm1699, %v12354
  %12415 = vst.msk [vmem:[#allocation2 + $0x198] sm:$0x7f] %vm3514, %v12355
  %12416 = vst.msk [vmem:[#allocation2 + $0x1a0] sm:$0xff] %vm1699, %v12356
  %12417 = vst.msk [vmem:[#allocation2 + $0x1a8] sm:$0x7f] %vm3514, %v12357
  %12418 = vst.msk [vmem:[#allocation2 + $0x1b0] sm:$0xff] %vm1699, %v12358
  %12419 = vst.msk [vmem:[#allocation2 + $0x1b8] sm:$0x7f] %vm3514, %v12359
  %12420 = vst.msk [vmem:[#allocation2 + $0x1c0] sm:$0xff] %vm1699, %v12360
  %12421 = vst.msk [vmem:[#allocation2 + $0x1c8] sm:$0x7f] %vm3514, %v12361
  %12422 = vst.msk [vmem:[#allocation2 + $0x1d0] sm:$0xff] %vm1699, %v12362
  %12423 = vst.msk [vmem:[#allocation2 + $0x1d8] sm:$0x7f] %vm3514, %v12363
  %12424 = vst.msk [vmem:[#allocation2 + $0x1e0] sm:$0xff] %vm1699, %v12364
  %12425 = vst.msk [vmem:[#allocation2 + $0x1e8] sm:$0x7f] %vm3514, %v12365
  %v12426 = vld [vmem:[#allocation2] sm:$0xff]
  %v12427 = vld [vmem:[#allocation2 + $0x8] sm:$0xff]
  %v12428 = vld [vmem:[#allocation2 + $0x10] sm:$0xff]
  %v12429 = vld [vmem:[#allocation2 + $0x18] sm:$0xff]
  %v12430 = vld [vmem:[#allocation2 + $0x20] sm:$0xff]
  %v12431 = vld [vmem:[#allocation2 + $0x28] sm:$0xff]
  %v12432 = vld [vmem:[#allocation2 + $0x30] sm:$0xff]
  %v12433 = vld [vmem:[#allocation2 + $0x38] sm:$0xff]
  %v12434 = vld [vmem:[#allocation2 + $0x40] sm:$0xff]
  %v12435 = vld [vmem:[#allocation2 + $0x48] sm:$0xff]
  %v12436 = vld [vmem:[#allocation2 + $0x50] sm:$0xff]
  %v12437 = vld [vmem:[#allocation2 + $0x58] sm:$0xff]
  %v12438 = vld [vmem:[#allocation2 + $0x60] sm:$0xff]
  %v12439 = vld [vmem:[#allocation2 + $0x68] sm:$0xff]
  %v12440 = vld [vmem:[#allocation2 + $0x70] sm:$0xff]
  %v12441 = vld [vmem:[#allocation2 + $0x78] sm:$0xff]
  %v12442 = vld [vmem:[#allocation2 + $0x80] sm:$0xff]
  %v12443 = vld [vmem:[#allocation2 + $0x88] sm:$0xff]
  %v12444 = vld [vmem:[#allocation2 + $0x90] sm:$0xff]
  %v12445 = vld [vmem:[#allocation2 + $0x98] sm:$0xff]
  %v12446 = vld [vmem:[#allocation2 + $0xa0] sm:$0xff]
  %v12447 = vld [vmem:[#allocation2 + $0xa8] sm:$0xff]
  %v12448 = vld [vmem:[#allocation2 + $0xb0] sm:$0xff]
  %v12449 = vld [vmem:[#allocation2 + $0xb8] sm:$0xff]
  %v12450 = vld [vmem:[#allocation2 + $0xc0] sm:$0xff]
  %v12451 = vld [vmem:[#allocation2 + $0xc8] sm:$0xff]
  %v12452 = vld [vmem:[#allocation2 + $0xd0] sm:$0xff]
  %v12453 = vld [vmem:[#allocation2 + $0xd8] sm:$0xff]
  %v12454 = vld [vmem:[#allocation2 + $0xe0] sm:$0xff]
  %v12455 = vld [vmem:[#allocation2 + $0xe8] sm:$0xff]
  %v12456 = vld [vmem:[#allocation2 + $0xf0] sm:$0xff]
  %v12457 = vld [vmem:[#allocation2 + $0xf8] sm:$0xff]
  %v12458 = vld [vmem:[#allocation2 + $0x100] sm:$0xff]
  %v12459 = vld [vmem:[#allocation2 + $0x108] sm:$0xff]
  %v12460 = vld [vmem:[#allocation2 + $0x110] sm:$0xff]
  %v12461 = vld [vmem:[#allocation2 + $0x118] sm:$0xff]
  %v12462 = vld [vmem:[#allocation2 + $0x120] sm:$0xff]
  %v12463 = vld [vmem:[#allocation2 + $0x128] sm:$0xff]
  %v12464 = vld [vmem:[#allocation2 + $0x130] sm:$0xff]
  %v12465 = vld [vmem:[#allocation2 + $0x138] sm:$0xff]
  %v12466 = vld [vmem:[#allocation2 + $0x140] sm:$0xff]
  %v12467 = vld [vmem:[#allocation2 + $0x148] sm:$0xff]
  %v12468 = vld [vmem:[#allocation2 + $0x150] sm:$0xff]
  %v12469 = vld [vmem:[#allocation2 + $0x158] sm:$0xff]
  %v12470 = vld [vmem:[#allocation2 + $0x160] sm:$0xff]
  %v12471 = vld [vmem:[#allocation2 + $0x168] sm:$0xff]
  %v12472 = vld [vmem:[#allocation2 + $0x170] sm:$0xff]
  %v12473 = vld [vmem:[#allocation2 + $0x178] sm:$0xff]
  %v12474 = vld [vmem:[#allocation2 + $0x180] sm:$0xff]
  %v12475 = vld [vmem:[#allocation2 + $0x188] sm:$0xff]
  %v12476 = vld [vmem:[#allocation2 + $0x190] sm:$0xff]
  %v12477 = vld [vmem:[#allocation2 + $0x198] sm:$0xff]
  %v12478 = vld [vmem:[#allocation2 + $0x1a0] sm:$0xff]
  %v12479 = vld [vmem:[#allocation2 + $0x1a8] sm:$0xff]
  %v12480 = vld [vmem:[#allocation2 + $0x1b0] sm:$0xff]
  %v12481 = vld [vmem:[#allocation2 + $0x1b8] sm:$0xff]
  %v12482 = vld [vmem:[#allocation2 + $0x1c0] sm:$0xff]
  %v12483 = vld [vmem:[#allocation2 + $0x1c8] sm:$0xff]
  %v12484 = vld [vmem:[#allocation2 + $0x1d0] sm:$0xff]
  %v12485 = vld [vmem:[#allocation2 + $0x1d8] sm:$0xff]
  %v12486 = vld [vmem:[#allocation2 + $0x1e0] sm:$0xff]
  %v12487 = vld [vmem:[#allocation2 + $0x1e8] sm:$0xff]
  %v12488 = vld [vmem:[#allocation2 + $0x1f0] sm:$0xff]
  %v12489 = vld [vmem:[#allocation2 + $0x1f8] sm:$0xff]
  %12490 = vst.msk [vmem:[%s13] sm:$0xff] %vm1699, %v12426
  %12491 = vst.msk [vmem:[%s13 + $0x8] sm:$0xff] %vm1699, %v12427
  %12492 = vst.msk [vmem:[%s13 + $0x10] sm:$0xff] %vm1699, %v12428
  %12493 = vst.msk [vmem:[%s13 + $0x18] sm:$0xff] %vm1699, %v12429
  %12494 = vst.msk [vmem:[%s13 + $0x20] sm:$0xff] %vm1699, %v12430
  %12495 = vst.msk [vmem:[%s13 + $0x28] sm:$0xff] %vm1699, %v12431
  %12496 = vst.msk [vmem:[%s13 + $0x30] sm:$0xff] %vm1699, %v12432
  %12497 = vst.msk [vmem:[%s13 + $0x38] sm:$0xff] %vm1699, %v12433
  %12498 = vst.msk [vmem:[%s13 + $0x40] sm:$0xff] %vm1699, %v12434
  %12499 = vst.msk [vmem:[%s13 + $0x48] sm:$0xff] %vm1699, %v12435
  %12500 = vst.msk [vmem:[%s13 + $0x50] sm:$0xff] %vm1699, %v12436
  %12501 = vst.msk [vmem:[%s13 + $0x58] sm:$0xff] %vm1699, %v12437
  %12502 = vst.msk [vmem:[%s13 + $0x60] sm:$0xff] %vm1699, %v12438
  %12503 = vst.msk [vmem:[%s13 + $0x68] sm:$0xff] %vm1699, %v12439
  %12504 = vst.msk [vmem:[%s13 + $0x70] sm:$0xff] %vm1699, %v12440
  %12505 = vst.msk [vmem:[%s13 + $0x78] sm:$0xff] %vm1699, %v12441
  %12506 = vst.msk [vmem:[%s13 + $0x80] sm:$0xff] %vm1699, %v12442
  %12507 = vst.msk [vmem:[%s13 + $0x88] sm:$0xff] %vm1699, %v12443
  %12508 = vst.msk [vmem:[%s13 + $0x90] sm:$0xff] %vm1699, %v12444
  %12509 = vst.msk [vmem:[%s13 + $0x98] sm:$0xff] %vm1699, %v12445
  %12510 = vst.msk [vmem:[%s13 + $0xa0] sm:$0xff] %vm1699, %v12446
  %12511 = vst.msk [vmem:[%s13 + $0xa8] sm:$0xff] %vm1699, %v12447
  %12512 = vst.msk [vmem:[%s13 + $0xb0] sm:$0xff] %vm1699, %v12448
  %12513 = vst.msk [vmem:[%s13 + $0xb8] sm:$0xff] %vm1699, %v12449
  %12514 = vst.msk [vmem:[%s13 + $0xc0] sm:$0xff] %vm1699, %v12450
  %12515 = vst.msk [vmem:[%s13 + $0xc8] sm:$0xff] %vm1699, %v12451
  %12516 = vst.msk [vmem:[%s13 + $0xd0] sm:$0xff] %vm1699, %v12452
  %12517 = vst.msk [vmem:[%s13 + $0xd8] sm:$0xff] %vm1699, %v12453
  %12518 = vst.msk [vmem:[%s13 + $0xe0] sm:$0xff] %vm1699, %v12454
  %12519 = vst.msk [vmem:[%s13 + $0xe8] sm:$0xff] %vm1699, %v12455
  %12520 = vst.msk [vmem:[%s13 + $0xf0] sm:$0xff] %vm1699, %v12456
  %12521 = vst.msk [vmem:[%s13 + $0xf8] sm:$0xff] %vm1699, %v12457
  %12522 = vst.msk [vmem:[%s13 + $0x100] sm:$0xff] %vm1699, %v12458
  %12523 = vst.msk [vmem:[%s13 + $0x108] sm:$0xff] %vm1699, %v12459
  %12524 = vst.msk [vmem:[%s13 + $0x110] sm:$0xff] %vm1699, %v12460
  %12525 = vst.msk [vmem:[%s13 + $0x118] sm:$0xff] %vm1699, %v12461
  %12526 = vst.msk [vmem:[%s13 + $0x120] sm:$0xff] %vm1699, %v12462
  %12527 = vst.msk [vmem:[%s13 + $0x128] sm:$0xff] %vm1699, %v12463
  %12528 = vst.msk [vmem:[%s13 + $0x130] sm:$0xff] %vm1699, %v12464
  %12529 = vst.msk [vmem:[%s13 + $0x138] sm:$0xff] %vm1699, %v12465
  %12530 = vst.msk [vmem:[%s13 + $0x140] sm:$0xff] %vm1699, %v12466
  %12531 = vst.msk [vmem:[%s13 + $0x148] sm:$0xff] %vm1699, %v12467
  %12532 = vst.msk [vmem:[%s13 + $0x150] sm:$0xff] %vm1699, %v12468
  %12533 = vst.msk [vmem:[%s13 + $0x158] sm:$0xff] %vm1699, %v12469
  %12534 = vst.msk [vmem:[%s13 + $0x160] sm:$0xff] %vm1699, %v12470
  %12535 = vst.msk [vmem:[%s13 + $0x168] sm:$0xff] %vm1699, %v12471
  %12536 = vst.msk [vmem:[%s13 + $0x170] sm:$0xff] %vm1699, %v12472
  %12537 = vst.msk [vmem:[%s13 + $0x178] sm:$0xff] %vm1699, %v12473
  %12538 = vst.msk [vmem:[%s13 + $0x180] sm:$0xff] %vm1699, %v12474
  %12539 = vst.msk [vmem:[%s13 + $0x188] sm:$0xff] %vm1699, %v12475
  %12540 = vst.msk [vmem:[%s13 + $0x190] sm:$0xff] %vm1699, %v12476
  %12541 = vst.msk [vmem:[%s13 + $0x198] sm:$0xff] %vm1699, %v12477
  %12542 = vst.msk [vmem:[%s13 + $0x1a0] sm:$0xff] %vm1699, %v12478
  %12543 = vst.msk [vmem:[%s13 + $0x1a8] sm:$0xff] %vm1699, %v12479
  %12544 = vst.msk [vmem:[%s13 + $0x1b0] sm:$0xff] %vm1699, %v12480
  %12545 = vst.msk [vmem:[%s13 + $0x1b8] sm:$0xff] %vm1699, %v12481
  %12546 = vst.msk [vmem:[%s13 + $0x1c0] sm:$0xff] %vm1699, %v12482
  %12547 = vst.msk [vmem:[%s13 + $0x1c8] sm:$0xff] %vm1699, %v12483
  %12548 = vst.msk [vmem:[%s13 + $0x1d0] sm:$0xff] %vm1699, %v12484
  %12549 = vst.msk [vmem:[%s13 + $0x1d8] sm:$0xff] %vm1699, %v12485
  %12550 = vst.msk [vmem:[%s13 + $0x1e0] sm:$0xff] %vm1699, %v12486
  %12551 = vst.msk [vmem:[%s13 + $0x1e8] sm:$0xff] %vm1699, %v12487
  %12552 = vst.msk [vmem:[%s13 + $0x1f0] sm:$0xff] %vm1699, %v12488
  %12553 = vst.msk [vmem:[%s13 + $0x1f8] sm:$0xff] %vm1699, %v12489
  // Predicated region
  $region54: #{tpu_custom_call.1} parent=0 // pred_check
    _
  $region55: #{tpu_custom_call.1} parent=0 // pred_check_branch
    %12555 = sbr.rel (0) target = $region57
  $region56: #{tpu_custom_call.1} parent=0 // pred_region
    _
  $region57: #{tpu_custom_call.1} parent=0 // pred_fallthru
    _
  // Predicated region
  $region58: #{tpu_custom_call.1} parent=0 // pred_check
    _
  $region59: #{tpu_custom_call.1} parent=0 // pred_check_branch
    %12557 = sbr.rel (0) target = $region61
  $region60: #{tpu_custom_call.1} parent=0 // pred_region
    _
  $region61: #{tpu_custom_call.1} parent=0 // pred_fallthru
    _

</llo_original>
